<compile_context>
chip_gen: v7x
topology: tpu7x:2x2x1
jax: 0.10.0
libtpu: 0.0.40
codegen_flags: <defaults>
</compile_context>

<pallas_src>
import functools

import numpy as np
import jax
import jax.numpy as jnp
from jax import lax
from jax.experimental import pallas as pl
from jax.experimental.pallas import tpu as pltpu


def _gelu(x):
    # exact (erf-based) GELU == torch.nn.GELU() default
    return 0.5 * x * (1.0 + lax.erf(x * (2.0 ** -0.5)))


def _default_vmem_limit():
    # v5e/v6e: 128 MiB physical -> allow ~100 MiB; v7x: 64 MiB -> ~48 MiB.
    try:
        cap = int(pltpu.get_tpu_info().vmem_capacity_bytes)
    except Exception:
        cap = 64 * 1024 * 1024
    return int(min(cap - 16 * 1024 * 1024, 100 * 1024 * 1024))


_VMEM_LIMIT = _default_vmem_limit()


# ----------------------------------------------------------------------------
# Fused kernel: one batch element per grid step.
#
# Phase arrays (zero padded, bf16, NHWC-like, C on lanes):
#   pee[a,b] = x[2a-1, 2b-1]   shape (Ho+1, Wo+1, C)
#   peo[a,b] = x[2a-1, 2b  ]   shape (Ho+1, Wo,   C)
#   poe[a,b] = x[2a,   2b-1]   shape (Ho,   Wo+1, C)
#   poo[a,b] = x[2a,   2b  ]   shape (Ho,   Wo,   C)
# so every stride-2 conv tap (and every maxpool tap) is a contiguous slab.
# ----------------------------------------------------------------------------
def _downsample_kernel(pee_ref, peo_ref, poe_ref, poo_ref,
                       w8_ref, wctr_ref, wB_ref, affA_ref, affB_ref,
                       out_ref, y1p_ref,
                       *, Ho, Wo, H, W, pool_pad):
    C = out_ref.shape[-1]
    f32 = jnp.float32
    M = Ho * Wo

    # folded-BN affines (f32)
    s3a = affA_ref[0:1, :]
    b3a = affA_ref[1:2, :]
    s1 = affA_ref[2:3, :]
    b1 = affA_ref[3:4, :]
    s3b = affB_ref[0:1, :].reshape(1, 1, C)
    b3b = affB_ref[1:2, :].reshape(1, 1, C)

    pee = pee_ref[0]          # (Ho+1, Wo+1, C) bf16
    peo = peo_ref[0]          # (Ho+1, Wo,   C)
    poe = poe_ref[0]          # (Ho,   Wo+1, C)
    poo = poo_ref[0]          # (Ho,   Wo,   C)

    def flat(a):              # (Ho, Wo, C) -> (Ho*Wo, C)
        return a.reshape(M, C)

    # -------- stride-2 stage: conv3x3 s2 (+ conv1x1 s2 packed along N) -----
    # centre tap (ky=1,kx=1) operand = poo; its weight is [w3a_center | w1],
    # so the 1x1 branch falls out of the same (M,128)x(128,256) matmul.
    ctr = jnp.dot(flat(poo), wctr_ref[...], preferred_element_type=f32)   # (M, 2C)

    # remaining 8 taps, order = ky*3+kx skipping the centre (matches w8).
    taps = (
        flat(pee[0:Ho, 0:Wo]),          # (0,0)
        flat(peo[0:Ho, 0:Wo]),          # (0,1)
        flat(pee[0:Ho, 1:Wo + 1]),      # (0,2)
        flat(poe[0:Ho, 0:Wo]),          # (1,0)
        flat(poe[0:Ho, 1:Wo + 1]),      # (1,2)
        flat(pee[1:Ho + 1, 0:Wo]),      # (2,0)
        flat(peo[1:Ho + 1, 0:Wo]),      # (2,1)
        flat(pee[1:Ho + 1, 1:Wo + 1]),  # (2,2)
    )
    acc = ctr[:, 0:C]
    for t in range(8):
        acc = acc + jnp.dot(taps[t], w8_ref[t], preferred_element_type=f32)

    y1 = _gelu(acc * s3a + b3a)                             # (M, C) f32
    d1 = (ctr[:, C:2 * C] * s1 + b1).reshape(Ho, Wo, C)     # (Ho, Wo, C) f32

    # -------- y1 scratch with explicit zero borders (no clamp/masking) -----
    zrow = jnp.zeros((1, Wo + 2, C), y1p_ref.dtype)
    zcol = jnp.zeros((Ho + 2, 1, C), y1p_ref.dtype)
    y1p_ref[0:1, :, :] = zrow
    y1p_ref[Ho + 1:Ho + 2, :, :] = zrow
    y1p_ref[:, 0:1, :] = zcol
    y1p_ref[:, Wo + 1:Wo + 2, :] = zcol
    y1p_ref[1:Ho + 1, 1:Wo + 1, :] = y1.reshape(Ho, Wo, C).astype(y1p_ref.dtype)

    # -------- max-pool ------------------------------------------------------
    if pool_pad == 0:
        # MaxPool2d(2): taps x[2r,2c], x[2r,2c+1], x[2r+1,2c], x[2r+1,2c+1]
        # (assumes even H, W, exactly like the PyTorch module for num != 3).
        mp = jnp.maximum(
            jnp.maximum(poo, poe[:, 1:Wo + 1]),
            jnp.maximum(peo[1:Ho + 1, :], pee[1:Ho + 1, 1:Wo + 1]))
    else:
        # MaxPool2d(2, padding=1): taps x[2r-1,2c-1], x[2r-1,2c], x[2r,2c-1],
        # x[2r,2c]; implicit padding behaves as -inf. Masks built once.
        t_ee = pee[0:Ho, 0:Wo]
        t_eo = peo[0:Ho, 0:Wo]
        t_oe = poe[0:Ho, 0:Wo]
        neg = jnp.asarray(-jnp.inf, dtype=poo.dtype)
        ri = lax.broadcasted_iota(jnp.int32, (Ho, 1, 1), 0)
        ci = lax.broadcasted_iota(jnp.int32, (1, Wo, 1), 1)
        rm1 = jnp.logical_and(2 * ri - 1 >= 0, 2 * ri - 1 < H)   # row 2r-1 valid
        rm0 = 2 * ri < H                                          # row 2r   valid
        cm1 = jnp.logical_and(2 * ci - 1 >= 0, 2 * ci - 1 < W)
        cm0 = 2 * ci < W
        mp = jnp.maximum(
            jnp.maximum(jnp.where(jnp.logical_and(rm1, cm1), t_ee, neg),
                        jnp.where(jnp.logical_and(rm1, cm0), t_eo, neg)),
            jnp.maximum(jnp.where(jnp.logical_and(rm0, cm1), t_oe, neg),
                        jnp.where(jnp.logical_and(rm0, cm0), poo, neg)))

    # -------- stride-1 stage: conv3x3 s1 + BN + residual adds + GELU -------
    # per-ky packed weights (C, 3C): 3 matmuls with N=384 instead of 9 N=128.
    Mw = Ho * (Wo + 2)
    acc2 = jnp.zeros((Ho, Wo, C), f32)
    for ky in range(3):
        op = y1p_ref[ky:ky + Ho, :, :].reshape(Mw, C)           # (Ho*(Wo+2), C)
        res = jnp.dot(op, wB_ref[ky], preferred_element_type=f32)
        res = res.reshape(Ho, Wo + 2, 3 * C)
        for kx in range(3):
            acc2 = acc2 + res[:, kx:kx + Wo, kx * C:(kx + 1) * C]

    z = _gelu(acc2 * s3b + b3b + d1)
    out_ref[0] = (z + mp.astype(f32)).astype(out_ref.dtype)


# ----------------------------------------------------------------------------
# Wrapper
# ----------------------------------------------------------------------------
@functools.partial(jax.jit, static_argnames=("num",))
def downsample_forward(params, x, num=1):
    """x: NCHW float32 (B, 128, H, W) -> NCHW float32 (B, 128, Ho, Wo)."""
    B, C, H, W = x.shape
    Ho = (H - 1) // 2 + 1
    Wo = (W - 1) // 2 + 1
    pool_pad = 1 if num == 3 else 0

    # NHWC bf16 (single pass); then one strided-slice+pad per parity phase
    # (XLA fuses slice+cast+pad, combined ~one more pass over the input).
    xh = jnp.transpose(x, (0, 2, 3, 1)).astype(jnp.bfloat16)
    pad_r = Ho - H // 2          # 0 (even H) or 1 (odd H)
    pad_c = Wo - W // 2
    poo = xh[:, 0::2, 0::2, :]                                               # (B,Ho,  Wo,  C)
    poe = jnp.pad(xh[:, 0::2, 1::2, :], ((0, 0), (0, 0), (1, pad_c), (0, 0)))  # (B,Ho,  Wo+1,C)
    peo = jnp.pad(xh[:, 1::2, 0::2, :], ((0, 0), (1, pad_r), (0, 0), (0, 0)))  # (B,Ho+1,Wo,  C)
    pee = jnp.pad(xh[:, 1::2, 1::2, :], ((0, 0), (1, pad_r), (1, pad_c), (0, 0)))  # (B,Ho+1,Wo+1,C)

    # pack weights for wide-N MXU matmuls (tiny one-off concats).
    w3a, w3b, w1 = params["w3a"], params["w3b"], params["w1"]
    w8 = jnp.concatenate([w3a[0:4], w3a[5:9]], axis=0)          # (8, C, C)
    wctr = jnp.concatenate([w3a[4], w1], axis=1)                # (C, 2C)
    wB = jnp.stack([jnp.concatenate([w3b[3 * k], w3b[3 * k + 1], w3b[3 * k + 2]],
                                    axis=1) for k in range(3)])  # (3, C, 3C)

    kern = functools.partial(_downsample_kernel, Ho=Ho, Wo=Wo, H=H, W=W,
                             pool_pad=pool_pad)
    out = pl.pallas_call(
        kern,
        out_shape=jax.ShapeDtypeStruct((B, Ho, Wo, C), jnp.float32),
        grid_spec=pltpu.PrefetchScalarGridSpec(
            num_scalar_prefetch=0,
            grid=(B,),
            in_specs=[
                pl.BlockSpec((1, Ho + 1, Wo + 1, C), lambda b: (b, 0, 0, 0)),
                pl.BlockSpec((1, Ho + 1, Wo, C), lambda b: (b, 0, 0, 0)),
                pl.BlockSpec((1, Ho, Wo + 1, C), lambda b: (b, 0, 0, 0)),
                pl.BlockSpec((1, Ho, Wo, C), lambda b: (b, 0, 0, 0)),
                # VMEM-resident weights / folded-BN affines (constant index)
                pl.BlockSpec((8, C, C), lambda b: (0, 0, 0)),
                pl.BlockSpec((C, 2 * C), lambda b: (0, 0)),
                pl.BlockSpec((3, C, 3 * C), lambda b: (0, 0, 0)),
                pl.BlockSpec((4, C), lambda b: (0, 0)),
                pl.BlockSpec((2, C), lambda b: (0, 0)),
            ],
            out_specs=pl.BlockSpec((1, Ho, Wo, C), lambda b: (b, 0, 0, 0)),
            scratch_shapes=[pltpu.VMEM((Ho + 2, Wo + 2, C), jnp.bfloat16)],
        ),
        compiler_params=pltpu.CompilerParams(
            dimension_semantics=("parallel",),
            vmem_limit_bytes=_VMEM_LIMIT),
    )(pee, peo, poe, poo, w8, wctr, wB, params["affA"], params["affB"])

    return jnp.transpose(out, (0, 3, 1, 2))


# ----------------------------------------------------------------------------
# Parameters (eval-mode BatchNorm folded to per-channel scale/bias, eps=1e-3).
# Conv weights stored as (k*k, Cin, Cout) bf16, tap order ky*3 + kx.
# ----------------------------------------------------------------------------
def init_params(key, C=128, eps=1e-3):
    ks = jax.random.split(key, 9)

    def conv_w(k, taps):
        w = jax.random.normal(k, (taps, C, C), jnp.float32) / np.sqrt(C * taps)
        return w.astype(jnp.bfloat16)

    def bn_fold(kg, kb):
        gamma = 1.0 + 0.1 * jax.random.normal(kg, (C,), jnp.float32)
        beta = 0.1 * jax.random.normal(kb, (C,), jnp.float32)
        mean = jnp.zeros((C,), jnp.float32)      # running stats at init
        var = jnp.ones((C,), jnp.float32)
        scale = gamma * lax.rsqrt(var + eps)
        bias = beta - mean * scale
        return scale, bias

    s3a, b3a = bn_fold(ks[0], ks[1])
    s3b, b3b = bn_fold(ks[2], ks[3])
    s1, b1 = bn_fold(ks[4], ks[5])
    return {
        "w3a": conv_w(ks[6], 9),
        "w3b": conv_w(ks[7], 9),
        "w1": conv_w(ks[8], 1).reshape(C, C),
        "affA": jnp.stack([s3a, b3a, s1, b1]),   # (4, C) f32
        "affB": jnp.stack([s3b, b3b]),           # (2, C) f32
    }


# ----------------------------------------------------------------------------
# Pure-JAX (XLA) reference for a loose numerical check.
# ----------------------------------------------------------------------------
def _reference(params, x, num):
    xh = jnp.transpose(x, (0, 2, 3, 1)).astype(jnp.bfloat16).astype(jnp.float32)
    C = xh.shape[-1]

    def conv(inp, wt, k, stride, pad):
        w = wt.astype(jnp.float32).reshape(k, k, C, C)     # HWIO
        return lax.conv_general_dilated(
            inp, w, (stride, stride), [(pad, pad), (pad, pad)],
            dimension_numbers=("NHWC", "HWIO", "NHWC"),
            precision=lax.Precision.HIGHEST)

    affA, affB = params["affA"], params["affB"]
    y1 = _gelu(conv(xh, params["w3a"], 3, 2, 1) * affA[0] + affA[1])
    y2 = conv(y1, params["w3b"], 3, 1, 1) * affB[0] + affB[1]
    d1 = conv(xh, params["w1"].reshape(1, C, C), 1, 2, 0) * affA[2] + affA[3]
    p = 1 if num == 3 else 0
    mp = lax.reduce_window(xh, -jnp.inf, lax.max, (1, 2, 2, 1), (1, 2, 2, 1),
                           [(0, 0), (p, p), (p, p), (0, 0)])
    out = _gelu(y2 + d1) + mp
    return jnp.transpose(out, (0, 3, 1, 2))


if __name__ == "__main__":
    root = jax.random.PRNGKey(0)
    pk, xk1, xk2 = jax.random.split(root, 3)
    params = init_params(pk)
    C = 128   # channel count hard-coded by the PyTorch module

    # num != 3 : MaxPool2d(2), even spatial dims
    x1 = jax.random.normal(xk1, (2, C, 16, 16), jnp.float32)
    out1 = jax.block_until_ready(downsample_forward(params, x1, num=1))
    assert out1.shape == (2, C, 8, 8), out1.shape
    assert bool(jnp.all(jnp.isfinite(out1)))
    ref1 = _reference(params, x1, 1)
    assert float(jnp.max(jnp.abs(out1 - ref1))) < 0.2

    # num == 3 : MaxPool2d(2, padding=1), odd spatial dims so shapes line up
    x2 = jax.random.normal(xk2, (2, C, 17, 17), jnp.float32)
    out2 = jax.block_until_ready(downsample_forward(params, x2, num=3))
    assert out2.shape == (2, C, 9, 9), out2.shape
    assert bool(jnp.all(jnp.isfinite(out2)))
    ref2 = _reference(params, x2, 3)
    assert float(jnp.max(jnp.abs(out2 - ref2))) < 0.2

    print("KERNEL_OK")
</pallas_src>

<mosaic_0001>
module attributes {stable_mosaic.version = 11 : i64} {
  func.func @_downsample_kernel(%arg0: i32, %arg1: memref<1x9x9x128xbf16, #tpu.memory_space<vmem>>, %arg2: memref<1x9x8x128xbf16, #tpu.memory_space<vmem>>, %arg3: memref<1x8x9x128xbf16, #tpu.memory_space<vmem>>, %arg4: memref<1x8x8x128xbf16, #tpu.memory_space<vmem>>, %arg5: memref<8x128x128xbf16, #tpu.memory_space<vmem>>, %arg6: memref<128x256xbf16, #tpu.memory_space<vmem>>, %arg7: memref<3x128x384xbf16, #tpu.memory_space<vmem>>, %arg8: memref<4x128xf32, #tpu.memory_space<vmem>>, %arg9: memref<2x128xf32, #tpu.memory_space<vmem>>, %arg10: memref<1x8x8x128xf32, #tpu.memory_space<vmem>>, %arg11: memref<10x10x128xbf16, #tpu.memory_space<vmem>>) attributes {dimension_semantics = [#tpu.dimension_semantics<parallel>], iteration_bounds = array<i64: 2>, scalar_prefetch = 0 : i64, scratch_operands = 1 : i64, tpu.core_type = #tpu.core_type<tc>, window_params = [{transform_indices = @transform_0, window_bounds = array<i64: 1, 9, 9, 128>}, {transform_indices = @transform_1, window_bounds = array<i64: 1, 9, 8, 128>}, {transform_indices = @transform_2, window_bounds = array<i64: 1, 8, 9, 128>}, {transform_indices = @transform_3, window_bounds = array<i64: 1, 8, 8, 128>}, {pipeline_mode = #tpu.pipeline_mode<synchronous>, transform_indices = @transform_4, window_bounds = array<i64: 8, 128, 128>}, {pipeline_mode = #tpu.pipeline_mode<synchronous>, transform_indices = @transform_5, window_bounds = array<i64: 128, 256>}, {pipeline_mode = #tpu.pipeline_mode<synchronous>, transform_indices = @transform_6, window_bounds = array<i64: 3, 128, 384>}, {pipeline_mode = #tpu.pipeline_mode<synchronous>, transform_indices = @transform_7, window_bounds = array<i64: 4, 128>}, {pipeline_mode = #tpu.pipeline_mode<synchronous>, transform_indices = @transform_8, window_bounds = array<i64: 2, 128>}, {transform_indices = @transform_9, window_bounds = array<i64: 1, 8, 8, 128>}]} {
    %c0 = arith.constant 0 : index
    %c0_0 = arith.constant 0 : index
    %0 = vector.load %arg8[%c0, %c0_0] : memref<4x128xf32, #tpu.memory_space<vmem>>, vector<1x128xf32>
    %c1 = arith.constant 1 : index
    %c0_1 = arith.constant 0 : index
    %1 = vector.load %arg8[%c1, %c0_1] : memref<4x128xf32, #tpu.memory_space<vmem>>, vector<1x128xf32>
    %c2 = arith.constant 2 : index
    %c0_2 = arith.constant 0 : index
    %2 = vector.load %arg8[%c2, %c0_2] : memref<4x128xf32, #tpu.memory_space<vmem>>, vector<1x128xf32>
    %c3 = arith.constant 3 : index
    %c0_3 = arith.constant 0 : index
    %3 = vector.load %arg8[%c3, %c0_3] : memref<4x128xf32, #tpu.memory_space<vmem>>, vector<1x128xf32>
    %c0_4 = arith.constant 0 : index
    %c0_5 = arith.constant 0 : index
    %4 = vector.load %arg9[%c0_4, %c0_5] : memref<2x128xf32, #tpu.memory_space<vmem>>, vector<1x128xf32>
    %5 = vector.shape_cast %4 : vector<1x128xf32> to vector<1x1x128xf32>
    %c1_6 = arith.constant 1 : index
    %c0_7 = arith.constant 0 : index
    %6 = vector.load %arg9[%c1_6, %c0_7] : memref<2x128xf32, #tpu.memory_space<vmem>>, vector<1x128xf32>
    %7 = vector.shape_cast %6 : vector<1x128xf32> to vector<1x1x128xf32>
    %c0_8 = arith.constant 0 : index
    %c0_9 = arith.constant 0 : index
    %c0_10 = arith.constant 0 : index
    %c0_11 = arith.constant 0 : index
    %8 = vector.load %arg1[%c0_8, %c0_9, %c0_10, %c0_11] : memref<1x9x9x128xbf16, #tpu.memory_space<vmem>>, vector<1x9x9x128xbf16>
    %9 = vector.shape_cast %8 : vector<1x9x9x128xbf16> to vector<9x9x128xbf16>
    %c0_12 = arith.constant 0 : index
    %c0_13 = arith.constant 0 : index
    %c0_14 = arith.constant 0 : index
    %c0_15 = arith.constant 0 : index
    %10 = vector.load %arg2[%c0_12, %c0_13, %c0_14, %c0_15] : memref<1x9x8x128xbf16, #tpu.memory_space<vmem>>, vector<1x9x8x128xbf16>
    %11 = vector.shape_cast %10 : vector<1x9x8x128xbf16> to vector<9x8x128xbf16>
    %c0_16 = arith.constant 0 : index
    %c0_17 = arith.constant 0 : index
    %c0_18 = arith.constant 0 : index
    %c0_19 = arith.constant 0 : index
    %12 = vector.load %arg3[%c0_16, %c0_17, %c0_18, %c0_19] : memref<1x8x9x128xbf16, #tpu.memory_space<vmem>>, vector<1x8x9x128xbf16>
    %13 = vector.shape_cast %12 : vector<1x8x9x128xbf16> to vector<8x9x128xbf16>
    %c0_20 = arith.constant 0 : index
    %c0_21 = arith.constant 0 : index
    %c0_22 = arith.constant 0 : index
    %c0_23 = arith.constant 0 : index
    %14 = vector.load %arg4[%c0_20, %c0_21, %c0_22, %c0_23] : memref<1x8x8x128xbf16, #tpu.memory_space<vmem>>, vector<1x8x8x128xbf16>
    %15 = vector.shape_cast %14 : vector<1x8x8x128xbf16> to vector<8x8x128xbf16>
    %16 = vector.shape_cast %15 : vector<8x8x128xbf16> to vector<64x128xbf16>
    %c0_24 = arith.constant 0 : index
    %c0_25 = arith.constant 0 : index
    %17 = vector.load %arg6[%c0_24, %c0_25] : memref<128x256xbf16, #tpu.memory_space<vmem>>, vector<128x256xbf16>
    %cst = arith.constant dense<0.000000e+00> : vector<64x256xf32>
    %18 = tpu.matmul %16, %17, %cst {dimension_numbers = #tpu.dot_dimension_numbers<[1], [0], [0], [1], [0, 0, 1, 1], [], []>} : vector<64x128xbf16>, vector<128x256xbf16>, vector<64x256xf32> -> vector<64x256xf32>
    %19 = vector.extract_strided_slice %9 {offsets = [0, 0, 0], sizes = [8, 8, 128], strides = [1, 1, 1]} : vector<9x9x128xbf16> to vector<8x8x128xbf16>
    %20 = vector.shape_cast %19 : vector<8x8x128xbf16> to vector<64x128xbf16>
    %21 = vector.extract_strided_slice %11 {offsets = [0, 0, 0], sizes = [8, 8, 128], strides = [1, 1, 1]} : vector<9x8x128xbf16> to vector<8x8x128xbf16>
    %22 = vector.shape_cast %21 : vector<8x8x128xbf16> to vector<64x128xbf16>
    %23 = vector.extract_strided_slice %9 {offsets = [0, 1, 0], sizes = [8, 8, 128], strides = [1, 1, 1]} : vector<9x9x128xbf16> to vector<8x8x128xbf16>
    %24 = vector.shape_cast %23 : vector<8x8x128xbf16> to vector<64x128xbf16>
    %25 = vector.extract_strided_slice %13 {offsets = [0, 0, 0], sizes = [8, 8, 128], strides = [1, 1, 1]} : vector<8x9x128xbf16> to vector<8x8x128xbf16>
    %26 = vector.shape_cast %25 : vector<8x8x128xbf16> to vector<64x128xbf16>
    %27 = vector.extract_strided_slice %13 {offsets = [0, 1, 0], sizes = [8, 8, 128], strides = [1, 1, 1]} : vector<8x9x128xbf16> to vector<8x8x128xbf16>
    %28 = vector.shape_cast %27 : vector<8x8x128xbf16> to vector<64x128xbf16>
    %29 = vector.extract_strided_slice %9 {offsets = [1, 0, 0], sizes = [8, 8, 128], strides = [1, 1, 1]} : vector<9x9x128xbf16> to vector<8x8x128xbf16>
    %30 = vector.shape_cast %29 : vector<8x8x128xbf16> to vector<64x128xbf16>
    %31 = vector.extract_strided_slice %11 {offsets = [1, 0, 0], sizes = [8, 8, 128], strides = [1, 1, 1]} : vector<9x8x128xbf16> to vector<8x8x128xbf16>
    %32 = vector.shape_cast %31 : vector<8x8x128xbf16> to vector<64x128xbf16>
    %33 = vector.extract_strided_slice %9 {offsets = [1, 1, 0], sizes = [8, 8, 128], strides = [1, 1, 1]} : vector<9x9x128xbf16> to vector<8x8x128xbf16>
    %34 = vector.shape_cast %33 : vector<8x8x128xbf16> to vector<64x128xbf16>
    %35 = vector.extract_strided_slice %18 {offsets = [0, 0], sizes = [64, 128], strides = [1, 1]} : vector<64x256xf32> to vector<64x128xf32>
    %c0_26 = arith.constant 0 : index
    %c0_27 = arith.constant 0 : index
    %c0_28 = arith.constant 0 : index
    %36 = vector.load %arg5[%c0_26, %c0_27, %c0_28] : memref<8x128x128xbf16, #tpu.memory_space<vmem>>, vector<1x128x128xbf16>
    %37 = vector.shape_cast %36 : vector<1x128x128xbf16> to vector<128x128xbf16>
    %cst_29 = arith.constant dense<0.000000e+00> : vector<64x128xf32>
    %38 = tpu.matmul %20, %37, %cst_29 {dimension_numbers = #tpu.dot_dimension_numbers<[1], [0], [0], [1], [0, 0, 1, 1], [], []>} : vector<64x128xbf16>, vector<128x128xbf16>, vector<64x128xf32> -> vector<64x128xf32>
    %39 = arith.addf %35, %38 : vector<64x128xf32>
    %c1_30 = arith.constant 1 : index
    %c0_31 = arith.constant 0 : index
    %c0_32 = arith.constant 0 : index
    %40 = vector.load %arg5[%c1_30, %c0_31, %c0_32] : memref<8x128x128xbf16, #tpu.memory_space<vmem>>, vector<1x128x128xbf16>
    %41 = vector.shape_cast %40 : vector<1x128x128xbf16> to vector<128x128xbf16>
    %cst_33 = arith.constant dense<0.000000e+00> : vector<64x128xf32>
    %42 = tpu.matmul %22, %41, %cst_33 {dimension_numbers = #tpu.dot_dimension_numbers<[1], [0], [0], [1], [0, 0, 1, 1], [], []>} : vector<64x128xbf16>, vector<128x128xbf16>, vector<64x128xf32> -> vector<64x128xf32>
    %43 = arith.addf %39, %42 : vector<64x128xf32>
    %c2_34 = arith.constant 2 : index
    %c0_35 = arith.constant 0 : index
    %c0_36 = arith.constant 0 : index
    %44 = vector.load %arg5[%c2_34, %c0_35, %c0_36] : memref<8x128x128xbf16, #tpu.memory_space<vmem>>, vector<1x128x128xbf16>
    %45 = vector.shape_cast %44 : vector<1x128x128xbf16> to vector<128x128xbf16>
    %cst_37 = arith.constant dense<0.000000e+00> : vector<64x128xf32>
    %46 = tpu.matmul %24, %45, %cst_37 {dimension_numbers = #tpu.dot_dimension_numbers<[1], [0], [0], [1], [0, 0, 1, 1], [], []>} : vector<64x128xbf16>, vector<128x128xbf16>, vector<64x128xf32> -> vector<64x128xf32>
    %47 = arith.addf %43, %46 : vector<64x128xf32>
    %c3_38 = arith.constant 3 : index
    %c0_39 = arith.constant 0 : index
    %c0_40 = arith.constant 0 : index
    %48 = vector.load %arg5[%c3_38, %c0_39, %c0_40] : memref<8x128x128xbf16, #tpu.memory_space<vmem>>, vector<1x128x128xbf16>
    %49 = vector.shape_cast %48 : vector<1x128x128xbf16> to vector<128x128xbf16>
    %cst_41 = arith.constant dense<0.000000e+00> : vector<64x128xf32>
    %50 = tpu.matmul %26, %49, %cst_41 {dimension_numbers = #tpu.dot_dimension_numbers<[1], [0], [0], [1], [0, 0, 1, 1], [], []>} : vector<64x128xbf16>, vector<128x128xbf16>, vector<64x128xf32> -> vector<64x128xf32>
    %51 = arith.addf %47, %50 : vector<64x128xf32>
    %c4 = arith.constant 4 : index
    %c0_42 = arith.constant 0 : index
    %c0_43 = arith.constant 0 : index
    %52 = vector.load %arg5[%c4, %c0_42, %c0_43] : memref<8x128x128xbf16, #tpu.memory_space<vmem>>, vector<1x128x128xbf16>
    %53 = vector.shape_cast %52 : vector<1x128x128xbf16> to vector<128x128xbf16>
    %cst_44 = arith.constant dense<0.000000e+00> : vector<64x128xf32>
    %54 = tpu.matmul %28, %53, %cst_44 {dimension_numbers = #tpu.dot_dimension_numbers<[1], [0], [0], [1], [0, 0, 1, 1], [], []>} : vector<64x128xbf16>, vector<128x128xbf16>, vector<64x128xf32> -> vector<64x128xf32>
    %55 = arith.addf %51, %54 : vector<64x128xf32>
    %c5 = arith.constant 5 : index
    %c0_45 = arith.constant 0 : index
    %c0_46 = arith.constant 0 : index
    %56 = vector.load %arg5[%c5, %c0_45, %c0_46] : memref<8x128x128xbf16, #tpu.memory_space<vmem>>, vector<1x128x128xbf16>
    %57 = vector.shape_cast %56 : vector<1x128x128xbf16> to vector<128x128xbf16>
    %cst_47 = arith.constant dense<0.000000e+00> : vector<64x128xf32>
    %58 = tpu.matmul %30, %57, %cst_47 {dimension_numbers = #tpu.dot_dimension_numbers<[1], [0], [0], [1], [0, 0, 1, 1], [], []>} : vector<64x128xbf16>, vector<128x128xbf16>, vector<64x128xf32> -> vector<64x128xf32>
    %59 = arith.addf %55, %58 : vector<64x128xf32>
    %c6 = arith.constant 6 : index
    %c0_48 = arith.constant 0 : index
    %c0_49 = arith.constant 0 : index
    %60 = vector.load %arg5[%c6, %c0_48, %c0_49] : memref<8x128x128xbf16, #tpu.memory_space<vmem>>, vector<1x128x128xbf16>
    %61 = vector.shape_cast %60 : vector<1x128x128xbf16> to vector<128x128xbf16>
    %cst_50 = arith.constant dense<0.000000e+00> : vector<64x128xf32>
    %62 = tpu.matmul %32, %61, %cst_50 {dimension_numbers = #tpu.dot_dimension_numbers<[1], [0], [0], [1], [0, 0, 1, 1], [], []>} : vector<64x128xbf16>, vector<128x128xbf16>, vector<64x128xf32> -> vector<64x128xf32>
    %63 = arith.addf %59, %62 : vector<64x128xf32>
    %c7 = arith.constant 7 : index
    %c0_51 = arith.constant 0 : index
    %c0_52 = arith.constant 0 : index
    %64 = vector.load %arg5[%c7, %c0_51, %c0_52] : memref<8x128x128xbf16, #tpu.memory_space<vmem>>, vector<1x128x128xbf16>
    %65 = vector.shape_cast %64 : vector<1x128x128xbf16> to vector<128x128xbf16>
    %cst_53 = arith.constant dense<0.000000e+00> : vector<64x128xf32>
    %66 = tpu.matmul %34, %65, %cst_53 {dimension_numbers = #tpu.dot_dimension_numbers<[1], [0], [0], [1], [0, 0, 1, 1], [], []>} : vector<64x128xbf16>, vector<128x128xbf16>, vector<64x128xf32> -> vector<64x128xf32>
    %67 = arith.addf %63, %66 : vector<64x128xf32>
    %68 = vector.broadcast %0 : vector<1x128xf32> to vector<64x128xf32>
    %69 = arith.mulf %67, %68 : vector<64x128xf32>
    %70 = vector.broadcast %1 : vector<1x128xf32> to vector<64x128xf32>
    %71 = arith.addf %69, %70 : vector<64x128xf32>
    %cst_54 = arith.constant 5.000000e-01 : f32
    %72 = vector.broadcast %cst_54 : f32 to vector<64x128xf32>
    %73 = arith.mulf %72, %71 : vector<64x128xf32>
    %cst_55 = arith.constant 0.707106769 : f32
    %74 = vector.broadcast %cst_55 : f32 to vector<64x128xf32>
    %75 = arith.mulf %71, %74 : vector<64x128xf32>
    %76 = math.erf %75 : vector<64x128xf32>
    %cst_56 = arith.constant 1.000000e+00 : f32
    %77 = vector.broadcast %cst_56 : f32 to vector<64x128xf32>
    %78 = arith.addf %77, %76 : vector<64x128xf32>
    %79 = arith.mulf %73, %78 : vector<64x128xf32>
    %80 = vector.extract_strided_slice %18 {offsets = [0, 128], sizes = [64, 128], strides = [1, 1]} : vector<64x256xf32> to vector<64x128xf32>
    %81 = vector.broadcast %2 : vector<1x128xf32> to vector<64x128xf32>
    %82 = arith.mulf %80, %81 : vector<64x128xf32>
    %83 = vector.broadcast %3 : vector<1x128xf32> to vector<64x128xf32>
    %84 = arith.addf %82, %83 : vector<64x128xf32>
    %85 = vector.shape_cast %84 : vector<64x128xf32> to vector<8x8x128xf32>
    %cst_57 = arith.constant 0.000000e+00 : bf16
    %86 = vector.broadcast %cst_57 : bf16 to vector<1x10x128xbf16>
    %cst_58 = arith.constant 0.000000e+00 : bf16
    %87 = vector.broadcast %cst_58 : bf16 to vector<10x1x128xbf16>
    %c0_59 = arith.constant 0 : index
    %c0_60 = arith.constant 0 : index
    %c0_61 = arith.constant 0 : index
    %88 = vector.load %arg11[%c0_59, %c0_60, %c0_61] : memref<10x10x128xbf16, #tpu.memory_space<vmem>>, vector<1x10x128xbf16>
    tpu.vector_store %arg11[%c0_59, %c0_60, %c0_61], %86 {strides = array<i32>} : memref<10x10x128xbf16, #tpu.memory_space<vmem>>, vector<1x10x128xbf16>,
    %c9 = arith.constant 9 : index
    %c0_62 = arith.constant 0 : index
    %c0_63 = arith.constant 0 : index
    %89 = vector.load %arg11[%c9, %c0_62, %c0_63] : memref<10x10x128xbf16, #tpu.memory_space<vmem>>, vector<1x10x128xbf16>
    tpu.vector_store %arg11[%c9, %c0_62, %c0_63], %86 {strides = array<i32>} : memref<10x10x128xbf16, #tpu.memory_space<vmem>>, vector<1x10x128xbf16>,
    %c0_64 = arith.constant 0 : index
    %c0_65 = arith.constant 0 : index
    %c0_66 = arith.constant 0 : index
    %90 = vector.load %arg11[%c0_64, %c0_65, %c0_66] : memref<10x10x128xbf16, #tpu.memory_space<vmem>>, vector<10x1x128xbf16>
    tpu.vector_store %arg11[%c0_64, %c0_65, %c0_66], %87 {strides = array<i32>} : memref<10x10x128xbf16, #tpu.memory_space<vmem>>, vector<10x1x128xbf16>,
    %c0_67 = arith.constant 0 : index
    %c9_68 = arith.constant 9 : index
    %c0_69 = arith.constant 0 : index
    %91 = vector.load %arg11[%c0_67, %c9_68, %c0_69] : memref<10x10x128xbf16, #tpu.memory_space<vmem>>, vector<10x1x128xbf16>
    tpu.vector_store %arg11[%c0_67, %c9_68, %c0_69], %87 {strides = array<i32>} : memref<10x10x128xbf16, #tpu.memory_space<vmem>>, vector<10x1x128xbf16>,
    %92 = vector.shape_cast %79 : vector<64x128xf32> to vector<8x8x128xf32>
    %93 = arith.truncf %92 : vector<8x8x128xf32> to vector<8x8x128xbf16>
    %c1_70 = arith.constant 1 : index
    %c1_71 = arith.constant 1 : index
    %c0_72 = arith.constant 0 : index
    %94 = vector.load %arg11[%c1_70, %c1_71, %c0_72] : memref<10x10x128xbf16, #tpu.memory_space<vmem>>, vector<8x8x128xbf16>
    tpu.vector_store %arg11[%c1_70, %c1_71, %c0_72], %93 {strides = array<i32>} : memref<10x10x128xbf16, #tpu.memory_space<vmem>>, vector<8x8x128xbf16>,
    %95 = vector.extract_strided_slice %13 {offsets = [0, 1, 0], sizes = [8, 8, 128], strides = [1, 1, 1]} : vector<8x9x128xbf16> to vector<8x8x128xbf16>
    %96 = arith.maximumf %15, %95 : vector<8x8x128xbf16>
    %97 = vector.extract_strided_slice %11 {offsets = [1, 0, 0], sizes = [8, 8, 128], strides = [1, 1, 1]} : vector<9x8x128xbf16> to vector<8x8x128xbf16>
    %98 = vector.extract_strided_slice %9 {offsets = [1, 1, 0], sizes = [8, 8, 128], strides = [1, 1, 1]} : vector<9x9x128xbf16> to vector<8x8x128xbf16>
    %99 = arith.maximumf %97, %98 : vector<8x8x128xbf16>
    %100 = arith.maximumf %96, %99 : vector<8x8x128xbf16>
    %cst_73 = arith.constant 0.000000e+00 : f32
    %101 = vector.broadcast %cst_73 : f32 to vector<8x8x128xf32>
    %c0_74 = arith.constant 0 : index
    %c0_75 = arith.constant 0 : index
    %c0_76 = arith.constant 0 : index
    %102 = vector.load %arg11[%c0_74, %c0_75, %c0_76] : memref<10x10x128xbf16, #tpu.memory_space<vmem>>, vector<8x10x128xbf16>
    %103 = vector.shape_cast %102 : vector<8x10x128xbf16> to vector<80x128xbf16>
    %c0_77 = arith.constant 0 : index
    %c0_78 = arith.constant 0 : index
    %c0_79 = arith.constant 0 : index
    %104 = vector.load %arg7[%c0_77, %c0_78, %c0_79] : memref<3x128x384xbf16, #tpu.memory_space<vmem>>, vector<1x128x384xbf16>
    %105 = vector.shape_cast %104 : vector<1x128x384xbf16> to vector<128x384xbf16>
    %cst_80 = arith.constant dense<0.000000e+00> : vector<80x384xf32>
    %106 = tpu.matmul %103, %105, %cst_80 {dimension_numbers = #tpu.dot_dimension_numbers<[1], [0], [0], [1], [0, 0, 1, 1], [], []>} : vector<80x128xbf16>, vector<128x384xbf16>, vector<80x384xf32> -> vector<80x384xf32>
    %107 = vector.shape_cast %106 : vector<80x384xf32> to vector<8x10x384xf32>
    %108 = vector.extract_strided_slice %107 {offsets = [0, 0, 0], sizes = [8, 8, 128], strides = [1, 1, 1]} : vector<8x10x384xf32> to vector<8x8x128xf32>
    %109 = arith.addf %101, %108 : vector<8x8x128xf32>
    %110 = vector.extract_strided_slice %107 {offsets = [0, 1, 128], sizes = [8, 8, 128], strides = [1, 1, 1]} : vector<8x10x384xf32> to vector<8x8x128xf32>
    %111 = arith.addf %109, %110 : vector<8x8x128xf32>
    %112 = vector.extract_strided_slice %107 {offsets = [0, 2, 256], sizes = [8, 8, 128], strides = [1, 1, 1]} : vector<8x10x384xf32> to vector<8x8x128xf32>
    %113 = arith.addf %111, %112 : vector<8x8x128xf32>
    %c1_81 = arith.constant 1 : index
    %c0_82 = arith.constant 0 : index
    %c0_83 = arith.constant 0 : index
    %114 = vector.load %arg11[%c1_81, %c0_82, %c0_83] : memref<10x10x128xbf16, #tpu.memory_space<vmem>>, vector<8x10x128xbf16>
    %115 = vector.shape_cast %114 : vector<8x10x128xbf16> to vector<80x128xbf16>
    %c1_84 = arith.constant 1 : index
    %c0_85 = arith.constant 0 : index
    %c0_86 = arith.constant 0 : index
    %116 = vector.load %arg7[%c1_84, %c0_85, %c0_86] : memref<3x128x384xbf16, #tpu.memory_space<vmem>>, vector<1x128x384xbf16>
    %117 = vector.shape_cast %116 : vector<1x128x384xbf16> to vector<128x384xbf16>
    %cst_87 = arith.constant dense<0.000000e+00> : vector<80x384xf32>
    %118 = tpu.matmul %115, %117, %cst_87 {dimension_numbers = #tpu.dot_dimension_numbers<[1], [0], [0], [1], [0, 0, 1, 1], [], []>} : vector<80x128xbf16>, vector<128x384xbf16>, vector<80x384xf32> -> vector<80x384xf32>
    %119 = vector.shape_cast %118 : vector<80x384xf32> to vector<8x10x384xf32>
    %120 = vector.extract_strided_slice %119 {offsets = [0, 0, 0], sizes = [8, 8, 128], strides = [1, 1, 1]} : vector<8x10x384xf32> to vector<8x8x128xf32>
    %121 = arith.addf %113, %120 : vector<8x8x128xf32>
    %122 = vector.extract_strided_slice %119 {offsets = [0, 1, 128], sizes = [8, 8, 128], strides = [1, 1, 1]} : vector<8x10x384xf32> to vector<8x8x128xf32>
    %123 = arith.addf %121, %122 : vector<8x8x128xf32>
    %124 = vector.extract_strided_slice %119 {offsets = [0, 2, 256], sizes = [8, 8, 128], strides = [1, 1, 1]} : vector<8x10x384xf32> to vector<8x8x128xf32>
    %125 = arith.addf %123, %124 : vector<8x8x128xf32>
    %c2_88 = arith.constant 2 : index
    %c0_89 = arith.constant 0 : index
    %c0_90 = arith.constant 0 : index
    %126 = vector.load %arg11[%c2_88, %c0_89, %c0_90] : memref<10x10x128xbf16, #tpu.memory_space<vmem>>, vector<8x10x128xbf16>
    %127 = vector.shape_cast %126 : vector<8x10x128xbf16> to vector<80x128xbf16>
    %c2_91 = arith.constant 2 : index
    %c0_92 = arith.constant 0 : index
    %c0_93 = arith.constant 0 : index
    %128 = vector.load %arg7[%c2_91, %c0_92, %c0_93] : memref<3x128x384xbf16, #tpu.memory_space<vmem>>, vector<1x128x384xbf16>
    %129 = vector.shape_cast %128 : vector<1x128x384xbf16> to vector<128x384xbf16>
    %cst_94 = arith.constant dense<0.000000e+00> : vector<80x384xf32>
    %130 = tpu.matmul %127, %129, %cst_94 {dimension_numbers = #tpu.dot_dimension_numbers<[1], [0], [0], [1], [0, 0, 1, 1], [], []>} : vector<80x128xbf16>, vector<128x384xbf16>, vector<80x384xf32> -> vector<80x384xf32>
    %131 = vector.shape_cast %130 : vector<80x384xf32> to vector<8x10x384xf32>
    %132 = vector.extract_strided_slice %131 {offsets = [0, 0, 0], sizes = [8, 8, 128], strides = [1, 1, 1]} : vector<8x10x384xf32> to vector<8x8x128xf32>
    %133 = arith.addf %125, %132 : vector<8x8x128xf32>
    %134 = vector.extract_strided_slice %131 {offsets = [0, 1, 128], sizes = [8, 8, 128], strides = [1, 1, 1]} : vector<8x10x384xf32> to vector<8x8x128xf32>
    %135 = arith.addf %133, %134 : vector<8x8x128xf32>
    %136 = vector.extract_strided_slice %131 {offsets = [0, 2, 256], sizes = [8, 8, 128], strides = [1, 1, 1]} : vector<8x10x384xf32> to vector<8x8x128xf32>
    %137 = arith.addf %135, %136 : vector<8x8x128xf32>
    %138 = vector.broadcast %5 : vector<1x1x128xf32> to vector<8x8x128xf32>
    %139 = arith.mulf %137, %138 : vector<8x8x128xf32>
    %140 = vector.broadcast %7 : vector<1x1x128xf32> to vector<8x8x128xf32>
    %141 = arith.addf %139, %140 : vector<8x8x128xf32>
    %142 = arith.addf %141, %85 : vector<8x8x128xf32>
    %cst_95 = arith.constant 5.000000e-01 : f32
    %143 = vector.broadcast %cst_95 : f32 to vector<8x8x128xf32>
    %144 = arith.mulf %143, %142 : vector<8x8x128xf32>
    %cst_96 = arith.constant 0.707106769 : f32
    %145 = vector.broadcast %cst_96 : f32 to vector<8x8x128xf32>
    %146 = arith.mulf %142, %145 : vector<8x8x128xf32>
    %147 = math.erf %146 : vector<8x8x128xf32>
    %cst_97 = arith.constant 1.000000e+00 : f32
    %148 = vector.broadcast %cst_97 : f32 to vector<8x8x128xf32>
    %149 = arith.addf %148, %147 : vector<8x8x128xf32>
    %150 = arith.mulf %144, %149 : vector<8x8x128xf32>
    %151 = arith.extf %100 : vector<8x8x128xbf16> to vector<8x8x128xf32>
    %152 = arith.addf %150, %151 : vector<8x8x128xf32>
    %c0_98 = arith.constant 0 : index
    %c0_99 = arith.constant 0 : index
    %c0_100 = arith.constant 0 : index
    %c0_101 = arith.constant 0 : index
    %153 = vector.load %arg10[%c0_98, %c0_99, %c0_100, %c0_101] : memref<1x8x8x128xf32, #tpu.memory_space<vmem>>, vector<1x8x8x128xf32>
    %154 = vector.shape_cast %153 : vector<1x8x8x128xf32> to vector<8x8x128xf32>
    %155 = vector.shape_cast %152 : vector<8x8x128xf32> to vector<1x8x8x128xf32>
    tpu.vector_store %arg10[%c0_98, %c0_99, %c0_100, %c0_101], %155 {strides = array<i32>} : memref<1x8x8x128xf32, #tpu.memory_space<vmem>>, vector<1x8x8x128xf32>,
    return
  }
  func.func @transform_0(%arg0: i32) -> (i32, i32, i32, i32) {
    %c0_i32 = arith.constant 0 : i32
    %c0_i32_0 = arith.constant 0 : i32
    %c0_i32_1 = arith.constant 0 : i32
    %c0_i32_2 = arith.constant 0 : i32
    return %arg0, %c0_i32, %c0_i32_0, %c0_i32_1 : i32, i32, i32, i32
  }
  func.func @transform_1(%arg0: i32) -> (i32, i32, i32, i32) {
    %c0_i32 = arith.constant 0 : i32
    %c0_i32_0 = arith.constant 0 : i32
    %c0_i32_1 = arith.constant 0 : i32
    %c0_i32_2 = arith.constant 0 : i32
    return %arg0, %c0_i32, %c0_i32_0, %c0_i32_1 : i32, i32, i32, i32
  }
  func.func @transform_2(%arg0: i32) -> (i32, i32, i32, i32) {
    %c0_i32 = arith.constant 0 : i32
    %c0_i32_0 = arith.constant 0 : i32
    %c0_i32_1 = arith.constant 0 : i32
    %c0_i32_2 = arith.constant 0 : i32
    return %arg0, %c0_i32, %c0_i32_0, %c0_i32_1 : i32, i32, i32, i32
  }
  func.func @transform_3(%arg0: i32) -> (i32, i32, i32, i32) {
    %c0_i32 = arith.constant 0 : i32
    %c0_i32_0 = arith.constant 0 : i32
    %c0_i32_1 = arith.constant 0 : i32
    %c0_i32_2 = arith.constant 0 : i32
    return %arg0, %c0_i32, %c0_i32_0, %c0_i32_1 : i32, i32, i32, i32
  }
  func.func @transform_4(%arg0: i32) -> (i32, i32, i32) {
    %c0_i32 = arith.constant 0 : i32
    %c0_i32_0 = arith.constant 0 : i32
    %c0_i32_1 = arith.constant 0 : i32
    %c0_i32_2 = arith.constant 0 : i32
    return %c0_i32, %c0_i32_0, %c0_i32_1 : i32, i32, i32
  }
  func.func @transform_5(%arg0: i32) -> (i32, i32) {
    %c0_i32 = arith.constant 0 : i32
    %c0_i32_0 = arith.constant 0 : i32
    %c0_i32_1 = arith.constant 0 : i32
    return %c0_i32, %c0_i32_0 : i32, i32
  }
  func.func @transform_6(%arg0: i32) -> (i32, i32, i32) {
    %c0_i32 = arith.constant 0 : i32
    %c0_i32_0 = arith.constant 0 : i32
    %c0_i32_1 = arith.constant 0 : i32
    %c0_i32_2 = arith.constant 0 : i32
    return %c0_i32, %c0_i32_0, %c0_i32_1 : i32, i32, i32
  }
  func.func @transform_7(%arg0: i32) -> (i32, i32) {
    %c0_i32 = arith.constant 0 : i32
    %c0_i32_0 = arith.constant 0 : i32
    %c0_i32_1 = arith.constant 0 : i32
    return %c0_i32, %c0_i32_0 : i32, i32
  }
  func.func @transform_8(%arg0: i32) -> (i32, i32) {
    %c0_i32 = arith.constant 0 : i32
    %c0_i32_0 = arith.constant 0 : i32
    %c0_i32_1 = arith.constant 0 : i32
    return %c0_i32, %c0_i32_0 : i32, i32
  }
  func.func @transform_9(%arg0: i32) -> (i32, i32, i32, i32) {
    %c0_i32 = arith.constant 0 : i32
    %c0_i32_0 = arith.constant 0 : i32
    %c0_i32_1 = arith.constant 0 : i32
    %c0_i32_2 = arith.constant 0 : i32
    return %arg0, %c0_i32, %c0_i32_0, %c0_i32_1 : i32, i32, i32, i32
  }
}

</mosaic_0001>

<llo_original>
// kernel: downsample_forward.1
$region0: #{downsample_forward.1}
  #allocation0 [shape = 'u32[]', space=smem, size = 0x4, offset = 0x4, fixed_abs, tag = 'smem constant byte address 0x4 - core index']
  #allocation1 [shape = 'u32[144,128]{1,0:T(1,128)}', space=vmem, size = 0x12000, scoped, tag = 'internal scratch']
  #allocation2 [shape = 'bf16[10,10,128]{2,1,0:T(8,128)(2,1)}', space=vmem, size = 0xa000, scoped, tag = 'scratch operand']
  %s0 = inlined_call_operand.vmem [shape: bf16[2,9,9,128], index: 0, kind: input, shape index: {}]
  %s1 = inlined_call_operand.vmem [shape: bf16[2,9,8,128], index: 1, kind: input, shape index: {}]
  %s2 = inlined_call_operand.vmem [shape: bf16[2,8,9,128], index: 2, kind: input, shape index: {}]
  %s3 = inlined_call_operand.vmem [shape: bf16[2,8,8,128], index: 3, kind: input, shape index: {}]
  %s4 = inlined_call_operand.vmem [shape: bf16[8,128,128], index: 4, kind: input, shape index: {}]
  %s5 = inlined_call_operand.vmem [shape: bf16[128,256], index: 5, kind: input, shape index: {}]
  %s6 = inlined_call_operand.vmem [shape: bf16[3,128,384], index: 6, kind: input, shape index: {}]
  %s7 = inlined_call_operand.vmem [shape: f32[4,128], index: 7, kind: input, shape index: {}]
  %s8 = inlined_call_operand.vmem [shape: f32[2,128], index: 8, kind: input, shape index: {}]
  %s9 = inlined_call_operand.hbm [shape: f32[2,8,8,128], index: 9, kind: output, shape index: {}]
  %s10 = sld [smem:[#allocation0]]
  $region69: #{downsample_forward.1} parent=0
    _
  %s12 = ssub.s32 1, %s10
  %s13 = scalar_select 0, %s12, %s10
  $region1: #{downsample_forward.1} parent=0
    #allocation3 [shape = 'u8[65536]{0}', space=vmem, size = 0x10000, scoped, tag = 'output window, operand 0']
    #allocation4 [shape = 's32[2]{0}', space=sflag, size = 0x8, scoped, tag = 'scoped memory for downsample_forward.1']
    %14 = vsyncpa [#allocation4], 0
    %s15 = scalar_lea.sflag [#allocation4], 1
    %16 = vsyncpa %s15, 0
    loop: start=0, step=1, limit=4
    $region2: #{downsample_forward.1} parent=1 // loop_pre_header
      _
    $region3: #{downsample_forward.1} parent=1 // loop_header
      %s18 = sphi 0, %s22
      %p19 = scmp.ge.s32.totalorder %s18, 4
      %s28 = sphi 0, %s30
      %s31 = sphi 0, %s28
      %s32 = sphi 0, %s31
      %s48 = sphi 0, %s32
      %s54 = sphi 0, %s56
      %s57 = sphi 0, %s54
      %s58 = sphi 0, %s57
      %s74 = sphi 0, %s58
      %s80 = sphi 0, %s82
      %s83 = sphi 0, %s80
      %s84 = sphi 0, %s83
      %s100 = sphi 0, %s84
      %s106 = sphi 0, %s108
      %s109 = sphi 0, %s106
      %s110 = sphi 0, %s109
      %s126 = sphi 0, %s110
      %s130 = sphi 0, %s130
      %s132 = sphi 0, %s130
      %s133 = sphi 0, %s132
      %s147 = sphi 0, %s133
      %s151 = sphi 0, %s151
      %s153 = sphi 0, %s151
      %s154 = sphi 0, %s153
      %s168 = sphi 0, %s154
      %s172 = sphi 0, %s172
      %s174 = sphi 0, %s172
      %s175 = sphi 0, %s174
      %s189 = sphi 0, %s175
      %s193 = sphi 0, %s193
      %s195 = sphi 0, %s193
      %s196 = sphi 0, %s195
      %s210 = sphi 0, %s196
      %s214 = sphi 0, %s214
      %s216 = sphi 0, %s214
      %s217 = sphi 0, %s216
      %s231 = sphi 0, %s217
      %s237 = sphi 0, %s239
      %s240 = sphi 0, %s237
      %s241 = sphi 0, %s240
      %s257 = sphi 0, %s241
    $region4: #{downsample_forward.1} parent=1 // loop_header_branch
      %21 = sbr.rel (%p19) target = $region8
    $region5: #{downsample_forward.1} parent=1 // loop_body
      %s23 = ssub.s32 %s18, 1
      %s24 = ssub.s32 %s18, 2
      %s25 = sadd.s32 %s18, 1
      %s26 = ssub.s32 %s18, %s25
      %p27 = scmp.eq.s32.totalorder %s26, 0
      %s29 = sadd.s32 %s28, 1
      %s30 = scalar_select %p27, %s28, %s29
      %p33 = pneg %p27
      %p34 = scmp.eq.s32.totalorder %s18, 1
      %p35 = por %p33, %p34
      %p36 = scmp.ne.s32.totalorder %s28, %s31
      %p37 = scmp.eq.s32.totalorder %s18, 0
      %p38 = por %p36, %p37
      %p39 = scmp.ne.s32.totalorder %s28, %s31
      %p40 = scmp.eq.s32.totalorder %s23, 1
      %p41 = por %p39, %p40
      %p42 = scmp.ne.s32.totalorder %s31, %s32
      %p43 = scmp.eq.s32.totalorder %s23, 0
      %p44 = por %p42, %p43
      %p45 = scmp.ne.s32.totalorder %s31, %s32
      %p46 = scmp.eq.s32.totalorder %s24, 1
      %p47 = por %p45, %p46
      %p49 = scmp.ne.s32.totalorder %s32, %s48
      %p50 = scmp.eq.s32.totalorder %s24, 0
      %p51 = por %p49, %p50
      %s52 = ssub.s32 %s18, %s25
      %p53 = scmp.eq.s32.totalorder %s52, 0
      %s55 = sadd.s32 %s54, 1
      %s56 = scalar_select %p53, %s54, %s55
      %p59 = pneg %p53
      %p60 = scmp.eq.s32.totalorder %s18, 1
      %p61 = por %p59, %p60
      %p62 = scmp.ne.s32.totalorder %s54, %s57
      %p63 = scmp.eq.s32.totalorder %s18, 0
      %p64 = por %p62, %p63
      %p65 = scmp.ne.s32.totalorder %s54, %s57
      %p66 = scmp.eq.s32.totalorder %s23, 1
      %p67 = por %p65, %p66
      %p68 = scmp.ne.s32.totalorder %s57, %s58
      %p69 = scmp.eq.s32.totalorder %s23, 0
      %p70 = por %p68, %p69
      %p71 = scmp.ne.s32.totalorder %s57, %s58
      %p72 = scmp.eq.s32.totalorder %s24, 1
      %p73 = por %p71, %p72
      %p75 = scmp.ne.s32.totalorder %s58, %s74
      %p76 = scmp.eq.s32.totalorder %s24, 0
      %p77 = por %p75, %p76
      %s78 = ssub.s32 %s18, %s25
      %p79 = scmp.eq.s32.totalorder %s78, 0
      %s81 = sadd.s32 %s80, 1
      %s82 = scalar_select %p79, %s80, %s81
      %p85 = pneg %p79
      %p86 = scmp.eq.s32.totalorder %s18, 1
      %p87 = por %p85, %p86
      %p88 = scmp.ne.s32.totalorder %s80, %s83
      %p89 = scmp.eq.s32.totalorder %s18, 0
      %p90 = por %p88, %p89
      %p91 = scmp.ne.s32.totalorder %s80, %s83
      %p92 = scmp.eq.s32.totalorder %s23, 1
      %p93 = por %p91, %p92
      %p94 = scmp.ne.s32.totalorder %s83, %s84
      %p95 = scmp.eq.s32.totalorder %s23, 0
      %p96 = por %p94, %p95
      %p97 = scmp.ne.s32.totalorder %s83, %s84
      %p98 = scmp.eq.s32.totalorder %s24, 1
      %p99 = por %p97, %p98
      %p101 = scmp.ne.s32.totalorder %s84, %s100
      %p102 = scmp.eq.s32.totalorder %s24, 0
      %p103 = por %p101, %p102
      %s104 = ssub.s32 %s18, %s25
      %p105 = scmp.eq.s32.totalorder %s104, 0
      %s107 = sadd.s32 %s106, 1
      %s108 = scalar_select %p105, %s106, %s107
      %p111 = pneg %p105
      %p112 = scmp.eq.s32.totalorder %s18, 1
      %p113 = por %p111, %p112
      %p114 = scmp.ne.s32.totalorder %s106, %s109
      %p115 = scmp.eq.s32.totalorder %s18, 0
      %p116 = por %p114, %p115
      %p117 = scmp.ne.s32.totalorder %s106, %s109
      %p118 = scmp.eq.s32.totalorder %s23, 1
      %p119 = por %p117, %p118
      %p120 = scmp.ne.s32.totalorder %s109, %s110
      %p121 = scmp.eq.s32.totalorder %s23, 0
      %p122 = por %p120, %p121
      %p123 = scmp.ne.s32.totalorder %s109, %s110
      %p124 = scmp.eq.s32.totalorder %s24, 1
      %p125 = por %p123, %p124
      %p127 = scmp.ne.s32.totalorder %s110, %s126
      %p128 = scmp.eq.s32.totalorder %s24, 0
      %p129 = por %p127, %p128
      %s131 = sadd.s32 %s130, 1
      %p134 = scmp.eq.s32.totalorder %s18, 1
      %p135 = scmp.ne.s32.totalorder %s130, %s132
      %p136 = scmp.eq.s32.totalorder %s18, 0
      %p137 = por %p135, %p136
      %p138 = scmp.ne.s32.totalorder %s130, %s132
      %p139 = scmp.eq.s32.totalorder %s23, 1
      %p140 = por %p138, %p139
      %p141 = scmp.ne.s32.totalorder %s132, %s133
      %p142 = scmp.eq.s32.totalorder %s23, 0
      %p143 = por %p141, %p142
      %p144 = scmp.ne.s32.totalorder %s132, %s133
      %p145 = scmp.eq.s32.totalorder %s24, 1
      %p146 = por %p144, %p145
      %p148 = scmp.ne.s32.totalorder %s133, %s147
      %p149 = scmp.eq.s32.totalorder %s24, 0
      %p150 = por %p148, %p149
      %s152 = sadd.s32 %s151, 1
      %p155 = scmp.eq.s32.totalorder %s18, 1
      %p156 = scmp.ne.s32.totalorder %s151, %s153
      %p157 = scmp.eq.s32.totalorder %s18, 0
      %p158 = por %p156, %p157
      %p159 = scmp.ne.s32.totalorder %s151, %s153
      %p160 = scmp.eq.s32.totalorder %s23, 1
      %p161 = por %p159, %p160
      %p162 = scmp.ne.s32.totalorder %s153, %s154
      %p163 = scmp.eq.s32.totalorder %s23, 0
      %p164 = por %p162, %p163
      %p165 = scmp.ne.s32.totalorder %s153, %s154
      %p166 = scmp.eq.s32.totalorder %s24, 1
      %p167 = por %p165, %p166
      %p169 = scmp.ne.s32.totalorder %s154, %s168
      %p170 = scmp.eq.s32.totalorder %s24, 0
      %p171 = por %p169, %p170
      %s173 = sadd.s32 %s172, 1
      %p176 = scmp.eq.s32.totalorder %s18, 1
      %p177 = scmp.ne.s32.totalorder %s172, %s174
      %p178 = scmp.eq.s32.totalorder %s18, 0
      %p179 = por %p177, %p178
      %p180 = scmp.ne.s32.totalorder %s172, %s174
      %p181 = scmp.eq.s32.totalorder %s23, 1
      %p182 = por %p180, %p181
      %p183 = scmp.ne.s32.totalorder %s174, %s175
      %p184 = scmp.eq.s32.totalorder %s23, 0
      %p185 = por %p183, %p184
      %p186 = scmp.ne.s32.totalorder %s174, %s175
      %p187 = scmp.eq.s32.totalorder %s24, 1
      %p188 = por %p186, %p187
      %p190 = scmp.ne.s32.totalorder %s175, %s189
      %p191 = scmp.eq.s32.totalorder %s24, 0
      %p192 = por %p190, %p191
      %s194 = sadd.s32 %s193, 1
      %p197 = scmp.eq.s32.totalorder %s18, 1
      %p198 = scmp.ne.s32.totalorder %s193, %s195
      %p199 = scmp.eq.s32.totalorder %s18, 0
      %p200 = por %p198, %p199
      %p201 = scmp.ne.s32.totalorder %s193, %s195
      %p202 = scmp.eq.s32.totalorder %s23, 1
      %p203 = por %p201, %p202
      %p204 = scmp.ne.s32.totalorder %s195, %s196
      %p205 = scmp.eq.s32.totalorder %s23, 0
      %p206 = por %p204, %p205
      %p207 = scmp.ne.s32.totalorder %s195, %s196
      %p208 = scmp.eq.s32.totalorder %s24, 1
      %p209 = por %p207, %p208
      %p211 = scmp.ne.s32.totalorder %s196, %s210
      %p212 = scmp.eq.s32.totalorder %s24, 0
      %p213 = por %p211, %p212
      %s215 = sadd.s32 %s214, 1
      %p218 = scmp.eq.s32.totalorder %s18, 1
      %p219 = scmp.ne.s32.totalorder %s214, %s216
      %p220 = scmp.eq.s32.totalorder %s18, 0
      %p221 = por %p219, %p220
      %p222 = scmp.ne.s32.totalorder %s214, %s216
      %p223 = scmp.eq.s32.totalorder %s23, 1
      %p224 = por %p222, %p223
      %p225 = scmp.ne.s32.totalorder %s216, %s217
      %p226 = scmp.eq.s32.totalorder %s23, 0
      %p227 = por %p225, %p226
      %p228 = scmp.ne.s32.totalorder %s216, %s217
      %p229 = scmp.eq.s32.totalorder %s24, 1
      %p230 = por %p228, %p229
      %p232 = scmp.ne.s32.totalorder %s217, %s231
      %p233 = scmp.eq.s32.totalorder %s24, 0
      %p234 = por %p232, %p233
      %s235 = ssub.s32 %s18, %s25
      %p236 = scmp.eq.s32.totalorder %s235, 0
      %s238 = sadd.s32 %s237, 1
      %s239 = scalar_select %p236, %s237, %s238
      %p242 = pneg %p236
      %p243 = scmp.eq.s32.totalorder %s18, 1
      %p244 = por %p242, %p243
      %p245 = scmp.ne.s32.totalorder %s237, %s240
      %p246 = scmp.eq.s32.totalorder %s18, 0
      %p247 = por %p245, %p246
      %p248 = scmp.ne.s32.totalorder %s237, %s240
      %p249 = scmp.eq.s32.totalorder %s23, 1
      %p250 = por %p248, %p249
      %p251 = scmp.ne.s32.totalorder %s240, %s241
      %p252 = scmp.eq.s32.totalorder %s23, 0
      %p253 = por %p251, %p252
      %p254 = scmp.ne.s32.totalorder %s240, %s241
      %p255 = scmp.eq.s32.totalorder %s24, 1
      %p256 = por %p254, %p255
      %p258 = scmp.ne.s32.totalorder %s241, %s257
      %p259 = scmp.eq.s32.totalorder %s24, 0
      %p260 = por %p258, %p259
      %p261 = scmp.le.s32.totalorder 1, %s18
      %p262 = scmp.lt.s32.totalorder %s18, 3
      %p263 = pnand %p261, %p262
      %p264 = pneg %p263
      // Predicated region
      $region9: #{downsample_forward.1} parent=5 // pred_check
        _
      $region10: #{downsample_forward.1} parent=5 // pred_check_branch
        %266 = sbr.rel (%p263) target = $region12
      $region11: #{downsample_forward.1} parent=5 // pred_region
        %s267 = ssub.s32 %s18, 1
        // Predicated region
        $region13: #{downsample_forward.1} parent=11 // pred_check
          %p268 = pneg %p143
        $region14: #{downsample_forward.1} parent=11 // pred_check_branch
          %270 = sbr.rel (%p268) target = $region16
        $region15: #{downsample_forward.1} parent=11 // pred_region
          _
        $region16: #{downsample_forward.1} parent=11 // pred_fallthru
          _
        // Predicated region
        $region17: #{downsample_forward.1} parent=11 // pred_check
          %p271 = pneg %p164
        $region18: #{downsample_forward.1} parent=11 // pred_check_branch
          %273 = sbr.rel (%p271) target = $region20
        $region19: #{downsample_forward.1} parent=11 // pred_region
          _
        $region20: #{downsample_forward.1} parent=11 // pred_fallthru
          _
        // Predicated region
        $region21: #{downsample_forward.1} parent=11 // pred_check
          %p274 = pneg %p185
        $region22: #{downsample_forward.1} parent=11 // pred_check_branch
          %276 = sbr.rel (%p274) target = $region24
        $region23: #{downsample_forward.1} parent=11 // pred_region
          _
        $region24: #{downsample_forward.1} parent=11 // pred_fallthru
          _
        // Predicated region
        $region25: #{downsample_forward.1} parent=11 // pred_check
          %p277 = pneg %p206
        $region26: #{downsample_forward.1} parent=11 // pred_check_branch
          %279 = sbr.rel (%p277) target = $region28
        $region27: #{downsample_forward.1} parent=11 // pred_region
          _
        $region28: #{downsample_forward.1} parent=11 // pred_fallthru
          _
        // Predicated region
        $region29: #{downsample_forward.1} parent=11 // pred_check
          %p280 = pneg %p227
        $region30: #{downsample_forward.1} parent=11 // pred_check_branch
          %282 = sbr.rel (%p280) target = $region32
        $region31: #{downsample_forward.1} parent=11 // pred_region
          _
        $region32: #{downsample_forward.1} parent=11 // pred_fallthru
          _
      $region12: #{downsample_forward.1} parent=5 // pred_fallthru
        _
      %p283 = scmp.lt.s32.totalorder %s18, 2
      // Predicated region
      $region33: #{downsample_forward.1} parent=5 // pred_check
        %p284 = pneg %p283
      $region34: #{downsample_forward.1} parent=5 // pred_check_branch
        %286 = sbr.rel (%p284) target = $region36
      $region35: #{downsample_forward.1} parent=5 // pred_region
        // Predicated region
        $region37: #{downsample_forward.1} parent=35 // pred_check
          %p287 = pneg %p38
        $region38: #{downsample_forward.1} parent=35 // pred_check_branch
          %289 = sbr.rel (%p287) target = $region40
        $region39: #{downsample_forward.1} parent=35 // pred_region
          %p290 = scmp.lt.s32.totalorder %s18, 1
          %s291 = scalar_select %p290, %s18, 1
          %s292 = smul.addr %s291, 18
          %s293 = smul.addr %s292, 4
          %s294 = scalar_lea.vmem %s0, %s293
        $region40: #{downsample_forward.1} parent=35 // pred_fallthru
          _
        // Predicated region
        $region41: #{downsample_forward.1} parent=35 // pred_check
          %p295 = pneg %p64
        $region42: #{downsample_forward.1} parent=35 // pred_check_branch
          %297 = sbr.rel (%p295) target = $region44
        $region43: #{downsample_forward.1} parent=35 // pred_region
          %p298 = scmp.lt.s32.totalorder %s18, 1
          %s299 = scalar_select %p298, %s18, 1
          %s300 = smul.addr %s299, 9
          %s301 = smul.addr %s300, 4
          %s302 = scalar_lea.vmem %s1, %s301
        $region44: #{downsample_forward.1} parent=35 // pred_fallthru
          _
        // Predicated region
        $region45: #{downsample_forward.1} parent=35 // pred_check
          %p303 = pneg %p90
        $region46: #{downsample_forward.1} parent=35 // pred_check_branch
          %305 = sbr.rel (%p303) target = $region48
        $region47: #{downsample_forward.1} parent=35 // pred_region
          %p306 = scmp.lt.s32.totalorder %s18, 1
          %s307 = scalar_select %p306, %s18, 1
          %s308 = smul.addr %s307, 16
          %s309 = smul.addr %s308, 4
          %s310 = scalar_lea.vmem %s2, %s309
        $region48: #{downsample_forward.1} parent=35 // pred_fallthru
          _
        // Predicated region
        $region49: #{downsample_forward.1} parent=35 // pred_check
          %p311 = pneg %p116
        $region50: #{downsample_forward.1} parent=35 // pred_check_branch
          %313 = sbr.rel (%p311) target = $region52
        $region51: #{downsample_forward.1} parent=35 // pred_region
          %p314 = scmp.lt.s32.totalorder %s18, 1
          %s315 = scalar_select %p314, %s18, 1
          %s316 = smul.addr %s315, 8
          %s317 = smul.addr %s316, 4
          %s318 = scalar_lea.vmem %s3, %s317
        $region52: #{downsample_forward.1} parent=35 // pred_fallthru
          _
      $region36: #{downsample_forward.1} parent=5 // pred_fallthru
        _
      %p319 = scmp.le.s32.totalorder 1, %s18
      %p320 = scmp.lt.s32.totalorder %s18, 3
      %p321 = pnand %p319, %p320
      %p322 = pneg %p321
      // Predicated region
      $region53: #{downsample_forward.1} parent=5 // pred_check
        _
      $region54: #{downsample_forward.1} parent=5 // pred_check_branch
        %324 = sbr.rel (%p321) target = $region56
      $region55: #{downsample_forward.1} parent=5 // pred_region
        %s325 = ssub.s32 %s18, 1
        %p326 = scmp.lt.s32.totalorder %s23, 1
        %s327 = scalar_select %p326, %s23, 1
        %s328 = smul.addr %s327, 18
        %s329 = smul.addr %s328, 4
        %s330 = scalar_lea.vmem %s0, %s329
        %p331 = pneg %p44
        %p332 = pneg %p41
        %p333 = scmp.lt.s32.totalorder %s23, 1
        %s334 = scalar_select %p333, %s23, 1
        %s335 = smul.addr %s334, 9
        %s336 = smul.addr %s335, 4
        %s337 = scalar_lea.vmem %s1, %s336
        %p338 = pneg %p70
        %p339 = pneg %p67
        %p340 = scmp.lt.s32.totalorder %s23, 1
        %s341 = scalar_select %p340, %s23, 1
        %s342 = smul.addr %s341, 16
        %s343 = smul.addr %s342, 4
        %s344 = scalar_lea.vmem %s2, %s343
        %p345 = pneg %p96
        %p346 = pneg %p93
        %p347 = scmp.lt.s32.totalorder %s23, 1
        %s348 = scalar_select %p347, %s23, 1
        %s349 = smul.addr %s348, 8
        %s350 = smul.addr %s349, 4
        %s351 = scalar_lea.vmem %s3, %s350
        %p352 = pneg %p122
        %p353 = pneg %p119
        %p354 = pneg %p143
        %p355 = pneg %p140
        %p356 = pneg %p164
        %p357 = pneg %p161
        %p358 = pneg %p185
        %p359 = pneg %p182
        %p360 = pneg %p206
        %p361 = pneg %p203
        %p362 = pneg %p227
        %p363 = pneg %p224
        %p364 = pneg %p253
        %p365 = pneg %p250
        %s366 = sand.u32 %s240, 1
        %s367 = scalar_lea.sflag [#allocation4], %s366
        %s368 = sand.u32 %s240, 1
        %s369 = smul.addr %s368, 64
        %s370 = scalar_lea.vmem [#allocation3], %s369
        %p371 = scmp.lt.s32.totalorder %s23, 1
        %s372 = scalar_select %p371, %s23, 1
        %s373 = smul.addr %s372, 18
        %s374 = smul.addr %s373, 4
        %s375 = scalar_lea.vmem %s0, %s374
        %p376 = scmp.lt.s32.totalorder %s23, 1
        %s377 = scalar_select %p376, %s23, 1
        %s378 = smul.addr %s377, 9
        %s379 = smul.addr %s378, 4
        %s380 = scalar_lea.vmem %s1, %s379
        %p381 = scmp.lt.s32.totalorder %s23, 1
        %s382 = scalar_select %p381, %s23, 1
        %s383 = smul.addr %s382, 16
        %s384 = smul.addr %s383, 4
        %s385 = scalar_lea.vmem %s2, %s384
        %p386 = scmp.lt.s32.totalorder %s23, 1
        %s387 = scalar_select %p386, %s23, 1
        %s388 = smul.addr %s387, 8
        %s389 = smul.addr %s388, 4
        %s390 = scalar_lea.vmem %s3, %s389
        %v392 = vld [vmem:[%s7] sm:$0x1]
        %v393 = vld [vmem:[%s7 + $0x1] sm:$0x1]
        %v394 = vld [vmem:[%s7 + $0x2] sm:$0x1]
        %v395 = vld [vmem:[%s7 + $0x3] sm:$0x1]
        %v396 = vld [vmem:[%s8] sm:$0x1]
        %v397 = vld [vmem:[%s8 + $0x1] sm:$0x1]
        %v398 = vld [vmem:[%s375] sm:$0xf]
        %v399 = vld [vmem:[%s375 + $0x4] sm:$0x1]
        %v400 = vld [vmem:[%s375 + $0x8] sm:$0xf]
        %v401 = vld [vmem:[%s375 + $0xc] sm:$0x1]
        %v402 = vld [vmem:[%s375 + $0x10] sm:$0xf]
        %v403 = vld [vmem:[%s375 + $0x14] sm:$0x1]
        %v404 = vld [vmem:[%s375 + $0x18] sm:$0xf]
        %v405 = vld [vmem:[%s375 + $0x1c] sm:$0x1]
        %v406 = vld [vmem:[%s375 + $0x20] sm:$0xf]
        %v407 = vld [vmem:[%s375 + $0x24] sm:$0x1]
        %v408 = vld [vmem:[%s375 + $0x28] sm:$0xf]
        %v409 = vld [vmem:[%s375 + $0x2c] sm:$0x1]
        %v410 = vld [vmem:[%s375 + $0x30] sm:$0xf]
        %v411 = vld [vmem:[%s375 + $0x34] sm:$0x1]
        %v412 = vld [vmem:[%s375 + $0x38] sm:$0xf]
        %v413 = vld [vmem:[%s375 + $0x3c] sm:$0x1]
        %v414 = vld [vmem:[%s375 + $0x40] sm:$0xf]
        %v415 = vld [vmem:[%s375 + $0x44] sm:$0x1]
        %v416 = vld [vmem:[%s380] sm:$0xf]
        %v417 = vld [vmem:[%s380 + $0x4] sm:$0xf]
        %v418 = vld [vmem:[%s380 + $0x8] sm:$0xf]
        %v419 = vld [vmem:[%s380 + $0xc] sm:$0xf]
        %v420 = vld [vmem:[%s380 + $0x10] sm:$0xf]
        %v421 = vld [vmem:[%s380 + $0x14] sm:$0xf]
        %v422 = vld [vmem:[%s380 + $0x18] sm:$0xf]
        %v423 = vld [vmem:[%s380 + $0x1c] sm:$0xf]
        %v424 = vld [vmem:[%s380 + $0x20] sm:$0xf]
        %v425 = vld [vmem:[%s385] sm:$0xf]
        %v426 = vld [vmem:[%s385 + $0x4] sm:$0x1]
        %v427 = vld [vmem:[%s385 + $0x8] sm:$0xf]
        %v428 = vld [vmem:[%s385 + $0xc] sm:$0x1]
        %v429 = vld [vmem:[%s385 + $0x10] sm:$0xf]
        %v430 = vld [vmem:[%s385 + $0x14] sm:$0x1]
        %v431 = vld [vmem:[%s385 + $0x18] sm:$0xf]
        %v432 = vld [vmem:[%s385 + $0x1c] sm:$0x1]
        %v433 = vld [vmem:[%s385 + $0x20] sm:$0xf]
        %v434 = vld [vmem:[%s385 + $0x24] sm:$0x1]
        %v435 = vld [vmem:[%s385 + $0x28] sm:$0xf]
        %v436 = vld [vmem:[%s385 + $0x2c] sm:$0x1]
        %v437 = vld [vmem:[%s385 + $0x30] sm:$0xf]
        %v438 = vld [vmem:[%s385 + $0x34] sm:$0x1]
        %v439 = vld [vmem:[%s385 + $0x38] sm:$0xf]
        %v440 = vld [vmem:[%s385 + $0x3c] sm:$0x1]
        %v441 = vld [vmem:[%s390] sm:$0xf]
        %v442 = vld [vmem:[%s390 + $0x4] sm:$0xf]
        %v443 = vld [vmem:[%s390 + $0x8] sm:$0xf]
        %v444 = vld [vmem:[%s390 + $0xc] sm:$0xf]
        %v445 = vld [vmem:[%s390 + $0x10] sm:$0xf]
        %v446 = vld [vmem:[%s390 + $0x14] sm:$0xf]
        %v447 = vld [vmem:[%s390 + $0x18] sm:$0xf]
        %v448 = vld [vmem:[%s390 + $0x1c] sm:$0xf]
        %v449 = vld [vmem:[%s5] sm:$0xff]
        %v450 = vld [vmem:[%s5 + $0x8] sm:$0xff]
        %v451 = vld [vmem:[%s5 + $0x10] sm:$0xff]
        %v452 = vld [vmem:[%s5 + $0x18] sm:$0xff]
        %v453 = vld [vmem:[%s5 + $0x20] sm:$0xff]
        %v454 = vld [vmem:[%s5 + $0x28] sm:$0xff]
        %v455 = vld [vmem:[%s5 + $0x30] sm:$0xff]
        %v456 = vld [vmem:[%s5 + $0x38] sm:$0xff]
        %v457 = vld [vmem:[%s5 + $0x40] sm:$0xff]
        %v458 = vld [vmem:[%s5 + $0x48] sm:$0xff]
        %v459 = vld [vmem:[%s5 + $0x50] sm:$0xff]
        %v460 = vld [vmem:[%s5 + $0x58] sm:$0xff]
        %v461 = vld [vmem:[%s5 + $0x60] sm:$0xff]
        %v462 = vld [vmem:[%s5 + $0x68] sm:$0xff]
        %v463 = vld [vmem:[%s5 + $0x70] sm:$0xff]
        %v464 = vld [vmem:[%s5 + $0x78] sm:$0xff]
        %v473 = vunpack.c.l.b16 %v441
        %v474 = vunpack.c.l.b16 %v442
        %v475 = vunpack.c.l.b16 %v443
        %v476 = vunpack.c.l.b16 %v444
        %v477 = vunpack.c.l.b16 %v445
        %v478 = vunpack.c.l.b16 %v446
        %v479 = vunpack.c.l.b16 %v447
        %v480 = vunpack.c.l.b16 %v448
        %v481 = vpack.c.b16 %v474, %v473
        %v482 = vpack.c.b16 %v476, %v475
        %v483 = vpack.c.b16 %v478, %v477
        %v484 = vpack.c.b16 %v480, %v479
        %v505 = vunpack.c.l.b16 %v449
        %v506 = vunpack.c.h.b16 %v449
        %v507 = vunpack.c.l.b16 %v450
        %v508 = vunpack.c.h.b16 %v450
        %v509 = vunpack.c.l.b16 %v451
        %v510 = vunpack.c.h.b16 %v451
        %v511 = vunpack.c.l.b16 %v452
        %v512 = vunpack.c.h.b16 %v452
        %v513 = vunpack.c.l.b16 %v453
        %v514 = vunpack.c.h.b16 %v453
        %v515 = vunpack.c.l.b16 %v454
        %v516 = vunpack.c.h.b16 %v454
        %v517 = vunpack.c.l.b16 %v455
        %v518 = vunpack.c.h.b16 %v455
        %v519 = vunpack.c.l.b16 %v456
        %v520 = vunpack.c.h.b16 %v456
        %v521 = vunpack.c.l.b16 %v457
        %v522 = vunpack.c.h.b16 %v457
        %v523 = vunpack.c.l.b16 %v458
        %v524 = vunpack.c.h.b16 %v458
        %v525 = vunpack.c.l.b16 %v459
        %v526 = vunpack.c.h.b16 %v459
        %v527 = vunpack.c.l.b16 %v460
        %v528 = vunpack.c.h.b16 %v460
        %v529 = vunpack.c.l.b16 %v461
        %v530 = vunpack.c.h.b16 %v461
        %v531 = vunpack.c.l.b16 %v462
        %v532 = vunpack.c.h.b16 %v462
        %v533 = vunpack.c.l.b16 %v463
        %v534 = vunpack.c.h.b16 %v463
        %v535 = vunpack.c.l.b16 %v464
        %v536 = vunpack.c.h.b16 %v464
        %v537 = vpack.c.b16 %v507, %v505
        %v538 = vpack.c.b16 %v508, %v506
        %v539 = vpack.c.b16 %v511, %v509
        %v540 = vpack.c.b16 %v512, %v510
        %v541 = vpack.c.b16 %v515, %v513
        %v542 = vpack.c.b16 %v516, %v514
        %v543 = vpack.c.b16 %v519, %v517
        %v544 = vpack.c.b16 %v520, %v518
        %v545 = vpack.c.b16 %v523, %v521
        %v546 = vpack.c.b16 %v524, %v522
        %v547 = vpack.c.b16 %v527, %v525
        %v548 = vpack.c.b16 %v528, %v526
        %v549 = vpack.c.b16 %v531, %v529
        %v550 = vpack.c.b16 %v532, %v530
        %v551 = vpack.c.b16 %v535, %v533
        %v552 = vpack.c.b16 %v536, %v534
        %569 = vmatprep.subr.bf16.mxu0 %v538
        %570 = vmatpush1.bf16.msra.mxu0 %v537
        %571 = vmatprep.subr.bf16.mxu0 %v540
        %572 = vmatpush1.bf16.msra.mxu0 %v539
        %573 = vmatprep.subr.bf16.mxu0 %v542
        %574 = vmatpush1.bf16.msra.mxu0 %v541
        %575 = vmatprep.subr.bf16.mxu0 %v544
        %576 = vmatpush1.bf16.msra.mxu0 %v543
        %577 = vmatprep.subr.bf16.mxu0 %v546
        %578 = vmatpush1.bf16.msra.mxu0 %v545
        %579 = vmatprep.subr.bf16.mxu0 %v548
        %580 = vmatpush1.bf16.msra.mxu0 %v547
        %581 = vmatprep.subr.bf16.mxu0 %v550
        %582 = vmatpush1.bf16.msra.mxu0 %v549
        %583 = vmatprep.subr.bf16.mxu0 %v552
        %584 = vmatpush1.bf16.msra.mxu0 %v551
        %585 = vmatprep.subr.bf16.mxu0 0
        %586 = vmatpush1.bf16.msra.mxu0 0
        %587 = vmatprep.subr.bf16.mxu0 0
        %588 = vmatpush1.bf16.msra.mxu0 0
        %589 = vmatprep.subr.bf16.mxu0 0
        %590 = vmatpush1.bf16.msra.mxu0 0
        %591 = vmatprep.subr.bf16.mxu0 0
        %592 = vmatpush1.bf16.msra.mxu0 0
        %593 = vmatprep.subr.bf16.mxu0 0
        %594 = vmatpush1.bf16.msra.mxu0 0
        %595 = vmatprep.subr.bf16.mxu0 0
        %596 = vmatpush1.bf16.msra.mxu0 0
        %597 = vmatprep.subr.bf16.mxu0 0
        %598 = vmatpush1.bf16.msra.mxu0 0
        %599 = vmatprep.subr.bf16.mxu0 0
        %600 = vmatpush1.bf16.msra.mxu0 0
        %601 = vmatprep.mubr.bf16.mxu0 0
        %602 = vmatmul.mubr.bf16.gmra.mrb[0].mxu0 %v481
        %v603 = vpop.f32.mrb[0].mxu0
        %v604 = vadd.f32 0.0, %v603
        %v605 = vpop.f32.mrb[0].mxu0
        %v606 = vadd.f32 0.0, %v605
        %v607 = vpop.f32.mrb[0].mxu0
        %v608 = vadd.f32 0.0, %v607
        %v609 = vpop.f32.mrb[0].mxu0
        %v610 = vadd.f32 0.0, %v609
        %611 = vmatprep.mubr.bf16.mxu0 0
        %612 = vmatmul.mubr.bf16.gmra.mrb[0].mxu0 %v482
        %v613 = vpop.f32.mrb[0].mxu0
        %v614 = vadd.f32 0.0, %v613
        %v615 = vpop.f32.mrb[0].mxu0
        %v616 = vadd.f32 0.0, %v615
        %v617 = vpop.f32.mrb[0].mxu0
        %v618 = vadd.f32 0.0, %v617
        %v619 = vpop.f32.mrb[0].mxu0
        %v620 = vadd.f32 0.0, %v619
        %621 = vmatprep.mubr.bf16.mxu0 0
        %622 = vmatmul.mubr.bf16.gmra.mrb[0].mxu0 %v483
        %v623 = vpop.f32.mrb[0].mxu0
        %v624 = vadd.f32 0.0, %v623
        %v625 = vpop.f32.mrb[0].mxu0
        %v626 = vadd.f32 0.0, %v625
        %v627 = vpop.f32.mrb[0].mxu0
        %v628 = vadd.f32 0.0, %v627
        %v629 = vpop.f32.mrb[0].mxu0
        %v630 = vadd.f32 0.0, %v629
        %631 = vmatprep.mubr.bf16.mxu0 0
        %632 = vmatmul.mubr.bf16.gmra.mrb[0].mxu0 %v484
        %v633 = vpop.f32.mrb[0].mxu0
        %v634 = vadd.f32 0.0, %v633
        %v635 = vpop.f32.mrb[0].mxu0
        %v636 = vadd.f32 0.0, %v635
        %v637 = vpop.f32.mrb[0].mxu0
        %v638 = vadd.f32 0.0, %v637
        %v639 = vpop.f32.mrb[0].mxu0
        %v640 = vadd.f32 0.0, %v639
        %641 = vdwg.mxu0
        %vm642 = vsmask.f32 3328
        %vm643 = vsmask.f32 7440
        %vm644 = vmor %vm642, %vm643
        %v646 = vshrl.u32 %v398, 16
        %v648 = vrot.slane %v646, 4
        %v649 = vshll.u32 %v398, 16
        %v651 = vrot.slane %v649, 5
        %v652 = vor.u32 %v648, %v651
        %v653 = vrot.slane %v652, 4
        %v655 = vshll.u32 %v399, 16
        %v657 = vrot.slane %v655, 5
        %v658 = vsel %vm644, %v653, %v657
        %v660 = vshrl.u32 %v400, 16
        %v662 = vrot.slane %v660, 4
        %v663 = vshll.u32 %v400, 16
        %v665 = vrot.slane %v663, 5
        %v666 = vor.u32 %v662, %v665
        %v667 = vrot.slane %v666, 4
        %v669 = vshll.u32 %v401, 16
        %v671 = vrot.slane %v669, 5
        %v672 = vsel %vm644, %v667, %v671
        %v674 = vshrl.u32 %v402, 16
        %v676 = vrot.slane %v674, 4
        %v677 = vshll.u32 %v402, 16
        %v679 = vrot.slane %v677, 5
        %v680 = vor.u32 %v676, %v679
        %v681 = vrot.slane %v680, 4
        %v683 = vshll.u32 %v403, 16
        %v685 = vrot.slane %v683, 5
        %v686 = vsel %vm644, %v681, %v685
        %v688 = vshrl.u32 %v404, 16
        %v690 = vrot.slane %v688, 4
        %v691 = vshll.u32 %v404, 16
        %v693 = vrot.slane %v691, 5
        %v694 = vor.u32 %v690, %v693
        %v695 = vrot.slane %v694, 4
        %v697 = vshll.u32 %v405, 16
        %v699 = vrot.slane %v697, 5
        %v700 = vsel %vm644, %v695, %v699
        %v702 = vshrl.u32 %v406, 16
        %v704 = vrot.slane %v702, 4
        %v705 = vshll.u32 %v406, 16
        %v707 = vrot.slane %v705, 5
        %v708 = vor.u32 %v704, %v707
        %v709 = vrot.slane %v708, 4
        %v711 = vshll.u32 %v407, 16
        %v713 = vrot.slane %v711, 5
        %v714 = vsel %vm644, %v709, %v713
        %v716 = vshrl.u32 %v408, 16
        %v718 = vrot.slane %v716, 4
        %v719 = vshll.u32 %v408, 16
        %v721 = vrot.slane %v719, 5
        %v722 = vor.u32 %v718, %v721
        %v723 = vrot.slane %v722, 4
        %v725 = vshll.u32 %v409, 16
        %v727 = vrot.slane %v725, 5
        %v728 = vsel %vm644, %v723, %v727
        %v730 = vshrl.u32 %v410, 16
        %v732 = vrot.slane %v730, 4
        %v733 = vshll.u32 %v410, 16
        %v735 = vrot.slane %v733, 5
        %v736 = vor.u32 %v732, %v735
        %v737 = vrot.slane %v736, 4
        %v739 = vshll.u32 %v411, 16
        %v741 = vrot.slane %v739, 5
        %v742 = vsel %vm644, %v737, %v741
        %v744 = vshrl.u32 %v412, 16
        %v746 = vrot.slane %v744, 4
        %v747 = vshll.u32 %v412, 16
        %v749 = vrot.slane %v747, 5
        %v750 = vor.u32 %v746, %v749
        %v751 = vrot.slane %v750, 4
        %v753 = vshll.u32 %v413, 16
        %v755 = vrot.slane %v753, 5
        %v756 = vsel %vm644, %v751, %v755
        %v758 = vshrl.u32 %v425, 16
        %v760 = vrot.slane %v758, 4
        %v761 = vshll.u32 %v425, 16
        %v763 = vrot.slane %v761, 5
        %v764 = vor.u32 %v760, %v763
        %v765 = vrot.slane %v764, 4
        %v767 = vshll.u32 %v426, 16
        %v769 = vrot.slane %v767, 5
        %v770 = vsel %vm644, %v765, %v769
        %v772 = vshrl.u32 %v427, 16
        %v774 = vrot.slane %v772, 4
        %v775 = vshll.u32 %v427, 16
        %v777 = vrot.slane %v775, 5
        %v778 = vor.u32 %v774, %v777
        %v779 = vrot.slane %v778, 4
        %v781 = vshll.u32 %v428, 16
        %v783 = vrot.slane %v781, 5
        %v784 = vsel %vm644, %v779, %v783
        %v786 = vshrl.u32 %v429, 16
        %v788 = vrot.slane %v786, 4
        %v789 = vshll.u32 %v429, 16
        %v791 = vrot.slane %v789, 5
        %v792 = vor.u32 %v788, %v791
        %v793 = vrot.slane %v792, 4
        %v795 = vshll.u32 %v430, 16
        %v797 = vrot.slane %v795, 5
        %v798 = vsel %vm644, %v793, %v797
        %v800 = vshrl.u32 %v431, 16
        %v802 = vrot.slane %v800, 4
        %v803 = vshll.u32 %v431, 16
        %v805 = vrot.slane %v803, 5
        %v806 = vor.u32 %v802, %v805
        %v807 = vrot.slane %v806, 4
        %v809 = vshll.u32 %v432, 16
        %v811 = vrot.slane %v809, 5
        %v812 = vsel %vm644, %v807, %v811
        %v814 = vshrl.u32 %v433, 16
        %v816 = vrot.slane %v814, 4
        %v817 = vshll.u32 %v433, 16
        %v819 = vrot.slane %v817, 5
        %v820 = vor.u32 %v816, %v819
        %v821 = vrot.slane %v820, 4
        %v823 = vshll.u32 %v434, 16
        %v825 = vrot.slane %v823, 5
        %v826 = vsel %vm644, %v821, %v825
        %v828 = vshrl.u32 %v435, 16
        %v830 = vrot.slane %v828, 4
        %v831 = vshll.u32 %v435, 16
        %v833 = vrot.slane %v831, 5
        %v834 = vor.u32 %v830, %v833
        %v835 = vrot.slane %v834, 4
        %v837 = vshll.u32 %v436, 16
        %v839 = vrot.slane %v837, 5
        %v840 = vsel %vm644, %v835, %v839
        %v842 = vshrl.u32 %v437, 16
        %v844 = vrot.slane %v842, 4
        %v845 = vshll.u32 %v437, 16
        %v847 = vrot.slane %v845, 5
        %v848 = vor.u32 %v844, %v847
        %v849 = vrot.slane %v848, 4
        %v851 = vshll.u32 %v438, 16
        %v853 = vrot.slane %v851, 5
        %v854 = vsel %vm644, %v849, %v853
        %v856 = vshrl.u32 %v439, 16
        %v858 = vrot.slane %v856, 4
        %v859 = vshll.u32 %v439, 16
        %v861 = vrot.slane %v859, 5
        %v862 = vor.u32 %v858, %v861
        %v863 = vrot.slane %v862, 4
        %v865 = vshll.u32 %v440, 16
        %v867 = vrot.slane %v865, 5
        %v868 = vsel %vm644, %v863, %v867
        %v870 = vshrl.u32 %v414, 16
        %v872 = vrot.slane %v870, 4
        %v873 = vshll.u32 %v414, 16
        %v875 = vrot.slane %v873, 5
        %v876 = vor.u32 %v872, %v875
        %v877 = vrot.slane %v876, 4
        %v879 = vshll.u32 %v415, 16
        %v881 = vrot.slane %v879, 5
        %v882 = vsel %vm644, %v877, %v881
        %v883 = vld [vmem:[%s4] sm:$0xf]
        %v884 = vld [vmem:[%s4 + $0x4] sm:$0xf]
        %v885 = vld [vmem:[%s4 + $0x8] sm:$0xf]
        %v886 = vld [vmem:[%s4 + $0xc] sm:$0xf]
        %v887 = vld [vmem:[%s4 + $0x10] sm:$0xf]
        %v888 = vld [vmem:[%s4 + $0x14] sm:$0xf]
        %v889 = vld [vmem:[%s4 + $0x18] sm:$0xf]
        %v890 = vld [vmem:[%s4 + $0x1c] sm:$0xf]
        %v891 = vld [vmem:[%s4 + $0x20] sm:$0xf]
        %v892 = vld [vmem:[%s4 + $0x24] sm:$0xf]
        %v893 = vld [vmem:[%s4 + $0x28] sm:$0xf]
        %v894 = vld [vmem:[%s4 + $0x2c] sm:$0xf]
        %v895 = vld [vmem:[%s4 + $0x30] sm:$0xf]
        %v896 = vld [vmem:[%s4 + $0x34] sm:$0xf]
        %v897 = vld [vmem:[%s4 + $0x38] sm:$0xf]
        %v898 = vld [vmem:[%s4 + $0x3c] sm:$0xf]
        %v907 = vunpack.c.l.b16 %v398
        %v908 = vunpack.c.l.b16 %v400
        %v909 = vunpack.c.l.b16 %v402
        %v910 = vunpack.c.l.b16 %v404
        %v911 = vunpack.c.l.b16 %v406
        %v912 = vunpack.c.l.b16 %v408
        %v913 = vunpack.c.l.b16 %v410
        %v914 = vunpack.c.l.b16 %v412
        %v915 = vpack.c.b16 %v908, %v907
        %v916 = vpack.c.b16 %v910, %v909
        %v917 = vpack.c.b16 %v912, %v911
        %v918 = vpack.c.b16 %v914, %v913
        %v939 = vunpack.c.l.b16 %v883
        %v940 = vunpack.c.l.b16 %v884
        %v941 = vunpack.c.l.b16 %v885
        %v942 = vunpack.c.l.b16 %v886
        %v943 = vunpack.c.l.b16 %v887
        %v944 = vunpack.c.l.b16 %v888
        %v945 = vunpack.c.l.b16 %v889
        %v946 = vunpack.c.l.b16 %v890
        %v947 = vunpack.c.l.b16 %v891
        %v948 = vunpack.c.l.b16 %v892
        %v949 = vunpack.c.l.b16 %v893
        %v950 = vunpack.c.l.b16 %v894
        %v951 = vunpack.c.l.b16 %v895
        %v952 = vunpack.c.l.b16 %v896
        %v953 = vunpack.c.l.b16 %v897
        %v954 = vunpack.c.l.b16 %v898
        %v955 = vpack.c.b16 %v940, %v939
        %v956 = vpack.c.b16 %v942, %v941
        %v957 = vpack.c.b16 %v944, %v943
        %v958 = vpack.c.b16 %v946, %v945
        %v959 = vpack.c.b16 %v948, %v947
        %v960 = vpack.c.b16 %v950, %v949
        %v961 = vpack.c.b16 %v952, %v951
        %v962 = vpack.c.b16 %v954, %v953
        %971 = vmatprep.subr.bf16.mxu0 0
        %972 = vmatpush1.bf16.msra.mxu0 %v955
        %973 = vmatprep.subr.bf16.mxu0 0
        %974 = vmatpush1.bf16.msra.mxu0 %v956
        %975 = vmatprep.subr.bf16.mxu0 0
        %976 = vmatpush1.bf16.msra.mxu0 %v957
        %977 = vmatprep.subr.bf16.mxu0 0
        %978 = vmatpush1.bf16.msra.mxu0 %v958
        %979 = vmatprep.subr.bf16.mxu0 0
        %980 = vmatpush1.bf16.msra.mxu0 %v959
        %981 = vmatprep.subr.bf16.mxu0 0
        %982 = vmatpush1.bf16.msra.mxu0 %v960
        %983 = vmatprep.subr.bf16.mxu0 0
        %984 = vmatpush1.bf16.msra.mxu0 %v961
        %985 = vmatprep.subr.bf16.mxu0 0
        %986 = vmatpush1.bf16.msra.mxu0 %v962
        %987 = vmatprep.subr.bf16.mxu0 0
        %988 = vmatpush1.bf16.msra.mxu0 0
        %989 = vmatprep.subr.bf16.mxu0 0
        %990 = vmatpush1.bf16.msra.mxu0 0
        %991 = vmatprep.subr.bf16.mxu0 0
        %992 = vmatpush1.bf16.msra.mxu0 0
        %993 = vmatprep.subr.bf16.mxu0 0
        %994 = vmatpush1.bf16.msra.mxu0 0
        %995 = vmatprep.subr.bf16.mxu0 0
        %996 = vmatpush1.bf16.msra.mxu0 0
        %997 = vmatprep.subr.bf16.mxu0 0
        %998 = vmatpush1.bf16.msra.mxu0 0
        %999 = vmatprep.subr.bf16.mxu0 0
        %1000 = vmatpush1.bf16.msra.mxu0 0
        %1001 = vmatprep.subr.bf16.mxu0 0
        %1002 = vmatpush1.bf16.msra.mxu0 0
        %1003 = vmatprep.mubr.bf16.mxu0 0
        %1004 = vmatmul.mubr.bf16.gmra.mrb[0].mxu0 %v915
        %v1005 = vpop.f32.mrb[0].mxu0
        %v1006 = vadd.f32 0.0, %v1005
        %v1007 = vpop.f32.mrb[0].mxu0
        %v1008 = vpop.f32.mrb[0].mxu0
        %v1009 = vadd.f32 0.0, %v1008
        %v1010 = vpop.f32.mrb[0].mxu0
        %1011 = vmatprep.mubr.bf16.mxu0 0
        %1012 = vmatmul.mubr.bf16.gmra.mrb[0].mxu0 %v916
        %v1013 = vpop.f32.mrb[0].mxu0
        %v1014 = vadd.f32 0.0, %v1013
        %v1015 = vpop.f32.mrb[0].mxu0
        %v1016 = vpop.f32.mrb[0].mxu0
        %v1017 = vadd.f32 0.0, %v1016
        %v1018 = vpop.f32.mrb[0].mxu0
        %1019 = vmatprep.mubr.bf16.mxu0 0
        %1020 = vmatmul.mubr.bf16.gmra.mrb[0].mxu0 %v917
        %v1021 = vpop.f32.mrb[0].mxu0
        %v1022 = vadd.f32 0.0, %v1021
        %v1023 = vpop.f32.mrb[0].mxu0
        %v1024 = vpop.f32.mrb[0].mxu0
        %v1025 = vadd.f32 0.0, %v1024
        %v1026 = vpop.f32.mrb[0].mxu0
        %1027 = vmatprep.mubr.bf16.mxu0 0
        %1028 = vmatmul.mubr.bf16.gmra.mrb[0].mxu0 %v918
        %v1029 = vpop.f32.mrb[0].mxu0
        %v1030 = vadd.f32 0.0, %v1029
        %v1031 = vpop.f32.mrb[0].mxu0
        %v1032 = vpop.f32.mrb[0].mxu0
        %v1033 = vadd.f32 0.0, %v1032
        %v1034 = vpop.f32.mrb[0].mxu0
        %1035 = vdwg.mxu0
        %v1036 = vadd.f32 %v604, %v1006
        %v1037 = vadd.f32 %v608, %v1009
        %v1038 = vadd.f32 %v614, %v1014
        %v1039 = vadd.f32 %v618, %v1017
        %v1040 = vadd.f32 %v624, %v1022
        %v1041 = vadd.f32 %v628, %v1025
        %v1042 = vadd.f32 %v634, %v1030
        %v1043 = vadd.f32 %v638, %v1033
        %s1044 = scalar_lea.vmem %s4, 64
        %v1045 = vld [vmem:[%s1044] sm:$0xf]
        %v1046 = vld [vmem:[%s1044 + $0x4] sm:$0xf]
        %v1047 = vld [vmem:[%s1044 + $0x8] sm:$0xf]
        %v1048 = vld [vmem:[%s1044 + $0xc] sm:$0xf]
        %v1049 = vld [vmem:[%s1044 + $0x10] sm:$0xf]
        %v1050 = vld [vmem:[%s1044 + $0x14] sm:$0xf]
        %v1051 = vld [vmem:[%s1044 + $0x18] sm:$0xf]
        %v1052 = vld [vmem:[%s1044 + $0x1c] sm:$0xf]
        %v1053 = vld [vmem:[%s1044 + $0x20] sm:$0xf]
        %v1054 = vld [vmem:[%s1044 + $0x24] sm:$0xf]
        %v1055 = vld [vmem:[%s1044 + $0x28] sm:$0xf]
        %v1056 = vld [vmem:[%s1044 + $0x2c] sm:$0xf]
        %v1057 = vld [vmem:[%s1044 + $0x30] sm:$0xf]
        %v1058 = vld [vmem:[%s1044 + $0x34] sm:$0xf]
        %v1059 = vld [vmem:[%s1044 + $0x38] sm:$0xf]
        %v1060 = vld [vmem:[%s1044 + $0x3c] sm:$0xf]
        %v1069 = vunpack.c.l.b16 %v416
        %v1070 = vunpack.c.l.b16 %v417
        %v1071 = vunpack.c.l.b16 %v418
        %v1072 = vunpack.c.l.b16 %v419
        %v1073 = vunpack.c.l.b16 %v420
        %v1074 = vunpack.c.l.b16 %v421
        %v1075 = vunpack.c.l.b16 %v422
        %v1076 = vunpack.c.l.b16 %v423
        %v1077 = vpack.c.b16 %v1070, %v1069
        %v1078 = vpack.c.b16 %v1072, %v1071
        %v1079 = vpack.c.b16 %v1074, %v1073
        %v1080 = vpack.c.b16 %v1076, %v1075
        %v1101 = vunpack.c.l.b16 %v1045
        %v1102 = vunpack.c.l.b16 %v1046
        %v1103 = vunpack.c.l.b16 %v1047
        %v1104 = vunpack.c.l.b16 %v1048
        %v1105 = vunpack.c.l.b16 %v1049
        %v1106 = vunpack.c.l.b16 %v1050
        %v1107 = vunpack.c.l.b16 %v1051
        %v1108 = vunpack.c.l.b16 %v1052
        %v1109 = vunpack.c.l.b16 %v1053
        %v1110 = vunpack.c.l.b16 %v1054
        %v1111 = vunpack.c.l.b16 %v1055
        %v1112 = vunpack.c.l.b16 %v1056
        %v1113 = vunpack.c.l.b16 %v1057
        %v1114 = vunpack.c.l.b16 %v1058
        %v1115 = vunpack.c.l.b16 %v1059
        %v1116 = vunpack.c.l.b16 %v1060
        %v1117 = vpack.c.b16 %v1102, %v1101
        %v1118 = vpack.c.b16 %v1104, %v1103
        %v1119 = vpack.c.b16 %v1106, %v1105
        %v1120 = vpack.c.b16 %v1108, %v1107
        %v1121 = vpack.c.b16 %v1110, %v1109
        %v1122 = vpack.c.b16 %v1112, %v1111
        %v1123 = vpack.c.b16 %v1114, %v1113
        %v1124 = vpack.c.b16 %v1116, %v1115
        %1133 = vmatprep.subr.bf16.mxu0 0
        %1134 = vmatpush1.bf16.msra.mxu0 %v1117
        %1135 = vmatprep.subr.bf16.mxu0 0
        %1136 = vmatpush1.bf16.msra.mxu0 %v1118
        %1137 = vmatprep.subr.bf16.mxu0 0
        %1138 = vmatpush1.bf16.msra.mxu0 %v1119
        %1139 = vmatprep.subr.bf16.mxu0 0
        %1140 = vmatpush1.bf16.msra.mxu0 %v1120
        %1141 = vmatprep.subr.bf16.mxu0 0
        %1142 = vmatpush1.bf16.msra.mxu0 %v1121
        %1143 = vmatprep.subr.bf16.mxu0 0
        %1144 = vmatpush1.bf16.msra.mxu0 %v1122
        %1145 = vmatprep.subr.bf16.mxu0 0
        %1146 = vmatpush1.bf16.msra.mxu0 %v1123
        %1147 = vmatprep.subr.bf16.mxu0 0
        %1148 = vmatpush1.bf16.msra.mxu0 %v1124
        %1149 = vmatprep.subr.bf16.mxu0 0
        %1150 = vmatpush1.bf16.msra.mxu0 0
        %1151 = vmatprep.subr.bf16.mxu0 0
        %1152 = vmatpush1.bf16.msra.mxu0 0
        %1153 = vmatprep.subr.bf16.mxu0 0
        %1154 = vmatpush1.bf16.msra.mxu0 0
        %1155 = vmatprep.subr.bf16.mxu0 0
        %1156 = vmatpush1.bf16.msra.mxu0 0
        %1157 = vmatprep.subr.bf16.mxu0 0
        %1158 = vmatpush1.bf16.msra.mxu0 0
        %1159 = vmatprep.subr.bf16.mxu0 0
        %1160 = vmatpush1.bf16.msra.mxu0 0
        %1161 = vmatprep.subr.bf16.mxu0 0
        %1162 = vmatpush1.bf16.msra.mxu0 0
        %1163 = vmatprep.subr.bf16.mxu0 0
        %1164 = vmatpush1.bf16.msra.mxu0 0
        %1165 = vmatprep.mubr.bf16.mxu0 0
        %1166 = vmatmul.mubr.bf16.gmra.mrb[0].mxu0 %v1077
        %v1167 = vpop.f32.mrb[0].mxu0
        %v1168 = vadd.f32 0.0, %v1167
        %v1169 = vpop.f32.mrb[0].mxu0
        %v1170 = vpop.f32.mrb[0].mxu0
        %v1171 = vadd.f32 0.0, %v1170
        %v1172 = vpop.f32.mrb[0].mxu0
        %1173 = vmatprep.mubr.bf16.mxu0 0
        %1174 = vmatmul.mubr.bf16.gmra.mrb[0].mxu0 %v1078
        %v1175 = vpop.f32.mrb[0].mxu0
        %v1176 = vadd.f32 0.0, %v1175
        %v1177 = vpop.f32.mrb[0].mxu0
        %v1178 = vpop.f32.mrb[0].mxu0
        %v1179 = vadd.f32 0.0, %v1178
        %v1180 = vpop.f32.mrb[0].mxu0
        %1181 = vmatprep.mubr.bf16.mxu0 0
        %1182 = vmatmul.mubr.bf16.gmra.mrb[0].mxu0 %v1079
        %v1183 = vpop.f32.mrb[0].mxu0
        %v1184 = vadd.f32 0.0, %v1183
        %v1185 = vpop.f32.mrb[0].mxu0
        %v1186 = vpop.f32.mrb[0].mxu0
        %v1187 = vadd.f32 0.0, %v1186
        %v1188 = vpop.f32.mrb[0].mxu0
        %1189 = vmatprep.mubr.bf16.mxu0 0
        %1190 = vmatmul.mubr.bf16.gmra.mrb[0].mxu0 %v1080
        %v1191 = vpop.f32.mrb[0].mxu0
        %v1192 = vadd.f32 0.0, %v1191
        %v1193 = vpop.f32.mrb[0].mxu0
        %v1194 = vpop.f32.mrb[0].mxu0
        %v1195 = vadd.f32 0.0, %v1194
        %v1196 = vpop.f32.mrb[0].mxu0
        %1197 = vdwg.mxu0
        %v1198 = vadd.f32 %v1036, %v1168
        %v1199 = vadd.f32 %v1037, %v1171
        %v1200 = vadd.f32 %v1038, %v1176
        %v1201 = vadd.f32 %v1039, %v1179
        %v1202 = vadd.f32 %v1040, %v1184
        %v1203 = vadd.f32 %v1041, %v1187
        %v1204 = vadd.f32 %v1042, %v1192
        %v1205 = vadd.f32 %v1043, %v1195
        %s1206 = scalar_lea.vmem %s4, 128
        %v1207 = vld [vmem:[%s1206] sm:$0xf]
        %v1208 = vld [vmem:[%s1206 + $0x4] sm:$0xf]
        %v1209 = vld [vmem:[%s1206 + $0x8] sm:$0xf]
        %v1210 = vld [vmem:[%s1206 + $0xc] sm:$0xf]
        %v1211 = vld [vmem:[%s1206 + $0x10] sm:$0xf]
        %v1212 = vld [vmem:[%s1206 + $0x14] sm:$0xf]
        %v1213 = vld [vmem:[%s1206 + $0x18] sm:$0xf]
        %v1214 = vld [vmem:[%s1206 + $0x1c] sm:$0xf]
        %v1215 = vld [vmem:[%s1206 + $0x20] sm:$0xf]
        %v1216 = vld [vmem:[%s1206 + $0x24] sm:$0xf]
        %v1217 = vld [vmem:[%s1206 + $0x28] sm:$0xf]
        %v1218 = vld [vmem:[%s1206 + $0x2c] sm:$0xf]
        %v1219 = vld [vmem:[%s1206 + $0x30] sm:$0xf]
        %v1220 = vld [vmem:[%s1206 + $0x34] sm:$0xf]
        %v1221 = vld [vmem:[%s1206 + $0x38] sm:$0xf]
        %v1222 = vld [vmem:[%s1206 + $0x3c] sm:$0xf]
        %v1223 = vunpack.c.l.b16 %v658
        %v1224 = vunpack.c.l.b16 %v672
        %v1225 = vunpack.c.l.b16 %v686
        %v1226 = vunpack.c.l.b16 %v700
        %v1227 = vunpack.c.l.b16 %v714
        %v1228 = vunpack.c.l.b16 %v728
        %v1229 = vunpack.c.l.b16 %v742
        %v1230 = vunpack.c.l.b16 %v756
        %v1231 = vpack.c.b16 %v1224, %v1223
        %v1232 = vpack.c.b16 %v1226, %v1225
        %v1233 = vpack.c.b16 %v1228, %v1227
        %v1234 = vpack.c.b16 %v1230, %v1229
        %v1255 = vunpack.c.l.b16 %v1207
        %v1256 = vunpack.c.l.b16 %v1208
        %v1257 = vunpack.c.l.b16 %v1209
        %v1258 = vunpack.c.l.b16 %v1210
        %v1259 = vunpack.c.l.b16 %v1211
        %v1260 = vunpack.c.l.b16 %v1212
        %v1261 = vunpack.c.l.b16 %v1213
        %v1262 = vunpack.c.l.b16 %v1214
        %v1263 = vunpack.c.l.b16 %v1215
        %v1264 = vunpack.c.l.b16 %v1216
        %v1265 = vunpack.c.l.b16 %v1217
        %v1266 = vunpack.c.l.b16 %v1218
        %v1267 = vunpack.c.l.b16 %v1219
        %v1268 = vunpack.c.l.b16 %v1220
        %v1269 = vunpack.c.l.b16 %v1221
        %v1270 = vunpack.c.l.b16 %v1222
        %v1271 = vpack.c.b16 %v1256, %v1255
        %v1272 = vpack.c.b16 %v1258, %v1257
        %v1273 = vpack.c.b16 %v1260, %v1259
        %v1274 = vpack.c.b16 %v1262, %v1261
        %v1275 = vpack.c.b16 %v1264, %v1263
        %v1276 = vpack.c.b16 %v1266, %v1265
        %v1277 = vpack.c.b16 %v1268, %v1267
        %v1278 = vpack.c.b16 %v1270, %v1269
        %1287 = vmatprep.subr.bf16.mxu0 0
        %1288 = vmatpush1.bf16.msra.mxu0 %v1271
        %1289 = vmatprep.subr.bf16.mxu0 0
        %1290 = vmatpush1.bf16.msra.mxu0 %v1272
        %1291 = vmatprep.subr.bf16.mxu0 0
        %1292 = vmatpush1.bf16.msra.mxu0 %v1273
        %1293 = vmatprep.subr.bf16.mxu0 0
        %1294 = vmatpush1.bf16.msra.mxu0 %v1274
        %1295 = vmatprep.subr.bf16.mxu0 0
        %1296 = vmatpush1.bf16.msra.mxu0 %v1275
        %1297 = vmatprep.subr.bf16.mxu0 0
        %1298 = vmatpush1.bf16.msra.mxu0 %v1276
        %1299 = vmatprep.subr.bf16.mxu0 0
        %1300 = vmatpush1.bf16.msra.mxu0 %v1277
        %1301 = vmatprep.subr.bf16.mxu0 0
        %1302 = vmatpush1.bf16.msra.mxu0 %v1278
        %1303 = vmatprep.subr.bf16.mxu0 0
        %1304 = vmatpush1.bf16.msra.mxu0 0
        %1305 = vmatprep.subr.bf16.mxu0 0
        %1306 = vmatpush1.bf16.msra.mxu0 0
        %1307 = vmatprep.subr.bf16.mxu0 0
        %1308 = vmatpush1.bf16.msra.mxu0 0
        %1309 = vmatprep.subr.bf16.mxu0 0
        %1310 = vmatpush1.bf16.msra.mxu0 0
        %1311 = vmatprep.subr.bf16.mxu0 0
        %1312 = vmatpush1.bf16.msra.mxu0 0
        %1313 = vmatprep.subr.bf16.mxu0 0
        %1314 = vmatpush1.bf16.msra.mxu0 0
        %1315 = vmatprep.subr.bf16.mxu0 0
        %1316 = vmatpush1.bf16.msra.mxu0 0
        %1317 = vmatprep.subr.bf16.mxu0 0
        %1318 = vmatpush1.bf16.msra.mxu0 0
        %1319 = vmatprep.mubr.bf16.mxu0 0
        %1320 = vmatmul.mubr.bf16.gmra.mrb[0].mxu0 %v1231
        %v1321 = vpop.f32.mrb[0].mxu0
        %v1322 = vadd.f32 0.0, %v1321
        %v1323 = vpop.f32.mrb[0].mxu0
        %v1324 = vpop.f32.mrb[0].mxu0
        %v1325 = vadd.f32 0.0, %v1324
        %v1326 = vpop.f32.mrb[0].mxu0
        %1327 = vmatprep.mubr.bf16.mxu0 0
        %1328 = vmatmul.mubr.bf16.gmra.mrb[0].mxu0 %v1232
        %v1329 = vpop.f32.mrb[0].mxu0
        %v1330 = vadd.f32 0.0, %v1329
        %v1331 = vpop.f32.mrb[0].mxu0
        %v1332 = vpop.f32.mrb[0].mxu0
        %v1333 = vadd.f32 0.0, %v1332
        %v1334 = vpop.f32.mrb[0].mxu0
        %1335 = vmatprep.mubr.bf16.mxu0 0
        %1336 = vmatmul.mubr.bf16.gmra.mrb[0].mxu0 %v1233
        %v1337 = vpop.f32.mrb[0].mxu0
        %v1338 = vadd.f32 0.0, %v1337
        %v1339 = vpop.f32.mrb[0].mxu0
        %v1340 = vpop.f32.mrb[0].mxu0
        %v1341 = vadd.f32 0.0, %v1340
        %v1342 = vpop.f32.mrb[0].mxu0
        %1343 = vmatprep.mubr.bf16.mxu0 0
        %1344 = vmatmul.mubr.bf16.gmra.mrb[0].mxu0 %v1234
        %v1345 = vpop.f32.mrb[0].mxu0
        %v1346 = vadd.f32 0.0, %v1345
        %v1347 = vpop.f32.mrb[0].mxu0
        %v1348 = vpop.f32.mrb[0].mxu0
        %v1349 = vadd.f32 0.0, %v1348
        %v1350 = vpop.f32.mrb[0].mxu0
        %1351 = vdwg.mxu0
        %v1352 = vadd.f32 %v1198, %v1322
        %v1353 = vadd.f32 %v1199, %v1325
        %v1354 = vadd.f32 %v1200, %v1330
        %v1355 = vadd.f32 %v1201, %v1333
        %v1356 = vadd.f32 %v1202, %v1338
        %v1357 = vadd.f32 %v1203, %v1341
        %v1358 = vadd.f32 %v1204, %v1346
        %v1359 = vadd.f32 %v1205, %v1349
        %s1360 = scalar_lea.vmem %s4, 192
        %v1361 = vld [vmem:[%s1360] sm:$0xf]
        %v1362 = vld [vmem:[%s1360 + $0x4] sm:$0xf]
        %v1363 = vld [vmem:[%s1360 + $0x8] sm:$0xf]
        %v1364 = vld [vmem:[%s1360 + $0xc] sm:$0xf]
        %v1365 = vld [vmem:[%s1360 + $0x10] sm:$0xf]
        %v1366 = vld [vmem:[%s1360 + $0x14] sm:$0xf]
        %v1367 = vld [vmem:[%s1360 + $0x18] sm:$0xf]
        %v1368 = vld [vmem:[%s1360 + $0x1c] sm:$0xf]
        %v1369 = vld [vmem:[%s1360 + $0x20] sm:$0xf]
        %v1370 = vld [vmem:[%s1360 + $0x24] sm:$0xf]
        %v1371 = vld [vmem:[%s1360 + $0x28] sm:$0xf]
        %v1372 = vld [vmem:[%s1360 + $0x2c] sm:$0xf]
        %v1373 = vld [vmem:[%s1360 + $0x30] sm:$0xf]
        %v1374 = vld [vmem:[%s1360 + $0x34] sm:$0xf]
        %v1375 = vld [vmem:[%s1360 + $0x38] sm:$0xf]
        %v1376 = vld [vmem:[%s1360 + $0x3c] sm:$0xf]
        %v1385 = vunpack.c.l.b16 %v425
        %v1386 = vunpack.c.l.b16 %v427
        %v1387 = vunpack.c.l.b16 %v429
        %v1388 = vunpack.c.l.b16 %v431
        %v1389 = vunpack.c.l.b16 %v433
        %v1390 = vunpack.c.l.b16 %v435
        %v1391 = vunpack.c.l.b16 %v437
        %v1392 = vunpack.c.l.b16 %v439
        %v1393 = vpack.c.b16 %v1386, %v1385
        %v1394 = vpack.c.b16 %v1388, %v1387
        %v1395 = vpack.c.b16 %v1390, %v1389
        %v1396 = vpack.c.b16 %v1392, %v1391
        %v1417 = vunpack.c.l.b16 %v1361
        %v1418 = vunpack.c.l.b16 %v1362
        %v1419 = vunpack.c.l.b16 %v1363
        %v1420 = vunpack.c.l.b16 %v1364
        %v1421 = vunpack.c.l.b16 %v1365
        %v1422 = vunpack.c.l.b16 %v1366
        %v1423 = vunpack.c.l.b16 %v1367
        %v1424 = vunpack.c.l.b16 %v1368
        %v1425 = vunpack.c.l.b16 %v1369
        %v1426 = vunpack.c.l.b16 %v1370
        %v1427 = vunpack.c.l.b16 %v1371
        %v1428 = vunpack.c.l.b16 %v1372
        %v1429 = vunpack.c.l.b16 %v1373
        %v1430 = vunpack.c.l.b16 %v1374
        %v1431 = vunpack.c.l.b16 %v1375
        %v1432 = vunpack.c.l.b16 %v1376
        %v1433 = vpack.c.b16 %v1418, %v1417
        %v1434 = vpack.c.b16 %v1420, %v1419
        %v1435 = vpack.c.b16 %v1422, %v1421
        %v1436 = vpack.c.b16 %v1424, %v1423
        %v1437 = vpack.c.b16 %v1426, %v1425
        %v1438 = vpack.c.b16 %v1428, %v1427
        %v1439 = vpack.c.b16 %v1430, %v1429
        %v1440 = vpack.c.b16 %v1432, %v1431
        %1449 = vmatprep.subr.bf16.mxu0 0
        %1450 = vmatpush1.bf16.msra.mxu0 %v1433
        %1451 = vmatprep.subr.bf16.mxu0 0
        %1452 = vmatpush1.bf16.msra.mxu0 %v1434
        %1453 = vmatprep.subr.bf16.mxu0 0
        %1454 = vmatpush1.bf16.msra.mxu0 %v1435
        %1455 = vmatprep.subr.bf16.mxu0 0
        %1456 = vmatpush1.bf16.msra.mxu0 %v1436
        %1457 = vmatprep.subr.bf16.mxu0 0
        %1458 = vmatpush1.bf16.msra.mxu0 %v1437
        %1459 = vmatprep.subr.bf16.mxu0 0
        %1460 = vmatpush1.bf16.msra.mxu0 %v1438
        %1461 = vmatprep.subr.bf16.mxu0 0
        %1462 = vmatpush1.bf16.msra.mxu0 %v1439
        %1463 = vmatprep.subr.bf16.mxu0 0
        %1464 = vmatpush1.bf16.msra.mxu0 %v1440
        %1465 = vmatprep.subr.bf16.mxu0 0
        %1466 = vmatpush1.bf16.msra.mxu0 0
        %1467 = vmatprep.subr.bf16.mxu0 0
        %1468 = vmatpush1.bf16.msra.mxu0 0
        %1469 = vmatprep.subr.bf16.mxu0 0
        %1470 = vmatpush1.bf16.msra.mxu0 0
        %1471 = vmatprep.subr.bf16.mxu0 0
        %1472 = vmatpush1.bf16.msra.mxu0 0
        %1473 = vmatprep.subr.bf16.mxu0 0
        %1474 = vmatpush1.bf16.msra.mxu0 0
        %1475 = vmatprep.subr.bf16.mxu0 0
        %1476 = vmatpush1.bf16.msra.mxu0 0
        %1477 = vmatprep.subr.bf16.mxu0 0
        %1478 = vmatpush1.bf16.msra.mxu0 0
        %1479 = vmatprep.subr.bf16.mxu0 0
        %1480 = vmatpush1.bf16.msra.mxu0 0
        %1481 = vmatprep.mubr.bf16.mxu0 0
        %1482 = vmatmul.mubr.bf16.gmra.mrb[0].mxu0 %v1393
        %v1483 = vpop.f32.mrb[0].mxu0
        %v1484 = vadd.f32 0.0, %v1483
        %v1485 = vpop.f32.mrb[0].mxu0
        %v1486 = vpop.f32.mrb[0].mxu0
        %v1487 = vadd.f32 0.0, %v1486
        %v1488 = vpop.f32.mrb[0].mxu0
        %1489 = vmatprep.mubr.bf16.mxu0 0
        %1490 = vmatmul.mubr.bf16.gmra.mrb[0].mxu0 %v1394
        %v1491 = vpop.f32.mrb[0].mxu0
        %v1492 = vadd.f32 0.0, %v1491
        %v1493 = vpop.f32.mrb[0].mxu0
        %v1494 = vpop.f32.mrb[0].mxu0
        %v1495 = vadd.f32 0.0, %v1494
        %v1496 = vpop.f32.mrb[0].mxu0
        %1497 = vmatprep.mubr.bf16.mxu0 0
        %1498 = vmatmul.mubr.bf16.gmra.mrb[0].mxu0 %v1395
        %v1499 = vpop.f32.mrb[0].mxu0
        %v1500 = vadd.f32 0.0, %v1499
        %v1501 = vpop.f32.mrb[0].mxu0
        %v1502 = vpop.f32.mrb[0].mxu0
        %v1503 = vadd.f32 0.0, %v1502
        %v1504 = vpop.f32.mrb[0].mxu0
        %1505 = vmatprep.mubr.bf16.mxu0 0
        %1506 = vmatmul.mubr.bf16.gmra.mrb[0].mxu0 %v1396
        %v1507 = vpop.f32.mrb[0].mxu0
        %v1508 = vadd.f32 0.0, %v1507
        %v1509 = vpop.f32.mrb[0].mxu0
        %v1510 = vpop.f32.mrb[0].mxu0
        %v1511 = vadd.f32 0.0, %v1510
        %v1512 = vpop.f32.mrb[0].mxu0
        %1513 = vdwg.mxu0
        %v1514 = vadd.f32 %v1352, %v1484
        %v1515 = vadd.f32 %v1353, %v1487
        %v1516 = vadd.f32 %v1354, %v1492
        %v1517 = vadd.f32 %v1355, %v1495
        %v1518 = vadd.f32 %v1356, %v1500
        %v1519 = vadd.f32 %v1357, %v1503
        %v1520 = vadd.f32 %v1358, %v1508
        %v1521 = vadd.f32 %v1359, %v1511
        %s1522 = scalar_lea.vmem %s4, 256
        %v1523 = vld [vmem:[%s1522] sm:$0xf]
        %v1524 = vld [vmem:[%s1522 + $0x4] sm:$0xf]
        %v1525 = vld [vmem:[%s1522 + $0x8] sm:$0xf]
        %v1526 = vld [vmem:[%s1522 + $0xc] sm:$0xf]
        %v1527 = vld [vmem:[%s1522 + $0x10] sm:$0xf]
        %v1528 = vld [vmem:[%s1522 + $0x14] sm:$0xf]
        %v1529 = vld [vmem:[%s1522 + $0x18] sm:$0xf]
        %v1530 = vld [vmem:[%s1522 + $0x1c] sm:$0xf]
        %v1531 = vld [vmem:[%s1522 + $0x20] sm:$0xf]
        %v1532 = vld [vmem:[%s1522 + $0x24] sm:$0xf]
        %v1533 = vld [vmem:[%s1522 + $0x28] sm:$0xf]
        %v1534 = vld [vmem:[%s1522 + $0x2c] sm:$0xf]
        %v1535 = vld [vmem:[%s1522 + $0x30] sm:$0xf]
        %v1536 = vld [vmem:[%s1522 + $0x34] sm:$0xf]
        %v1537 = vld [vmem:[%s1522 + $0x38] sm:$0xf]
        %v1538 = vld [vmem:[%s1522 + $0x3c] sm:$0xf]
        %v1539 = vunpack.c.l.b16 %v770
        %v1540 = vunpack.c.l.b16 %v784
        %v1541 = vunpack.c.l.b16 %v798
        %v1542 = vunpack.c.l.b16 %v812
        %v1543 = vunpack.c.l.b16 %v826
        %v1544 = vunpack.c.l.b16 %v840
        %v1545 = vunpack.c.l.b16 %v854
        %v1546 = vunpack.c.l.b16 %v868
        %v1547 = vpack.c.b16 %v1540, %v1539
        %v1548 = vpack.c.b16 %v1542, %v1541
        %v1549 = vpack.c.b16 %v1544, %v1543
        %v1550 = vpack.c.b16 %v1546, %v1545
        %v1571 = vunpack.c.l.b16 %v1523
        %v1572 = vunpack.c.l.b16 %v1524
        %v1573 = vunpack.c.l.b16 %v1525
        %v1574 = vunpack.c.l.b16 %v1526
        %v1575 = vunpack.c.l.b16 %v1527
        %v1576 = vunpack.c.l.b16 %v1528
        %v1577 = vunpack.c.l.b16 %v1529
        %v1578 = vunpack.c.l.b16 %v1530
        %v1579 = vunpack.c.l.b16 %v1531
        %v1580 = vunpack.c.l.b16 %v1532
        %v1581 = vunpack.c.l.b16 %v1533
        %v1582 = vunpack.c.l.b16 %v1534
        %v1583 = vunpack.c.l.b16 %v1535
        %v1584 = vunpack.c.l.b16 %v1536
        %v1585 = vunpack.c.l.b16 %v1537
        %v1586 = vunpack.c.l.b16 %v1538
        %v1587 = vpack.c.b16 %v1572, %v1571
        %v1588 = vpack.c.b16 %v1574, %v1573
        %v1589 = vpack.c.b16 %v1576, %v1575
        %v1590 = vpack.c.b16 %v1578, %v1577
        %v1591 = vpack.c.b16 %v1580, %v1579
        %v1592 = vpack.c.b16 %v1582, %v1581
        %v1593 = vpack.c.b16 %v1584, %v1583
        %v1594 = vpack.c.b16 %v1586, %v1585
        %1603 = vmatprep.subr.bf16.mxu0 0
        %1604 = vmatpush1.bf16.msra.mxu0 %v1587
        %1605 = vmatprep.subr.bf16.mxu0 0
        %1606 = vmatpush1.bf16.msra.mxu0 %v1588
        %1607 = vmatprep.subr.bf16.mxu0 0
        %1608 = vmatpush1.bf16.msra.mxu0 %v1589
        %1609 = vmatprep.subr.bf16.mxu0 0
        %1610 = vmatpush1.bf16.msra.mxu0 %v1590
        %1611 = vmatprep.subr.bf16.mxu0 0
        %1612 = vmatpush1.bf16.msra.mxu0 %v1591
        %1613 = vmatprep.subr.bf16.mxu0 0
        %1614 = vmatpush1.bf16.msra.mxu0 %v1592
        %1615 = vmatprep.subr.bf16.mxu0 0
        %1616 = vmatpush1.bf16.msra.mxu0 %v1593
        %1617 = vmatprep.subr.bf16.mxu0 0
        %1618 = vmatpush1.bf16.msra.mxu0 %v1594
        %1619 = vmatprep.subr.bf16.mxu0 0
        %1620 = vmatpush1.bf16.msra.mxu0 0
        %1621 = vmatprep.subr.bf16.mxu0 0
        %1622 = vmatpush1.bf16.msra.mxu0 0
        %1623 = vmatprep.subr.bf16.mxu0 0
        %1624 = vmatpush1.bf16.msra.mxu0 0
        %1625 = vmatprep.subr.bf16.mxu0 0
        %1626 = vmatpush1.bf16.msra.mxu0 0
        %1627 = vmatprep.subr.bf16.mxu0 0
        %1628 = vmatpush1.bf16.msra.mxu0 0
        %1629 = vmatprep.subr.bf16.mxu0 0
        %1630 = vmatpush1.bf16.msra.mxu0 0
        %1631 = vmatprep.subr.bf16.mxu0 0
        %1632 = vmatpush1.bf16.msra.mxu0 0
        %1633 = vmatprep.subr.bf16.mxu0 0
        %1634 = vmatpush1.bf16.msra.mxu0 0
        %1635 = vmatprep.mubr.bf16.mxu0 0
        %1636 = vmatmul.mubr.bf16.gmra.mrb[0].mxu0 %v1547
        %v1637 = vpop.f32.mrb[0].mxu0
        %v1638 = vadd.f32 0.0, %v1637
        %v1639 = vpop.f32.mrb[0].mxu0
        %v1640 = vpop.f32.mrb[0].mxu0
        %v1641 = vadd.f32 0.0, %v1640
        %v1642 = vpop.f32.mrb[0].mxu0
        %1643 = vmatprep.mubr.bf16.mxu0 0
        %1644 = vmatmul.mubr.bf16.gmra.mrb[0].mxu0 %v1548
        %v1645 = vpop.f32.mrb[0].mxu0
        %v1646 = vadd.f32 0.0, %v1645
        %v1647 = vpop.f32.mrb[0].mxu0
        %v1648 = vpop.f32.mrb[0].mxu0
        %v1649 = vadd.f32 0.0, %v1648
        %v1650 = vpop.f32.mrb[0].mxu0
        %1651 = vmatprep.mubr.bf16.mxu0 0
        %1652 = vmatmul.mubr.bf16.gmra.mrb[0].mxu0 %v1549
        %v1653 = vpop.f32.mrb[0].mxu0
        %v1654 = vadd.f32 0.0, %v1653
        %v1655 = vpop.f32.mrb[0].mxu0
        %v1656 = vpop.f32.mrb[0].mxu0
        %v1657 = vadd.f32 0.0, %v1656
        %v1658 = vpop.f32.mrb[0].mxu0
        %1659 = vmatprep.mubr.bf16.mxu0 0
        %1660 = vmatmul.mubr.bf16.gmra.mrb[0].mxu0 %v1550
        %v1661 = vpop.f32.mrb[0].mxu0
        %v1662 = vadd.f32 0.0, %v1661
        %v1663 = vpop.f32.mrb[0].mxu0
        %v1664 = vpop.f32.mrb[0].mxu0
        %v1665 = vadd.f32 0.0, %v1664
        %v1666 = vpop.f32.mrb[0].mxu0
        %1667 = vdwg.mxu0
        %v1668 = vadd.f32 %v1514, %v1638
        %v1669 = vadd.f32 %v1515, %v1641
        %v1670 = vadd.f32 %v1516, %v1646
        %v1671 = vadd.f32 %v1517, %v1649
        %v1672 = vadd.f32 %v1518, %v1654
        %v1673 = vadd.f32 %v1519, %v1657
        %v1674 = vadd.f32 %v1520, %v1662
        %v1675 = vadd.f32 %v1521, %v1665
        %s1676 = scalar_lea.vmem %s4, 320
        %v1677 = vld [vmem:[%s1676] sm:$0xf]
        %v1678 = vld [vmem:[%s1676 + $0x4] sm:$0xf]
        %v1679 = vld [vmem:[%s1676 + $0x8] sm:$0xf]
        %v1680 = vld [vmem:[%s1676 + $0xc] sm:$0xf]
        %v1681 = vld [vmem:[%s1676 + $0x10] sm:$0xf]
        %v1682 = vld [vmem:[%s1676 + $0x14] sm:$0xf]
        %v1683 = vld [vmem:[%s1676 + $0x18] sm:$0xf]
        %v1684 = vld [vmem:[%s1676 + $0x1c] sm:$0xf]
        %v1685 = vld [vmem:[%s1676 + $0x20] sm:$0xf]
        %v1686 = vld [vmem:[%s1676 + $0x24] sm:$0xf]
        %v1687 = vld [vmem:[%s1676 + $0x28] sm:$0xf]
        %v1688 = vld [vmem:[%s1676 + $0x2c] sm:$0xf]
        %v1689 = vld [vmem:[%s1676 + $0x30] sm:$0xf]
        %v1690 = vld [vmem:[%s1676 + $0x34] sm:$0xf]
        %v1691 = vld [vmem:[%s1676 + $0x38] sm:$0xf]
        %v1692 = vld [vmem:[%s1676 + $0x3c] sm:$0xf]
        %v1694 = vunpack.c.l.b16 %v414
        %v1695 = vpack.c.b16 %v909, %v908
        %v1696 = vpack.c.b16 %v911, %v910
        %v1697 = vpack.c.b16 %v913, %v912
        %v1698 = vpack.c.b16 %v1694, %v914
        %v1719 = vunpack.c.l.b16 %v1677
        %v1720 = vunpack.c.l.b16 %v1678
        %v1721 = vunpack.c.l.b16 %v1679
        %v1722 = vunpack.c.l.b16 %v1680
        %v1723 = vunpack.c.l.b16 %v1681
        %v1724 = vunpack.c.l.b16 %v1682
        %v1725 = vunpack.c.l.b16 %v1683
        %v1726 = vunpack.c.l.b16 %v1684
        %v1727 = vunpack.c.l.b16 %v1685
        %v1728 = vunpack.c.l.b16 %v1686
        %v1729 = vunpack.c.l.b16 %v1687
        %v1730 = vunpack.c.l.b16 %v1688
        %v1731 = vunpack.c.l.b16 %v1689
        %v1732 = vunpack.c.l.b16 %v1690
        %v1733 = vunpack.c.l.b16 %v1691
        %v1734 = vunpack.c.l.b16 %v1692
        %v1735 = vpack.c.b16 %v1720, %v1719
        %v1736 = vpack.c.b16 %v1722, %v1721
        %v1737 = vpack.c.b16 %v1724, %v1723
        %v1738 = vpack.c.b16 %v1726, %v1725
        %v1739 = vpack.c.b16 %v1728, %v1727
        %v1740 = vpack.c.b16 %v1730, %v1729
        %v1741 = vpack.c.b16 %v1732, %v1731
        %v1742 = vpack.c.b16 %v1734, %v1733
        %1751 = vmatprep.subr.bf16.mxu0 0
        %1752 = vmatpush1.bf16.msra.mxu0 %v1735
        %1753 = vmatprep.subr.bf16.mxu0 0
        %1754 = vmatpush1.bf16.msra.mxu0 %v1736
        %1755 = vmatprep.subr.bf16.mxu0 0
        %1756 = vmatpush1.bf16.msra.mxu0 %v1737
        %1757 = vmatprep.subr.bf16.mxu0 0
        %1758 = vmatpush1.bf16.msra.mxu0 %v1738
        %1759 = vmatprep.subr.bf16.mxu0 0
        %1760 = vmatpush1.bf16.msra.mxu0 %v1739
        %1761 = vmatprep.subr.bf16.mxu0 0
        %1762 = vmatpush1.bf16.msra.mxu0 %v1740
        %1763 = vmatprep.subr.bf16.mxu0 0
        %1764 = vmatpush1.bf16.msra.mxu0 %v1741
        %1765 = vmatprep.subr.bf16.mxu0 0
        %1766 = vmatpush1.bf16.msra.mxu0 %v1742
        %1767 = vmatprep.subr.bf16.mxu0 0
        %1768 = vmatpush1.bf16.msra.mxu0 0
        %1769 = vmatprep.subr.bf16.mxu0 0
        %1770 = vmatpush1.bf16.msra.mxu0 0
        %1771 = vmatprep.subr.bf16.mxu0 0
        %1772 = vmatpush1.bf16.msra.mxu0 0
        %1773 = vmatprep.subr.bf16.mxu0 0
        %1774 = vmatpush1.bf16.msra.mxu0 0
        %1775 = vmatprep.subr.bf16.mxu0 0
        %1776 = vmatpush1.bf16.msra.mxu0 0
        %1777 = vmatprep.subr.bf16.mxu0 0
        %1778 = vmatpush1.bf16.msra.mxu0 0
        %1779 = vmatprep.subr.bf16.mxu0 0
        %1780 = vmatpush1.bf16.msra.mxu0 0
        %1781 = vmatprep.subr.bf16.mxu0 0
        %1782 = vmatpush1.bf16.msra.mxu0 0
        %1783 = vmatprep.mubr.bf16.mxu0 0
        %1784 = vmatmul.mubr.bf16.gmra.mrb[0].mxu0 %v1695
        %v1785 = vpop.f32.mrb[0].mxu0
        %v1786 = vadd.f32 0.0, %v1785
        %v1787 = vpop.f32.mrb[0].mxu0
        %v1788 = vpop.f32.mrb[0].mxu0
        %v1789 = vadd.f32 0.0, %v1788
        %v1790 = vpop.f32.mrb[0].mxu0
        %1791 = vmatprep.mubr.bf16.mxu0 0
        %1792 = vmatmul.mubr.bf16.gmra.mrb[0].mxu0 %v1696
        %v1793 = vpop.f32.mrb[0].mxu0
        %v1794 = vadd.f32 0.0, %v1793
        %v1795 = vpop.f32.mrb[0].mxu0
        %v1796 = vpop.f32.mrb[0].mxu0
        %v1797 = vadd.f32 0.0, %v1796
        %v1798 = vpop.f32.mrb[0].mxu0
        %1799 = vmatprep.mubr.bf16.mxu0 0
        %1800 = vmatmul.mubr.bf16.gmra.mrb[0].mxu0 %v1697
        %v1801 = vpop.f32.mrb[0].mxu0
        %v1802 = vadd.f32 0.0, %v1801
        %v1803 = vpop.f32.mrb[0].mxu0
        %v1804 = vpop.f32.mrb[0].mxu0
        %v1805 = vadd.f32 0.0, %v1804
        %v1806 = vpop.f32.mrb[0].mxu0
        %1807 = vmatprep.mubr.bf16.mxu0 0
        %1808 = vmatmul.mubr.bf16.gmra.mrb[0].mxu0 %v1698
        %v1809 = vpop.f32.mrb[0].mxu0
        %v1810 = vadd.f32 0.0, %v1809
        %v1811 = vpop.f32.mrb[0].mxu0
        %v1812 = vpop.f32.mrb[0].mxu0
        %v1813 = vadd.f32 0.0, %v1812
        %v1814 = vpop.f32.mrb[0].mxu0
        %1815 = vdwg.mxu0
        %v1816 = vadd.f32 %v1668, %v1786
        %v1817 = vadd.f32 %v1669, %v1789
        %v1818 = vadd.f32 %v1670, %v1794
        %v1819 = vadd.f32 %v1671, %v1797
        %v1820 = vadd.f32 %v1672, %v1802
        %v1821 = vadd.f32 %v1673, %v1805
        %v1822 = vadd.f32 %v1674, %v1810
        %v1823 = vadd.f32 %v1675, %v1813
        %s1824 = scalar_lea.vmem %s4, 384
        %v1825 = vld [vmem:[%s1824] sm:$0xf]
        %v1826 = vld [vmem:[%s1824 + $0x4] sm:$0xf]
        %v1827 = vld [vmem:[%s1824 + $0x8] sm:$0xf]
        %v1828 = vld [vmem:[%s1824 + $0xc] sm:$0xf]
        %v1829 = vld [vmem:[%s1824 + $0x10] sm:$0xf]
        %v1830 = vld [vmem:[%s1824 + $0x14] sm:$0xf]
        %v1831 = vld [vmem:[%s1824 + $0x18] sm:$0xf]
        %v1832 = vld [vmem:[%s1824 + $0x1c] sm:$0xf]
        %v1833 = vld [vmem:[%s1824 + $0x20] sm:$0xf]
        %v1834 = vld [vmem:[%s1824 + $0x24] sm:$0xf]
        %v1835 = vld [vmem:[%s1824 + $0x28] sm:$0xf]
        %v1836 = vld [vmem:[%s1824 + $0x2c] sm:$0xf]
        %v1837 = vld [vmem:[%s1824 + $0x30] sm:$0xf]
        %v1838 = vld [vmem:[%s1824 + $0x34] sm:$0xf]
        %v1839 = vld [vmem:[%s1824 + $0x38] sm:$0xf]
        %v1840 = vld [vmem:[%s1824 + $0x3c] sm:$0xf]
        %v1842 = vunpack.c.l.b16 %v424
        %v1843 = vpack.c.b16 %v1071, %v1070
        %v1844 = vpack.c.b16 %v1073, %v1072
        %v1845 = vpack.c.b16 %v1075, %v1074
        %v1846 = vpack.c.b16 %v1842, %v1076
        %v1867 = vunpack.c.l.b16 %v1825
        %v1868 = vunpack.c.l.b16 %v1826
        %v1869 = vunpack.c.l.b16 %v1827
        %v1870 = vunpack.c.l.b16 %v1828
        %v1871 = vunpack.c.l.b16 %v1829
        %v1872 = vunpack.c.l.b16 %v1830
        %v1873 = vunpack.c.l.b16 %v1831
        %v1874 = vunpack.c.l.b16 %v1832
        %v1875 = vunpack.c.l.b16 %v1833
        %v1876 = vunpack.c.l.b16 %v1834
        %v1877 = vunpack.c.l.b16 %v1835
        %v1878 = vunpack.c.l.b16 %v1836
        %v1879 = vunpack.c.l.b16 %v1837
        %v1880 = vunpack.c.l.b16 %v1838
        %v1881 = vunpack.c.l.b16 %v1839
        %v1882 = vunpack.c.l.b16 %v1840
        %v1883 = vpack.c.b16 %v1868, %v1867
        %v1884 = vpack.c.b16 %v1870, %v1869
        %v1885 = vpack.c.b16 %v1872, %v1871
        %v1886 = vpack.c.b16 %v1874, %v1873
        %v1887 = vpack.c.b16 %v1876, %v1875
        %v1888 = vpack.c.b16 %v1878, %v1877
        %v1889 = vpack.c.b16 %v1880, %v1879
        %v1890 = vpack.c.b16 %v1882, %v1881
        %1899 = vmatprep.subr.bf16.mxu0 0
        %1900 = vmatpush1.bf16.msra.mxu0 %v1883
        %1901 = vmatprep.subr.bf16.mxu0 0
        %1902 = vmatpush1.bf16.msra.mxu0 %v1884
        %1903 = vmatprep.subr.bf16.mxu0 0
        %1904 = vmatpush1.bf16.msra.mxu0 %v1885
        %1905 = vmatprep.subr.bf16.mxu0 0
        %1906 = vmatpush1.bf16.msra.mxu0 %v1886
        %1907 = vmatprep.subr.bf16.mxu0 0
        %1908 = vmatpush1.bf16.msra.mxu0 %v1887
        %1909 = vmatprep.subr.bf16.mxu0 0
        %1910 = vmatpush1.bf16.msra.mxu0 %v1888
        %1911 = vmatprep.subr.bf16.mxu0 0
        %1912 = vmatpush1.bf16.msra.mxu0 %v1889
        %1913 = vmatprep.subr.bf16.mxu0 0
        %1914 = vmatpush1.bf16.msra.mxu0 %v1890
        %1915 = vmatprep.subr.bf16.mxu0 0
        %1916 = vmatpush1.bf16.msra.mxu0 0
        %1917 = vmatprep.subr.bf16.mxu0 0
        %1918 = vmatpush1.bf16.msra.mxu0 0
        %1919 = vmatprep.subr.bf16.mxu0 0
        %1920 = vmatpush1.bf16.msra.mxu0 0
        %1921 = vmatprep.subr.bf16.mxu0 0
        %1922 = vmatpush1.bf16.msra.mxu0 0
        %1923 = vmatprep.subr.bf16.mxu0 0
        %1924 = vmatpush1.bf16.msra.mxu0 0
        %1925 = vmatprep.subr.bf16.mxu0 0
        %1926 = vmatpush1.bf16.msra.mxu0 0
        %1927 = vmatprep.subr.bf16.mxu0 0
        %1928 = vmatpush1.bf16.msra.mxu0 0
        %1929 = vmatprep.subr.bf16.mxu0 0
        %1930 = vmatpush1.bf16.msra.mxu0 0
        %1931 = vmatprep.mubr.bf16.mxu0 0
        %1932 = vmatmul.mubr.bf16.gmra.mrb[0].mxu0 %v1843
        %v1933 = vpop.f32.mrb[0].mxu0
        %v1934 = vadd.f32 0.0, %v1933
        %v1935 = vpop.f32.mrb[0].mxu0
        %v1936 = vpop.f32.mrb[0].mxu0
        %v1937 = vadd.f32 0.0, %v1936
        %v1938 = vpop.f32.mrb[0].mxu0
        %1939 = vmatprep.mubr.bf16.mxu0 0
        %1940 = vmatmul.mubr.bf16.gmra.mrb[0].mxu0 %v1844
        %v1941 = vpop.f32.mrb[0].mxu0
        %v1942 = vadd.f32 0.0, %v1941
        %v1943 = vpop.f32.mrb[0].mxu0
        %v1944 = vpop.f32.mrb[0].mxu0
        %v1945 = vadd.f32 0.0, %v1944
        %v1946 = vpop.f32.mrb[0].mxu0
        %1947 = vmatprep.mubr.bf16.mxu0 0
        %1948 = vmatmul.mubr.bf16.gmra.mrb[0].mxu0 %v1845
        %v1949 = vpop.f32.mrb[0].mxu0
        %v1950 = vadd.f32 0.0, %v1949
        %v1951 = vpop.f32.mrb[0].mxu0
        %v1952 = vpop.f32.mrb[0].mxu0
        %v1953 = vadd.f32 0.0, %v1952
        %v1954 = vpop.f32.mrb[0].mxu0
        %1955 = vmatprep.mubr.bf16.mxu0 0
        %1956 = vmatmul.mubr.bf16.gmra.mrb[0].mxu0 %v1846
        %v1957 = vpop.f32.mrb[0].mxu0
        %v1958 = vadd.f32 0.0, %v1957
        %v1959 = vpop.f32.mrb[0].mxu0
        %v1960 = vpop.f32.mrb[0].mxu0
        %v1961 = vadd.f32 0.0, %v1960
        %v1962 = vpop.f32.mrb[0].mxu0
        %1963 = vdwg.mxu0
        %v1964 = vadd.f32 %v1816, %v1934
        %v1965 = vadd.f32 %v1817, %v1937
        %v1966 = vadd.f32 %v1818, %v1942
        %v1967 = vadd.f32 %v1819, %v1945
        %v1968 = vadd.f32 %v1820, %v1950
        %v1969 = vadd.f32 %v1821, %v1953
        %v1970 = vadd.f32 %v1822, %v1958
        %v1971 = vadd.f32 %v1823, %v1961
        %s1972 = scalar_lea.vmem %s4, 448
        %v1973 = vld [vmem:[%s1972] sm:$0xf]
        %v1974 = vld [vmem:[%s1972 + $0x4] sm:$0xf]
        %v1975 = vld [vmem:[%s1972 + $0x8] sm:$0xf]
        %v1976 = vld [vmem:[%s1972 + $0xc] sm:$0xf]
        %v1977 = vld [vmem:[%s1972 + $0x10] sm:$0xf]
        %v1978 = vld [vmem:[%s1972 + $0x14] sm:$0xf]
        %v1979 = vld [vmem:[%s1972 + $0x18] sm:$0xf]
        %v1980 = vld [vmem:[%s1972 + $0x1c] sm:$0xf]
        %v1981 = vld [vmem:[%s1972 + $0x20] sm:$0xf]
        %v1982 = vld [vmem:[%s1972 + $0x24] sm:$0xf]
        %v1983 = vld [vmem:[%s1972 + $0x28] sm:$0xf]
        %v1984 = vld [vmem:[%s1972 + $0x2c] sm:$0xf]
        %v1985 = vld [vmem:[%s1972 + $0x30] sm:$0xf]
        %v1986 = vld [vmem:[%s1972 + $0x34] sm:$0xf]
        %v1987 = vld [vmem:[%s1972 + $0x38] sm:$0xf]
        %v1988 = vld [vmem:[%s1972 + $0x3c] sm:$0xf]
        %v1989 = vunpack.c.l.b16 %v882
        %v1990 = vpack.c.b16 %v1225, %v1224
        %v1991 = vpack.c.b16 %v1227, %v1226
        %v1992 = vpack.c.b16 %v1229, %v1228
        %v1993 = vpack.c.b16 %v1989, %v1230
        %v2014 = vunpack.c.l.b16 %v1973
        %v2015 = vunpack.c.l.b16 %v1974
        %v2016 = vunpack.c.l.b16 %v1975
        %v2017 = vunpack.c.l.b16 %v1976
        %v2018 = vunpack.c.l.b16 %v1977
        %v2019 = vunpack.c.l.b16 %v1978
        %v2020 = vunpack.c.l.b16 %v1979
        %v2021 = vunpack.c.l.b16 %v1980
        %v2022 = vunpack.c.l.b16 %v1981
        %v2023 = vunpack.c.l.b16 %v1982
        %v2024 = vunpack.c.l.b16 %v1983
        %v2025 = vunpack.c.l.b16 %v1984
        %v2026 = vunpack.c.l.b16 %v1985
        %v2027 = vunpack.c.l.b16 %v1986
        %v2028 = vunpack.c.l.b16 %v1987
        %v2029 = vunpack.c.l.b16 %v1988
        %v2030 = vpack.c.b16 %v2015, %v2014
        %v2031 = vpack.c.b16 %v2017, %v2016
        %v2032 = vpack.c.b16 %v2019, %v2018
        %v2033 = vpack.c.b16 %v2021, %v2020
        %v2034 = vpack.c.b16 %v2023, %v2022
        %v2035 = vpack.c.b16 %v2025, %v2024
        %v2036 = vpack.c.b16 %v2027, %v2026
        %v2037 = vpack.c.b16 %v2029, %v2028
        %2046 = vmatprep.subr.bf16.mxu0 0
        %2047 = vmatpush1.bf16.msra.mxu0 %v2030
        %2048 = vmatprep.subr.bf16.mxu0 0
        %2049 = vmatpush1.bf16.msra.mxu0 %v2031
        %2050 = vmatprep.subr.bf16.mxu0 0
        %2051 = vmatpush1.bf16.msra.mxu0 %v2032
        %2052 = vmatprep.subr.bf16.mxu0 0
        %2053 = vmatpush1.bf16.msra.mxu0 %v2033
        %2054 = vmatprep.subr.bf16.mxu0 0
        %2055 = vmatpush1.bf16.msra.mxu0 %v2034
        %2056 = vmatprep.subr.bf16.mxu0 0
        %2057 = vmatpush1.bf16.msra.mxu0 %v2035
        %2058 = vmatprep.subr.bf16.mxu0 0
        %2059 = vmatpush1.bf16.msra.mxu0 %v2036
        %2060 = vmatprep.subr.bf16.mxu0 0
        %2061 = vmatpush1.bf16.msra.mxu0 %v2037
        %2062 = vmatprep.subr.bf16.mxu0 0
        %2063 = vmatpush1.bf16.msra.mxu0 0
        %2064 = vmatprep.subr.bf16.mxu0 0
        %2065 = vmatpush1.bf16.msra.mxu0 0
        %2066 = vmatprep.subr.bf16.mxu0 0
        %2067 = vmatpush1.bf16.msra.mxu0 0
        %2068 = vmatprep.subr.bf16.mxu0 0
        %2069 = vmatpush1.bf16.msra.mxu0 0
        %2070 = vmatprep.subr.bf16.mxu0 0
        %2071 = vmatpush1.bf16.msra.mxu0 0
        %2072 = vmatprep.subr.bf16.mxu0 0
        %2073 = vmatpush1.bf16.msra.mxu0 0
        %2074 = vmatprep.subr.bf16.mxu0 0
        %2075 = vmatpush1.bf16.msra.mxu0 0
        %2076 = vmatprep.subr.bf16.mxu0 0
        %2077 = vmatpush1.bf16.msra.mxu0 0
        %2078 = vmatprep.mubr.bf16.mxu0 0
        %2079 = vmatmul.mubr.bf16.gmra.mrb[0].mxu0 %v1990
        %v2080 = vpop.f32.mrb[0].mxu0
        %v2081 = vadd.f32 0.0, %v2080
        %v2082 = vpop.f32.mrb[0].mxu0
        %v2083 = vpop.f32.mrb[0].mxu0
        %v2084 = vadd.f32 0.0, %v2083
        %v2085 = vpop.f32.mrb[0].mxu0
        %2086 = vmatprep.mubr.bf16.mxu0 0
        %2087 = vmatmul.mubr.bf16.gmra.mrb[0].mxu0 %v1991
        %v2088 = vpop.f32.mrb[0].mxu0
        %v2089 = vadd.f32 0.0, %v2088
        %v2090 = vpop.f32.mrb[0].mxu0
        %v2091 = vpop.f32.mrb[0].mxu0
        %v2092 = vadd.f32 0.0, %v2091
        %v2093 = vpop.f32.mrb[0].mxu0
        %2094 = vmatprep.mubr.bf16.mxu0 0
        %2095 = vmatmul.mubr.bf16.gmra.mrb[0].mxu0 %v1992
        %v2096 = vpop.f32.mrb[0].mxu0
        %v2097 = vadd.f32 0.0, %v2096
        %v2098 = vpop.f32.mrb[0].mxu0
        %v2099 = vpop.f32.mrb[0].mxu0
        %v2100 = vadd.f32 0.0, %v2099
        %v2101 = vpop.f32.mrb[0].mxu0
        %2102 = vmatprep.mubr.bf16.mxu0 0
        %2103 = vmatmul.mubr.bf16.gmra.mrb[0].mxu0 %v1993
        %v2104 = vpop.f32.mrb[0].mxu0
        %v2105 = vadd.f32 0.0, %v2104
        %v2106 = vpop.f32.mrb[0].mxu0
        %v2107 = vpop.f32.mrb[0].mxu0
        %v2108 = vadd.f32 0.0, %v2107
        %v2109 = vpop.f32.mrb[0].mxu0
        %2110 = vdwg.mxu0
        %v2111 = vadd.f32 %v1964, %v2081
        %v2112 = vadd.f32 %v1965, %v2084
        %v2113 = vadd.f32 %v1966, %v2089
        %v2114 = vadd.f32 %v1967, %v2092
        %v2115 = vadd.f32 %v1968, %v2097
        %v2116 = vadd.f32 %v1969, %v2100
        %v2117 = vadd.f32 %v1970, %v2105
        %v2118 = vadd.f32 %v1971, %v2108
        %v2119 = vlaneseq
        %v2120 = vshrl.u32 %v2119, 7
        %v2121 = vsub.s32 0, %v2120
        %v2122 = vrot.slane %v392, %v2121
        %v2123 = vmul.f32 %v2111, %v2122
        %v2124 = vmul.f32 %v2112, %v2122
        %v2125 = vmul.f32 %v2113, %v2122
        %v2126 = vmul.f32 %v2114, %v2122
        %v2127 = vmul.f32 %v2115, %v2122
        %v2128 = vmul.f32 %v2116, %v2122
        %v2129 = vmul.f32 %v2117, %v2122
        %v2130 = vmul.f32 %v2118, %v2122
        %v2131 = vlaneseq
        %v2132 = vshrl.u32 %v2131, 7
        %v2133 = vsub.s32 0, %v2132
        %v2134 = vrot.slane %v393, %v2133
        %v2135 = vadd.f32 %v2123, %v2134
        %v2136 = vadd.f32 %v2124, %v2134
        %v2137 = vadd.f32 %v2125, %v2134
        %v2138 = vadd.f32 %v2126, %v2134
        %v2139 = vadd.f32 %v2127, %v2134
        %v2140 = vadd.f32 %v2128, %v2134
        %v2141 = vadd.f32 %v2129, %v2134
        %v2142 = vadd.f32 %v2130, %v2134
        %v2143 = vmul.f32 %v2135, 0.5
        %v2144 = vmul.f32 %v2136, 0.5
        %v2145 = vmul.f32 %v2137, 0.5
        %v2146 = vmul.f32 %v2138, 0.5
        %v2147 = vmul.f32 %v2139, 0.5
        %v2148 = vmul.f32 %v2140, 0.5
        %v2149 = vmul.f32 %v2141, 0.5
        %v2150 = vmul.f32 %v2142, 0.5
        %v2151 = vmul.f32 %v2135, 0.70710677
        %v2152 = vmul.f32 %v2136, 0.70710677
        %v2153 = vmul.f32 %v2137, 0.70710677
        %v2154 = vmul.f32 %v2138, 0.70710677
        %v2155 = vmul.f32 %v2139, 0.70710677
        %v2156 = vmul.f32 %v2140, 0.70710677
        %v2157 = vmul.f32 %v2141, 0.70710677
        %v2158 = vmul.f32 %v2142, 0.70710677
        %v2159 = verf.f32.pop %v2151
        %v2160 = verf.f32.pop %v2152
        %v2161 = verf.f32.pop %v2153
        %v2162 = verf.f32.pop %v2154
        %v2163 = verf.f32.pop %v2155
        %v2164 = verf.f32.pop %v2156
        %v2165 = verf.f32.pop %v2157
        %v2166 = verf.f32.pop %v2158
        %v2167 = vadd.f32 %v2159, 1.0
        %v2168 = vadd.f32 %v2160, 1.0
        %v2169 = vadd.f32 %v2161, 1.0
        %v2170 = vadd.f32 %v2162, 1.0
        %v2171 = vadd.f32 %v2163, 1.0
        %v2172 = vadd.f32 %v2164, 1.0
        %v2173 = vadd.f32 %v2165, 1.0
        %v2174 = vadd.f32 %v2166, 1.0
        %v2175 = vmul.f32 %v2143, %v2167
        %v2176 = vmul.f32 %v2144, %v2168
        %v2177 = vmul.f32 %v2145, %v2169
        %v2178 = vmul.f32 %v2146, %v2170
        %v2179 = vmul.f32 %v2147, %v2171
        %v2180 = vmul.f32 %v2148, %v2172
        %v2181 = vmul.f32 %v2149, %v2173
        %v2182 = vmul.f32 %v2150, %v2174
        %v2183 = vlaneseq
        %v2184 = vshrl.u32 %v2183, 7
        %v2185 = vsub.s32 0, %v2184
        %v2186 = vrot.slane %v394, %v2185
        %v2187 = vmul.f32 %v606, %v2186
        %v2188 = vmul.f32 %v610, %v2186
        %v2189 = vmul.f32 %v616, %v2186
        %v2190 = vmul.f32 %v620, %v2186
        %v2191 = vmul.f32 %v626, %v2186
        %v2192 = vmul.f32 %v630, %v2186
        %v2193 = vmul.f32 %v636, %v2186
        %v2194 = vmul.f32 %v640, %v2186
        %v2195 = vlaneseq
        %v2196 = vshrl.u32 %v2195, 7
        %v2197 = vsub.s32 0, %v2196
        %v2198 = vrot.slane %v395, %v2197
        %v2199 = vadd.f32 %v2187, %v2198
        %v2200 = vadd.f32 %v2188, %v2198
        %v2201 = vadd.f32 %v2189, %v2198
        %v2202 = vadd.f32 %v2190, %v2198
        %v2203 = vadd.f32 %v2191, %v2198
        %v2204 = vadd.f32 %v2192, %v2198
        %v2205 = vadd.f32 %v2193, %v2198
        %v2206 = vadd.f32 %v2194, %v2198
        %2207 = vst [vmem:[#allocation2] sm:$0xf] 0
        %2208 = vst [vmem:[#allocation2 + $0x4] sm:$0x1] 0
        %s2209 = scalar_lea.vmem [#allocation2], 72
        %2210 = vst [vmem:[%s2209] sm:$0xf] 0
        %2211 = vst [vmem:[%s2209 + $0x4] sm:$0x1] 0
        %vm2212 = vcmask 1040384
        %vm2213 = vsmask.f32 256
        %vm2214 = vmand %vm2212, %vm2213
        %v2215 = vld [vmem:[#allocation2] sm:$0x1]
        %v2216 = vsel %vm2214, 0, %v2215
        %2217 = vst [vmem:[#allocation2] sm:$0x1] %v2216
        %v2218 = vld [vmem:[#allocation2 + $0x8] sm:$0x1]
        %v2219 = vsel %vm2214, 0, %v2218
        %2220 = vst [vmem:[#allocation2 + $0x8] sm:$0x1] %v2219
        %v2221 = vld [vmem:[#allocation2 + $0x10] sm:$0x1]
        %v2222 = vsel %vm2214, 0, %v2221
        %2223 = vst [vmem:[#allocation2 + $0x10] sm:$0x1] %v2222
        %v2224 = vld [vmem:[#allocation2 + $0x18] sm:$0x1]
        %v2225 = vsel %vm2214, 0, %v2224
        %2226 = vst [vmem:[#allocation2 + $0x18] sm:$0x1] %v2225
        %v2227 = vld [vmem:[#allocation2 + $0x20] sm:$0x1]
        %v2228 = vsel %vm2214, 0, %v2227
        %2229 = vst [vmem:[#allocation2 + $0x20] sm:$0x1] %v2228
        %v2230 = vld [vmem:[#allocation2 + $0x28] sm:$0x1]
        %v2231 = vsel %vm2214, 0, %v2230
        %2232 = vst [vmem:[#allocation2 + $0x28] sm:$0x1] %v2231
        %v2233 = vld [vmem:[#allocation2 + $0x30] sm:$0x1]
        %v2234 = vsel %vm2214, 0, %v2233
        %2235 = vst [vmem:[#allocation2 + $0x30] sm:$0x1] %v2234
        %v2236 = vld [vmem:[#allocation2 + $0x38] sm:$0x1]
        %v2237 = vsel %vm2214, 0, %v2236
        %2238 = vst [vmem:[#allocation2 + $0x38] sm:$0x1] %v2237
        %v2239 = vld [vmem:[#allocation2 + $0x40] sm:$0x1]
        %v2240 = vsel %vm2214, 0, %v2239
        %2241 = vst [vmem:[#allocation2 + $0x40] sm:$0x1] %v2240
        %v2242 = vld [vmem:[#allocation2 + $0x48] sm:$0x1]
        %v2243 = vsel %vm2214, 0, %v2242
        %2244 = vst [vmem:[#allocation2 + $0x48] sm:$0x1] %v2243
        %vm2245 = vsmask.f32 7938
        %vm2246 = vmand %vm2212, %vm2245
        %v2247 = vld [vmem:[#allocation2 + $0x4] sm:$0x1]
        %v2248 = vsel %vm2246, 0, %v2247
        %2249 = vst [vmem:[#allocation2 + $0x4] sm:$0x1] %v2248
        %v2250 = vld [vmem:[#allocation2 + $0xc] sm:$0x1]
        %v2251 = vsel %vm2246, 0, %v2250
        %2252 = vst [vmem:[#allocation2 + $0xc] sm:$0x1] %v2251
        %v2253 = vld [vmem:[#allocation2 + $0x14] sm:$0x1]
        %v2254 = vsel %vm2246, 0, %v2253
        %2255 = vst [vmem:[#allocation2 + $0x14] sm:$0x1] %v2254
        %v2256 = vld [vmem:[#allocation2 + $0x1c] sm:$0x1]
        %v2257 = vsel %vm2246, 0, %v2256
        %2258 = vst [vmem:[#allocation2 + $0x1c] sm:$0x1] %v2257
        %v2259 = vld [vmem:[#allocation2 + $0x24] sm:$0x1]
        %v2260 = vsel %vm2246, 0, %v2259
        %2261 = vst [vmem:[#allocation2 + $0x24] sm:$0x1] %v2260
        %v2262 = vld [vmem:[#allocation2 + $0x2c] sm:$0x1]
        %v2263 = vsel %vm2246, 0, %v2262
        %2264 = vst [vmem:[#allocation2 + $0x2c] sm:$0x1] %v2263
        %v2265 = vld [vmem:[#allocation2 + $0x34] sm:$0x1]
        %v2266 = vsel %vm2246, 0, %v2265
        %2267 = vst [vmem:[#allocation2 + $0x34] sm:$0x1] %v2266
        %v2268 = vld [vmem:[#allocation2 + $0x3c] sm:$0x1]
        %v2269 = vsel %vm2246, 0, %v2268
        %2270 = vst [vmem:[#allocation2 + $0x3c] sm:$0x1] %v2269
        %v2271 = vld [vmem:[#allocation2 + $0x44] sm:$0x1]
        %v2272 = vsel %vm2246, 0, %v2271
        %2273 = vst [vmem:[#allocation2 + $0x44] sm:$0x1] %v2272
        %v2274 = vld [vmem:[#allocation2 + $0x4c] sm:$0x1]
        %v2275 = vsel %vm2246, 0, %v2274
        %2276 = vst [vmem:[#allocation2 + $0x4c] sm:$0x1] %v2275
        %v2277 = vpack.c.bf16 %v2175, %v2175
        %v2278 = vpack.c.bf16 %v2176, %v2176
        %v2279 = vpack.c.bf16 %v2177, %v2177
        %v2280 = vpack.c.bf16 %v2178, %v2178
        %v2281 = vpack.c.bf16 %v2179, %v2179
        %v2282 = vpack.c.bf16 %v2180, %v2180
        %v2283 = vpack.c.bf16 %v2181, %v2181
        %v2284 = vpack.c.bf16 %v2182, %v2182
        %v2293 = vunpack.c.l.b16 %v2277
        %v2294 = vunpack.c.l.b16 %v2278
        %v2295 = vunpack.c.l.b16 %v2279
        %v2296 = vunpack.c.l.b16 %v2280
        %v2297 = vunpack.c.l.b16 %v2281
        %v2298 = vunpack.c.l.b16 %v2282
        %v2299 = vunpack.c.l.b16 %v2283
        %v2300 = vunpack.c.l.b16 %v2284
        %v2301 = vpack.c.b16 %v2293, %v2293
        %v2302 = vpack.c.b16 %v2294, %v2294
        %v2303 = vpack.c.b16 %v2295, %v2295
        %v2304 = vpack.c.b16 %v2296, %v2296
        %v2305 = vpack.c.b16 %v2297, %v2297
        %v2306 = vpack.c.b16 %v2298, %v2298
        %v2307 = vpack.c.b16 %v2299, %v2299
        %v2308 = vpack.c.b16 %v2300, %v2300
        %v2310 = vshrl.u32 %v2301, 16
        %v2312 = vrot.slane %v2310, 7
        %v2313 = vshll.u32 %v2301, 16
        %v2315 = vor.u32 %v2312, %v2313
        %v2316 = vrot.slane %v2312, 4
        %v2318 = vshrl.u32 %v2302, 16
        %v2320 = vrot.slane %v2318, 7
        %v2321 = vshll.u32 %v2302, 16
        %v2323 = vor.u32 %v2320, %v2321
        %v2324 = vrot.slane %v2320, 4
        %v2326 = vshrl.u32 %v2303, 16
        %v2328 = vrot.slane %v2326, 7
        %v2329 = vshll.u32 %v2303, 16
        %v2331 = vor.u32 %v2328, %v2329
        %v2332 = vrot.slane %v2328, 4
        %v2334 = vshrl.u32 %v2304, 16
        %v2336 = vrot.slane %v2334, 7
        %v2337 = vshll.u32 %v2304, 16
        %v2339 = vor.u32 %v2336, %v2337
        %v2340 = vrot.slane %v2336, 4
        %v2342 = vshrl.u32 %v2305, 16
        %v2344 = vrot.slane %v2342, 7
        %v2345 = vshll.u32 %v2305, 16
        %v2347 = vor.u32 %v2344, %v2345
        %v2348 = vrot.slane %v2344, 4
        %v2350 = vshrl.u32 %v2306, 16
        %v2352 = vrot.slane %v2350, 7
        %v2353 = vshll.u32 %v2306, 16
        %v2355 = vor.u32 %v2352, %v2353
        %v2356 = vrot.slane %v2352, 4
        %v2358 = vshrl.u32 %v2307, 16
        %v2360 = vrot.slane %v2358, 7
        %v2361 = vshll.u32 %v2307, 16
        %v2363 = vor.u32 %v2360, %v2361
        %v2364 = vrot.slane %v2360, 4
        %v2366 = vshrl.u32 %v2308, 16
        %v2368 = vrot.slane %v2366, 7
        %v2369 = vshll.u32 %v2308, 16
        %v2371 = vor.u32 %v2368, %v2369
        %v2372 = vrot.slane %v2368, 4
        %s2389 = scalar_lea.vmem [#allocation2], 8
        %vm2390 = vcmask 1043456
        %vm2391 = vmand %vm2390, %vm2245
        %v2392 = vld [vmem:[%s2389] sm:$0xf]
        %v2393 = vsel %vm2391, %v2315, %v2392
        %2394 = vst [vmem:[%s2389] sm:$0xf] %v2393
        %v2395 = vld [vmem:[%s2389 + $0x4] sm:$0x1]
        %v2396 = vsel %vm2214, %v2316, %v2395
        %2397 = vst [vmem:[%s2389 + $0x4] sm:$0x1] %v2396
        %v2398 = vld [vmem:[%s2389 + $0x8] sm:$0xf]
        %v2399 = vsel %vm2391, %v2323, %v2398
        %2400 = vst [vmem:[%s2389 + $0x8] sm:$0xf] %v2399
        %v2401 = vld [vmem:[%s2389 + $0xc] sm:$0x1]
        %v2402 = vsel %vm2214, %v2324, %v2401
        %2403 = vst [vmem:[%s2389 + $0xc] sm:$0x1] %v2402
        %v2404 = vld [vmem:[%s2389 + $0x10] sm:$0xf]
        %v2405 = vsel %vm2391, %v2331, %v2404
        %2406 = vst [vmem:[%s2389 + $0x10] sm:$0xf] %v2405
        %v2407 = vld [vmem:[%s2389 + $0x14] sm:$0x1]
        %v2408 = vsel %vm2214, %v2332, %v2407
        %2409 = vst [vmem:[%s2389 + $0x14] sm:$0x1] %v2408
        %v2410 = vld [vmem:[%s2389 + $0x18] sm:$0xf]
        %v2411 = vsel %vm2391, %v2339, %v2410
        %2412 = vst [vmem:[%s2389 + $0x18] sm:$0xf] %v2411
        %v2413 = vld [vmem:[%s2389 + $0x1c] sm:$0x1]
        %v2414 = vsel %vm2214, %v2340, %v2413
        %2415 = vst [vmem:[%s2389 + $0x1c] sm:$0x1] %v2414
        %v2416 = vld [vmem:[%s2389 + $0x20] sm:$0xf]
        %v2417 = vsel %vm2391, %v2347, %v2416
        %2418 = vst [vmem:[%s2389 + $0x20] sm:$0xf] %v2417
        %v2419 = vld [vmem:[%s2389 + $0x24] sm:$0x1]
        %v2420 = vsel %vm2214, %v2348, %v2419
        %2421 = vst [vmem:[%s2389 + $0x24] sm:$0x1] %v2420
        %v2422 = vld [vmem:[%s2389 + $0x28] sm:$0xf]
        %v2423 = vsel %vm2391, %v2355, %v2422
        %2424 = vst [vmem:[%s2389 + $0x28] sm:$0xf] %v2423
        %v2425 = vld [vmem:[%s2389 + $0x2c] sm:$0x1]
        %v2426 = vsel %vm2214, %v2356, %v2425
        %2427 = vst [vmem:[%s2389 + $0x2c] sm:$0x1] %v2426
        %v2428 = vld [vmem:[%s2389 + $0x30] sm:$0xf]
        %v2429 = vsel %vm2391, %v2363, %v2428
        %2430 = vst [vmem:[%s2389 + $0x30] sm:$0xf] %v2429
        %v2431 = vld [vmem:[%s2389 + $0x34] sm:$0x1]
        %v2432 = vsel %vm2214, %v2364, %v2431
        %2433 = vst [vmem:[%s2389 + $0x34] sm:$0x1] %v2432
        %v2434 = vld [vmem:[%s2389 + $0x38] sm:$0xf]
        %v2435 = vsel %vm2391, %v2371, %v2434
        %2436 = vst [vmem:[%s2389 + $0x38] sm:$0xf] %v2435
        %v2437 = vld [vmem:[%s2389 + $0x3c] sm:$0x1]
        %v2438 = vsel %vm2214, %v2372, %v2437
        %2439 = vst [vmem:[%s2389 + $0x3c] sm:$0x1] %v2438
        %v2448 = vmax.bf16 %v441, %v770
        %v2449 = vmax.bf16 %v442, %v784
        %v2450 = vmax.bf16 %v443, %v798
        %v2451 = vmax.bf16 %v444, %v812
        %v2452 = vmax.bf16 %v445, %v826
        %v2453 = vmax.bf16 %v446, %v840
        %v2454 = vmax.bf16 %v447, %v854
        %v2455 = vmax.bf16 %v448, %v868
        %v2464 = vmax.bf16 %v417, %v672
        %v2465 = vmax.bf16 %v418, %v686
        %v2466 = vmax.bf16 %v419, %v700
        %v2467 = vmax.bf16 %v420, %v714
        %v2468 = vmax.bf16 %v421, %v728
        %v2469 = vmax.bf16 %v422, %v742
        %v2470 = vmax.bf16 %v423, %v756
        %v2471 = vmax.bf16 %v424, %v882
        %v2472 = vmax.bf16 %v2448, %v2464
        %v2473 = vmax.bf16 %v2449, %v2465
        %v2474 = vmax.bf16 %v2450, %v2466
        %v2475 = vmax.bf16 %v2451, %v2467
        %v2476 = vmax.bf16 %v2452, %v2468
        %v2477 = vmax.bf16 %v2453, %v2469
        %v2478 = vmax.bf16 %v2454, %v2470
        %v2479 = vmax.bf16 %v2455, %v2471
        %v2480 = vld [vmem:[#allocation2] sm:$0xf]
        %v2481 = vld [vmem:[#allocation2 + $0x4] sm:$0x1]
        %v2482 = vld [vmem:[#allocation2 + $0x8] sm:$0xf]
        %v2483 = vld [vmem:[#allocation2 + $0xc] sm:$0x1]
        %v2484 = vld [vmem:[#allocation2 + $0x10] sm:$0xf]
        %v2485 = vld [vmem:[#allocation2 + $0x14] sm:$0x1]
        %v2486 = vld [vmem:[#allocation2 + $0x18] sm:$0xf]
        %v2487 = vld [vmem:[#allocation2 + $0x1c] sm:$0x1]
        %v2488 = vld [vmem:[#allocation2 + $0x20] sm:$0xf]
        %v2489 = vld [vmem:[#allocation2 + $0x24] sm:$0x1]
        %v2490 = vld [vmem:[#allocation2 + $0x28] sm:$0xf]
        %v2491 = vld [vmem:[#allocation2 + $0x2c] sm:$0x1]
        %v2492 = vld [vmem:[#allocation2 + $0x30] sm:$0xf]
        %v2493 = vld [vmem:[#allocation2 + $0x34] sm:$0x1]
        %v2494 = vld [vmem:[#allocation2 + $0x38] sm:$0xf]
        %v2495 = vld [vmem:[#allocation2 + $0x3c] sm:$0x1]
        %v2513 = vunpack.c.l.s4 1966171168
        %v2514 = vunpack.c.0.s8 %v2513
        %v2515 = vlaneseq
        %v2516 = vshrl.u32 %v2515, 7
        %v2517 = vsub.s32 %v2514, %v2516
        %v2518 = vrot.slane %v2480, %v2517
        %v2519 = vcombine.high %v2518, %v2518
        %v2521 = vunpack.c.l.s4 1966171168
        %v2522 = vunpack.c.0.s8 %v2521
        %v2523 = vlaneseq
        %v2524 = vshrl.u32 %v2523, 7
        %v2525 = vsub.s32 %v2522, %v2524
        %v2526 = vrot.slane %v2518, %v2525
        %v2528 = vunpack.c.l.s4 1966171168
        %v2529 = vunpack.c.0.s8 %v2528
        %v2530 = vlaneseq
        %v2531 = vshrl.u32 %v2530, 7
        %v2532 = vsub.s32 %v2529, %v2531
        %v2533 = vrot.slane %v2519, %v2532
        %v2534 = vcombine.high %v2526, %v2526
        %v2535 = vcombine.high %v2533, %v2533
        %v2537 = vunpack.c.l.s4 1966171168
        %v2538 = vunpack.c.0.s8 %v2537
        %v2539 = vlaneseq
        %v2540 = vshrl.u32 %v2539, 7
        %v2541 = vsub.s32 %v2538, %v2540
        %v2542 = vrot.slane %v2481, %v2541
        %v2544 = vunpack.c.l.s4 1966171168
        %v2545 = vunpack.c.0.s8 %v2544
        %v2546 = vlaneseq
        %v2547 = vshrl.u32 %v2546, 7
        %v2548 = vsub.s32 %v2545, %v2547
        %v2549 = vrot.slane %v2542, %v2548
        %v2551 = vunpack.c.l.s4 1966171168
        %v2552 = vunpack.c.0.s8 %v2551
        %v2553 = vlaneseq
        %v2554 = vshrl.u32 %v2553, 7
        %v2555 = vsub.s32 %v2552, %v2554
        %v2556 = vrot.slane %v2482, %v2555
        %v2557 = vcombine.high %v2556, %v2556
        %v2559 = vunpack.c.l.s4 1966171168
        %v2560 = vunpack.c.0.s8 %v2559
        %v2561 = vlaneseq
        %v2562 = vshrl.u32 %v2561, 7
        %v2563 = vsub.s32 %v2560, %v2562
        %v2564 = vrot.slane %v2556, %v2563
        %v2566 = vunpack.c.l.s4 1966171168
        %v2567 = vunpack.c.0.s8 %v2566
        %v2568 = vlaneseq
        %v2569 = vshrl.u32 %v2568, 7
        %v2570 = vsub.s32 %v2567, %v2569
        %v2571 = vrot.slane %v2557, %v2570
        %v2572 = vcombine.high %v2564, %v2564
        %v2573 = vcombine.high %v2571, %v2571
        %v2575 = vunpack.c.l.s4 1966171168
        %v2576 = vunpack.c.0.s8 %v2575
        %v2577 = vlaneseq
        %v2578 = vshrl.u32 %v2577, 7
        %v2579 = vsub.s32 %v2576, %v2578
        %v2580 = vrot.slane %v2483, %v2579
        %v2582 = vunpack.c.l.s4 1966171168
        %v2583 = vunpack.c.0.s8 %v2582
        %v2584 = vlaneseq
        %v2585 = vshrl.u32 %v2584, 7
        %v2586 = vsub.s32 %v2583, %v2585
        %v2587 = vrot.slane %v2580, %v2586
        %v2589 = vunpack.c.l.s4 1966171168
        %v2590 = vunpack.c.0.s8 %v2589
        %v2591 = vlaneseq
        %v2592 = vshrl.u32 %v2591, 7
        %v2593 = vsub.s32 %v2590, %v2592
        %v2594 = vrot.slane %v2484, %v2593
        %v2595 = vcombine.high %v2594, %v2594
        %v2597 = vunpack.c.l.s4 1966171168
        %v2598 = vunpack.c.0.s8 %v2597
        %v2599 = vlaneseq
        %v2600 = vshrl.u32 %v2599, 7
        %v2601 = vsub.s32 %v2598, %v2600
        %v2602 = vrot.slane %v2594, %v2601
        %v2604 = vunpack.c.l.s4 1966171168
        %v2605 = vunpack.c.0.s8 %v2604
        %v2606 = vlaneseq
        %v2607 = vshrl.u32 %v2606, 7
        %v2608 = vsub.s32 %v2605, %v2607
        %v2609 = vrot.slane %v2595, %v2608
        %v2610 = vcombine.high %v2602, %v2602
        %v2611 = vcombine.high %v2609, %v2609
        %v2613 = vunpack.c.l.s4 1966171168
        %v2614 = vunpack.c.0.s8 %v2613
        %v2615 = vlaneseq
        %v2616 = vshrl.u32 %v2615, 7
        %v2617 = vsub.s32 %v2614, %v2616
        %v2618 = vrot.slane %v2485, %v2617
        %v2620 = vunpack.c.l.s4 1966171168
        %v2621 = vunpack.c.0.s8 %v2620
        %v2622 = vlaneseq
        %v2623 = vshrl.u32 %v2622, 7
        %v2624 = vsub.s32 %v2621, %v2623
        %v2625 = vrot.slane %v2618, %v2624
        %v2627 = vunpack.c.l.s4 1966171168
        %v2628 = vunpack.c.0.s8 %v2627
        %v2629 = vlaneseq
        %v2630 = vshrl.u32 %v2629, 7
        %v2631 = vsub.s32 %v2628, %v2630
        %v2632 = vrot.slane %v2486, %v2631
        %v2633 = vcombine.high %v2632, %v2632
        %v2635 = vunpack.c.l.s4 1966171168
        %v2636 = vunpack.c.0.s8 %v2635
        %v2637 = vlaneseq
        %v2638 = vshrl.u32 %v2637, 7
        %v2639 = vsub.s32 %v2636, %v2638
        %v2640 = vrot.slane %v2632, %v2639
        %v2642 = vunpack.c.l.s4 1966171168
        %v2643 = vunpack.c.0.s8 %v2642
        %v2644 = vlaneseq
        %v2645 = vshrl.u32 %v2644, 7
        %v2646 = vsub.s32 %v2643, %v2645
        %v2647 = vrot.slane %v2633, %v2646
        %v2648 = vcombine.high %v2640, %v2640
        %v2649 = vcombine.high %v2647, %v2647
        %v2651 = vunpack.c.l.s4 1966171168
        %v2652 = vunpack.c.0.s8 %v2651
        %v2653 = vlaneseq
        %v2654 = vshrl.u32 %v2653, 7
        %v2655 = vsub.s32 %v2652, %v2654
        %v2656 = vrot.slane %v2487, %v2655
        %v2658 = vunpack.c.l.s4 1966171168
        %v2659 = vunpack.c.0.s8 %v2658
        %v2660 = vlaneseq
        %v2661 = vshrl.u32 %v2660, 7
        %v2662 = vsub.s32 %v2659, %v2661
        %v2663 = vrot.slane %v2656, %v2662
        %v2665 = vunpack.c.l.s4 1966171168
        %v2666 = vunpack.c.0.s8 %v2665
        %v2667 = vlaneseq
        %v2668 = vshrl.u32 %v2667, 7
        %v2669 = vsub.s32 %v2666, %v2668
        %v2670 = vrot.slane %v2488, %v2669
        %v2671 = vcombine.high %v2670, %v2670
        %v2673 = vunpack.c.l.s4 1966171168
        %v2674 = vunpack.c.0.s8 %v2673
        %v2675 = vlaneseq
        %v2676 = vshrl.u32 %v2675, 7
        %v2677 = vsub.s32 %v2674, %v2676
        %v2678 = vrot.slane %v2670, %v2677
        %v2680 = vunpack.c.l.s4 1966171168
        %v2681 = vunpack.c.0.s8 %v2680
        %v2682 = vlaneseq
        %v2683 = vshrl.u32 %v2682, 7
        %v2684 = vsub.s32 %v2681, %v2683
        %v2685 = vrot.slane %v2671, %v2684
        %v2686 = vcombine.high %v2678, %v2678
        %v2687 = vcombine.high %v2685, %v2685
        %v2689 = vunpack.c.l.s4 1966171168
        %v2690 = vunpack.c.0.s8 %v2689
        %v2691 = vlaneseq
        %v2692 = vshrl.u32 %v2691, 7
        %v2693 = vsub.s32 %v2690, %v2692
        %v2694 = vrot.slane %v2489, %v2693
        %v2696 = vunpack.c.l.s4 1966171168
        %v2697 = vunpack.c.0.s8 %v2696
        %v2698 = vlaneseq
        %v2699 = vshrl.u32 %v2698, 7
        %v2700 = vsub.s32 %v2697, %v2699
        %v2701 = vrot.slane %v2694, %v2700
        %v2703 = vunpack.c.l.s4 1966171168
        %v2704 = vunpack.c.0.s8 %v2703
        %v2705 = vlaneseq
        %v2706 = vshrl.u32 %v2705, 7
        %v2707 = vsub.s32 %v2704, %v2706
        %v2708 = vrot.slane %v2490, %v2707
        %v2709 = vcombine.high %v2708, %v2708
        %v2711 = vunpack.c.l.s4 1966171168
        %v2712 = vunpack.c.0.s8 %v2711
        %v2713 = vlaneseq
        %v2714 = vshrl.u32 %v2713, 7
        %v2715 = vsub.s32 %v2712, %v2714
        %v2716 = vrot.slane %v2708, %v2715
        %v2718 = vunpack.c.l.s4 1966171168
        %v2719 = vunpack.c.0.s8 %v2718
        %v2720 = vlaneseq
        %v2721 = vshrl.u32 %v2720, 7
        %v2722 = vsub.s32 %v2719, %v2721
        %v2723 = vrot.slane %v2709, %v2722
        %v2724 = vcombine.high %v2716, %v2716
        %v2725 = vcombine.high %v2723, %v2723
        %v2727 = vunpack.c.l.s4 1966171168
        %v2728 = vunpack.c.0.s8 %v2727
        %v2729 = vlaneseq
        %v2730 = vshrl.u32 %v2729, 7
        %v2731 = vsub.s32 %v2728, %v2730
        %v2732 = vrot.slane %v2491, %v2731
        %v2734 = vunpack.c.l.s4 1966171168
        %v2735 = vunpack.c.0.s8 %v2734
        %v2736 = vlaneseq
        %v2737 = vshrl.u32 %v2736, 7
        %v2738 = vsub.s32 %v2735, %v2737
        %v2739 = vrot.slane %v2732, %v2738
        %v2741 = vunpack.c.l.s4 1966171168
        %v2742 = vunpack.c.0.s8 %v2741
        %v2743 = vlaneseq
        %v2744 = vshrl.u32 %v2743, 7
        %v2745 = vsub.s32 %v2742, %v2744
        %v2746 = vrot.slane %v2492, %v2745
        %v2747 = vcombine.high %v2746, %v2746
        %v2749 = vunpack.c.l.s4 1966171168
        %v2750 = vunpack.c.0.s8 %v2749
        %v2751 = vlaneseq
        %v2752 = vshrl.u32 %v2751, 7
        %v2753 = vsub.s32 %v2750, %v2752
        %v2754 = vrot.slane %v2746, %v2753
        %v2756 = vunpack.c.l.s4 1966171168
        %v2757 = vunpack.c.0.s8 %v2756
        %v2758 = vlaneseq
        %v2759 = vshrl.u32 %v2758, 7
        %v2760 = vsub.s32 %v2757, %v2759
        %v2761 = vrot.slane %v2747, %v2760
        %v2762 = vcombine.high %v2754, %v2754
        %v2763 = vcombine.high %v2761, %v2761
        %v2765 = vunpack.c.l.s4 1966171168
        %v2766 = vunpack.c.0.s8 %v2765
        %v2767 = vlaneseq
        %v2768 = vshrl.u32 %v2767, 7
        %v2769 = vsub.s32 %v2766, %v2768
        %v2770 = vrot.slane %v2493, %v2769
        %v2772 = vunpack.c.l.s4 1966171168
        %v2773 = vunpack.c.0.s8 %v2772
        %v2774 = vlaneseq
        %v2775 = vshrl.u32 %v2774, 7
        %v2776 = vsub.s32 %v2773, %v2775
        %v2777 = vrot.slane %v2770, %v2776
        %v2779 = vunpack.c.l.s4 1966171168
        %v2780 = vunpack.c.0.s8 %v2779
        %v2781 = vlaneseq
        %v2782 = vshrl.u32 %v2781, 7
        %v2783 = vsub.s32 %v2780, %v2782
        %v2784 = vrot.slane %v2494, %v2783
        %v2785 = vcombine.high %v2784, %v2784
        %v2787 = vunpack.c.l.s4 1966171168
        %v2788 = vunpack.c.0.s8 %v2787
        %v2789 = vlaneseq
        %v2790 = vshrl.u32 %v2789, 7
        %v2791 = vsub.s32 %v2788, %v2790
        %v2792 = vrot.slane %v2784, %v2791
        %v2794 = vunpack.c.l.s4 1966171168
        %v2795 = vunpack.c.0.s8 %v2794
        %v2796 = vlaneseq
        %v2797 = vshrl.u32 %v2796, 7
        %v2798 = vsub.s32 %v2795, %v2797
        %v2799 = vrot.slane %v2785, %v2798
        %v2800 = vcombine.high %v2792, %v2792
        %v2801 = vcombine.high %v2799, %v2799
        %v2803 = vunpack.c.l.s4 1966171168
        %v2804 = vunpack.c.0.s8 %v2803
        %v2805 = vlaneseq
        %v2806 = vshrl.u32 %v2805, 7
        %v2807 = vsub.s32 %v2804, %v2806
        %v2808 = vrot.slane %v2495, %v2807
        %v2810 = vunpack.c.l.s4 1966171168
        %v2811 = vunpack.c.0.s8 %v2810
        %v2812 = vlaneseq
        %v2813 = vshrl.u32 %v2812, 7
        %v2814 = vsub.s32 %v2811, %v2813
        %v2815 = vrot.slane %v2808, %v2814
        %v2816 = vld [vmem:[%s6] sm:$0xff]
        %v2817 = vld [vmem:[%s6 + $0x8] sm:$0xf]
        %v2818 = vld [vmem:[%s6 + $0xc] sm:$0xff]
        %v2819 = vld [vmem:[%s6 + $0x14] sm:$0xf]
        %v2820 = vld [vmem:[%s6 + $0x18] sm:$0xff]
        %v2821 = vld [vmem:[%s6 + $0x20] sm:$0xf]
        %v2822 = vld [vmem:[%s6 + $0x24] sm:$0xff]
        %v2823 = vld [vmem:[%s6 + $0x2c] sm:$0xf]
        %v2824 = vld [vmem:[%s6 + $0x30] sm:$0xff]
        %v2825 = vld [vmem:[%s6 + $0x38] sm:$0xf]
        %v2826 = vld [vmem:[%s6 + $0x3c] sm:$0xff]
        %v2827 = vld [vmem:[%s6 + $0x44] sm:$0xf]
        %v2828 = vld [vmem:[%s6 + $0x48] sm:$0xff]
        %v2829 = vld [vmem:[%s6 + $0x50] sm:$0xf]
        %v2830 = vld [vmem:[%s6 + $0x54] sm:$0xff]
        %v2831 = vld [vmem:[%s6 + $0x5c] sm:$0xf]
        %v2832 = vld [vmem:[%s6 + $0x60] sm:$0xff]
        %v2833 = vld [vmem:[%s6 + $0x68] sm:$0xf]
        %v2834 = vld [vmem:[%s6 + $0x6c] sm:$0xff]
        %v2835 = vld [vmem:[%s6 + $0x74] sm:$0xf]
        %v2836 = vld [vmem:[%s6 + $0x78] sm:$0xff]
        %v2837 = vld [vmem:[%s6 + $0x80] sm:$0xf]
        %v2838 = vld [vmem:[%s6 + $0x84] sm:$0xff]
        %v2839 = vld [vmem:[%s6 + $0x8c] sm:$0xf]
        %v2840 = vld [vmem:[%s6 + $0x90] sm:$0xff]
        %v2841 = vld [vmem:[%s6 + $0x98] sm:$0xf]
        %v2842 = vld [vmem:[%s6 + $0x9c] sm:$0xff]
        %v2843 = vld [vmem:[%s6 + $0xa4] sm:$0xf]
        %v2844 = vld [vmem:[%s6 + $0xa8] sm:$0xff]
        %v2845 = vld [vmem:[%s6 + $0xb0] sm:$0xf]
        %v2846 = vld [vmem:[%s6 + $0xb4] sm:$0xff]
        %v2847 = vld [vmem:[%s6 + $0xbc] sm:$0xf]
        %v2848 = vcombine.low %v2526, %v2533
        %v2849 = vcombine.low %v2534, %v2535
        %v2850 = vcombine.low %v2549, %v2564
        %v2851 = vcombine.low %v2571, %v2572
        %v2853 = vunpack.c.l.s4 1966171168
        %v2854 = vunpack.c.0.s8 %v2853
        %v2855 = vlaneseq
        %v2856 = vshrl.u32 %v2855, 7
        %v2857 = vsub.s32 %v2854, %v2856
        %v2858 = vrot.slane %v2848, %v2857
        %v2860 = vunpack.c.l.s4 1966171168
        %v2861 = vunpack.c.0.s8 %v2860
        %v2862 = vlaneseq
        %v2863 = vshrl.u32 %v2862, 7
        %v2864 = vsub.s32 %v2861, %v2863
        %v2865 = vrot.slane %v2849, %v2864
        %v2867 = vunpack.c.l.s4 1966171168
        %v2868 = vunpack.c.0.s8 %v2867
        %v2869 = vlaneseq
        %v2870 = vshrl.u32 %v2869, 7
        %v2871 = vsub.s32 %v2868, %v2870
        %v2872 = vrot.slane %v2850, %v2871
        %v2874 = vunpack.c.l.s4 1966171168
        %v2875 = vunpack.c.0.s8 %v2874
        %v2876 = vlaneseq
        %v2877 = vshrl.u32 %v2876, 7
        %v2878 = vsub.s32 %v2875, %v2877
        %v2879 = vrot.slane %v2851, %v2878
        %v2880 = vcombine.low %v2858, %v2865
        %v2881 = vcombine.low %v2872, %v2879
        %v2883 = vunpack.c.l.s4 1966171168
        %v2884 = vunpack.c.0.s8 %v2883
        %v2885 = vlaneseq
        %v2886 = vshrl.u32 %v2885, 7
        %v2887 = vsub.s32 %v2884, %v2886
        %v2888 = vrot.slane %v2880, %v2887
        %v2890 = vunpack.c.l.s4 1966171168
        %v2891 = vunpack.c.0.s8 %v2890
        %v2892 = vlaneseq
        %v2893 = vshrl.u32 %v2892, 7
        %v2894 = vsub.s32 %v2891, %v2893
        %v2895 = vrot.slane %v2881, %v2894
        %v2896 = vcombine.low %v2888, %v2895
        %v2897 = vcombine.low %v2573, %v2587
        %v2898 = vcombine.low %v2602, %v2609
        %v2899 = vcombine.low %v2610, %v2611
        %v2900 = vcombine.low %v2625, %v2640
        %v2902 = vunpack.c.l.s4 1966171168
        %v2903 = vunpack.c.0.s8 %v2902
        %v2904 = vlaneseq
        %v2905 = vshrl.u32 %v2904, 7
        %v2906 = vsub.s32 %v2903, %v2905
        %v2907 = vrot.slane %v2897, %v2906
        %v2909 = vunpack.c.l.s4 1966171168
        %v2910 = vunpack.c.0.s8 %v2909
        %v2911 = vlaneseq
        %v2912 = vshrl.u32 %v2911, 7
        %v2913 = vsub.s32 %v2910, %v2912
        %v2914 = vrot.slane %v2898, %v2913
        %v2916 = vunpack.c.l.s4 1966171168
        %v2917 = vunpack.c.0.s8 %v2916
        %v2918 = vlaneseq
        %v2919 = vshrl.u32 %v2918, 7
        %v2920 = vsub.s32 %v2917, %v2919
        %v2921 = vrot.slane %v2899, %v2920
        %v2923 = vunpack.c.l.s4 1966171168
        %v2924 = vunpack.c.0.s8 %v2923
        %v2925 = vlaneseq
        %v2926 = vshrl.u32 %v2925, 7
        %v2927 = vsub.s32 %v2924, %v2926
        %v2928 = vrot.slane %v2900, %v2927
        %v2929 = vcombine.low %v2907, %v2914
        %v2930 = vcombine.low %v2921, %v2928
        %v2932 = vunpack.c.l.s4 1966171168
        %v2933 = vunpack.c.0.s8 %v2932
        %v2934 = vlaneseq
        %v2935 = vshrl.u32 %v2934, 7
        %v2936 = vsub.s32 %v2933, %v2935
        %v2937 = vrot.slane %v2929, %v2936
        %v2939 = vunpack.c.l.s4 1966171168
        %v2940 = vunpack.c.0.s8 %v2939
        %v2941 = vlaneseq
        %v2942 = vshrl.u32 %v2941, 7
        %v2943 = vsub.s32 %v2940, %v2942
        %v2944 = vrot.slane %v2930, %v2943
        %v2945 = vcombine.low %v2937, %v2944
        %v2946 = vcombine.low %v2647, %v2648
        %v2947 = vcombine.low %v2649, %v2663
        %v2948 = vcombine.low %v2678, %v2685
        %v2949 = vcombine.low %v2686, %v2687
        %v2951 = vunpack.c.l.s4 1966171168
        %v2952 = vunpack.c.0.s8 %v2951
        %v2953 = vlaneseq
        %v2954 = vshrl.u32 %v2953, 7
        %v2955 = vsub.s32 %v2952, %v2954
        %v2956 = vrot.slane %v2946, %v2955
        %v2958 = vunpack.c.l.s4 1966171168
        %v2959 = vunpack.c.0.s8 %v2958
        %v2960 = vlaneseq
        %v2961 = vshrl.u32 %v2960, 7
        %v2962 = vsub.s32 %v2959, %v2961
        %v2963 = vrot.slane %v2947, %v2962
        %v2965 = vunpack.c.l.s4 1966171168
        %v2966 = vunpack.c.0.s8 %v2965
        %v2967 = vlaneseq
        %v2968 = vshrl.u32 %v2967, 7
        %v2969 = vsub.s32 %v2966, %v2968
        %v2970 = vrot.slane %v2948, %v2969
        %v2972 = vunpack.c.l.s4 1966171168
        %v2973 = vunpack.c.0.s8 %v2972
        %v2974 = vlaneseq
        %v2975 = vshrl.u32 %v2974, 7
        %v2976 = vsub.s32 %v2973, %v2975
        %v2977 = vrot.slane %v2949, %v2976
        %v2978 = vcombine.low %v2956, %v2963
        %v2979 = vcombine.low %v2970, %v2977
        %v2981 = vunpack.c.l.s4 1966171168
        %v2982 = vunpack.c.0.s8 %v2981
        %v2983 = vlaneseq
        %v2984 = vshrl.u32 %v2983, 7
        %v2985 = vsub.s32 %v2982, %v2984
        %v2986 = vrot.slane %v2978, %v2985
        %v2988 = vunpack.c.l.s4 1966171168
        %v2989 = vunpack.c.0.s8 %v2988
        %v2990 = vlaneseq
        %v2991 = vshrl.u32 %v2990, 7
        %v2992 = vsub.s32 %v2989, %v2991
        %v2993 = vrot.slane %v2979, %v2992
        %v2994 = vcombine.low %v2986, %v2993
        %v2995 = vcombine.low %v2701, %v2716
        %v2996 = vcombine.low %v2723, %v2724
        %v2997 = vcombine.low %v2725, %v2739
        %v2998 = vcombine.low %v2754, %v2761
        %v3000 = vunpack.c.l.s4 1966171168
        %v3001 = vunpack.c.0.s8 %v3000
        %v3002 = vlaneseq
        %v3003 = vshrl.u32 %v3002, 7
        %v3004 = vsub.s32 %v3001, %v3003
        %v3005 = vrot.slane %v2995, %v3004
        %v3007 = vunpack.c.l.s4 1966171168
        %v3008 = vunpack.c.0.s8 %v3007
        %v3009 = vlaneseq
        %v3010 = vshrl.u32 %v3009, 7
        %v3011 = vsub.s32 %v3008, %v3010
        %v3012 = vrot.slane %v2996, %v3011
        %v3014 = vunpack.c.l.s4 1966171168
        %v3015 = vunpack.c.0.s8 %v3014
        %v3016 = vlaneseq
        %v3017 = vshrl.u32 %v3016, 7
        %v3018 = vsub.s32 %v3015, %v3017
        %v3019 = vrot.slane %v2997, %v3018
        %v3021 = vunpack.c.l.s4 1966171168
        %v3022 = vunpack.c.0.s8 %v3021
        %v3023 = vlaneseq
        %v3024 = vshrl.u32 %v3023, 7
        %v3025 = vsub.s32 %v3022, %v3024
        %v3026 = vrot.slane %v2998, %v3025
        %v3027 = vcombine.low %v3005, %v3012
        %v3028 = vcombine.low %v3019, %v3026
        %v3030 = vunpack.c.l.s4 1966171168
        %v3031 = vunpack.c.0.s8 %v3030
        %v3032 = vlaneseq
        %v3033 = vshrl.u32 %v3032, 7
        %v3034 = vsub.s32 %v3031, %v3033
        %v3035 = vrot.slane %v3027, %v3034
        %v3037 = vunpack.c.l.s4 1966171168
        %v3038 = vunpack.c.0.s8 %v3037
        %v3039 = vlaneseq
        %v3040 = vshrl.u32 %v3039, 7
        %v3041 = vsub.s32 %v3038, %v3040
        %v3042 = vrot.slane %v3028, %v3041
        %v3043 = vcombine.low %v3035, %v3042
        %v3044 = vcombine.low %v2762, %v2763
        %v3045 = vcombine.low %v2777, %v2792
        %v3046 = vcombine.low %v2799, %v2800
        %v3047 = vcombine.low %v2801, %v2815
        %v3049 = vunpack.c.l.s4 1966171168
        %v3050 = vunpack.c.0.s8 %v3049
        %v3051 = vlaneseq
        %v3052 = vshrl.u32 %v3051, 7
        %v3053 = vsub.s32 %v3050, %v3052
        %v3054 = vrot.slane %v3044, %v3053
        %v3056 = vunpack.c.l.s4 1966171168
        %v3057 = vunpack.c.0.s8 %v3056
        %v3058 = vlaneseq
        %v3059 = vshrl.u32 %v3058, 7
        %v3060 = vsub.s32 %v3057, %v3059
        %v3061 = vrot.slane %v3045, %v3060
        %v3063 = vunpack.c.l.s4 1966171168
        %v3064 = vunpack.c.0.s8 %v3063
        %v3065 = vlaneseq
        %v3066 = vshrl.u32 %v3065, 7
        %v3067 = vsub.s32 %v3064, %v3066
        %v3068 = vrot.slane %v3046, %v3067
        %v3070 = vunpack.c.l.s4 1966171168
        %v3071 = vunpack.c.0.s8 %v3070
        %v3072 = vlaneseq
        %v3073 = vshrl.u32 %v3072, 7
        %v3074 = vsub.s32 %v3071, %v3073
        %v3075 = vrot.slane %v3047, %v3074
        %v3076 = vcombine.low %v3054, %v3061
        %v3077 = vcombine.low %v3068, %v3075
        %v3079 = vunpack.c.l.s4 1966171168
        %v3080 = vunpack.c.0.s8 %v3079
        %v3081 = vlaneseq
        %v3082 = vshrl.u32 %v3081, 7
        %v3083 = vsub.s32 %v3080, %v3082
        %v3084 = vrot.slane %v3076, %v3083
        %v3086 = vunpack.c.l.s4 1966171168
        %v3087 = vunpack.c.0.s8 %v3086
        %v3088 = vlaneseq
        %v3089 = vshrl.u32 %v3088, 7
        %v3090 = vsub.s32 %v3087, %v3089
        %v3091 = vrot.slane %v3077, %v3090
        %v3092 = vcombine.low %v3084, %v3091
        %v3130 = vunpack.c.l.b16 %v2816
        %v3131 = vunpack.c.h.b16 %v2816
        %v3132 = vunpack.c.l.b16 %v2817
        %v3133 = vunpack.c.l.b16 %v2818
        %v3134 = vunpack.c.h.b16 %v2818
        %v3135 = vunpack.c.l.b16 %v2819
        %v3136 = vunpack.c.l.b16 %v2820
        %v3137 = vunpack.c.h.b16 %v2820
        %v3138 = vunpack.c.l.b16 %v2821
        %v3139 = vunpack.c.l.b16 %v2822
        %v3140 = vunpack.c.h.b16 %v2822
        %v3141 = vunpack.c.l.b16 %v2823
        %v3142 = vunpack.c.l.b16 %v2824
        %v3143 = vunpack.c.h.b16 %v2824
        %v3144 = vunpack.c.l.b16 %v2825
        %v3145 = vunpack.c.l.b16 %v2826
        %v3146 = vunpack.c.h.b16 %v2826
        %v3147 = vunpack.c.l.b16 %v2827
        %v3148 = vunpack.c.l.b16 %v2828
        %v3149 = vunpack.c.h.b16 %v2828
        %v3150 = vunpack.c.l.b16 %v2829
        %v3151 = vunpack.c.l.b16 %v2830
        %v3152 = vunpack.c.h.b16 %v2830
        %v3153 = vunpack.c.l.b16 %v2831
        %v3154 = vunpack.c.l.b16 %v2832
        %v3155 = vunpack.c.h.b16 %v2832
        %v3156 = vunpack.c.l.b16 %v2833
        %v3157 = vunpack.c.l.b16 %v2834
        %v3158 = vunpack.c.h.b16 %v2834
        %v3159 = vunpack.c.l.b16 %v2835
        %v3160 = vunpack.c.l.b16 %v2836
        %v3161 = vunpack.c.h.b16 %v2836
        %v3162 = vunpack.c.l.b16 %v2837
        %v3163 = vunpack.c.l.b16 %v2838
        %v3164 = vunpack.c.h.b16 %v2838
        %v3165 = vunpack.c.l.b16 %v2839
        %v3166 = vunpack.c.l.b16 %v2840
        %v3167 = vunpack.c.h.b16 %v2840
        %v3168 = vunpack.c.l.b16 %v2841
        %v3169 = vunpack.c.l.b16 %v2842
        %v3170 = vunpack.c.h.b16 %v2842
        %v3171 = vunpack.c.l.b16 %v2843
        %v3172 = vunpack.c.l.b16 %v2844
        %v3173 = vunpack.c.h.b16 %v2844
        %v3174 = vunpack.c.l.b16 %v2845
        %v3175 = vunpack.c.l.b16 %v2846
        %v3176 = vunpack.c.h.b16 %v2846
        %v3177 = vunpack.c.l.b16 %v2847
        %v3178 = vpack.c.b16 %v3133, %v3130
        %v3179 = vpack.c.b16 %v3134, %v3131
        %v3180 = vpack.c.b16 %v3135, %v3132
        %v3181 = vpack.c.b16 %v3139, %v3136
        %v3182 = vpack.c.b16 %v3140, %v3137
        %v3183 = vpack.c.b16 %v3141, %v3138
        %v3184 = vpack.c.b16 %v3145, %v3142
        %v3185 = vpack.c.b16 %v3146, %v3143
        %v3186 = vpack.c.b16 %v3147, %v3144
        %v3187 = vpack.c.b16 %v3151, %v3148
        %v3188 = vpack.c.b16 %v3152, %v3149
        %v3189 = vpack.c.b16 %v3153, %v3150
        %v3190 = vpack.c.b16 %v3157, %v3154
        %v3191 = vpack.c.b16 %v3158, %v3155
        %v3192 = vpack.c.b16 %v3159, %v3156
        %v3193 = vpack.c.b16 %v3163, %v3160
        %v3194 = vpack.c.b16 %v3164, %v3161
        %v3195 = vpack.c.b16 %v3165, %v3162
        %v3196 = vpack.c.b16 %v3169, %v3166
        %v3197 = vpack.c.b16 %v3170, %v3167
        %v3198 = vpack.c.b16 %v3171, %v3168
        %v3199 = vpack.c.b16 %v3175, %v3172
        %v3200 = vpack.c.b16 %v3176, %v3173
        %v3201 = vpack.c.b16 %v3177, %v3174
        %3226 = vmatprep.subr.bf16.mxu0 %v3179
        %3227 = vmatpush1.bf16.msra.mxu0 %v3178
        %3228 = vmatprep.subr.bf16.mxu0 %v3182
        %3229 = vmatpush1.bf16.msra.mxu0 %v3181
        %3230 = vmatprep.subr.bf16.mxu0 %v3185
        %3231 = vmatpush1.bf16.msra.mxu0 %v3184
        %3232 = vmatprep.subr.bf16.mxu0 %v3188
        %3233 = vmatpush1.bf16.msra.mxu0 %v3187
        %3234 = vmatprep.subr.bf16.mxu0 %v3191
        %3235 = vmatpush1.bf16.msra.mxu0 %v3190
        %3236 = vmatprep.subr.bf16.mxu0 %v3194
        %3237 = vmatpush1.bf16.msra.mxu0 %v3193
        %3238 = vmatprep.subr.bf16.mxu0 %v3197
        %3239 = vmatpush1.bf16.msra.mxu0 %v3196
        %3240 = vmatprep.subr.bf16.mxu0 %v3200
        %3241 = vmatpush1.bf16.msra.mxu0 %v3199
        %3242 = vmatprep.subr.bf16.mxu0 0
        %3243 = vmatpush1.bf16.msra.mxu0 0
        %3244 = vmatprep.subr.bf16.mxu0 0
        %3245 = vmatpush1.bf16.msra.mxu0 0
        %3246 = vmatprep.subr.bf16.mxu0 0
        %3247 = vmatpush1.bf16.msra.mxu0 0
        %3248 = vmatprep.subr.bf16.mxu0 0
        %3249 = vmatpush1.bf16.msra.mxu0 0
        %3250 = vmatprep.subr.bf16.mxu0 0
        %3251 = vmatpush1.bf16.msra.mxu0 0
        %3252 = vmatprep.subr.bf16.mxu0 0
        %3253 = vmatpush1.bf16.msra.mxu0 0
        %3254 = vmatprep.subr.bf16.mxu0 0
        %3255 = vmatpush1.bf16.msra.mxu0 0
        %3256 = vmatprep.subr.bf16.mxu0 0
        %3257 = vmatpush1.bf16.msra.mxu0 0
        %3258 = vmatprep.mubr.bf16.mxu0 0
        %3259 = vmatmul.mubr.bf16.gmra.mrb[0].mxu0 %v2896
        %v3260 = vpop.f32.mrb[0].mxu0
        %v3261 = vadd.f32 0.0, %v3260
        %v3262 = vpop.f32.mrb[0].mxu0
        %v3263 = vadd.f32 0.0, %v3262
        %v3264 = vpop.f32.mrb[0].mxu0
        %v3265 = vadd.f32 0.0, %v3264
        %v3266 = vpop.f32.mrb[0].mxu0
        %v3267 = vadd.f32 0.0, %v3266
        %3268 = vmatprep.mubr.bf16.mxu0 0
        %3269 = vmatmul.mubr.bf16.gmra.mrb[0].mxu0 %v2945
        %v3270 = vpop.f32.mrb[0].mxu0
        %v3271 = vadd.f32 0.0, %v3270
        %v3272 = vpop.f32.mrb[0].mxu0
        %v3273 = vadd.f32 0.0, %v3272
        %v3274 = vpop.f32.mrb[0].mxu0
        %v3275 = vadd.f32 0.0, %v3274
        %v3276 = vpop.f32.mrb[0].mxu0
        %v3277 = vadd.f32 0.0, %v3276
        %3278 = vmatprep.mubr.bf16.mxu0 0
        %3279 = vmatmul.mubr.bf16.gmra.mrb[0].mxu0 %v2994
        %v3280 = vpop.f32.mrb[0].mxu0
        %v3281 = vadd.f32 0.0, %v3280
        %v3282 = vpop.f32.mrb[0].mxu0
        %v3283 = vadd.f32 0.0, %v3282
        %v3284 = vpop.f32.mrb[0].mxu0
        %v3285 = vadd.f32 0.0, %v3284
        %v3286 = vpop.f32.mrb[0].mxu0
        %v3287 = vadd.f32 0.0, %v3286
        %3288 = vmatprep.mubr.bf16.mxu0 0
        %3289 = vmatmul.mubr.bf16.gmra.mrb[0].mxu0 %v3043
        %v3290 = vpop.f32.mrb[0].mxu0
        %v3291 = vadd.f32 0.0, %v3290
        %v3292 = vpop.f32.mrb[0].mxu0
        %v3293 = vadd.f32 0.0, %v3292
        %v3294 = vpop.f32.mrb[0].mxu0
        %v3295 = vadd.f32 0.0, %v3294
        %v3296 = vpop.f32.mrb[0].mxu0
        %v3297 = vadd.f32 0.0, %v3296
        %3298 = vmatprep.mubr.bf16.mxu0 0
        %3299 = vmatmul.mubr.bf16.gmra.mrb[0].mxu0 %v3092
        %v3300 = vpop.f32.mrb[0].mxu0
        %v3301 = vadd.f32 0.0, %v3300
        %v3302 = vpop.f32.mrb[0].mxu0
        %v3303 = vadd.f32 0.0, %v3302
        %v3304 = vpop.f32.mrb[0].mxu0
        %v3305 = vadd.f32 0.0, %v3304
        %v3306 = vpop.f32.mrb[0].mxu0
        %v3307 = vadd.f32 0.0, %v3306
        %3308 = vdwg.mxu0
        %3309 = vmatprep.subr.bf16.mxu0 0
        %3310 = vmatpush1.bf16.msra.mxu0 %v3180
        %3311 = vmatprep.subr.bf16.mxu0 0
        %3312 = vmatpush1.bf16.msra.mxu0 %v3183
        %3313 = vmatprep.subr.bf16.mxu0 0
        %3314 = vmatpush1.bf16.msra.mxu0 %v3186
        %3315 = vmatprep.subr.bf16.mxu0 0
        %3316 = vmatpush1.bf16.msra.mxu0 %v3189
        %3317 = vmatprep.subr.bf16.mxu0 0
        %3318 = vmatpush1.bf16.msra.mxu0 %v3192
        %3319 = vmatprep.subr.bf16.mxu0 0
        %3320 = vmatpush1.bf16.msra.mxu0 %v3195
        %3321 = vmatprep.subr.bf16.mxu0 0
        %3322 = vmatpush1.bf16.msra.mxu0 %v3198
        %3323 = vmatprep.subr.bf16.mxu0 0
        %3324 = vmatpush1.bf16.msra.mxu0 %v3201
        %3325 = vmatprep.subr.bf16.mxu0 0
        %3326 = vmatpush1.bf16.msra.mxu0 0
        %3327 = vmatprep.subr.bf16.mxu0 0
        %3328 = vmatpush1.bf16.msra.mxu0 0
        %3329 = vmatprep.subr.bf16.mxu0 0
        %3330 = vmatpush1.bf16.msra.mxu0 0
        %3331 = vmatprep.subr.bf16.mxu0 0
        %3332 = vmatpush1.bf16.msra.mxu0 0
        %3333 = vmatprep.subr.bf16.mxu0 0
        %3334 = vmatpush1.bf16.msra.mxu0 0
        %3335 = vmatprep.subr.bf16.mxu0 0
        %3336 = vmatpush1.bf16.msra.mxu0 0
        %3337 = vmatprep.subr.bf16.mxu0 0
        %3338 = vmatpush1.bf16.msra.mxu0 0
        %3339 = vmatprep.subr.bf16.mxu0 0
        %3340 = vmatpush1.bf16.msra.mxu0 0
        %3341 = vmatprep.mubr.bf16.mxu0 0
        %3342 = vmatmul.mubr.bf16.gmra.mrb[0].mxu0 %v2896
        %v3343 = vpop.f32.mrb[0].mxu0
        %v3344 = vadd.f32 0.0, %v3343
        %v3345 = vpop.f32.mrb[0].mxu0
        %v3346 = vpop.f32.mrb[0].mxu0
        %v3347 = vadd.f32 0.0, %v3346
        %v3348 = vpop.f32.mrb[0].mxu0
        %3349 = vmatprep.mubr.bf16.mxu0 0
        %3350 = vmatmul.mubr.bf16.gmra.mrb[0].mxu0 %v2945
        %v3351 = vpop.f32.mrb[0].mxu0
        %v3352 = vadd.f32 0.0, %v3351
        %v3353 = vpop.f32.mrb[0].mxu0
        %v3354 = vpop.f32.mrb[0].mxu0
        %v3355 = vadd.f32 0.0, %v3354
        %v3356 = vpop.f32.mrb[0].mxu0
        %3357 = vmatprep.mubr.bf16.mxu0 0
        %3358 = vmatmul.mubr.bf16.gmra.mrb[0].mxu0 %v2994
        %v3359 = vpop.f32.mrb[0].mxu0
        %v3360 = vadd.f32 0.0, %v3359
        %v3361 = vpop.f32.mrb[0].mxu0
        %v3362 = vpop.f32.mrb[0].mxu0
        %v3363 = vadd.f32 0.0, %v3362
        %v3364 = vpop.f32.mrb[0].mxu0
        %3365 = vmatprep.mubr.bf16.mxu0 0
        %3366 = vmatmul.mubr.bf16.gmra.mrb[0].mxu0 %v3043
        %v3367 = vpop.f32.mrb[0].mxu0
        %v3368 = vadd.f32 0.0, %v3367
        %v3369 = vpop.f32.mrb[0].mxu0
        %v3370 = vpop.f32.mrb[0].mxu0
        %v3371 = vadd.f32 0.0, %v3370
        %v3372 = vpop.f32.mrb[0].mxu0
        %3373 = vmatprep.mubr.bf16.mxu0 0
        %3374 = vmatmul.mubr.bf16.gmra.mrb[0].mxu0 %v3092
        %v3375 = vpop.f32.mrb[0].mxu0
        %v3376 = vadd.f32 0.0, %v3375
        %v3377 = vpop.f32.mrb[0].mxu0
        %v3378 = vpop.f32.mrb[0].mxu0
        %v3379 = vadd.f32 0.0, %v3378
        %v3380 = vpop.f32.mrb[0].mxu0
        %3381 = vdwg.mxu0
        %v3412 = vcombine.low %v3261, %v3263
        %v3413 = vcombine.high %v3261, %v3263
        %v3414 = vcombine.high %v3344, %v3344
        %v3416 = vunpack.c.l.s4 1983009808
        %v3417 = vunpack.c.0.s8 %v3416
        %v3418 = vlaneseq
        %v3419 = vshrl.u32 %v3418, 7
        %v3420 = vsub.s32 %v3417, %v3419
        %v3421 = vrot.slane %v3412, %v3420
        %v3423 = vunpack.c.l.s4 1983009808
        %v3424 = vunpack.c.0.s8 %v3423
        %v3425 = vlaneseq
        %v3426 = vshrl.u32 %v3425, 7
        %v3427 = vsub.s32 %v3424, %v3426
        %v3428 = vrot.slane %v3413, %v3427
        %v3430 = vunpack.c.l.s4 1983009808
        %v3431 = vunpack.c.0.s8 %v3430
        %v3432 = vlaneseq
        %v3433 = vshrl.u32 %v3432, 7
        %v3434 = vsub.s32 %v3431, %v3433
        %v3435 = vrot.slane %v3344, %v3434
        %v3437 = vunpack.c.l.s4 1983009808
        %v3438 = vunpack.c.0.s8 %v3437
        %v3439 = vlaneseq
        %v3440 = vshrl.u32 %v3439, 7
        %v3441 = vsub.s32 %v3438, %v3440
        %v3442 = vrot.slane %v3414, %v3441
        %v3443 = vcombine.low %v3421, %v3435
        %v3444 = vcombine.high %v3421, %v3435
        %v3445 = vcombine.low %v3428, %v3442
        %v3446 = vcombine.high %v3428, %v3442
        %v3447 = vcombine.low %v3265, %v3267
        %v3448 = vcombine.high %v3265, %v3267
        %v3449 = vcombine.high %v3347, %v3347
        %v3451 = vunpack.c.l.s4 1983009808
        %v3452 = vunpack.c.0.s8 %v3451
        %v3453 = vlaneseq
        %v3454 = vshrl.u32 %v3453, 7
        %v3455 = vsub.s32 %v3452, %v3454
        %v3456 = vrot.slane %v3447, %v3455
        %v3458 = vunpack.c.l.s4 1983009808
        %v3459 = vunpack.c.0.s8 %v3458
        %v3460 = vlaneseq
        %v3461 = vshrl.u32 %v3460, 7
        %v3462 = vsub.s32 %v3459, %v3461
        %v3463 = vrot.slane %v3448, %v3462
        %v3465 = vunpack.c.l.s4 1983009808
        %v3466 = vunpack.c.0.s8 %v3465
        %v3467 = vlaneseq
        %v3468 = vshrl.u32 %v3467, 7
        %v3469 = vsub.s32 %v3466, %v3468
        %v3470 = vrot.slane %v3347, %v3469
        %v3472 = vunpack.c.l.s4 1983009808
        %v3473 = vunpack.c.0.s8 %v3472
        %v3474 = vlaneseq
        %v3475 = vshrl.u32 %v3474, 7
        %v3476 = vsub.s32 %v3473, %v3475
        %v3477 = vrot.slane %v3449, %v3476
        %v3478 = vcombine.low %v3456, %v3470
        %v3479 = vcombine.high %v3456, %v3470
        %v3480 = vcombine.low %v3463, %v3477
        %v3481 = vcombine.high %v3463, %v3477
        %v3482 = vcombine.low %v3271, %v3273
        %v3483 = vcombine.high %v3271, %v3273
        %v3484 = vcombine.high %v3352, %v3352
        %v3486 = vunpack.c.l.s4 1983009808
        %v3487 = vunpack.c.0.s8 %v3486
        %v3488 = vlaneseq
        %v3489 = vshrl.u32 %v3488, 7
        %v3490 = vsub.s32 %v3487, %v3489
        %v3491 = vrot.slane %v3482, %v3490
        %v3493 = vunpack.c.l.s4 1983009808
        %v3494 = vunpack.c.0.s8 %v3493
        %v3495 = vlaneseq
        %v3496 = vshrl.u32 %v3495, 7
        %v3497 = vsub.s32 %v3494, %v3496
        %v3498 = vrot.slane %v3483, %v3497
        %v3500 = vunpack.c.l.s4 1983009808
        %v3501 = vunpack.c.0.s8 %v3500
        %v3502 = vlaneseq
        %v3503 = vshrl.u32 %v3502, 7
        %v3504 = vsub.s32 %v3501, %v3503
        %v3505 = vrot.slane %v3352, %v3504
        %v3507 = vunpack.c.l.s4 1983009808
        %v3508 = vunpack.c.0.s8 %v3507
        %v3509 = vlaneseq
        %v3510 = vshrl.u32 %v3509, 7
        %v3511 = vsub.s32 %v3508, %v3510
        %v3512 = vrot.slane %v3484, %v3511
        %v3513 = vcombine.low %v3491, %v3505
        %v3514 = vcombine.high %v3491, %v3505
        %v3515 = vcombine.low %v3498, %v3512
        %v3516 = vcombine.high %v3498, %v3512
        %v3517 = vcombine.low %v3275, %v3277
        %v3518 = vcombine.high %v3275, %v3277
        %v3519 = vcombine.high %v3355, %v3355
        %v3521 = vunpack.c.l.s4 1983009808
        %v3522 = vunpack.c.0.s8 %v3521
        %v3523 = vlaneseq
        %v3524 = vshrl.u32 %v3523, 7
        %v3525 = vsub.s32 %v3522, %v3524
        %v3526 = vrot.slane %v3517, %v3525
        %v3528 = vunpack.c.l.s4 1983009808
        %v3529 = vunpack.c.0.s8 %v3528
        %v3530 = vlaneseq
        %v3531 = vshrl.u32 %v3530, 7
        %v3532 = vsub.s32 %v3529, %v3531
        %v3533 = vrot.slane %v3518, %v3532
        %v3535 = vunpack.c.l.s4 1983009808
        %v3536 = vunpack.c.0.s8 %v3535
        %v3537 = vlaneseq
        %v3538 = vshrl.u32 %v3537, 7
        %v3539 = vsub.s32 %v3536, %v3538
        %v3540 = vrot.slane %v3355, %v3539
        %v3542 = vunpack.c.l.s4 1983009808
        %v3543 = vunpack.c.0.s8 %v3542
        %v3544 = vlaneseq
        %v3545 = vshrl.u32 %v3544, 7
        %v3546 = vsub.s32 %v3543, %v3545
        %v3547 = vrot.slane %v3519, %v3546
        %v3548 = vcombine.low %v3526, %v3540
        %v3549 = vcombine.high %v3526, %v3540
        %v3550 = vcombine.low %v3533, %v3547
        %v3551 = vcombine.high %v3533, %v3547
        %v3552 = vcombine.low %v3281, %v3283
        %v3553 = vcombine.high %v3281, %v3283
        %v3554 = vcombine.high %v3360, %v3360
        %v3556 = vunpack.c.l.s4 1983009808
        %v3557 = vunpack.c.0.s8 %v3556
        %v3558 = vlaneseq
        %v3559 = vshrl.u32 %v3558, 7
        %v3560 = vsub.s32 %v3557, %v3559
        %v3561 = vrot.slane %v3552, %v3560
        %v3563 = vunpack.c.l.s4 1983009808
        %v3564 = vunpack.c.0.s8 %v3563
        %v3565 = vlaneseq
        %v3566 = vshrl.u32 %v3565, 7
        %v3567 = vsub.s32 %v3564, %v3566
        %v3568 = vrot.slane %v3553, %v3567
        %v3570 = vunpack.c.l.s4 1983009808
        %v3571 = vunpack.c.0.s8 %v3570
        %v3572 = vlaneseq
        %v3573 = vshrl.u32 %v3572, 7
        %v3574 = vsub.s32 %v3571, %v3573
        %v3575 = vrot.slane %v3360, %v3574
        %v3577 = vunpack.c.l.s4 1983009808
        %v3578 = vunpack.c.0.s8 %v3577
        %v3579 = vlaneseq
        %v3580 = vshrl.u32 %v3579, 7
        %v3581 = vsub.s32 %v3578, %v3580
        %v3582 = vrot.slane %v3554, %v3581
        %v3583 = vcombine.low %v3561, %v3575
        %v3584 = vcombine.high %v3561, %v3575
        %v3585 = vcombine.low %v3568, %v3582
        %v3586 = vcombine.high %v3568, %v3582
        %v3587 = vcombine.low %v3285, %v3287
        %v3588 = vcombine.high %v3285, %v3287
        %v3589 = vcombine.high %v3363, %v3363
        %v3591 = vunpack.c.l.s4 1983009808
        %v3592 = vunpack.c.0.s8 %v3591
        %v3593 = vlaneseq
        %v3594 = vshrl.u32 %v3593, 7
        %v3595 = vsub.s32 %v3592, %v3594
        %v3596 = vrot.slane %v3587, %v3595
        %v3598 = vunpack.c.l.s4 1983009808
        %v3599 = vunpack.c.0.s8 %v3598
        %v3600 = vlaneseq
        %v3601 = vshrl.u32 %v3600, 7
        %v3602 = vsub.s32 %v3599, %v3601
        %v3603 = vrot.slane %v3588, %v3602
        %v3605 = vunpack.c.l.s4 1983009808
        %v3606 = vunpack.c.0.s8 %v3605
        %v3607 = vlaneseq
        %v3608 = vshrl.u32 %v3607, 7
        %v3609 = vsub.s32 %v3606, %v3608
        %v3610 = vrot.slane %v3363, %v3609
        %v3612 = vunpack.c.l.s4 1983009808
        %v3613 = vunpack.c.0.s8 %v3612
        %v3614 = vlaneseq
        %v3615 = vshrl.u32 %v3614, 7
        %v3616 = vsub.s32 %v3613, %v3615
        %v3617 = vrot.slane %v3589, %v3616
        %v3618 = vcombine.low %v3596, %v3610
        %v3619 = vcombine.high %v3596, %v3610
        %v3620 = vcombine.low %v3603, %v3617
        %v3621 = vcombine.high %v3603, %v3617
        %v3622 = vcombine.low %v3291, %v3293
        %v3623 = vcombine.high %v3291, %v3293
        %v3624 = vcombine.high %v3368, %v3368
        %v3626 = vunpack.c.l.s4 1983009808
        %v3627 = vunpack.c.0.s8 %v3626
        %v3628 = vlaneseq
        %v3629 = vshrl.u32 %v3628, 7
        %v3630 = vsub.s32 %v3627, %v3629
        %v3631 = vrot.slane %v3622, %v3630
        %v3633 = vunpack.c.l.s4 1983009808
        %v3634 = vunpack.c.0.s8 %v3633
        %v3635 = vlaneseq
        %v3636 = vshrl.u32 %v3635, 7
        %v3637 = vsub.s32 %v3634, %v3636
        %v3638 = vrot.slane %v3623, %v3637
        %v3640 = vunpack.c.l.s4 1983009808
        %v3641 = vunpack.c.0.s8 %v3640
        %v3642 = vlaneseq
        %v3643 = vshrl.u32 %v3642, 7
        %v3644 = vsub.s32 %v3641, %v3643
        %v3645 = vrot.slane %v3368, %v3644
        %v3647 = vunpack.c.l.s4 1983009808
        %v3648 = vunpack.c.0.s8 %v3647
        %v3649 = vlaneseq
        %v3650 = vshrl.u32 %v3649, 7
        %v3651 = vsub.s32 %v3648, %v3650
        %v3652 = vrot.slane %v3624, %v3651
        %v3653 = vcombine.low %v3631, %v3645
        %v3654 = vcombine.high %v3631, %v3645
        %v3655 = vcombine.low %v3638, %v3652
        %v3656 = vcombine.high %v3638, %v3652
        %v3657 = vcombine.low %v3295, %v3297
        %v3658 = vcombine.high %v3295, %v3297
        %v3659 = vcombine.high %v3371, %v3371
        %v3661 = vunpack.c.l.s4 1983009808
        %v3662 = vunpack.c.0.s8 %v3661
        %v3663 = vlaneseq
        %v3664 = vshrl.u32 %v3663, 7
        %v3665 = vsub.s32 %v3662, %v3664
        %v3666 = vrot.slane %v3657, %v3665
        %v3668 = vunpack.c.l.s4 1983009808
        %v3669 = vunpack.c.0.s8 %v3668
        %v3670 = vlaneseq
        %v3671 = vshrl.u32 %v3670, 7
        %v3672 = vsub.s32 %v3669, %v3671
        %v3673 = vrot.slane %v3658, %v3672
        %v3675 = vunpack.c.l.s4 1983009808
        %v3676 = vunpack.c.0.s8 %v3675
        %v3677 = vlaneseq
        %v3678 = vshrl.u32 %v3677, 7
        %v3679 = vsub.s32 %v3676, %v3678
        %v3680 = vrot.slane %v3371, %v3679
        %v3682 = vunpack.c.l.s4 1983009808
        %v3683 = vunpack.c.0.s8 %v3682
        %v3684 = vlaneseq
        %v3685 = vshrl.u32 %v3684, 7
        %v3686 = vsub.s32 %v3683, %v3685
        %v3687 = vrot.slane %v3659, %v3686
        %v3688 = vcombine.low %v3666, %v3680
        %v3689 = vcombine.high %v3666, %v3680
        %v3690 = vcombine.low %v3673, %v3687
        %v3691 = vcombine.high %v3673, %v3687
        %v3692 = vcombine.low %v3301, %v3303
        %v3693 = vcombine.high %v3301, %v3303
        %v3694 = vcombine.high %v3376, %v3376
        %v3696 = vunpack.c.l.s4 1983009808
        %v3697 = vunpack.c.0.s8 %v3696
        %v3698 = vlaneseq
        %v3699 = vshrl.u32 %v3698, 7
        %v3700 = vsub.s32 %v3697, %v3699
        %v3701 = vrot.slane %v3692, %v3700
        %v3703 = vunpack.c.l.s4 1983009808
        %v3704 = vunpack.c.0.s8 %v3703
        %v3705 = vlaneseq
        %v3706 = vshrl.u32 %v3705, 7
        %v3707 = vsub.s32 %v3704, %v3706
        %v3708 = vrot.slane %v3693, %v3707
        %v3710 = vunpack.c.l.s4 1983009808
        %v3711 = vunpack.c.0.s8 %v3710
        %v3712 = vlaneseq
        %v3713 = vshrl.u32 %v3712, 7
        %v3714 = vsub.s32 %v3711, %v3713
        %v3715 = vrot.slane %v3376, %v3714
        %v3717 = vunpack.c.l.s4 1983009808
        %v3718 = vunpack.c.0.s8 %v3717
        %v3719 = vlaneseq
        %v3720 = vshrl.u32 %v3719, 7
        %v3721 = vsub.s32 %v3718, %v3720
        %v3722 = vrot.slane %v3694, %v3721
        %v3723 = vcombine.low %v3701, %v3715
        %v3724 = vcombine.high %v3701, %v3715
        %v3725 = vcombine.low %v3708, %v3722
        %v3726 = vcombine.high %v3708, %v3722
        %v3727 = vcombine.low %v3305, %v3307
        %v3728 = vcombine.high %v3305, %v3307
        %v3729 = vcombine.high %v3379, %v3379
        %v3731 = vunpack.c.l.s4 1983009808
        %v3732 = vunpack.c.0.s8 %v3731
        %v3733 = vlaneseq
        %v3734 = vshrl.u32 %v3733, 7
        %v3735 = vsub.s32 %v3732, %v3734
        %v3736 = vrot.slane %v3727, %v3735
        %v3738 = vunpack.c.l.s4 1983009808
        %v3739 = vunpack.c.0.s8 %v3738
        %v3740 = vlaneseq
        %v3741 = vshrl.u32 %v3740, 7
        %v3742 = vsub.s32 %v3739, %v3741
        %v3743 = vrot.slane %v3728, %v3742
        %v3745 = vunpack.c.l.s4 1983009808
        %v3746 = vunpack.c.0.s8 %v3745
        %v3747 = vlaneseq
        %v3748 = vshrl.u32 %v3747, 7
        %v3749 = vsub.s32 %v3746, %v3748
        %v3750 = vrot.slane %v3379, %v3749
        %v3752 = vunpack.c.l.s4 1983009808
        %v3753 = vunpack.c.0.s8 %v3752
        %v3754 = vlaneseq
        %v3755 = vshrl.u32 %v3754, 7
        %v3756 = vsub.s32 %v3753, %v3755
        %v3757 = vrot.slane %v3729, %v3756
        %v3758 = vcombine.low %v3736, %v3750
        %v3759 = vcombine.high %v3736, %v3750
        %v3760 = vcombine.low %v3743, %v3757
        %v3761 = vcombine.high %v3743, %v3757
        %v3794 = vadd.f32 %v3443, 0.0
        %v3795 = vadd.f32 %v3444, 0.0
        %v3796 = vadd.f32 %v3445, 0.0
        %v3797 = vadd.f32 %v3446, 0.0
        %v3798 = vadd.f32 %v3479, 0.0
        %v3799 = vadd.f32 %v3480, 0.0
        %v3800 = vadd.f32 %v3481, 0.0
        %v3801 = vadd.f32 %v3513, 0.0
        %v3802 = vadd.f32 %v3515, 0.0
        %v3803 = vadd.f32 %v3516, 0.0
        %v3804 = vadd.f32 %v3548, 0.0
        %v3805 = vadd.f32 %v3549, 0.0
        %v3806 = vadd.f32 %v3551, 0.0
        %v3807 = vadd.f32 %v3583, 0.0
        %v3808 = vadd.f32 %v3584, 0.0
        %v3809 = vadd.f32 %v3585, 0.0
        %v3810 = vadd.f32 %v3618, 0.0
        %v3811 = vadd.f32 %v3619, 0.0
        %v3812 = vadd.f32 %v3620, 0.0
        %v3813 = vadd.f32 %v3621, 0.0
        %v3814 = vadd.f32 %v3654, 0.0
        %v3815 = vadd.f32 %v3655, 0.0
        %v3816 = vadd.f32 %v3656, 0.0
        %v3817 = vadd.f32 %v3688, 0.0
        %v3818 = vadd.f32 %v3690, 0.0
        %v3819 = vadd.f32 %v3691, 0.0
        %v3820 = vadd.f32 %v3723, 0.0
        %v3821 = vadd.f32 %v3724, 0.0
        %v3822 = vadd.f32 %v3726, 0.0
        %v3823 = vadd.f32 %v3758, 0.0
        %v3824 = vadd.f32 %v3759, 0.0
        %v3825 = vadd.f32 %v3760, 0.0
        %vm3826 = vcmask 1040384
        %vm3827 = vcmask 1042434
        %vm3828 = vmor %vm3826, %vm3827
        %vm3829 = vcmask 1044484
        %vm3830 = vmor %vm3828, %vm3829
        %vm3831 = vcmask 1046534
        %vm3832 = vmor %vm3830, %vm3831
        %v3833 = vrot.slane %v3443, 7
        %v3834 = vrot.slane %v3833, 2
        %v3835 = vrot.slane %v3444, 7
        %v3836 = vsel %vm3832, %v3834, %v3835
        %v3837 = vrot.slane %v3835, 2
        %v3838 = vrot.slane %v3445, 7
        %v3839 = vsel %vm3832, %v3837, %v3838
        %v3840 = vrot.slane %v3838, 2
        %v3841 = vrot.slane %v3446, 7
        %v3842 = vsel %vm3832, %v3840, %v3841
        %v3843 = vrot.slane %v3841, 2
        %v3844 = vrot.slane %v3478, 7
        %v3845 = vsel %vm3832, %v3843, %v3844
        %v3846 = vrot.slane %v3479, 7
        %v3847 = vrot.slane %v3846, 2
        %v3848 = vrot.slane %v3480, 7
        %v3849 = vsel %vm3832, %v3847, %v3848
        %v3850 = vrot.slane %v3848, 2
        %v3851 = vrot.slane %v3481, 7
        %v3852 = vsel %vm3832, %v3850, %v3851
        %v3853 = vrot.slane %v3851, 2
        %v3854 = vrot.slane %v3513, 7
        %v3855 = vsel %vm3832, %v3853, %v3854
        %v3856 = vrot.slane %v3854, 2
        %v3857 = vrot.slane %v3514, 7
        %v3858 = vsel %vm3832, %v3856, %v3857
        %v3859 = vrot.slane %v3515, 7
        %v3860 = vrot.slane %v3859, 2
        %v3861 = vrot.slane %v3516, 7
        %v3862 = vsel %vm3832, %v3860, %v3861
        %v3863 = vrot.slane %v3861, 2
        %v3864 = vrot.slane %v3548, 7
        %v3865 = vsel %vm3832, %v3863, %v3864
        %v3866 = vrot.slane %v3864, 2
        %v3867 = vrot.slane %v3549, 7
        %v3868 = vsel %vm3832, %v3866, %v3867
        %v3869 = vrot.slane %v3867, 2
        %v3870 = vrot.slane %v3550, 7
        %v3871 = vsel %vm3832, %v3869, %v3870
        %v3872 = vrot.slane %v3551, 7
        %v3873 = vrot.slane %v3872, 2
        %v3874 = vrot.slane %v3583, 7
        %v3875 = vsel %vm3832, %v3873, %v3874
        %v3876 = vrot.slane %v3874, 2
        %v3877 = vrot.slane %v3584, 7
        %v3878 = vsel %vm3832, %v3876, %v3877
        %v3879 = vrot.slane %v3877, 2
        %v3880 = vrot.slane %v3585, 7
        %v3881 = vsel %vm3832, %v3879, %v3880
        %v3882 = vrot.slane %v3880, 2
        %v3883 = vrot.slane %v3586, 7
        %v3884 = vsel %vm3832, %v3882, %v3883
        %v3885 = vrot.slane %v3618, 7
        %v3886 = vrot.slane %v3885, 2
        %v3887 = vrot.slane %v3619, 7
        %v3888 = vsel %vm3832, %v3886, %v3887
        %v3889 = vrot.slane %v3887, 2
        %v3890 = vrot.slane %v3620, 7
        %v3891 = vsel %vm3832, %v3889, %v3890
        %v3892 = vrot.slane %v3890, 2
        %v3893 = vrot.slane %v3621, 7
        %v3894 = vsel %vm3832, %v3892, %v3893
        %v3895 = vrot.slane %v3893, 2
        %v3896 = vrot.slane %v3653, 7
        %v3897 = vsel %vm3832, %v3895, %v3896
        %v3898 = vrot.slane %v3654, 7
        %v3899 = vrot.slane %v3898, 2
        %v3900 = vrot.slane %v3655, 7
        %v3901 = vsel %vm3832, %v3899, %v3900
        %v3902 = vrot.slane %v3900, 2
        %v3903 = vrot.slane %v3656, 7
        %v3904 = vsel %vm3832, %v3902, %v3903
        %v3905 = vrot.slane %v3903, 2
        %v3906 = vrot.slane %v3688, 7
        %v3907 = vsel %vm3832, %v3905, %v3906
        %v3908 = vrot.slane %v3906, 2
        %v3909 = vrot.slane %v3689, 7
        %v3910 = vsel %vm3832, %v3908, %v3909
        %v3911 = vrot.slane %v3690, 7
        %v3912 = vrot.slane %v3911, 2
        %v3913 = vrot.slane %v3691, 7
        %v3914 = vsel %vm3832, %v3912, %v3913
        %v3915 = vrot.slane %v3913, 2
        %v3916 = vrot.slane %v3723, 7
        %v3917 = vsel %vm3832, %v3915, %v3916
        %v3918 = vrot.slane %v3916, 2
        %v3919 = vrot.slane %v3724, 7
        %v3920 = vsel %vm3832, %v3918, %v3919
        %v3921 = vrot.slane %v3919, 2
        %v3922 = vrot.slane %v3725, 7
        %v3923 = vsel %vm3832, %v3921, %v3922
        %v3924 = vrot.slane %v3726, 7
        %v3925 = vrot.slane %v3924, 2
        %v3926 = vrot.slane %v3758, 7
        %v3927 = vsel %vm3832, %v3925, %v3926
        %v3928 = vrot.slane %v3926, 2
        %v3929 = vrot.slane %v3759, 7
        %v3930 = vsel %vm3832, %v3928, %v3929
        %v3931 = vrot.slane %v3929, 2
        %v3932 = vrot.slane %v3760, 7
        %v3933 = vsel %vm3832, %v3931, %v3932
        %v3934 = vrot.slane %v3932, 2
        %v3935 = vrot.slane %v3761, 7
        %v3936 = vsel %vm3832, %v3934, %v3935
        %v3937 = vrot.slane %v3836, 2
        %v3938 = vrot.slane %v3839, 2
        %v3939 = vrot.slane %v3842, 2
        %v3940 = vrot.slane %v3845, 2
        %v3941 = vrot.slane %v3849, 2
        %v3942 = vrot.slane %v3852, 2
        %v3943 = vrot.slane %v3855, 2
        %v3944 = vrot.slane %v3858, 2
        %v3945 = vrot.slane %v3862, 2
        %v3946 = vrot.slane %v3865, 2
        %v3947 = vrot.slane %v3868, 2
        %v3948 = vrot.slane %v3871, 2
        %v3949 = vrot.slane %v3875, 2
        %v3950 = vrot.slane %v3878, 2
        %v3951 = vrot.slane %v3881, 2
        %v3952 = vrot.slane %v3884, 2
        %v3953 = vrot.slane %v3888, 2
        %v3954 = vrot.slane %v3891, 2
        %v3955 = vrot.slane %v3894, 2
        %v3956 = vrot.slane %v3897, 2
        %v3957 = vrot.slane %v3901, 2
        %v3958 = vrot.slane %v3904, 2
        %v3959 = vrot.slane %v3907, 2
        %v3960 = vrot.slane %v3910, 2
        %v3961 = vrot.slane %v3914, 2
        %v3962 = vrot.slane %v3917, 2
        %v3963 = vrot.slane %v3920, 2
        %v3964 = vrot.slane %v3923, 2
        %v3965 = vrot.slane %v3927, 2
        %v3966 = vrot.slane %v3930, 2
        %v3967 = vrot.slane %v3933, 2
        %v3968 = vrot.slane %v3936, 2
        %v4001 = vadd.f32 %v3794, %v3937
        %v4002 = vadd.f32 %v3795, %v3938
        %v4003 = vadd.f32 %v3796, %v3939
        %v4004 = vadd.f32 %v3797, %v3940
        %v4005 = vadd.f32 %v3798, %v3941
        %v4006 = vadd.f32 %v3799, %v3942
        %v4007 = vadd.f32 %v3800, %v3943
        %v4008 = vadd.f32 %v3801, %v3944
        %v4009 = vadd.f32 %v3802, %v3945
        %v4010 = vadd.f32 %v3803, %v3946
        %v4011 = vadd.f32 %v3804, %v3947
        %v4012 = vadd.f32 %v3805, %v3948
        %v4013 = vadd.f32 %v3806, %v3949
        %v4014 = vadd.f32 %v3807, %v3950
        %v4015 = vadd.f32 %v3808, %v3951
        %v4016 = vadd.f32 %v3809, %v3952
        %v4017 = vadd.f32 %v3810, %v3953
        %v4018 = vadd.f32 %v3811, %v3954
        %v4019 = vadd.f32 %v3812, %v3955
        %v4020 = vadd.f32 %v3813, %v3956
        %v4021 = vadd.f32 %v3814, %v3957
        %v4022 = vadd.f32 %v3815, %v3958
        %v4023 = vadd.f32 %v3816, %v3959
        %v4024 = vadd.f32 %v3817, %v3960
        %v4025 = vadd.f32 %v3818, %v3961
        %v4026 = vadd.f32 %v3819, %v3962
        %v4027 = vadd.f32 %v3820, %v3963
        %v4028 = vadd.f32 %v3821, %v3964
        %v4029 = vadd.f32 %v3822, %v3965
        %v4030 = vadd.f32 %v3823, %v3966
        %v4031 = vadd.f32 %v3824, %v3967
        %v4032 = vadd.f32 %v3825, %v3968
        %v4033 = vrot.slane %v3444, 4
        %v4034 = vrot.slane %v3445, 4
        %v4035 = vrot.slane %v3446, 4
        %v4036 = vrot.slane %v3478, 4
        %v4037 = vrot.slane %v3480, 4
        %v4038 = vrot.slane %v3481, 4
        %v4039 = vrot.slane %v3513, 4
        %v4040 = vrot.slane %v3514, 4
        %v4041 = vrot.slane %v3516, 4
        %v4042 = vrot.slane %v3548, 4
        %v4043 = vrot.slane %v3549, 4
        %v4044 = vrot.slane %v3550, 4
        %v4045 = vrot.slane %v3583, 4
        %v4046 = vrot.slane %v3584, 4
        %v4047 = vrot.slane %v3585, 4
        %v4048 = vrot.slane %v3586, 4
        %v4049 = vrot.slane %v3619, 4
        %v4050 = vrot.slane %v3620, 4
        %v4051 = vrot.slane %v3621, 4
        %v4052 = vrot.slane %v3653, 4
        %v4053 = vrot.slane %v3655, 4
        %v4054 = vrot.slane %v3656, 4
        %v4055 = vrot.slane %v3688, 4
        %v4056 = vrot.slane %v3689, 4
        %v4057 = vrot.slane %v3691, 4
        %v4058 = vrot.slane %v3723, 4
        %v4059 = vrot.slane %v3724, 4
        %v4060 = vrot.slane %v3725, 4
        %v4061 = vrot.slane %v3758, 4
        %v4062 = vrot.slane %v3759, 4
        %v4063 = vrot.slane %v3760, 4
        %v4064 = vrot.slane %v3761, 4
        %v4097 = vadd.f32 %v4001, %v4033
        %v4098 = vadd.f32 %v4002, %v4034
        %v4099 = vadd.f32 %v4003, %v4035
        %v4100 = vadd.f32 %v4004, %v4036
        %v4101 = vadd.f32 %v4005, %v4037
        %v4102 = vadd.f32 %v4006, %v4038
        %v4103 = vadd.f32 %v4007, %v4039
        %v4104 = vadd.f32 %v4008, %v4040
        %v4105 = vadd.f32 %v4009, %v4041
        %v4106 = vadd.f32 %v4010, %v4042
        %v4107 = vadd.f32 %v4011, %v4043
        %v4108 = vadd.f32 %v4012, %v4044
        %v4109 = vadd.f32 %v4013, %v4045
        %v4110 = vadd.f32 %v4014, %v4046
        %v4111 = vadd.f32 %v4015, %v4047
        %v4112 = vadd.f32 %v4016, %v4048
        %v4113 = vadd.f32 %v4017, %v4049
        %v4114 = vadd.f32 %v4018, %v4050
        %v4115 = vadd.f32 %v4019, %v4051
        %v4116 = vadd.f32 %v4020, %v4052
        %v4117 = vadd.f32 %v4021, %v4053
        %v4118 = vadd.f32 %v4022, %v4054
        %v4119 = vadd.f32 %v4023, %v4055
        %v4120 = vadd.f32 %v4024, %v4056
        %v4121 = vadd.f32 %v4025, %v4057
        %v4122 = vadd.f32 %v4026, %v4058
        %v4123 = vadd.f32 %v4027, %v4059
        %v4124 = vadd.f32 %v4028, %v4060
        %v4125 = vadd.f32 %v4029, %v4061
        %v4126 = vadd.f32 %v4030, %v4062
        %v4127 = vadd.f32 %v4031, %v4063
        %v4128 = vadd.f32 %v4032, %v4064
        %v4129 = vld [vmem:[%s2389] sm:$0xf]
        %v4130 = vld [vmem:[%s2389 + $0x4] sm:$0x1]
        %v4131 = vld [vmem:[%s2389 + $0x8] sm:$0xf]
        %v4132 = vld [vmem:[%s2389 + $0xc] sm:$0x1]
        %v4133 = vld [vmem:[%s2389 + $0x10] sm:$0xf]
        %v4134 = vld [vmem:[%s2389 + $0x14] sm:$0x1]
        %v4135 = vld [vmem:[%s2389 + $0x18] sm:$0xf]
        %v4136 = vld [vmem:[%s2389 + $0x1c] sm:$0x1]
        %v4137 = vld [vmem:[%s2389 + $0x20] sm:$0xf]
        %v4138 = vld [vmem:[%s2389 + $0x24] sm:$0x1]
        %v4139 = vld [vmem:[%s2389 + $0x28] sm:$0xf]
        %v4140 = vld [vmem:[%s2389 + $0x2c] sm:$0x1]
        %v4141 = vld [vmem:[%s2389 + $0x30] sm:$0xf]
        %v4142 = vld [vmem:[%s2389 + $0x34] sm:$0x1]
        %v4143 = vld [vmem:[%s2389 + $0x38] sm:$0xf]
        %v4144 = vld [vmem:[%s2389 + $0x3c] sm:$0x1]
        %v4162 = vunpack.c.l.s4 1966171168
        %v4163 = vunpack.c.0.s8 %v4162
        %v4164 = vlaneseq
        %v4165 = vshrl.u32 %v4164, 7
        %v4166 = vsub.s32 %v4163, %v4165
        %v4167 = vrot.slane %v4129, %v4166
        %v4168 = vcombine.high %v4167, %v4167
        %v4170 = vunpack.c.l.s4 1966171168
        %v4171 = vunpack.c.0.s8 %v4170
        %v4172 = vlaneseq
        %v4173 = vshrl.u32 %v4172, 7
        %v4174 = vsub.s32 %v4171, %v4173
        %v4175 = vrot.slane %v4167, %v4174
        %v4177 = vunpack.c.l.s4 1966171168
        %v4178 = vunpack.c.0.s8 %v4177
        %v4179 = vlaneseq
        %v4180 = vshrl.u32 %v4179, 7
        %v4181 = vsub.s32 %v4178, %v4180
        %v4182 = vrot.slane %v4168, %v4181
        %v4183 = vcombine.high %v4175, %v4175
        %v4184 = vcombine.high %v4182, %v4182
        %v4186 = vunpack.c.l.s4 1966171168
        %v4187 = vunpack.c.0.s8 %v4186
        %v4188 = vlaneseq
        %v4189 = vshrl.u32 %v4188, 7
        %v4190 = vsub.s32 %v4187, %v4189
        %v4191 = vrot.slane %v4130, %v4190
        %v4193 = vunpack.c.l.s4 1966171168
        %v4194 = vunpack.c.0.s8 %v4193
        %v4195 = vlaneseq
        %v4196 = vshrl.u32 %v4195, 7
        %v4197 = vsub.s32 %v4194, %v4196
        %v4198 = vrot.slane %v4191, %v4197
        %v4200 = vunpack.c.l.s4 1966171168
        %v4201 = vunpack.c.0.s8 %v4200
        %v4202 = vlaneseq
        %v4203 = vshrl.u32 %v4202, 7
        %v4204 = vsub.s32 %v4201, %v4203
        %v4205 = vrot.slane %v4131, %v4204
        %v4206 = vcombine.high %v4205, %v4205
        %v4208 = vunpack.c.l.s4 1966171168
        %v4209 = vunpack.c.0.s8 %v4208
        %v4210 = vlaneseq
        %v4211 = vshrl.u32 %v4210, 7
        %v4212 = vsub.s32 %v4209, %v4211
        %v4213 = vrot.slane %v4205, %v4212
        %v4215 = vunpack.c.l.s4 1966171168
        %v4216 = vunpack.c.0.s8 %v4215
        %v4217 = vlaneseq
        %v4218 = vshrl.u32 %v4217, 7
        %v4219 = vsub.s32 %v4216, %v4218
        %v4220 = vrot.slane %v4206, %v4219
        %v4221 = vcombine.high %v4213, %v4213
        %v4222 = vcombine.high %v4220, %v4220
        %v4224 = vunpack.c.l.s4 1966171168
        %v4225 = vunpack.c.0.s8 %v4224
        %v4226 = vlaneseq
        %v4227 = vshrl.u32 %v4226, 7
        %v4228 = vsub.s32 %v4225, %v4227
        %v4229 = vrot.slane %v4132, %v4228
        %v4231 = vunpack.c.l.s4 1966171168
        %v4232 = vunpack.c.0.s8 %v4231
        %v4233 = vlaneseq
        %v4234 = vshrl.u32 %v4233, 7
        %v4235 = vsub.s32 %v4232, %v4234
        %v4236 = vrot.slane %v4229, %v4235
        %v4238 = vunpack.c.l.s4 1966171168
        %v4239 = vunpack.c.0.s8 %v4238
        %v4240 = vlaneseq
        %v4241 = vshrl.u32 %v4240, 7
        %v4242 = vsub.s32 %v4239, %v4241
        %v4243 = vrot.slane %v4133, %v4242
        %v4244 = vcombine.high %v4243, %v4243
        %v4246 = vunpack.c.l.s4 1966171168
        %v4247 = vunpack.c.0.s8 %v4246
        %v4248 = vlaneseq
        %v4249 = vshrl.u32 %v4248, 7
        %v4250 = vsub.s32 %v4247, %v4249
        %v4251 = vrot.slane %v4243, %v4250
        %v4253 = vunpack.c.l.s4 1966171168
        %v4254 = vunpack.c.0.s8 %v4253
        %v4255 = vlaneseq
        %v4256 = vshrl.u32 %v4255, 7
        %v4257 = vsub.s32 %v4254, %v4256
        %v4258 = vrot.slane %v4244, %v4257
        %v4259 = vcombine.high %v4251, %v4251
        %v4260 = vcombine.high %v4258, %v4258
        %v4262 = vunpack.c.l.s4 1966171168
        %v4263 = vunpack.c.0.s8 %v4262
        %v4264 = vlaneseq
        %v4265 = vshrl.u32 %v4264, 7
        %v4266 = vsub.s32 %v4263, %v4265
        %v4267 = vrot.slane %v4134, %v4266
        %v4269 = vunpack.c.l.s4 1966171168
        %v4270 = vunpack.c.0.s8 %v4269
        %v4271 = vlaneseq
        %v4272 = vshrl.u32 %v4271, 7
        %v4273 = vsub.s32 %v4270, %v4272
        %v4274 = vrot.slane %v4267, %v4273
        %v4276 = vunpack.c.l.s4 1966171168
        %v4277 = vunpack.c.0.s8 %v4276
        %v4278 = vlaneseq
        %v4279 = vshrl.u32 %v4278, 7
        %v4280 = vsub.s32 %v4277, %v4279
        %v4281 = vrot.slane %v4135, %v4280
        %v4282 = vcombine.high %v4281, %v4281
        %v4284 = vunpack.c.l.s4 1966171168
        %v4285 = vunpack.c.0.s8 %v4284
        %v4286 = vlaneseq
        %v4287 = vshrl.u32 %v4286, 7
        %v4288 = vsub.s32 %v4285, %v4287
        %v4289 = vrot.slane %v4281, %v4288
        %v4291 = vunpack.c.l.s4 1966171168
        %v4292 = vunpack.c.0.s8 %v4291
        %v4293 = vlaneseq
        %v4294 = vshrl.u32 %v4293, 7
        %v4295 = vsub.s32 %v4292, %v4294
        %v4296 = vrot.slane %v4282, %v4295
        %v4297 = vcombine.high %v4289, %v4289
        %v4298 = vcombine.high %v4296, %v4296
        %v4300 = vunpack.c.l.s4 1966171168
        %v4301 = vunpack.c.0.s8 %v4300
        %v4302 = vlaneseq
        %v4303 = vshrl.u32 %v4302, 7
        %v4304 = vsub.s32 %v4301, %v4303
        %v4305 = vrot.slane %v4136, %v4304
        %v4307 = vunpack.c.l.s4 1966171168
        %v4308 = vunpack.c.0.s8 %v4307
        %v4309 = vlaneseq
        %v4310 = vshrl.u32 %v4309, 7
        %v4311 = vsub.s32 %v4308, %v4310
        %v4312 = vrot.slane %v4305, %v4311
        %v4314 = vunpack.c.l.s4 1966171168
        %v4315 = vunpack.c.0.s8 %v4314
        %v4316 = vlaneseq
        %v4317 = vshrl.u32 %v4316, 7
        %v4318 = vsub.s32 %v4315, %v4317
        %v4319 = vrot.slane %v4137, %v4318
        %v4320 = vcombine.high %v4319, %v4319
        %v4322 = vunpack.c.l.s4 1966171168
        %v4323 = vunpack.c.0.s8 %v4322
        %v4324 = vlaneseq
        %v4325 = vshrl.u32 %v4324, 7
        %v4326 = vsub.s32 %v4323, %v4325
        %v4327 = vrot.slane %v4319, %v4326
        %v4329 = vunpack.c.l.s4 1966171168
        %v4330 = vunpack.c.0.s8 %v4329
        %v4331 = vlaneseq
        %v4332 = vshrl.u32 %v4331, 7
        %v4333 = vsub.s32 %v4330, %v4332
        %v4334 = vrot.slane %v4320, %v4333
        %v4335 = vcombine.high %v4327, %v4327
        %v4336 = vcombine.high %v4334, %v4334
        %v4338 = vunpack.c.l.s4 1966171168
        %v4339 = vunpack.c.0.s8 %v4338
        %v4340 = vlaneseq
        %v4341 = vshrl.u32 %v4340, 7
        %v4342 = vsub.s32 %v4339, %v4341
        %v4343 = vrot.slane %v4138, %v4342
        %v4345 = vunpack.c.l.s4 1966171168
        %v4346 = vunpack.c.0.s8 %v4345
        %v4347 = vlaneseq
        %v4348 = vshrl.u32 %v4347, 7
        %v4349 = vsub.s32 %v4346, %v4348
        %v4350 = vrot.slane %v4343, %v4349
        %v4352 = vunpack.c.l.s4 1966171168
        %v4353 = vunpack.c.0.s8 %v4352
        %v4354 = vlaneseq
        %v4355 = vshrl.u32 %v4354, 7
        %v4356 = vsub.s32 %v4353, %v4355
        %v4357 = vrot.slane %v4139, %v4356
        %v4358 = vcombine.high %v4357, %v4357
        %v4360 = vunpack.c.l.s4 1966171168
        %v4361 = vunpack.c.0.s8 %v4360
        %v4362 = vlaneseq
        %v4363 = vshrl.u32 %v4362, 7
        %v4364 = vsub.s32 %v4361, %v4363
        %v4365 = vrot.slane %v4357, %v4364
        %v4367 = vunpack.c.l.s4 1966171168
        %v4368 = vunpack.c.0.s8 %v4367
        %v4369 = vlaneseq
        %v4370 = vshrl.u32 %v4369, 7
        %v4371 = vsub.s32 %v4368, %v4370
        %v4372 = vrot.slane %v4358, %v4371
        %v4373 = vcombine.high %v4365, %v4365
        %v4374 = vcombine.high %v4372, %v4372
        %v4376 = vunpack.c.l.s4 1966171168
        %v4377 = vunpack.c.0.s8 %v4376
        %v4378 = vlaneseq
        %v4379 = vshrl.u32 %v4378, 7
        %v4380 = vsub.s32 %v4377, %v4379
        %v4381 = vrot.slane %v4140, %v4380
        %v4383 = vunpack.c.l.s4 1966171168
        %v4384 = vunpack.c.0.s8 %v4383
        %v4385 = vlaneseq
        %v4386 = vshrl.u32 %v4385, 7
        %v4387 = vsub.s32 %v4384, %v4386
        %v4388 = vrot.slane %v4381, %v4387
        %v4390 = vunpack.c.l.s4 1966171168
        %v4391 = vunpack.c.0.s8 %v4390
        %v4392 = vlaneseq
        %v4393 = vshrl.u32 %v4392, 7
        %v4394 = vsub.s32 %v4391, %v4393
        %v4395 = vrot.slane %v4141, %v4394
        %v4396 = vcombine.high %v4395, %v4395
        %v4398 = vunpack.c.l.s4 1966171168
        %v4399 = vunpack.c.0.s8 %v4398
        %v4400 = vlaneseq
        %v4401 = vshrl.u32 %v4400, 7
        %v4402 = vsub.s32 %v4399, %v4401
        %v4403 = vrot.slane %v4395, %v4402
        %v4405 = vunpack.c.l.s4 1966171168
        %v4406 = vunpack.c.0.s8 %v4405
        %v4407 = vlaneseq
        %v4408 = vshrl.u32 %v4407, 7
        %v4409 = vsub.s32 %v4406, %v4408
        %v4410 = vrot.slane %v4396, %v4409
        %v4411 = vcombine.high %v4403, %v4403
        %v4412 = vcombine.high %v4410, %v4410
        %v4414 = vunpack.c.l.s4 1966171168
        %v4415 = vunpack.c.0.s8 %v4414
        %v4416 = vlaneseq
        %v4417 = vshrl.u32 %v4416, 7
        %v4418 = vsub.s32 %v4415, %v4417
        %v4419 = vrot.slane %v4142, %v4418
        %v4421 = vunpack.c.l.s4 1966171168
        %v4422 = vunpack.c.0.s8 %v4421
        %v4423 = vlaneseq
        %v4424 = vshrl.u32 %v4423, 7
        %v4425 = vsub.s32 %v4422, %v4424
        %v4426 = vrot.slane %v4419, %v4425
        %v4428 = vunpack.c.l.s4 1966171168
        %v4429 = vunpack.c.0.s8 %v4428
        %v4430 = vlaneseq
        %v4431 = vshrl.u32 %v4430, 7
        %v4432 = vsub.s32 %v4429, %v4431
        %v4433 = vrot.slane %v4143, %v4432
        %v4434 = vcombine.high %v4433, %v4433
        %v4436 = vunpack.c.l.s4 1966171168
        %v4437 = vunpack.c.0.s8 %v4436
        %v4438 = vlaneseq
        %v4439 = vshrl.u32 %v4438, 7
        %v4440 = vsub.s32 %v4437, %v4439
        %v4441 = vrot.slane %v4433, %v4440
        %v4443 = vunpack.c.l.s4 1966171168
        %v4444 = vunpack.c.0.s8 %v4443
        %v4445 = vlaneseq
        %v4446 = vshrl.u32 %v4445, 7
        %v4447 = vsub.s32 %v4444, %v4446
        %v4448 = vrot.slane %v4434, %v4447
        %v4449 = vcombine.high %v4441, %v4441
        %v4450 = vcombine.high %v4448, %v4448
        %v4452 = vunpack.c.l.s4 1966171168
        %v4453 = vunpack.c.0.s8 %v4452
        %v4454 = vlaneseq
        %v4455 = vshrl.u32 %v4454, 7
        %v4456 = vsub.s32 %v4453, %v4455
        %v4457 = vrot.slane %v4144, %v4456
        %v4459 = vunpack.c.l.s4 1966171168
        %v4460 = vunpack.c.0.s8 %v4459
        %v4461 = vlaneseq
        %v4462 = vshrl.u32 %v4461, 7
        %v4463 = vsub.s32 %v4460, %v4462
        %v4464 = vrot.slane %v4457, %v4463
        %s4465 = scalar_lea.vmem %s6, 192
        %v4466 = vld [vmem:[%s4465] sm:$0xff]
        %v4467 = vld [vmem:[%s4465 + $0x8] sm:$0xf]
        %v4468 = vld [vmem:[%s4465 + $0xc] sm:$0xff]
        %v4469 = vld [vmem:[%s4465 + $0x14] sm:$0xf]
        %v4470 = vld [vmem:[%s4465 + $0x18] sm:$0xff]
        %v4471 = vld [vmem:[%s4465 + $0x20] sm:$0xf]
        %v4472 = vld [vmem:[%s4465 + $0x24] sm:$0xff]
        %v4473 = vld [vmem:[%s4465 + $0x2c] sm:$0xf]
        %v4474 = vld [vmem:[%s4465 + $0x30] sm:$0xff]
        %v4475 = vld [vmem:[%s4465 + $0x38] sm:$0xf]
        %v4476 = vld [vmem:[%s4465 + $0x3c] sm:$0xff]
        %v4477 = vld [vmem:[%s4465 + $0x44] sm:$0xf]
        %v4478 = vld [vmem:[%s4465 + $0x48] sm:$0xff]
        %v4479 = vld [vmem:[%s4465 + $0x50] sm:$0xf]
        %v4480 = vld [vmem:[%s4465 + $0x54] sm:$0xff]
        %v4481 = vld [vmem:[%s4465 + $0x5c] sm:$0xf]
        %v4482 = vld [vmem:[%s4465 + $0x60] sm:$0xff]
        %v4483 = vld [vmem:[%s4465 + $0x68] sm:$0xf]
        %v4484 = vld [vmem:[%s4465 + $0x6c] sm:$0xff]
        %v4485 = vld [vmem:[%s4465 + $0x74] sm:$0xf]
        %v4486 = vld [vmem:[%s4465 + $0x78] sm:$0xff]
        %v4487 = vld [vmem:[%s4465 + $0x80] sm:$0xf]
        %v4488 = vld [vmem:[%s4465 + $0x84] sm:$0xff]
        %v4489 = vld [vmem:[%s4465 + $0x8c] sm:$0xf]
        %v4490 = vld [vmem:[%s4465 + $0x90] sm:$0xff]
        %v4491 = vld [vmem:[%s4465 + $0x98] sm:$0xf]
        %v4492 = vld [vmem:[%s4465 + $0x9c] sm:$0xff]
        %v4493 = vld [vmem:[%s4465 + $0xa4] sm:$0xf]
        %v4494 = vld [vmem:[%s4465 + $0xa8] sm:$0xff]
        %v4495 = vld [vmem:[%s4465 + $0xb0] sm:$0xf]
        %v4496 = vld [vmem:[%s4465 + $0xb4] sm:$0xff]
        %v4497 = vld [vmem:[%s4465 + $0xbc] sm:$0xf]
        %v4498 = vcombine.low %v4175, %v4182
        %v4499 = vcombine.low %v4183, %v4184
        %v4500 = vcombine.low %v4198, %v4213
        %v4501 = vcombine.low %v4220, %v4221
        %v4503 = vunpack.c.l.s4 1966171168
        %v4504 = vunpack.c.0.s8 %v4503
        %v4505 = vlaneseq
        %v4506 = vshrl.u32 %v4505, 7
        %v4507 = vsub.s32 %v4504, %v4506
        %v4508 = vrot.slane %v4498, %v4507
        %v4510 = vunpack.c.l.s4 1966171168
        %v4511 = vunpack.c.0.s8 %v4510
        %v4512 = vlaneseq
        %v4513 = vshrl.u32 %v4512, 7
        %v4514 = vsub.s32 %v4511, %v4513
        %v4515 = vrot.slane %v4499, %v4514
        %v4517 = vunpack.c.l.s4 1966171168
        %v4518 = vunpack.c.0.s8 %v4517
        %v4519 = vlaneseq
        %v4520 = vshrl.u32 %v4519, 7
        %v4521 = vsub.s32 %v4518, %v4520
        %v4522 = vrot.slane %v4500, %v4521
        %v4524 = vunpack.c.l.s4 1966171168
        %v4525 = vunpack.c.0.s8 %v4524
        %v4526 = vlaneseq
        %v4527 = vshrl.u32 %v4526, 7
        %v4528 = vsub.s32 %v4525, %v4527
        %v4529 = vrot.slane %v4501, %v4528
        %v4530 = vcombine.low %v4508, %v4515
        %v4531 = vcombine.low %v4522, %v4529
        %v4533 = vunpack.c.l.s4 1966171168
        %v4534 = vunpack.c.0.s8 %v4533
        %v4535 = vlaneseq
        %v4536 = vshrl.u32 %v4535, 7
        %v4537 = vsub.s32 %v4534, %v4536
        %v4538 = vrot.slane %v4530, %v4537
        %v4540 = vunpack.c.l.s4 1966171168
        %v4541 = vunpack.c.0.s8 %v4540
        %v4542 = vlaneseq
        %v4543 = vshrl.u32 %v4542, 7
        %v4544 = vsub.s32 %v4541, %v4543
        %v4545 = vrot.slane %v4531, %v4544
        %v4546 = vcombine.low %v4538, %v4545
        %v4547 = vcombine.low %v4222, %v4236
        %v4548 = vcombine.low %v4251, %v4258
        %v4549 = vcombine.low %v4259, %v4260
        %v4550 = vcombine.low %v4274, %v4289
        %v4552 = vunpack.c.l.s4 1966171168
        %v4553 = vunpack.c.0.s8 %v4552
        %v4554 = vlaneseq
        %v4555 = vshrl.u32 %v4554, 7
        %v4556 = vsub.s32 %v4553, %v4555
        %v4557 = vrot.slane %v4547, %v4556
        %v4559 = vunpack.c.l.s4 1966171168
        %v4560 = vunpack.c.0.s8 %v4559
        %v4561 = vlaneseq
        %v4562 = vshrl.u32 %v4561, 7
        %v4563 = vsub.s32 %v4560, %v4562
        %v4564 = vrot.slane %v4548, %v4563
        %v4566 = vunpack.c.l.s4 1966171168
        %v4567 = vunpack.c.0.s8 %v4566
        %v4568 = vlaneseq
        %v4569 = vshrl.u32 %v4568, 7
        %v4570 = vsub.s32 %v4567, %v4569
        %v4571 = vrot.slane %v4549, %v4570
        %v4573 = vunpack.c.l.s4 1966171168
        %v4574 = vunpack.c.0.s8 %v4573
        %v4575 = vlaneseq
        %v4576 = vshrl.u32 %v4575, 7
        %v4577 = vsub.s32 %v4574, %v4576
        %v4578 = vrot.slane %v4550, %v4577
        %v4579 = vcombine.low %v4557, %v4564
        %v4580 = vcombine.low %v4571, %v4578
        %v4582 = vunpack.c.l.s4 1966171168
        %v4583 = vunpack.c.0.s8 %v4582
        %v4584 = vlaneseq
        %v4585 = vshrl.u32 %v4584, 7
        %v4586 = vsub.s32 %v4583, %v4585
        %v4587 = vrot.slane %v4579, %v4586
        %v4589 = vunpack.c.l.s4 1966171168
        %v4590 = vunpack.c.0.s8 %v4589
        %v4591 = vlaneseq
        %v4592 = vshrl.u32 %v4591, 7
        %v4593 = vsub.s32 %v4590, %v4592
        %v4594 = vrot.slane %v4580, %v4593
        %v4595 = vcombine.low %v4587, %v4594
        %v4596 = vcombine.low %v4296, %v4297
        %v4597 = vcombine.low %v4298, %v4312
        %v4598 = vcombine.low %v4327, %v4334
        %v4599 = vcombine.low %v4335, %v4336
        %v4601 = vunpack.c.l.s4 1966171168
        %v4602 = vunpack.c.0.s8 %v4601
        %v4603 = vlaneseq
        %v4604 = vshrl.u32 %v4603, 7
        %v4605 = vsub.s32 %v4602, %v4604
        %v4606 = vrot.slane %v4596, %v4605
        %v4608 = vunpack.c.l.s4 1966171168
        %v4609 = vunpack.c.0.s8 %v4608
        %v4610 = vlaneseq
        %v4611 = vshrl.u32 %v4610, 7
        %v4612 = vsub.s32 %v4609, %v4611
        %v4613 = vrot.slane %v4597, %v4612
        %v4615 = vunpack.c.l.s4 1966171168
        %v4616 = vunpack.c.0.s8 %v4615
        %v4617 = vlaneseq
        %v4618 = vshrl.u32 %v4617, 7
        %v4619 = vsub.s32 %v4616, %v4618
        %v4620 = vrot.slane %v4598, %v4619
        %v4622 = vunpack.c.l.s4 1966171168
        %v4623 = vunpack.c.0.s8 %v4622
        %v4624 = vlaneseq
        %v4625 = vshrl.u32 %v4624, 7
        %v4626 = vsub.s32 %v4623, %v4625
        %v4627 = vrot.slane %v4599, %v4626
        %v4628 = vcombine.low %v4606, %v4613
        %v4629 = vcombine.low %v4620, %v4627
        %v4631 = vunpack.c.l.s4 1966171168
        %v4632 = vunpack.c.0.s8 %v4631
        %v4633 = vlaneseq
        %v4634 = vshrl.u32 %v4633, 7
        %v4635 = vsub.s32 %v4632, %v4634
        %v4636 = vrot.slane %v4628, %v4635
        %v4638 = vunpack.c.l.s4 1966171168
        %v4639 = vunpack.c.0.s8 %v4638
        %v4640 = vlaneseq
        %v4641 = vshrl.u32 %v4640, 7
        %v4642 = vsub.s32 %v4639, %v4641
        %v4643 = vrot.slane %v4629, %v4642
        %v4644 = vcombine.low %v4636, %v4643
        %v4645 = vcombine.low %v4350, %v4365
        %v4646 = vcombine.low %v4372, %v4373
        %v4647 = vcombine.low %v4374, %v4388
        %v4648 = vcombine.low %v4403, %v4410
        %v4650 = vunpack.c.l.s4 1966171168
        %v4651 = vunpack.c.0.s8 %v4650
        %v4652 = vlaneseq
        %v4653 = vshrl.u32 %v4652, 7
        %v4654 = vsub.s32 %v4651, %v4653
        %v4655 = vrot.slane %v4645, %v4654
        %v4657 = vunpack.c.l.s4 1966171168
        %v4658 = vunpack.c.0.s8 %v4657
        %v4659 = vlaneseq
        %v4660 = vshrl.u32 %v4659, 7
        %v4661 = vsub.s32 %v4658, %v4660
        %v4662 = vrot.slane %v4646, %v4661
        %v4664 = vunpack.c.l.s4 1966171168
        %v4665 = vunpack.c.0.s8 %v4664
        %v4666 = vlaneseq
        %v4667 = vshrl.u32 %v4666, 7
        %v4668 = vsub.s32 %v4665, %v4667
        %v4669 = vrot.slane %v4647, %v4668
        %v4671 = vunpack.c.l.s4 1966171168
        %v4672 = vunpack.c.0.s8 %v4671
        %v4673 = vlaneseq
        %v4674 = vshrl.u32 %v4673, 7
        %v4675 = vsub.s32 %v4672, %v4674
        %v4676 = vrot.slane %v4648, %v4675
        %v4677 = vcombine.low %v4655, %v4662
        %v4678 = vcombine.low %v4669, %v4676
        %v4680 = vunpack.c.l.s4 1966171168
        %v4681 = vunpack.c.0.s8 %v4680
        %v4682 = vlaneseq
        %v4683 = vshrl.u32 %v4682, 7
        %v4684 = vsub.s32 %v4681, %v4683
        %v4685 = vrot.slane %v4677, %v4684
        %v4687 = vunpack.c.l.s4 1966171168
        %v4688 = vunpack.c.0.s8 %v4687
        %v4689 = vlaneseq
        %v4690 = vshrl.u32 %v4689, 7
        %v4691 = vsub.s32 %v4688, %v4690
        %v4692 = vrot.slane %v4678, %v4691
        %v4693 = vcombine.low %v4685, %v4692
        %v4694 = vcombine.low %v4411, %v4412
        %v4695 = vcombine.low %v4426, %v4441
        %v4696 = vcombine.low %v4448, %v4449
        %v4697 = vcombine.low %v4450, %v4464
        %v4699 = vunpack.c.l.s4 1966171168
        %v4700 = vunpack.c.0.s8 %v4699
        %v4701 = vlaneseq
        %v4702 = vshrl.u32 %v4701, 7
        %v4703 = vsub.s32 %v4700, %v4702
        %v4704 = vrot.slane %v4694, %v4703
        %v4706 = vunpack.c.l.s4 1966171168
        %v4707 = vunpack.c.0.s8 %v4706
        %v4708 = vlaneseq
        %v4709 = vshrl.u32 %v4708, 7
        %v4710 = vsub.s32 %v4707, %v4709
        %v4711 = vrot.slane %v4695, %v4710
        %v4713 = vunpack.c.l.s4 1966171168
        %v4714 = vunpack.c.0.s8 %v4713
        %v4715 = vlaneseq
        %v4716 = vshrl.u32 %v4715, 7
        %v4717 = vsub.s32 %v4714, %v4716
        %v4718 = vrot.slane %v4696, %v4717
        %v4720 = vunpack.c.l.s4 1966171168
        %v4721 = vunpack.c.0.s8 %v4720
        %v4722 = vlaneseq
        %v4723 = vshrl.u32 %v4722, 7
        %v4724 = vsub.s32 %v4721, %v4723
        %v4725 = vrot.slane %v4697, %v4724
        %v4726 = vcombine.low %v4704, %v4711
        %v4727 = vcombine.low %v4718, %v4725
        %v4729 = vunpack.c.l.s4 1966171168
        %v4730 = vunpack.c.0.s8 %v4729
        %v4731 = vlaneseq
        %v4732 = vshrl.u32 %v4731, 7
        %v4733 = vsub.s32 %v4730, %v4732
        %v4734 = vrot.slane %v4726, %v4733
        %v4736 = vunpack.c.l.s4 1966171168
        %v4737 = vunpack.c.0.s8 %v4736
        %v4738 = vlaneseq
        %v4739 = vshrl.u32 %v4738, 7
        %v4740 = vsub.s32 %v4737, %v4739
        %v4741 = vrot.slane %v4727, %v4740
        %v4742 = vcombine.low %v4734, %v4741
        %v4780 = vunpack.c.l.b16 %v4466
        %v4781 = vunpack.c.h.b16 %v4466
        %v4782 = vunpack.c.l.b16 %v4467
        %v4783 = vunpack.c.l.b16 %v4468
        %v4784 = vunpack.c.h.b16 %v4468
        %v4785 = vunpack.c.l.b16 %v4469
        %v4786 = vunpack.c.l.b16 %v4470
        %v4787 = vunpack.c.h.b16 %v4470
        %v4788 = vunpack.c.l.b16 %v4471
        %v4789 = vunpack.c.l.b16 %v4472
        %v4790 = vunpack.c.h.b16 %v4472
        %v4791 = vunpack.c.l.b16 %v4473
        %v4792 = vunpack.c.l.b16 %v4474
        %v4793 = vunpack.c.h.b16 %v4474
        %v4794 = vunpack.c.l.b16 %v4475
        %v4795 = vunpack.c.l.b16 %v4476
        %v4796 = vunpack.c.h.b16 %v4476
        %v4797 = vunpack.c.l.b16 %v4477
        %v4798 = vunpack.c.l.b16 %v4478
        %v4799 = vunpack.c.h.b16 %v4478
        %v4800 = vunpack.c.l.b16 %v4479
        %v4801 = vunpack.c.l.b16 %v4480
        %v4802 = vunpack.c.h.b16 %v4480
        %v4803 = vunpack.c.l.b16 %v4481
        %v4804 = vunpack.c.l.b16 %v4482
        %v4805 = vunpack.c.h.b16 %v4482
        %v4806 = vunpack.c.l.b16 %v4483
        %v4807 = vunpack.c.l.b16 %v4484
        %v4808 = vunpack.c.h.b16 %v4484
        %v4809 = vunpack.c.l.b16 %v4485
        %v4810 = vunpack.c.l.b16 %v4486
        %v4811 = vunpack.c.h.b16 %v4486
        %v4812 = vunpack.c.l.b16 %v4487
        %v4813 = vunpack.c.l.b16 %v4488
        %v4814 = vunpack.c.h.b16 %v4488
        %v4815 = vunpack.c.l.b16 %v4489
        %v4816 = vunpack.c.l.b16 %v4490
        %v4817 = vunpack.c.h.b16 %v4490
        %v4818 = vunpack.c.l.b16 %v4491
        %v4819 = vunpack.c.l.b16 %v4492
        %v4820 = vunpack.c.h.b16 %v4492
        %v4821 = vunpack.c.l.b16 %v4493
        %v4822 = vunpack.c.l.b16 %v4494
        %v4823 = vunpack.c.h.b16 %v4494
        %v4824 = vunpack.c.l.b16 %v4495
        %v4825 = vunpack.c.l.b16 %v4496
        %v4826 = vunpack.c.h.b16 %v4496
        %v4827 = vunpack.c.l.b16 %v4497
        %v4828 = vpack.c.b16 %v4783, %v4780
        %v4829 = vpack.c.b16 %v4784, %v4781
        %v4830 = vpack.c.b16 %v4785, %v4782
        %v4831 = vpack.c.b16 %v4789, %v4786
        %v4832 = vpack.c.b16 %v4790, %v4787
        %v4833 = vpack.c.b16 %v4791, %v4788
        %v4834 = vpack.c.b16 %v4795, %v4792
        %v4835 = vpack.c.b16 %v4796, %v4793
        %v4836 = vpack.c.b16 %v4797, %v4794
        %v4837 = vpack.c.b16 %v4801, %v4798
        %v4838 = vpack.c.b16 %v4802, %v4799
        %v4839 = vpack.c.b16 %v4803, %v4800
        %v4840 = vpack.c.b16 %v4807, %v4804
        %v4841 = vpack.c.b16 %v4808, %v4805
        %v4842 = vpack.c.b16 %v4809, %v4806
        %v4843 = vpack.c.b16 %v4813, %v4810
        %v4844 = vpack.c.b16 %v4814, %v4811
        %v4845 = vpack.c.b16 %v4815, %v4812
        %v4846 = vpack.c.b16 %v4819, %v4816
        %v4847 = vpack.c.b16 %v4820, %v4817
        %v4848 = vpack.c.b16 %v4821, %v4818
        %v4849 = vpack.c.b16 %v4825, %v4822
        %v4850 = vpack.c.b16 %v4826, %v4823
        %v4851 = vpack.c.b16 %v4827, %v4824
        %4876 = vmatprep.subr.bf16.mxu0 %v4829
        %4877 = vmatpush1.bf16.msra.mxu0 %v4828
        %4878 = vmatprep.subr.bf16.mxu0 %v4832
        %4879 = vmatpush1.bf16.msra.mxu0 %v4831
        %4880 = vmatprep.subr.bf16.mxu0 %v4835
        %4881 = vmatpush1.bf16.msra.mxu0 %v4834
        %4882 = vmatprep.subr.bf16.mxu0 %v4838
        %4883 = vmatpush1.bf16.msra.mxu0 %v4837
        %4884 = vmatprep.subr.bf16.mxu0 %v4841
        %4885 = vmatpush1.bf16.msra.mxu0 %v4840
        %4886 = vmatprep.subr.bf16.mxu0 %v4844
        %4887 = vmatpush1.bf16.msra.mxu0 %v4843
        %4888 = vmatprep.subr.bf16.mxu0 %v4847
        %4889 = vmatpush1.bf16.msra.mxu0 %v4846
        %4890 = vmatprep.subr.bf16.mxu0 %v4850
        %4891 = vmatpush1.bf16.msra.mxu0 %v4849
        %4892 = vmatprep.subr.bf16.mxu0 0
        %4893 = vmatpush1.bf16.msra.mxu0 0
        %4894 = vmatprep.subr.bf16.mxu0 0
        %4895 = vmatpush1.bf16.msra.mxu0 0
        %4896 = vmatprep.subr.bf16.mxu0 0
        %4897 = vmatpush1.bf16.msra.mxu0 0
        %4898 = vmatprep.subr.bf16.mxu0 0
        %4899 = vmatpush1.bf16.msra.mxu0 0
        %4900 = vmatprep.subr.bf16.mxu0 0
        %4901 = vmatpush1.bf16.msra.mxu0 0
        %4902 = vmatprep.subr.bf16.mxu0 0
        %4903 = vmatpush1.bf16.msra.mxu0 0
        %4904 = vmatprep.subr.bf16.mxu0 0
        %4905 = vmatpush1.bf16.msra.mxu0 0
        %4906 = vmatprep.subr.bf16.mxu0 0
        %4907 = vmatpush1.bf16.msra.mxu0 0
        %4908 = vmatprep.mubr.bf16.mxu0 0
        %4909 = vmatmul.mubr.bf16.gmra.mrb[0].mxu0 %v4546
        %v4910 = vpop.f32.mrb[0].mxu0
        %v4911 = vadd.f32 0.0, %v4910
        %v4912 = vpop.f32.mrb[0].mxu0
        %v4913 = vadd.f32 0.0, %v4912
        %v4914 = vpop.f32.mrb[0].mxu0
        %v4915 = vadd.f32 0.0, %v4914
        %v4916 = vpop.f32.mrb[0].mxu0
        %v4917 = vadd.f32 0.0, %v4916
        %4918 = vmatprep.mubr.bf16.mxu0 0
        %4919 = vmatmul.mubr.bf16.gmra.mrb[0].mxu0 %v4595
        %v4920 = vpop.f32.mrb[0].mxu0
        %v4921 = vadd.f32 0.0, %v4920
        %v4922 = vpop.f32.mrb[0].mxu0
        %v4923 = vadd.f32 0.0, %v4922
        %v4924 = vpop.f32.mrb[0].mxu0
        %v4925 = vadd.f32 0.0, %v4924
        %v4926 = vpop.f32.mrb[0].mxu0
        %v4927 = vadd.f32 0.0, %v4926
        %4928 = vmatprep.mubr.bf16.mxu0 0
        %4929 = vmatmul.mubr.bf16.gmra.mrb[0].mxu0 %v4644
        %v4930 = vpop.f32.mrb[0].mxu0
        %v4931 = vadd.f32 0.0, %v4930
        %v4932 = vpop.f32.mrb[0].mxu0
        %v4933 = vadd.f32 0.0, %v4932
        %v4934 = vpop.f32.mrb[0].mxu0
        %v4935 = vadd.f32 0.0, %v4934
        %v4936 = vpop.f32.mrb[0].mxu0
        %v4937 = vadd.f32 0.0, %v4936
        %4938 = vmatprep.mubr.bf16.mxu0 0
        %4939 = vmatmul.mubr.bf16.gmra.mrb[0].mxu0 %v4693
        %v4940 = vpop.f32.mrb[0].mxu0
        %v4941 = vadd.f32 0.0, %v4940
        %v4942 = vpop.f32.mrb[0].mxu0
        %v4943 = vadd.f32 0.0, %v4942
        %v4944 = vpop.f32.mrb[0].mxu0
        %v4945 = vadd.f32 0.0, %v4944
        %v4946 = vpop.f32.mrb[0].mxu0
        %v4947 = vadd.f32 0.0, %v4946
        %4948 = vmatprep.mubr.bf16.mxu0 0
        %4949 = vmatmul.mubr.bf16.gmra.mrb[0].mxu0 %v4742
        %v4950 = vpop.f32.mrb[0].mxu0
        %v4951 = vadd.f32 0.0, %v4950
        %v4952 = vpop.f32.mrb[0].mxu0
        %v4953 = vadd.f32 0.0, %v4952
        %v4954 = vpop.f32.mrb[0].mxu0
        %v4955 = vadd.f32 0.0, %v4954
        %v4956 = vpop.f32.mrb[0].mxu0
        %v4957 = vadd.f32 0.0, %v4956
        %4958 = vdwg.mxu0
        %4959 = vmatprep.subr.bf16.mxu0 0
        %4960 = vmatpush1.bf16.msra.mxu0 %v4830
        %4961 = vmatprep.subr.bf16.mxu0 0
        %4962 = vmatpush1.bf16.msra.mxu0 %v4833
        %4963 = vmatprep.subr.bf16.mxu0 0
        %4964 = vmatpush1.bf16.msra.mxu0 %v4836
        %4965 = vmatprep.subr.bf16.mxu0 0
        %4966 = vmatpush1.bf16.msra.mxu0 %v4839
        %4967 = vmatprep.subr.bf16.mxu0 0
        %4968 = vmatpush1.bf16.msra.mxu0 %v4842
        %4969 = vmatprep.subr.bf16.mxu0 0
        %4970 = vmatpush1.bf16.msra.mxu0 %v4845
        %4971 = vmatprep.subr.bf16.mxu0 0
        %4972 = vmatpush1.bf16.msra.mxu0 %v4848
        %4973 = vmatprep.subr.bf16.mxu0 0
        %4974 = vmatpush1.bf16.msra.mxu0 %v4851
        %4975 = vmatprep.subr.bf16.mxu0 0
        %4976 = vmatpush1.bf16.msra.mxu0 0
        %4977 = vmatprep.subr.bf16.mxu0 0
        %4978 = vmatpush1.bf16.msra.mxu0 0
        %4979 = vmatprep.subr.bf16.mxu0 0
        %4980 = vmatpush1.bf16.msra.mxu0 0
        %4981 = vmatprep.subr.bf16.mxu0 0
        %4982 = vmatpush1.bf16.msra.mxu0 0
        %4983 = vmatprep.subr.bf16.mxu0 0
        %4984 = vmatpush1.bf16.msra.mxu0 0
        %4985 = vmatprep.subr.bf16.mxu0 0
        %4986 = vmatpush1.bf16.msra.mxu0 0
        %4987 = vmatprep.subr.bf16.mxu0 0
        %4988 = vmatpush1.bf16.msra.mxu0 0
        %4989 = vmatprep.subr.bf16.mxu0 0
        %4990 = vmatpush1.bf16.msra.mxu0 0
        %4991 = vmatprep.mubr.bf16.mxu0 0
        %4992 = vmatmul.mubr.bf16.gmra.mrb[0].mxu0 %v4546
        %v4993 = vpop.f32.mrb[0].mxu0
        %v4994 = vadd.f32 0.0, %v4993
        %v4995 = vpop.f32.mrb[0].mxu0
        %v4996 = vpop.f32.mrb[0].mxu0
        %v4997 = vadd.f32 0.0, %v4996
        %v4998 = vpop.f32.mrb[0].mxu0
        %4999 = vmatprep.mubr.bf16.mxu0 0
        %5000 = vmatmul.mubr.bf16.gmra.mrb[0].mxu0 %v4595
        %v5001 = vpop.f32.mrb[0].mxu0
        %v5002 = vadd.f32 0.0, %v5001
        %v5003 = vpop.f32.mrb[0].mxu0
        %v5004 = vpop.f32.mrb[0].mxu0
        %v5005 = vadd.f32 0.0, %v5004
        %v5006 = vpop.f32.mrb[0].mxu0
        %5007 = vmatprep.mubr.bf16.mxu0 0
        %5008 = vmatmul.mubr.bf16.gmra.mrb[0].mxu0 %v4644
        %v5009 = vpop.f32.mrb[0].mxu0
        %v5010 = vadd.f32 0.0, %v5009
        %v5011 = vpop.f32.mrb[0].mxu0
        %v5012 = vpop.f32.mrb[0].mxu0
        %v5013 = vadd.f32 0.0, %v5012
        %v5014 = vpop.f32.mrb[0].mxu0
        %5015 = vmatprep.mubr.bf16.mxu0 0
        %5016 = vmatmul.mubr.bf16.gmra.mrb[0].mxu0 %v4693
        %v5017 = vpop.f32.mrb[0].mxu0
        %v5018 = vadd.f32 0.0, %v5017
        %v5019 = vpop.f32.mrb[0].mxu0
        %v5020 = vpop.f32.mrb[0].mxu0
        %v5021 = vadd.f32 0.0, %v5020
        %v5022 = vpop.f32.mrb[0].mxu0
        %5023 = vmatprep.mubr.bf16.mxu0 0
        %5024 = vmatmul.mubr.bf16.gmra.mrb[0].mxu0 %v4742
        %v5025 = vpop.f32.mrb[0].mxu0
        %v5026 = vadd.f32 0.0, %v5025
        %v5027 = vpop.f32.mrb[0].mxu0
        %v5028 = vpop.f32.mrb[0].mxu0
        %v5029 = vadd.f32 0.0, %v5028
        %v5030 = vpop.f32.mrb[0].mxu0
        %5031 = vdwg.mxu0
        %v5062 = vcombine.low %v4911, %v4913
        %v5063 = vcombine.high %v4911, %v4913
        %v5064 = vcombine.high %v4994, %v4994
        %v5066 = vunpack.c.l.s4 1983009808
        %v5067 = vunpack.c.0.s8 %v5066
        %v5068 = vlaneseq
        %v5069 = vshrl.u32 %v5068, 7
        %v5070 = vsub.s32 %v5067, %v5069
        %v5071 = vrot.slane %v5062, %v5070
        %v5073 = vunpack.c.l.s4 1983009808
        %v5074 = vunpack.c.0.s8 %v5073
        %v5075 = vlaneseq
        %v5076 = vshrl.u32 %v5075, 7
        %v5077 = vsub.s32 %v5074, %v5076
        %v5078 = vrot.slane %v5063, %v5077
        %v5080 = vunpack.c.l.s4 1983009808
        %v5081 = vunpack.c.0.s8 %v5080
        %v5082 = vlaneseq
        %v5083 = vshrl.u32 %v5082, 7
        %v5084 = vsub.s32 %v5081, %v5083
        %v5085 = vrot.slane %v4994, %v5084
        %v5087 = vunpack.c.l.s4 1983009808
        %v5088 = vunpack.c.0.s8 %v5087
        %v5089 = vlaneseq
        %v5090 = vshrl.u32 %v5089, 7
        %v5091 = vsub.s32 %v5088, %v5090
        %v5092 = vrot.slane %v5064, %v5091
        %v5093 = vcombine.low %v5071, %v5085
        %v5094 = vcombine.high %v5071, %v5085
        %v5095 = vcombine.low %v5078, %v5092
        %v5096 = vcombine.high %v5078, %v5092
        %v5097 = vcombine.low %v4915, %v4917
        %v5098 = vcombine.high %v4915, %v4917
        %v5099 = vcombine.high %v4997, %v4997
        %v5101 = vunpack.c.l.s4 1983009808
        %v5102 = vunpack.c.0.s8 %v5101
        %v5103 = vlaneseq
        %v5104 = vshrl.u32 %v5103, 7
        %v5105 = vsub.s32 %v5102, %v5104
        %v5106 = vrot.slane %v5097, %v5105
        %v5108 = vunpack.c.l.s4 1983009808
        %v5109 = vunpack.c.0.s8 %v5108
        %v5110 = vlaneseq
        %v5111 = vshrl.u32 %v5110, 7
        %v5112 = vsub.s32 %v5109, %v5111
        %v5113 = vrot.slane %v5098, %v5112
        %v5115 = vunpack.c.l.s4 1983009808
        %v5116 = vunpack.c.0.s8 %v5115
        %v5117 = vlaneseq
        %v5118 = vshrl.u32 %v5117, 7
        %v5119 = vsub.s32 %v5116, %v5118
        %v5120 = vrot.slane %v4997, %v5119
        %v5122 = vunpack.c.l.s4 1983009808
        %v5123 = vunpack.c.0.s8 %v5122
        %v5124 = vlaneseq
        %v5125 = vshrl.u32 %v5124, 7
        %v5126 = vsub.s32 %v5123, %v5125
        %v5127 = vrot.slane %v5099, %v5126
        %v5128 = vcombine.low %v5106, %v5120
        %v5129 = vcombine.high %v5106, %v5120
        %v5130 = vcombine.low %v5113, %v5127
        %v5131 = vcombine.high %v5113, %v5127
        %v5132 = vcombine.low %v4921, %v4923
        %v5133 = vcombine.high %v4921, %v4923
        %v5134 = vcombine.high %v5002, %v5002
        %v5136 = vunpack.c.l.s4 1983009808
        %v5137 = vunpack.c.0.s8 %v5136
        %v5138 = vlaneseq
        %v5139 = vshrl.u32 %v5138, 7
        %v5140 = vsub.s32 %v5137, %v5139
        %v5141 = vrot.slane %v5132, %v5140
        %v5143 = vunpack.c.l.s4 1983009808
        %v5144 = vunpack.c.0.s8 %v5143
        %v5145 = vlaneseq
        %v5146 = vshrl.u32 %v5145, 7
        %v5147 = vsub.s32 %v5144, %v5146
        %v5148 = vrot.slane %v5133, %v5147
        %v5150 = vunpack.c.l.s4 1983009808
        %v5151 = vunpack.c.0.s8 %v5150
        %v5152 = vlaneseq
        %v5153 = vshrl.u32 %v5152, 7
        %v5154 = vsub.s32 %v5151, %v5153
        %v5155 = vrot.slane %v5002, %v5154
        %v5157 = vunpack.c.l.s4 1983009808
        %v5158 = vunpack.c.0.s8 %v5157
        %v5159 = vlaneseq
        %v5160 = vshrl.u32 %v5159, 7
        %v5161 = vsub.s32 %v5158, %v5160
        %v5162 = vrot.slane %v5134, %v5161
        %v5163 = vcombine.low %v5141, %v5155
        %v5164 = vcombine.high %v5141, %v5155
        %v5165 = vcombine.low %v5148, %v5162
        %v5166 = vcombine.high %v5148, %v5162
        %v5167 = vcombine.low %v4925, %v4927
        %v5168 = vcombine.high %v4925, %v4927
        %v5169 = vcombine.high %v5005, %v5005
        %v5171 = vunpack.c.l.s4 1983009808
        %v5172 = vunpack.c.0.s8 %v5171
        %v5173 = vlaneseq
        %v5174 = vshrl.u32 %v5173, 7
        %v5175 = vsub.s32 %v5172, %v5174
        %v5176 = vrot.slane %v5167, %v5175
        %v5178 = vunpack.c.l.s4 1983009808
        %v5179 = vunpack.c.0.s8 %v5178
        %v5180 = vlaneseq
        %v5181 = vshrl.u32 %v5180, 7
        %v5182 = vsub.s32 %v5179, %v5181
        %v5183 = vrot.slane %v5168, %v5182
        %v5185 = vunpack.c.l.s4 1983009808
        %v5186 = vunpack.c.0.s8 %v5185
        %v5187 = vlaneseq
        %v5188 = vshrl.u32 %v5187, 7
        %v5189 = vsub.s32 %v5186, %v5188
        %v5190 = vrot.slane %v5005, %v5189
        %v5192 = vunpack.c.l.s4 1983009808
        %v5193 = vunpack.c.0.s8 %v5192
        %v5194 = vlaneseq
        %v5195 = vshrl.u32 %v5194, 7
        %v5196 = vsub.s32 %v5193, %v5195
        %v5197 = vrot.slane %v5169, %v5196
        %v5198 = vcombine.low %v5176, %v5190
        %v5199 = vcombine.high %v5176, %v5190
        %v5200 = vcombine.low %v5183, %v5197
        %v5201 = vcombine.high %v5183, %v5197
        %v5202 = vcombine.low %v4931, %v4933
        %v5203 = vcombine.high %v4931, %v4933
        %v5204 = vcombine.high %v5010, %v5010
        %v5206 = vunpack.c.l.s4 1983009808
        %v5207 = vunpack.c.0.s8 %v5206
        %v5208 = vlaneseq
        %v5209 = vshrl.u32 %v5208, 7
        %v5210 = vsub.s32 %v5207, %v5209
        %v5211 = vrot.slane %v5202, %v5210
        %v5213 = vunpack.c.l.s4 1983009808
        %v5214 = vunpack.c.0.s8 %v5213
        %v5215 = vlaneseq
        %v5216 = vshrl.u32 %v5215, 7
        %v5217 = vsub.s32 %v5214, %v5216
        %v5218 = vrot.slane %v5203, %v5217
        %v5220 = vunpack.c.l.s4 1983009808
        %v5221 = vunpack.c.0.s8 %v5220
        %v5222 = vlaneseq
        %v5223 = vshrl.u32 %v5222, 7
        %v5224 = vsub.s32 %v5221, %v5223
        %v5225 = vrot.slane %v5010, %v5224
        %v5227 = vunpack.c.l.s4 1983009808
        %v5228 = vunpack.c.0.s8 %v5227
        %v5229 = vlaneseq
        %v5230 = vshrl.u32 %v5229, 7
        %v5231 = vsub.s32 %v5228, %v5230
        %v5232 = vrot.slane %v5204, %v5231
        %v5233 = vcombine.low %v5211, %v5225
        %v5234 = vcombine.high %v5211, %v5225
        %v5235 = vcombine.low %v5218, %v5232
        %v5236 = vcombine.high %v5218, %v5232
        %v5237 = vcombine.low %v4935, %v4937
        %v5238 = vcombine.high %v4935, %v4937
        %v5239 = vcombine.high %v5013, %v5013
        %v5241 = vunpack.c.l.s4 1983009808
        %v5242 = vunpack.c.0.s8 %v5241
        %v5243 = vlaneseq
        %v5244 = vshrl.u32 %v5243, 7
        %v5245 = vsub.s32 %v5242, %v5244
        %v5246 = vrot.slane %v5237, %v5245
        %v5248 = vunpack.c.l.s4 1983009808
        %v5249 = vunpack.c.0.s8 %v5248
        %v5250 = vlaneseq
        %v5251 = vshrl.u32 %v5250, 7
        %v5252 = vsub.s32 %v5249, %v5251
        %v5253 = vrot.slane %v5238, %v5252
        %v5255 = vunpack.c.l.s4 1983009808
        %v5256 = vunpack.c.0.s8 %v5255
        %v5257 = vlaneseq
        %v5258 = vshrl.u32 %v5257, 7
        %v5259 = vsub.s32 %v5256, %v5258
        %v5260 = vrot.slane %v5013, %v5259
        %v5262 = vunpack.c.l.s4 1983009808
        %v5263 = vunpack.c.0.s8 %v5262
        %v5264 = vlaneseq
        %v5265 = vshrl.u32 %v5264, 7
        %v5266 = vsub.s32 %v5263, %v5265
        %v5267 = vrot.slane %v5239, %v5266
        %v5268 = vcombine.low %v5246, %v5260
        %v5269 = vcombine.high %v5246, %v5260
        %v5270 = vcombine.low %v5253, %v5267
        %v5271 = vcombine.high %v5253, %v5267
        %v5272 = vcombine.low %v4941, %v4943
        %v5273 = vcombine.high %v4941, %v4943
        %v5274 = vcombine.high %v5018, %v5018
        %v5276 = vunpack.c.l.s4 1983009808
        %v5277 = vunpack.c.0.s8 %v5276
        %v5278 = vlaneseq
        %v5279 = vshrl.u32 %v5278, 7
        %v5280 = vsub.s32 %v5277, %v5279
        %v5281 = vrot.slane %v5272, %v5280
        %v5283 = vunpack.c.l.s4 1983009808
        %v5284 = vunpack.c.0.s8 %v5283
        %v5285 = vlaneseq
        %v5286 = vshrl.u32 %v5285, 7
        %v5287 = vsub.s32 %v5284, %v5286
        %v5288 = vrot.slane %v5273, %v5287
        %v5290 = vunpack.c.l.s4 1983009808
        %v5291 = vunpack.c.0.s8 %v5290
        %v5292 = vlaneseq
        %v5293 = vshrl.u32 %v5292, 7
        %v5294 = vsub.s32 %v5291, %v5293
        %v5295 = vrot.slane %v5018, %v5294
        %v5297 = vunpack.c.l.s4 1983009808
        %v5298 = vunpack.c.0.s8 %v5297
        %v5299 = vlaneseq
        %v5300 = vshrl.u32 %v5299, 7
        %v5301 = vsub.s32 %v5298, %v5300
        %v5302 = vrot.slane %v5274, %v5301
        %v5303 = vcombine.low %v5281, %v5295
        %v5304 = vcombine.high %v5281, %v5295
        %v5305 = vcombine.low %v5288, %v5302
        %v5306 = vcombine.high %v5288, %v5302
        %v5307 = vcombine.low %v4945, %v4947
        %v5308 = vcombine.high %v4945, %v4947
        %v5309 = vcombine.high %v5021, %v5021
        %v5311 = vunpack.c.l.s4 1983009808
        %v5312 = vunpack.c.0.s8 %v5311
        %v5313 = vlaneseq
        %v5314 = vshrl.u32 %v5313, 7
        %v5315 = vsub.s32 %v5312, %v5314
        %v5316 = vrot.slane %v5307, %v5315
        %v5318 = vunpack.c.l.s4 1983009808
        %v5319 = vunpack.c.0.s8 %v5318
        %v5320 = vlaneseq
        %v5321 = vshrl.u32 %v5320, 7
        %v5322 = vsub.s32 %v5319, %v5321
        %v5323 = vrot.slane %v5308, %v5322
        %v5325 = vunpack.c.l.s4 1983009808
        %v5326 = vunpack.c.0.s8 %v5325
        %v5327 = vlaneseq
        %v5328 = vshrl.u32 %v5327, 7
        %v5329 = vsub.s32 %v5326, %v5328
        %v5330 = vrot.slane %v5021, %v5329
        %v5332 = vunpack.c.l.s4 1983009808
        %v5333 = vunpack.c.0.s8 %v5332
        %v5334 = vlaneseq
        %v5335 = vshrl.u32 %v5334, 7
        %v5336 = vsub.s32 %v5333, %v5335
        %v5337 = vrot.slane %v5309, %v5336
        %v5338 = vcombine.low %v5316, %v5330
        %v5339 = vcombine.high %v5316, %v5330
        %v5340 = vcombine.low %v5323, %v5337
        %v5341 = vcombine.high %v5323, %v5337
        %v5342 = vcombine.low %v4951, %v4953
        %v5343 = vcombine.high %v4951, %v4953
        %v5344 = vcombine.high %v5026, %v5026
        %v5346 = vunpack.c.l.s4 1983009808
        %v5347 = vunpack.c.0.s8 %v5346
        %v5348 = vlaneseq
        %v5349 = vshrl.u32 %v5348, 7
        %v5350 = vsub.s32 %v5347, %v5349
        %v5351 = vrot.slane %v5342, %v5350
        %v5353 = vunpack.c.l.s4 1983009808
        %v5354 = vunpack.c.0.s8 %v5353
        %v5355 = vlaneseq
        %v5356 = vshrl.u32 %v5355, 7
        %v5357 = vsub.s32 %v5354, %v5356
        %v5358 = vrot.slane %v5343, %v5357
        %v5360 = vunpack.c.l.s4 1983009808
        %v5361 = vunpack.c.0.s8 %v5360
        %v5362 = vlaneseq
        %v5363 = vshrl.u32 %v5362, 7
        %v5364 = vsub.s32 %v5361, %v5363
        %v5365 = vrot.slane %v5026, %v5364
        %v5367 = vunpack.c.l.s4 1983009808
        %v5368 = vunpack.c.0.s8 %v5367
        %v5369 = vlaneseq
        %v5370 = vshrl.u32 %v5369, 7
        %v5371 = vsub.s32 %v5368, %v5370
        %v5372 = vrot.slane %v5344, %v5371
        %v5373 = vcombine.low %v5351, %v5365
        %v5374 = vcombine.high %v5351, %v5365
        %v5375 = vcombine.low %v5358, %v5372
        %v5376 = vcombine.high %v5358, %v5372
        %v5377 = vcombine.low %v4955, %v4957
        %v5378 = vcombine.high %v4955, %v4957
        %v5379 = vcombine.high %v5029, %v5029
        %v5381 = vunpack.c.l.s4 1983009808
        %v5382 = vunpack.c.0.s8 %v5381
        %v5383 = vlaneseq
        %v5384 = vshrl.u32 %v5383, 7
        %v5385 = vsub.s32 %v5382, %v5384
        %v5386 = vrot.slane %v5377, %v5385
        %v5388 = vunpack.c.l.s4 1983009808
        %v5389 = vunpack.c.0.s8 %v5388
        %v5390 = vlaneseq
        %v5391 = vshrl.u32 %v5390, 7
        %v5392 = vsub.s32 %v5389, %v5391
        %v5393 = vrot.slane %v5378, %v5392
        %v5395 = vunpack.c.l.s4 1983009808
        %v5396 = vunpack.c.0.s8 %v5395
        %v5397 = vlaneseq
        %v5398 = vshrl.u32 %v5397, 7
        %v5399 = vsub.s32 %v5396, %v5398
        %v5400 = vrot.slane %v5029, %v5399
        %v5402 = vunpack.c.l.s4 1983009808
        %v5403 = vunpack.c.0.s8 %v5402
        %v5404 = vlaneseq
        %v5405 = vshrl.u32 %v5404, 7
        %v5406 = vsub.s32 %v5403, %v5405
        %v5407 = vrot.slane %v5379, %v5406
        %v5408 = vcombine.low %v5386, %v5400
        %v5409 = vcombine.high %v5386, %v5400
        %v5410 = vcombine.low %v5393, %v5407
        %v5411 = vcombine.high %v5393, %v5407
        %v5444 = vadd.f32 %v4097, %v5093
        %v5445 = vadd.f32 %v4098, %v5094
        %v5446 = vadd.f32 %v4099, %v5095
        %v5447 = vadd.f32 %v4100, %v5096
        %v5448 = vadd.f32 %v4101, %v5129
        %v5449 = vadd.f32 %v4102, %v5130
        %v5450 = vadd.f32 %v4103, %v5131
        %v5451 = vadd.f32 %v4104, %v5163
        %v5452 = vadd.f32 %v4105, %v5165
        %v5453 = vadd.f32 %v4106, %v5166
        %v5454 = vadd.f32 %v4107, %v5198
        %v5455 = vadd.f32 %v4108, %v5199
        %v5456 = vadd.f32 %v4109, %v5201
        %v5457 = vadd.f32 %v4110, %v5233
        %v5458 = vadd.f32 %v4111, %v5234
        %v5459 = vadd.f32 %v4112, %v5235
        %v5460 = vadd.f32 %v4113, %v5268
        %v5461 = vadd.f32 %v4114, %v5269
        %v5462 = vadd.f32 %v4115, %v5270
        %v5463 = vadd.f32 %v4116, %v5271
        %v5464 = vadd.f32 %v4117, %v5304
        %v5465 = vadd.f32 %v4118, %v5305
        %v5466 = vadd.f32 %v4119, %v5306
        %v5467 = vadd.f32 %v4120, %v5338
        %v5468 = vadd.f32 %v4121, %v5340
        %v5469 = vadd.f32 %v4122, %v5341
        %v5470 = vadd.f32 %v4123, %v5373
        %v5471 = vadd.f32 %v4124, %v5374
        %v5472 = vadd.f32 %v4125, %v5376
        %v5473 = vadd.f32 %v4126, %v5408
        %v5474 = vadd.f32 %v4127, %v5409
        %v5475 = vadd.f32 %v4128, %v5410
        %v5476 = vrot.slane %v5093, 7
        %v5477 = vrot.slane %v5476, 2
        %v5478 = vrot.slane %v5094, 7
        %v5479 = vsel %vm3832, %v5477, %v5478
        %v5480 = vrot.slane %v5478, 2
        %v5481 = vrot.slane %v5095, 7
        %v5482 = vsel %vm3832, %v5480, %v5481
        %v5483 = vrot.slane %v5481, 2
        %v5484 = vrot.slane %v5096, 7
        %v5485 = vsel %vm3832, %v5483, %v5484
        %v5486 = vrot.slane %v5484, 2
        %v5487 = vrot.slane %v5128, 7
        %v5488 = vsel %vm3832, %v5486, %v5487
        %v5489 = vrot.slane %v5129, 7
        %v5490 = vrot.slane %v5489, 2
        %v5491 = vrot.slane %v5130, 7
        %v5492 = vsel %vm3832, %v5490, %v5491
        %v5493 = vrot.slane %v5491, 2
        %v5494 = vrot.slane %v5131, 7
        %v5495 = vsel %vm3832, %v5493, %v5494
        %v5496 = vrot.slane %v5494, 2
        %v5497 = vrot.slane %v5163, 7
        %v5498 = vsel %vm3832, %v5496, %v5497
        %v5499 = vrot.slane %v5497, 2
        %v5500 = vrot.slane %v5164, 7
        %v5501 = vsel %vm3832, %v5499, %v5500
        %v5502 = vrot.slane %v5165, 7
        %v5503 = vrot.slane %v5502, 2
        %v5504 = vrot.slane %v5166, 7
        %v5505 = vsel %vm3832, %v5503, %v5504
        %v5506 = vrot.slane %v5504, 2
        %v5507 = vrot.slane %v5198, 7
        %v5508 = vsel %vm3832, %v5506, %v5507
        %v5509 = vrot.slane %v5507, 2
        %v5510 = vrot.slane %v5199, 7
        %v5511 = vsel %vm3832, %v5509, %v5510
        %v5512 = vrot.slane %v5510, 2
        %v5513 = vrot.slane %v5200, 7
        %v5514 = vsel %vm3832, %v5512, %v5513
        %v5515 = vrot.slane %v5201, 7
        %v5516 = vrot.slane %v5515, 2
        %v5517 = vrot.slane %v5233, 7
        %v5518 = vsel %vm3832, %v5516, %v5517
        %v5519 = vrot.slane %v5517, 2
        %v5520 = vrot.slane %v5234, 7
        %v5521 = vsel %vm3832, %v5519, %v5520
        %v5522 = vrot.slane %v5520, 2
        %v5523 = vrot.slane %v5235, 7
        %v5524 = vsel %vm3832, %v5522, %v5523
        %v5525 = vrot.slane %v5523, 2
        %v5526 = vrot.slane %v5236, 7
        %v5527 = vsel %vm3832, %v5525, %v5526
        %v5528 = vrot.slane %v5268, 7
        %v5529 = vrot.slane %v5528, 2
        %v5530 = vrot.slane %v5269, 7
        %v5531 = vsel %vm3832, %v5529, %v5530
        %v5532 = vrot.slane %v5530, 2
        %v5533 = vrot.slane %v5270, 7
        %v5534 = vsel %vm3832, %v5532, %v5533
        %v5535 = vrot.slane %v5533, 2
        %v5536 = vrot.slane %v5271, 7
        %v5537 = vsel %vm3832, %v5535, %v5536
        %v5538 = vrot.slane %v5536, 2
        %v5539 = vrot.slane %v5303, 7
        %v5540 = vsel %vm3832, %v5538, %v5539
        %v5541 = vrot.slane %v5304, 7
        %v5542 = vrot.slane %v5541, 2
        %v5543 = vrot.slane %v5305, 7
        %v5544 = vsel %vm3832, %v5542, %v5543
        %v5545 = vrot.slane %v5543, 2
        %v5546 = vrot.slane %v5306, 7
        %v5547 = vsel %vm3832, %v5545, %v5546
        %v5548 = vrot.slane %v5546, 2
        %v5549 = vrot.slane %v5338, 7
        %v5550 = vsel %vm3832, %v5548, %v5549
        %v5551 = vrot.slane %v5549, 2
        %v5552 = vrot.slane %v5339, 7
        %v5553 = vsel %vm3832, %v5551, %v5552
        %v5554 = vrot.slane %v5340, 7
        %v5555 = vrot.slane %v5554, 2
        %v5556 = vrot.slane %v5341, 7
        %v5557 = vsel %vm3832, %v5555, %v5556
        %v5558 = vrot.slane %v5556, 2
        %v5559 = vrot.slane %v5373, 7
        %v5560 = vsel %vm3832, %v5558, %v5559
        %v5561 = vrot.slane %v5559, 2
        %v5562 = vrot.slane %v5374, 7
        %v5563 = vsel %vm3832, %v5561, %v5562
        %v5564 = vrot.slane %v5562, 2
        %v5565 = vrot.slane %v5375, 7
        %v5566 = vsel %vm3832, %v5564, %v5565
        %v5567 = vrot.slane %v5376, 7
        %v5568 = vrot.slane %v5567, 2
        %v5569 = vrot.slane %v5408, 7
        %v5570 = vsel %vm3832, %v5568, %v5569
        %v5571 = vrot.slane %v5569, 2
        %v5572 = vrot.slane %v5409, 7
        %v5573 = vsel %vm3832, %v5571, %v5572
        %v5574 = vrot.slane %v5572, 2
        %v5575 = vrot.slane %v5410, 7
        %v5576 = vsel %vm3832, %v5574, %v5575
        %v5577 = vrot.slane %v5575, 2
        %v5578 = vrot.slane %v5411, 7
        %v5579 = vsel %vm3832, %v5577, %v5578
        %v5580 = vrot.slane %v5479, 2
        %v5581 = vrot.slane %v5482, 2
        %v5582 = vrot.slane %v5485, 2
        %v5583 = vrot.slane %v5488, 2
        %v5584 = vrot.slane %v5492, 2
        %v5585 = vrot.slane %v5495, 2
        %v5586 = vrot.slane %v5498, 2
        %v5587 = vrot.slane %v5501, 2
        %v5588 = vrot.slane %v5505, 2
        %v5589 = vrot.slane %v5508, 2
        %v5590 = vrot.slane %v5511, 2
        %v5591 = vrot.slane %v5514, 2
        %v5592 = vrot.slane %v5518, 2
        %v5593 = vrot.slane %v5521, 2
        %v5594 = vrot.slane %v5524, 2
        %v5595 = vrot.slane %v5527, 2
        %v5596 = vrot.slane %v5531, 2
        %v5597 = vrot.slane %v5534, 2
        %v5598 = vrot.slane %v5537, 2
        %v5599 = vrot.slane %v5540, 2
        %v5600 = vrot.slane %v5544, 2
        %v5601 = vrot.slane %v5547, 2
        %v5602 = vrot.slane %v5550, 2
        %v5603 = vrot.slane %v5553, 2
        %v5604 = vrot.slane %v5557, 2
        %v5605 = vrot.slane %v5560, 2
        %v5606 = vrot.slane %v5563, 2
        %v5607 = vrot.slane %v5566, 2
        %v5608 = vrot.slane %v5570, 2
        %v5609 = vrot.slane %v5573, 2
        %v5610 = vrot.slane %v5576, 2
        %v5611 = vrot.slane %v5579, 2
        %v5644 = vadd.f32 %v5444, %v5580
        %v5645 = vadd.f32 %v5445, %v5581
        %v5646 = vadd.f32 %v5446, %v5582
        %v5647 = vadd.f32 %v5447, %v5583
        %v5648 = vadd.f32 %v5448, %v5584
        %v5649 = vadd.f32 %v5449, %v5585
        %v5650 = vadd.f32 %v5450, %v5586
        %v5651 = vadd.f32 %v5451, %v5587
        %v5652 = vadd.f32 %v5452, %v5588
        %v5653 = vadd.f32 %v5453, %v5589
        %v5654 = vadd.f32 %v5454, %v5590
        %v5655 = vadd.f32 %v5455, %v5591
        %v5656 = vadd.f32 %v5456, %v5592
        %v5657 = vadd.f32 %v5457, %v5593
        %v5658 = vadd.f32 %v5458, %v5594
        %v5659 = vadd.f32 %v5459, %v5595
        %v5660 = vadd.f32 %v5460, %v5596
        %v5661 = vadd.f32 %v5461, %v5597
        %v5662 = vadd.f32 %v5462, %v5598
        %v5663 = vadd.f32 %v5463, %v5599
        %v5664 = vadd.f32 %v5464, %v5600
        %v5665 = vadd.f32 %v5465, %v5601
        %v5666 = vadd.f32 %v5466, %v5602
        %v5667 = vadd.f32 %v5467, %v5603
        %v5668 = vadd.f32 %v5468, %v5604
        %v5669 = vadd.f32 %v5469, %v5605
        %v5670 = vadd.f32 %v5470, %v5606
        %v5671 = vadd.f32 %v5471, %v5607
        %v5672 = vadd.f32 %v5472, %v5608
        %v5673 = vadd.f32 %v5473, %v5609
        %v5674 = vadd.f32 %v5474, %v5610
        %v5675 = vadd.f32 %v5475, %v5611
        %v5676 = vrot.slane %v5094, 4
        %v5677 = vrot.slane %v5095, 4
        %v5678 = vrot.slane %v5096, 4
        %v5679 = vrot.slane %v5128, 4
        %v5680 = vrot.slane %v5130, 4
        %v5681 = vrot.slane %v5131, 4
        %v5682 = vrot.slane %v5163, 4
        %v5683 = vrot.slane %v5164, 4
        %v5684 = vrot.slane %v5166, 4
        %v5685 = vrot.slane %v5198, 4
        %v5686 = vrot.slane %v5199, 4
        %v5687 = vrot.slane %v5200, 4
        %v5688 = vrot.slane %v5233, 4
        %v5689 = vrot.slane %v5234, 4
        %v5690 = vrot.slane %v5235, 4
        %v5691 = vrot.slane %v5236, 4
        %v5692 = vrot.slane %v5269, 4
        %v5693 = vrot.slane %v5270, 4
        %v5694 = vrot.slane %v5271, 4
        %v5695 = vrot.slane %v5303, 4
        %v5696 = vrot.slane %v5305, 4
        %v5697 = vrot.slane %v5306, 4
        %v5698 = vrot.slane %v5338, 4
        %v5699 = vrot.slane %v5339, 4
        %v5700 = vrot.slane %v5341, 4
        %v5701 = vrot.slane %v5373, 4
        %v5702 = vrot.slane %v5374, 4
        %v5703 = vrot.slane %v5375, 4
        %v5704 = vrot.slane %v5408, 4
        %v5705 = vrot.slane %v5409, 4
        %v5706 = vrot.slane %v5410, 4
        %v5707 = vrot.slane %v5411, 4
        %v5740 = vadd.f32 %v5644, %v5676
        %v5741 = vadd.f32 %v5645, %v5677
        %v5742 = vadd.f32 %v5646, %v5678
        %v5743 = vadd.f32 %v5647, %v5679
        %v5744 = vadd.f32 %v5648, %v5680
        %v5745 = vadd.f32 %v5649, %v5681
        %v5746 = vadd.f32 %v5650, %v5682
        %v5747 = vadd.f32 %v5651, %v5683
        %v5748 = vadd.f32 %v5652, %v5684
        %v5749 = vadd.f32 %v5653, %v5685
        %v5750 = vadd.f32 %v5654, %v5686
        %v5751 = vadd.f32 %v5655, %v5687
        %v5752 = vadd.f32 %v5656, %v5688
        %v5753 = vadd.f32 %v5657, %v5689
        %v5754 = vadd.f32 %v5658, %v5690
        %v5755 = vadd.f32 %v5659, %v5691
        %v5756 = vadd.f32 %v5660, %v5692
        %v5757 = vadd.f32 %v5661, %v5693
        %v5758 = vadd.f32 %v5662, %v5694
        %v5759 = vadd.f32 %v5663, %v5695
        %v5760 = vadd.f32 %v5664, %v5696
        %v5761 = vadd.f32 %v5665, %v5697
        %v5762 = vadd.f32 %v5666, %v5698
        %v5763 = vadd.f32 %v5667, %v5699
        %v5764 = vadd.f32 %v5668, %v5700
        %v5765 = vadd.f32 %v5669, %v5701
        %v5766 = vadd.f32 %v5670, %v5702
        %v5767 = vadd.f32 %v5671, %v5703
        %v5768 = vadd.f32 %v5672, %v5704
        %v5769 = vadd.f32 %v5673, %v5705
        %v5770 = vadd.f32 %v5674, %v5706
        %v5771 = vadd.f32 %v5675, %v5707
        %s5772 = scalar_lea.vmem [#allocation2], 16
        %v5773 = vld [vmem:[%s5772] sm:$0xf]
        %v5774 = vld [vmem:[%s5772 + $0x4] sm:$0x1]
        %v5775 = vld [vmem:[%s5772 + $0x8] sm:$0xf]
        %v5776 = vld [vmem:[%s5772 + $0xc] sm:$0x1]
        %v5777 = vld [vmem:[%s5772 + $0x10] sm:$0xf]
        %v5778 = vld [vmem:[%s5772 + $0x14] sm:$0x1]
        %v5779 = vld [vmem:[%s5772 + $0x18] sm:$0xf]
        %v5780 = vld [vmem:[%s5772 + $0x1c] sm:$0x1]
        %v5781 = vld [vmem:[%s5772 + $0x20] sm:$0xf]
        %v5782 = vld [vmem:[%s5772 + $0x24] sm:$0x1]
        %v5783 = vld [vmem:[%s5772 + $0x28] sm:$0xf]
        %v5784 = vld [vmem:[%s5772 + $0x2c] sm:$0x1]
        %v5785 = vld [vmem:[%s5772 + $0x30] sm:$0xf]
        %v5786 = vld [vmem:[%s5772 + $0x34] sm:$0x1]
        %v5787 = vld [vmem:[%s5772 + $0x38] sm:$0xf]
        %v5788 = vld [vmem:[%s5772 + $0x3c] sm:$0x1]
        %v5806 = vunpack.c.l.s4 1966171168
        %v5807 = vunpack.c.0.s8 %v5806
        %v5808 = vlaneseq
        %v5809 = vshrl.u32 %v5808, 7
        %v5810 = vsub.s32 %v5807, %v5809
        %v5811 = vrot.slane %v5773, %v5810
        %v5812 = vcombine.high %v5811, %v5811
        %v5814 = vunpack.c.l.s4 1966171168
        %v5815 = vunpack.c.0.s8 %v5814
        %v5816 = vlaneseq
        %v5817 = vshrl.u32 %v5816, 7
        %v5818 = vsub.s32 %v5815, %v5817
        %v5819 = vrot.slane %v5811, %v5818
        %v5821 = vunpack.c.l.s4 1966171168
        %v5822 = vunpack.c.0.s8 %v5821
        %v5823 = vlaneseq
        %v5824 = vshrl.u32 %v5823, 7
        %v5825 = vsub.s32 %v5822, %v5824
        %v5826 = vrot.slane %v5812, %v5825
        %v5827 = vcombine.high %v5819, %v5819
        %v5828 = vcombine.high %v5826, %v5826
        %v5830 = vunpack.c.l.s4 1966171168
        %v5831 = vunpack.c.0.s8 %v5830
        %v5832 = vlaneseq
        %v5833 = vshrl.u32 %v5832, 7
        %v5834 = vsub.s32 %v5831, %v5833
        %v5835 = vrot.slane %v5774, %v5834
        %v5837 = vunpack.c.l.s4 1966171168
        %v5838 = vunpack.c.0.s8 %v5837
        %v5839 = vlaneseq
        %v5840 = vshrl.u32 %v5839, 7
        %v5841 = vsub.s32 %v5838, %v5840
        %v5842 = vrot.slane %v5835, %v5841
        %v5844 = vunpack.c.l.s4 1966171168
        %v5845 = vunpack.c.0.s8 %v5844
        %v5846 = vlaneseq
        %v5847 = vshrl.u32 %v5846, 7
        %v5848 = vsub.s32 %v5845, %v5847
        %v5849 = vrot.slane %v5775, %v5848
        %v5850 = vcombine.high %v5849, %v5849
        %v5852 = vunpack.c.l.s4 1966171168
        %v5853 = vunpack.c.0.s8 %v5852
        %v5854 = vlaneseq
        %v5855 = vshrl.u32 %v5854, 7
        %v5856 = vsub.s32 %v5853, %v5855
        %v5857 = vrot.slane %v5849, %v5856
        %v5859 = vunpack.c.l.s4 1966171168
        %v5860 = vunpack.c.0.s8 %v5859
        %v5861 = vlaneseq
        %v5862 = vshrl.u32 %v5861, 7
        %v5863 = vsub.s32 %v5860, %v5862
        %v5864 = vrot.slane %v5850, %v5863
        %v5865 = vcombine.high %v5857, %v5857
        %v5866 = vcombine.high %v5864, %v5864
        %v5868 = vunpack.c.l.s4 1966171168
        %v5869 = vunpack.c.0.s8 %v5868
        %v5870 = vlaneseq
        %v5871 = vshrl.u32 %v5870, 7
        %v5872 = vsub.s32 %v5869, %v5871
        %v5873 = vrot.slane %v5776, %v5872
        %v5875 = vunpack.c.l.s4 1966171168
        %v5876 = vunpack.c.0.s8 %v5875
        %v5877 = vlaneseq
        %v5878 = vshrl.u32 %v5877, 7
        %v5879 = vsub.s32 %v5876, %v5878
        %v5880 = vrot.slane %v5873, %v5879
        %v5882 = vunpack.c.l.s4 1966171168
        %v5883 = vunpack.c.0.s8 %v5882
        %v5884 = vlaneseq
        %v5885 = vshrl.u32 %v5884, 7
        %v5886 = vsub.s32 %v5883, %v5885
        %v5887 = vrot.slane %v5777, %v5886
        %v5888 = vcombine.high %v5887, %v5887
        %v5890 = vunpack.c.l.s4 1966171168
        %v5891 = vunpack.c.0.s8 %v5890
        %v5892 = vlaneseq
        %v5893 = vshrl.u32 %v5892, 7
        %v5894 = vsub.s32 %v5891, %v5893
        %v5895 = vrot.slane %v5887, %v5894
        %v5897 = vunpack.c.l.s4 1966171168
        %v5898 = vunpack.c.0.s8 %v5897
        %v5899 = vlaneseq
        %v5900 = vshrl.u32 %v5899, 7
        %v5901 = vsub.s32 %v5898, %v5900
        %v5902 = vrot.slane %v5888, %v5901
        %v5903 = vcombine.high %v5895, %v5895
        %v5904 = vcombine.high %v5902, %v5902
        %v5906 = vunpack.c.l.s4 1966171168
        %v5907 = vunpack.c.0.s8 %v5906
        %v5908 = vlaneseq
        %v5909 = vshrl.u32 %v5908, 7
        %v5910 = vsub.s32 %v5907, %v5909
        %v5911 = vrot.slane %v5778, %v5910
        %v5913 = vunpack.c.l.s4 1966171168
        %v5914 = vunpack.c.0.s8 %v5913
        %v5915 = vlaneseq
        %v5916 = vshrl.u32 %v5915, 7
        %v5917 = vsub.s32 %v5914, %v5916
        %v5918 = vrot.slane %v5911, %v5917
        %v5920 = vunpack.c.l.s4 1966171168
        %v5921 = vunpack.c.0.s8 %v5920
        %v5922 = vlaneseq
        %v5923 = vshrl.u32 %v5922, 7
        %v5924 = vsub.s32 %v5921, %v5923
        %v5925 = vrot.slane %v5779, %v5924
        %v5926 = vcombine.high %v5925, %v5925
        %v5928 = vunpack.c.l.s4 1966171168
        %v5929 = vunpack.c.0.s8 %v5928
        %v5930 = vlaneseq
        %v5931 = vshrl.u32 %v5930, 7
        %v5932 = vsub.s32 %v5929, %v5931
        %v5933 = vrot.slane %v5925, %v5932
        %v5935 = vunpack.c.l.s4 1966171168
        %v5936 = vunpack.c.0.s8 %v5935
        %v5937 = vlaneseq
        %v5938 = vshrl.u32 %v5937, 7
        %v5939 = vsub.s32 %v5936, %v5938
        %v5940 = vrot.slane %v5926, %v5939
        %v5941 = vcombine.high %v5933, %v5933
        %v5942 = vcombine.high %v5940, %v5940
        %v5944 = vunpack.c.l.s4 1966171168
        %v5945 = vunpack.c.0.s8 %v5944
        %v5946 = vlaneseq
        %v5947 = vshrl.u32 %v5946, 7
        %v5948 = vsub.s32 %v5945, %v5947
        %v5949 = vrot.slane %v5780, %v5948
        %v5951 = vunpack.c.l.s4 1966171168
        %v5952 = vunpack.c.0.s8 %v5951
        %v5953 = vlaneseq
        %v5954 = vshrl.u32 %v5953, 7
        %v5955 = vsub.s32 %v5952, %v5954
        %v5956 = vrot.slane %v5949, %v5955
        %v5958 = vunpack.c.l.s4 1966171168
        %v5959 = vunpack.c.0.s8 %v5958
        %v5960 = vlaneseq
        %v5961 = vshrl.u32 %v5960, 7
        %v5962 = vsub.s32 %v5959, %v5961
        %v5963 = vrot.slane %v5781, %v5962
        %v5964 = vcombine.high %v5963, %v5963
        %v5966 = vunpack.c.l.s4 1966171168
        %v5967 = vunpack.c.0.s8 %v5966
        %v5968 = vlaneseq
        %v5969 = vshrl.u32 %v5968, 7
        %v5970 = vsub.s32 %v5967, %v5969
        %v5971 = vrot.slane %v5963, %v5970
        %v5973 = vunpack.c.l.s4 1966171168
        %v5974 = vunpack.c.0.s8 %v5973
        %v5975 = vlaneseq
        %v5976 = vshrl.u32 %v5975, 7
        %v5977 = vsub.s32 %v5974, %v5976
        %v5978 = vrot.slane %v5964, %v5977
        %v5979 = vcombine.high %v5971, %v5971
        %v5980 = vcombine.high %v5978, %v5978
        %v5982 = vunpack.c.l.s4 1966171168
        %v5983 = vunpack.c.0.s8 %v5982
        %v5984 = vlaneseq
        %v5985 = vshrl.u32 %v5984, 7
        %v5986 = vsub.s32 %v5983, %v5985
        %v5987 = vrot.slane %v5782, %v5986
        %v5989 = vunpack.c.l.s4 1966171168
        %v5990 = vunpack.c.0.s8 %v5989
        %v5991 = vlaneseq
        %v5992 = vshrl.u32 %v5991, 7
        %v5993 = vsub.s32 %v5990, %v5992
        %v5994 = vrot.slane %v5987, %v5993
        %v5996 = vunpack.c.l.s4 1966171168
        %v5997 = vunpack.c.0.s8 %v5996
        %v5998 = vlaneseq
        %v5999 = vshrl.u32 %v5998, 7
        %v6000 = vsub.s32 %v5997, %v5999
        %v6001 = vrot.slane %v5783, %v6000
        %v6002 = vcombine.high %v6001, %v6001
        %v6004 = vunpack.c.l.s4 1966171168
        %v6005 = vunpack.c.0.s8 %v6004
        %v6006 = vlaneseq
        %v6007 = vshrl.u32 %v6006, 7
        %v6008 = vsub.s32 %v6005, %v6007
        %v6009 = vrot.slane %v6001, %v6008
        %v6011 = vunpack.c.l.s4 1966171168
        %v6012 = vunpack.c.0.s8 %v6011
        %v6013 = vlaneseq
        %v6014 = vshrl.u32 %v6013, 7
        %v6015 = vsub.s32 %v6012, %v6014
        %v6016 = vrot.slane %v6002, %v6015
        %v6017 = vcombine.high %v6009, %v6009
        %v6018 = vcombine.high %v6016, %v6016
        %v6020 = vunpack.c.l.s4 1966171168
        %v6021 = vunpack.c.0.s8 %v6020
        %v6022 = vlaneseq
        %v6023 = vshrl.u32 %v6022, 7
        %v6024 = vsub.s32 %v6021, %v6023
        %v6025 = vrot.slane %v5784, %v6024
        %v6027 = vunpack.c.l.s4 1966171168
        %v6028 = vunpack.c.0.s8 %v6027
        %v6029 = vlaneseq
        %v6030 = vshrl.u32 %v6029, 7
        %v6031 = vsub.s32 %v6028, %v6030
        %v6032 = vrot.slane %v6025, %v6031
        %v6034 = vunpack.c.l.s4 1966171168
        %v6035 = vunpack.c.0.s8 %v6034
        %v6036 = vlaneseq
        %v6037 = vshrl.u32 %v6036, 7
        %v6038 = vsub.s32 %v6035, %v6037
        %v6039 = vrot.slane %v5785, %v6038
        %v6040 = vcombine.high %v6039, %v6039
        %v6042 = vunpack.c.l.s4 1966171168
        %v6043 = vunpack.c.0.s8 %v6042
        %v6044 = vlaneseq
        %v6045 = vshrl.u32 %v6044, 7
        %v6046 = vsub.s32 %v6043, %v6045
        %v6047 = vrot.slane %v6039, %v6046
        %v6049 = vunpack.c.l.s4 1966171168
        %v6050 = vunpack.c.0.s8 %v6049
        %v6051 = vlaneseq
        %v6052 = vshrl.u32 %v6051, 7
        %v6053 = vsub.s32 %v6050, %v6052
        %v6054 = vrot.slane %v6040, %v6053
        %v6055 = vcombine.high %v6047, %v6047
        %v6056 = vcombine.high %v6054, %v6054
        %v6058 = vunpack.c.l.s4 1966171168
        %v6059 = vunpack.c.0.s8 %v6058
        %v6060 = vlaneseq
        %v6061 = vshrl.u32 %v6060, 7
        %v6062 = vsub.s32 %v6059, %v6061
        %v6063 = vrot.slane %v5786, %v6062
        %v6065 = vunpack.c.l.s4 1966171168
        %v6066 = vunpack.c.0.s8 %v6065
        %v6067 = vlaneseq
        %v6068 = vshrl.u32 %v6067, 7
        %v6069 = vsub.s32 %v6066, %v6068
        %v6070 = vrot.slane %v6063, %v6069
        %v6072 = vunpack.c.l.s4 1966171168
        %v6073 = vunpack.c.0.s8 %v6072
        %v6074 = vlaneseq
        %v6075 = vshrl.u32 %v6074, 7
        %v6076 = vsub.s32 %v6073, %v6075
        %v6077 = vrot.slane %v5787, %v6076
        %v6078 = vcombine.high %v6077, %v6077
        %v6080 = vunpack.c.l.s4 1966171168
        %v6081 = vunpack.c.0.s8 %v6080
        %v6082 = vlaneseq
        %v6083 = vshrl.u32 %v6082, 7
        %v6084 = vsub.s32 %v6081, %v6083
        %v6085 = vrot.slane %v6077, %v6084
        %v6087 = vunpack.c.l.s4 1966171168
        %v6088 = vunpack.c.0.s8 %v6087
        %v6089 = vlaneseq
        %v6090 = vshrl.u32 %v6089, 7
        %v6091 = vsub.s32 %v6088, %v6090
        %v6092 = vrot.slane %v6078, %v6091
        %v6093 = vcombine.high %v6085, %v6085
        %v6094 = vcombine.high %v6092, %v6092
        %v6096 = vunpack.c.l.s4 1966171168
        %v6097 = vunpack.c.0.s8 %v6096
        %v6098 = vlaneseq
        %v6099 = vshrl.u32 %v6098, 7
        %v6100 = vsub.s32 %v6097, %v6099
        %v6101 = vrot.slane %v5788, %v6100
        %v6103 = vunpack.c.l.s4 1966171168
        %v6104 = vunpack.c.0.s8 %v6103
        %v6105 = vlaneseq
        %v6106 = vshrl.u32 %v6105, 7
        %v6107 = vsub.s32 %v6104, %v6106
        %v6108 = vrot.slane %v6101, %v6107
        %s6109 = scalar_lea.vmem %s6, 384
        %v6110 = vld [vmem:[%s6109] sm:$0xff]
        %v6111 = vld [vmem:[%s6109 + $0x8] sm:$0xf]
        %v6112 = vld [vmem:[%s6109 + $0xc] sm:$0xff]
        %v6113 = vld [vmem:[%s6109 + $0x14] sm:$0xf]
        %v6114 = vld [vmem:[%s6109 + $0x18] sm:$0xff]
        %v6115 = vld [vmem:[%s6109 + $0x20] sm:$0xf]
        %v6116 = vld [vmem:[%s6109 + $0x24] sm:$0xff]
        %v6117 = vld [vmem:[%s6109 + $0x2c] sm:$0xf]
        %v6118 = vld [vmem:[%s6109 + $0x30] sm:$0xff]
        %v6119 = vld [vmem:[%s6109 + $0x38] sm:$0xf]
        %v6120 = vld [vmem:[%s6109 + $0x3c] sm:$0xff]
        %v6121 = vld [vmem:[%s6109 + $0x44] sm:$0xf]
        %v6122 = vld [vmem:[%s6109 + $0x48] sm:$0xff]
        %v6123 = vld [vmem:[%s6109 + $0x50] sm:$0xf]
        %v6124 = vld [vmem:[%s6109 + $0x54] sm:$0xff]
        %v6125 = vld [vmem:[%s6109 + $0x5c] sm:$0xf]
        %v6126 = vld [vmem:[%s6109 + $0x60] sm:$0xff]
        %v6127 = vld [vmem:[%s6109 + $0x68] sm:$0xf]
        %v6128 = vld [vmem:[%s6109 + $0x6c] sm:$0xff]
        %v6129 = vld [vmem:[%s6109 + $0x74] sm:$0xf]
        %v6130 = vld [vmem:[%s6109 + $0x78] sm:$0xff]
        %v6131 = vld [vmem:[%s6109 + $0x80] sm:$0xf]
        %v6132 = vld [vmem:[%s6109 + $0x84] sm:$0xff]
        %v6133 = vld [vmem:[%s6109 + $0x8c] sm:$0xf]
        %v6134 = vld [vmem:[%s6109 + $0x90] sm:$0xff]
        %v6135 = vld [vmem:[%s6109 + $0x98] sm:$0xf]
        %v6136 = vld [vmem:[%s6109 + $0x9c] sm:$0xff]
        %v6137 = vld [vmem:[%s6109 + $0xa4] sm:$0xf]
        %v6138 = vld [vmem:[%s6109 + $0xa8] sm:$0xff]
        %v6139 = vld [vmem:[%s6109 + $0xb0] sm:$0xf]
        %v6140 = vld [vmem:[%s6109 + $0xb4] sm:$0xff]
        %v6141 = vld [vmem:[%s6109 + $0xbc] sm:$0xf]
        %v6142 = vcombine.low %v5819, %v5826
        %v6143 = vcombine.low %v5827, %v5828
        %v6144 = vcombine.low %v5842, %v5857
        %v6145 = vcombine.low %v5864, %v5865
        %v6147 = vunpack.c.l.s4 1966171168
        %v6148 = vunpack.c.0.s8 %v6147
        %v6149 = vlaneseq
        %v6150 = vshrl.u32 %v6149, 7
        %v6151 = vsub.s32 %v6148, %v6150
        %v6152 = vrot.slane %v6142, %v6151
        %v6154 = vunpack.c.l.s4 1966171168
        %v6155 = vunpack.c.0.s8 %v6154
        %v6156 = vlaneseq
        %v6157 = vshrl.u32 %v6156, 7
        %v6158 = vsub.s32 %v6155, %v6157
        %v6159 = vrot.slane %v6143, %v6158
        %v6161 = vunpack.c.l.s4 1966171168
        %v6162 = vunpack.c.0.s8 %v6161
        %v6163 = vlaneseq
        %v6164 = vshrl.u32 %v6163, 7
        %v6165 = vsub.s32 %v6162, %v6164
        %v6166 = vrot.slane %v6144, %v6165
        %v6168 = vunpack.c.l.s4 1966171168
        %v6169 = vunpack.c.0.s8 %v6168
        %v6170 = vlaneseq
        %v6171 = vshrl.u32 %v6170, 7
        %v6172 = vsub.s32 %v6169, %v6171
        %v6173 = vrot.slane %v6145, %v6172
        %v6174 = vcombine.low %v6152, %v6159
        %v6175 = vcombine.low %v6166, %v6173
        %v6177 = vunpack.c.l.s4 1966171168
        %v6178 = vunpack.c.0.s8 %v6177
        %v6179 = vlaneseq
        %v6180 = vshrl.u32 %v6179, 7
        %v6181 = vsub.s32 %v6178, %v6180
        %v6182 = vrot.slane %v6174, %v6181
        %v6184 = vunpack.c.l.s4 1966171168
        %v6185 = vunpack.c.0.s8 %v6184
        %v6186 = vlaneseq
        %v6187 = vshrl.u32 %v6186, 7
        %v6188 = vsub.s32 %v6185, %v6187
        %v6189 = vrot.slane %v6175, %v6188
        %v6190 = vcombine.low %v6182, %v6189
        %v6191 = vcombine.low %v5866, %v5880
        %v6192 = vcombine.low %v5895, %v5902
        %v6193 = vcombine.low %v5903, %v5904
        %v6194 = vcombine.low %v5918, %v5933
        %v6196 = vunpack.c.l.s4 1966171168
        %v6197 = vunpack.c.0.s8 %v6196
        %v6198 = vlaneseq
        %v6199 = vshrl.u32 %v6198, 7
        %v6200 = vsub.s32 %v6197, %v6199
        %v6201 = vrot.slane %v6191, %v6200
        %v6203 = vunpack.c.l.s4 1966171168
        %v6204 = vunpack.c.0.s8 %v6203
        %v6205 = vlaneseq
        %v6206 = vshrl.u32 %v6205, 7
        %v6207 = vsub.s32 %v6204, %v6206
        %v6208 = vrot.slane %v6192, %v6207
        %v6210 = vunpack.c.l.s4 1966171168
        %v6211 = vunpack.c.0.s8 %v6210
        %v6212 = vlaneseq
        %v6213 = vshrl.u32 %v6212, 7
        %v6214 = vsub.s32 %v6211, %v6213
        %v6215 = vrot.slane %v6193, %v6214
        %v6217 = vunpack.c.l.s4 1966171168
        %v6218 = vunpack.c.0.s8 %v6217
        %v6219 = vlaneseq
        %v6220 = vshrl.u32 %v6219, 7
        %v6221 = vsub.s32 %v6218, %v6220
        %v6222 = vrot.slane %v6194, %v6221
        %v6223 = vcombine.low %v6201, %v6208
        %v6224 = vcombine.low %v6215, %v6222
        %v6226 = vunpack.c.l.s4 1966171168
        %v6227 = vunpack.c.0.s8 %v6226
        %v6228 = vlaneseq
        %v6229 = vshrl.u32 %v6228, 7
        %v6230 = vsub.s32 %v6227, %v6229
        %v6231 = vrot.slane %v6223, %v6230
        %v6233 = vunpack.c.l.s4 1966171168
        %v6234 = vunpack.c.0.s8 %v6233
        %v6235 = vlaneseq
        %v6236 = vshrl.u32 %v6235, 7
        %v6237 = vsub.s32 %v6234, %v6236
        %v6238 = vrot.slane %v6224, %v6237
        %v6239 = vcombine.low %v6231, %v6238
        %v6240 = vcombine.low %v5940, %v5941
        %v6241 = vcombine.low %v5942, %v5956
        %v6242 = vcombine.low %v5971, %v5978
        %v6243 = vcombine.low %v5979, %v5980
        %v6245 = vunpack.c.l.s4 1966171168
        %v6246 = vunpack.c.0.s8 %v6245
        %v6247 = vlaneseq
        %v6248 = vshrl.u32 %v6247, 7
        %v6249 = vsub.s32 %v6246, %v6248
        %v6250 = vrot.slane %v6240, %v6249
        %v6252 = vunpack.c.l.s4 1966171168
        %v6253 = vunpack.c.0.s8 %v6252
        %v6254 = vlaneseq
        %v6255 = vshrl.u32 %v6254, 7
        %v6256 = vsub.s32 %v6253, %v6255
        %v6257 = vrot.slane %v6241, %v6256
        %v6259 = vunpack.c.l.s4 1966171168
        %v6260 = vunpack.c.0.s8 %v6259
        %v6261 = vlaneseq
        %v6262 = vshrl.u32 %v6261, 7
        %v6263 = vsub.s32 %v6260, %v6262
        %v6264 = vrot.slane %v6242, %v6263
        %v6266 = vunpack.c.l.s4 1966171168
        %v6267 = vunpack.c.0.s8 %v6266
        %v6268 = vlaneseq
        %v6269 = vshrl.u32 %v6268, 7
        %v6270 = vsub.s32 %v6267, %v6269
        %v6271 = vrot.slane %v6243, %v6270
        %v6272 = vcombine.low %v6250, %v6257
        %v6273 = vcombine.low %v6264, %v6271
        %v6275 = vunpack.c.l.s4 1966171168
        %v6276 = vunpack.c.0.s8 %v6275
        %v6277 = vlaneseq
        %v6278 = vshrl.u32 %v6277, 7
        %v6279 = vsub.s32 %v6276, %v6278
        %v6280 = vrot.slane %v6272, %v6279
        %v6282 = vunpack.c.l.s4 1966171168
        %v6283 = vunpack.c.0.s8 %v6282
        %v6284 = vlaneseq
        %v6285 = vshrl.u32 %v6284, 7
        %v6286 = vsub.s32 %v6283, %v6285
        %v6287 = vrot.slane %v6273, %v6286
        %v6288 = vcombine.low %v6280, %v6287
        %v6289 = vcombine.low %v5994, %v6009
        %v6290 = vcombine.low %v6016, %v6017
        %v6291 = vcombine.low %v6018, %v6032
        %v6292 = vcombine.low %v6047, %v6054
        %v6294 = vunpack.c.l.s4 1966171168
        %v6295 = vunpack.c.0.s8 %v6294
        %v6296 = vlaneseq
        %v6297 = vshrl.u32 %v6296, 7
        %v6298 = vsub.s32 %v6295, %v6297
        %v6299 = vrot.slane %v6289, %v6298
        %v6301 = vunpack.c.l.s4 1966171168
        %v6302 = vunpack.c.0.s8 %v6301
        %v6303 = vlaneseq
        %v6304 = vshrl.u32 %v6303, 7
        %v6305 = vsub.s32 %v6302, %v6304
        %v6306 = vrot.slane %v6290, %v6305
        %v6308 = vunpack.c.l.s4 1966171168
        %v6309 = vunpack.c.0.s8 %v6308
        %v6310 = vlaneseq
        %v6311 = vshrl.u32 %v6310, 7
        %v6312 = vsub.s32 %v6309, %v6311
        %v6313 = vrot.slane %v6291, %v6312
        %v6315 = vunpack.c.l.s4 1966171168
        %v6316 = vunpack.c.0.s8 %v6315
        %v6317 = vlaneseq
        %v6318 = vshrl.u32 %v6317, 7
        %v6319 = vsub.s32 %v6316, %v6318
        %v6320 = vrot.slane %v6292, %v6319
        %v6321 = vcombine.low %v6299, %v6306
        %v6322 = vcombine.low %v6313, %v6320
        %v6324 = vunpack.c.l.s4 1966171168
        %v6325 = vunpack.c.0.s8 %v6324
        %v6326 = vlaneseq
        %v6327 = vshrl.u32 %v6326, 7
        %v6328 = vsub.s32 %v6325, %v6327
        %v6329 = vrot.slane %v6321, %v6328
        %v6331 = vunpack.c.l.s4 1966171168
        %v6332 = vunpack.c.0.s8 %v6331
        %v6333 = vlaneseq
        %v6334 = vshrl.u32 %v6333, 7
        %v6335 = vsub.s32 %v6332, %v6334
        %v6336 = vrot.slane %v6322, %v6335
        %v6337 = vcombine.low %v6329, %v6336
        %v6338 = vcombine.low %v6055, %v6056
        %v6339 = vcombine.low %v6070, %v6085
        %v6340 = vcombine.low %v6092, %v6093
        %v6341 = vcombine.low %v6094, %v6108
        %v6343 = vunpack.c.l.s4 1966171168
        %v6344 = vunpack.c.0.s8 %v6343
        %v6345 = vlaneseq
        %v6346 = vshrl.u32 %v6345, 7
        %v6347 = vsub.s32 %v6344, %v6346
        %v6348 = vrot.slane %v6338, %v6347
        %v6350 = vunpack.c.l.s4 1966171168
        %v6351 = vunpack.c.0.s8 %v6350
        %v6352 = vlaneseq
        %v6353 = vshrl.u32 %v6352, 7
        %v6354 = vsub.s32 %v6351, %v6353
        %v6355 = vrot.slane %v6339, %v6354
        %v6357 = vunpack.c.l.s4 1966171168
        %v6358 = vunpack.c.0.s8 %v6357
        %v6359 = vlaneseq
        %v6360 = vshrl.u32 %v6359, 7
        %v6361 = vsub.s32 %v6358, %v6360
        %v6362 = vrot.slane %v6340, %v6361
        %v6364 = vunpack.c.l.s4 1966171168
        %v6365 = vunpack.c.0.s8 %v6364
        %v6366 = vlaneseq
        %v6367 = vshrl.u32 %v6366, 7
        %v6368 = vsub.s32 %v6365, %v6367
        %v6369 = vrot.slane %v6341, %v6368
        %v6370 = vcombine.low %v6348, %v6355
        %v6371 = vcombine.low %v6362, %v6369
        %v6373 = vunpack.c.l.s4 1966171168
        %v6374 = vunpack.c.0.s8 %v6373
        %v6375 = vlaneseq
        %v6376 = vshrl.u32 %v6375, 7
        %v6377 = vsub.s32 %v6374, %v6376
        %v6378 = vrot.slane %v6370, %v6377
        %v6380 = vunpack.c.l.s4 1966171168
        %v6381 = vunpack.c.0.s8 %v6380
        %v6382 = vlaneseq
        %v6383 = vshrl.u32 %v6382, 7
        %v6384 = vsub.s32 %v6381, %v6383
        %v6385 = vrot.slane %v6371, %v6384
        %v6386 = vcombine.low %v6378, %v6385
        %v6424 = vunpack.c.l.b16 %v6110
        %v6425 = vunpack.c.h.b16 %v6110
        %v6426 = vunpack.c.l.b16 %v6111
        %v6427 = vunpack.c.l.b16 %v6112
        %v6428 = vunpack.c.h.b16 %v6112
        %v6429 = vunpack.c.l.b16 %v6113
        %v6430 = vunpack.c.l.b16 %v6114
        %v6431 = vunpack.c.h.b16 %v6114
        %v6432 = vunpack.c.l.b16 %v6115
        %v6433 = vunpack.c.l.b16 %v6116
        %v6434 = vunpack.c.h.b16 %v6116
        %v6435 = vunpack.c.l.b16 %v6117
        %v6436 = vunpack.c.l.b16 %v6118
        %v6437 = vunpack.c.h.b16 %v6118
        %v6438 = vunpack.c.l.b16 %v6119
        %v6439 = vunpack.c.l.b16 %v6120
        %v6440 = vunpack.c.h.b16 %v6120
        %v6441 = vunpack.c.l.b16 %v6121
        %v6442 = vunpack.c.l.b16 %v6122
        %v6443 = vunpack.c.h.b16 %v6122
        %v6444 = vunpack.c.l.b16 %v6123
        %v6445 = vunpack.c.l.b16 %v6124
        %v6446 = vunpack.c.h.b16 %v6124
        %v6447 = vunpack.c.l.b16 %v6125
        %v6448 = vunpack.c.l.b16 %v6126
        %v6449 = vunpack.c.h.b16 %v6126
        %v6450 = vunpack.c.l.b16 %v6127
        %v6451 = vunpack.c.l.b16 %v6128
        %v6452 = vunpack.c.h.b16 %v6128
        %v6453 = vunpack.c.l.b16 %v6129
        %v6454 = vunpack.c.l.b16 %v6130
        %v6455 = vunpack.c.h.b16 %v6130
        %v6456 = vunpack.c.l.b16 %v6131
        %v6457 = vunpack.c.l.b16 %v6132
        %v6458 = vunpack.c.h.b16 %v6132
        %v6459 = vunpack.c.l.b16 %v6133
        %v6460 = vunpack.c.l.b16 %v6134
        %v6461 = vunpack.c.h.b16 %v6134
        %v6462 = vunpack.c.l.b16 %v6135
        %v6463 = vunpack.c.l.b16 %v6136
        %v6464 = vunpack.c.h.b16 %v6136
        %v6465 = vunpack.c.l.b16 %v6137
        %v6466 = vunpack.c.l.b16 %v6138
        %v6467 = vunpack.c.h.b16 %v6138
        %v6468 = vunpack.c.l.b16 %v6139
        %v6469 = vunpack.c.l.b16 %v6140
        %v6470 = vunpack.c.h.b16 %v6140
        %v6471 = vunpack.c.l.b16 %v6141
        %v6472 = vpack.c.b16 %v6427, %v6424
        %v6473 = vpack.c.b16 %v6428, %v6425
        %v6474 = vpack.c.b16 %v6429, %v6426
        %v6475 = vpack.c.b16 %v6433, %v6430
        %v6476 = vpack.c.b16 %v6434, %v6431
        %v6477 = vpack.c.b16 %v6435, %v6432
        %v6478 = vpack.c.b16 %v6439, %v6436
        %v6479 = vpack.c.b16 %v6440, %v6437
        %v6480 = vpack.c.b16 %v6441, %v6438
        %v6481 = vpack.c.b16 %v6445, %v6442
        %v6482 = vpack.c.b16 %v6446, %v6443
        %v6483 = vpack.c.b16 %v6447, %v6444
        %v6484 = vpack.c.b16 %v6451, %v6448
        %v6485 = vpack.c.b16 %v6452, %v6449
        %v6486 = vpack.c.b16 %v6453, %v6450
        %v6487 = vpack.c.b16 %v6457, %v6454
        %v6488 = vpack.c.b16 %v6458, %v6455
        %v6489 = vpack.c.b16 %v6459, %v6456
        %v6490 = vpack.c.b16 %v6463, %v6460
        %v6491 = vpack.c.b16 %v6464, %v6461
        %v6492 = vpack.c.b16 %v6465, %v6462
        %v6493 = vpack.c.b16 %v6469, %v6466
        %v6494 = vpack.c.b16 %v6470, %v6467
        %v6495 = vpack.c.b16 %v6471, %v6468
        %6520 = vmatprep.subr.bf16.mxu0 %v6473
        %6521 = vmatpush1.bf16.msra.mxu0 %v6472
        %6522 = vmatprep.subr.bf16.mxu0 %v6476
        %6523 = vmatpush1.bf16.msra.mxu0 %v6475
        %6524 = vmatprep.subr.bf16.mxu0 %v6479
        %6525 = vmatpush1.bf16.msra.mxu0 %v6478
        %6526 = vmatprep.subr.bf16.mxu0 %v6482
        %6527 = vmatpush1.bf16.msra.mxu0 %v6481
        %6528 = vmatprep.subr.bf16.mxu0 %v6485
        %6529 = vmatpush1.bf16.msra.mxu0 %v6484
        %6530 = vmatprep.subr.bf16.mxu0 %v6488
        %6531 = vmatpush1.bf16.msra.mxu0 %v6487
        %6532 = vmatprep.subr.bf16.mxu0 %v6491
        %6533 = vmatpush1.bf16.msra.mxu0 %v6490
        %6534 = vmatprep.subr.bf16.mxu0 %v6494
        %6535 = vmatpush1.bf16.msra.mxu0 %v6493
        %6536 = vmatprep.subr.bf16.mxu0 0
        %6537 = vmatpush1.bf16.msra.mxu0 0
        %6538 = vmatprep.subr.bf16.mxu0 0
        %6539 = vmatpush1.bf16.msra.mxu0 0
        %6540 = vmatprep.subr.bf16.mxu0 0
        %6541 = vmatpush1.bf16.msra.mxu0 0
        %6542 = vmatprep.subr.bf16.mxu0 0
        %6543 = vmatpush1.bf16.msra.mxu0 0
        %6544 = vmatprep.subr.bf16.mxu0 0
        %6545 = vmatpush1.bf16.msra.mxu0 0
        %6546 = vmatprep.subr.bf16.mxu0 0
        %6547 = vmatpush1.bf16.msra.mxu0 0
        %6548 = vmatprep.subr.bf16.mxu0 0
        %6549 = vmatpush1.bf16.msra.mxu0 0
        %6550 = vmatprep.subr.bf16.mxu0 0
        %6551 = vmatpush1.bf16.msra.mxu0 0
        %6552 = vmatprep.mubr.bf16.mxu0 0
        %6553 = vmatmul.mubr.bf16.gmra.mrb[0].mxu0 %v6190
        %v6554 = vpop.f32.mrb[0].mxu0
        %v6555 = vadd.f32 0.0, %v6554
        %v6556 = vpop.f32.mrb[0].mxu0
        %v6557 = vadd.f32 0.0, %v6556
        %v6558 = vpop.f32.mrb[0].mxu0
        %v6559 = vadd.f32 0.0, %v6558
        %v6560 = vpop.f32.mrb[0].mxu0
        %v6561 = vadd.f32 0.0, %v6560
        %6562 = vmatprep.mubr.bf16.mxu0 0
        %6563 = vmatmul.mubr.bf16.gmra.mrb[0].mxu0 %v6239
        %v6564 = vpop.f32.mrb[0].mxu0
        %v6565 = vadd.f32 0.0, %v6564
        %v6566 = vpop.f32.mrb[0].mxu0
        %v6567 = vadd.f32 0.0, %v6566
        %v6568 = vpop.f32.mrb[0].mxu0
        %v6569 = vadd.f32 0.0, %v6568
        %v6570 = vpop.f32.mrb[0].mxu0
        %v6571 = vadd.f32 0.0, %v6570
        %6572 = vmatprep.mubr.bf16.mxu0 0
        %6573 = vmatmul.mubr.bf16.gmra.mrb[0].mxu0 %v6288
        %v6574 = vpop.f32.mrb[0].mxu0
        %v6575 = vadd.f32 0.0, %v6574
        %v6576 = vpop.f32.mrb[0].mxu0
        %v6577 = vadd.f32 0.0, %v6576
        %v6578 = vpop.f32.mrb[0].mxu0
        %v6579 = vadd.f32 0.0, %v6578
        %v6580 = vpop.f32.mrb[0].mxu0
        %v6581 = vadd.f32 0.0, %v6580
        %6582 = vmatprep.mubr.bf16.mxu0 0
        %6583 = vmatmul.mubr.bf16.gmra.mrb[0].mxu0 %v6337
        %v6584 = vpop.f32.mrb[0].mxu0
        %v6585 = vadd.f32 0.0, %v6584
        %v6586 = vpop.f32.mrb[0].mxu0
        %v6587 = vadd.f32 0.0, %v6586
        %v6588 = vpop.f32.mrb[0].mxu0
        %v6589 = vadd.f32 0.0, %v6588
        %v6590 = vpop.f32.mrb[0].mxu0
        %v6591 = vadd.f32 0.0, %v6590
        %6592 = vmatprep.mubr.bf16.mxu0 0
        %6593 = vmatmul.mubr.bf16.gmra.mrb[0].mxu0 %v6386
        %v6594 = vpop.f32.mrb[0].mxu0
        %v6595 = vadd.f32 0.0, %v6594
        %v6596 = vpop.f32.mrb[0].mxu0
        %v6597 = vadd.f32 0.0, %v6596
        %v6598 = vpop.f32.mrb[0].mxu0
        %v6599 = vadd.f32 0.0, %v6598
        %v6600 = vpop.f32.mrb[0].mxu0
        %v6601 = vadd.f32 0.0, %v6600
        %6602 = vdwg.mxu0
        %6603 = vmatprep.subr.bf16.mxu0 0
        %6604 = vmatpush1.bf16.msra.mxu0 %v6474
        %6605 = vmatprep.subr.bf16.mxu0 0
        %6606 = vmatpush1.bf16.msra.mxu0 %v6477
        %6607 = vmatprep.subr.bf16.mxu0 0
        %6608 = vmatpush1.bf16.msra.mxu0 %v6480
        %6609 = vmatprep.subr.bf16.mxu0 0
        %6610 = vmatpush1.bf16.msra.mxu0 %v6483
        %6611 = vmatprep.subr.bf16.mxu0 0
        %6612 = vmatpush1.bf16.msra.mxu0 %v6486
        %6613 = vmatprep.subr.bf16.mxu0 0
        %6614 = vmatpush1.bf16.msra.mxu0 %v6489
        %6615 = vmatprep.subr.bf16.mxu0 0
        %6616 = vmatpush1.bf16.msra.mxu0 %v6492
        %6617 = vmatprep.subr.bf16.mxu0 0
        %6618 = vmatpush1.bf16.msra.mxu0 %v6495
        %6619 = vmatprep.subr.bf16.mxu0 0
        %6620 = vmatpush1.bf16.msra.mxu0 0
        %6621 = vmatprep.subr.bf16.mxu0 0
        %6622 = vmatpush1.bf16.msra.mxu0 0
        %6623 = vmatprep.subr.bf16.mxu0 0
        %6624 = vmatpush1.bf16.msra.mxu0 0
        %6625 = vmatprep.subr.bf16.mxu0 0
        %6626 = vmatpush1.bf16.msra.mxu0 0
        %6627 = vmatprep.subr.bf16.mxu0 0
        %6628 = vmatpush1.bf16.msra.mxu0 0
        %6629 = vmatprep.subr.bf16.mxu0 0
        %6630 = vmatpush1.bf16.msra.mxu0 0
        %6631 = vmatprep.subr.bf16.mxu0 0
        %6632 = vmatpush1.bf16.msra.mxu0 0
        %6633 = vmatprep.subr.bf16.mxu0 0
        %6634 = vmatpush1.bf16.msra.mxu0 0
        %6635 = vmatprep.mubr.bf16.mxu0 0
        %6636 = vmatmul.mubr.bf16.gmra.mrb[0].mxu0 %v6190
        %v6637 = vpop.f32.mrb[0].mxu0
        %v6638 = vadd.f32 0.0, %v6637
        %v6639 = vpop.f32.mrb[0].mxu0
        %v6640 = vpop.f32.mrb[0].mxu0
        %v6641 = vadd.f32 0.0, %v6640
        %v6642 = vpop.f32.mrb[0].mxu0
        %6643 = vmatprep.mubr.bf16.mxu0 0
        %6644 = vmatmul.mubr.bf16.gmra.mrb[0].mxu0 %v6239
        %v6645 = vpop.f32.mrb[0].mxu0
        %v6646 = vadd.f32 0.0, %v6645
        %v6647 = vpop.f32.mrb[0].mxu0
        %v6648 = vpop.f32.mrb[0].mxu0
        %v6649 = vadd.f32 0.0, %v6648
        %v6650 = vpop.f32.mrb[0].mxu0
        %6651 = vmatprep.mubr.bf16.mxu0 0
        %6652 = vmatmul.mubr.bf16.gmra.mrb[0].mxu0 %v6288
        %v6653 = vpop.f32.mrb[0].mxu0
        %v6654 = vadd.f32 0.0, %v6653
        %v6655 = vpop.f32.mrb[0].mxu0
        %v6656 = vpop.f32.mrb[0].mxu0
        %v6657 = vadd.f32 0.0, %v6656
        %v6658 = vpop.f32.mrb[0].mxu0
        %6659 = vmatprep.mubr.bf16.mxu0 0
        %6660 = vmatmul.mubr.bf16.gmra.mrb[0].mxu0 %v6337
        %v6661 = vpop.f32.mrb[0].mxu0
        %v6662 = vadd.f32 0.0, %v6661
        %v6663 = vpop.f32.mrb[0].mxu0
        %v6664 = vpop.f32.mrb[0].mxu0
        %v6665 = vadd.f32 0.0, %v6664
        %v6666 = vpop.f32.mrb[0].mxu0
        %6667 = vmatprep.mubr.bf16.mxu0 0
        %6668 = vmatmul.mubr.bf16.gmra.mrb[0].mxu0 %v6386
        %v6669 = vpop.f32.mrb[0].mxu0
        %v6670 = vadd.f32 0.0, %v6669
        %v6671 = vpop.f32.mrb[0].mxu0
        %v6672 = vpop.f32.mrb[0].mxu0
        %v6673 = vadd.f32 0.0, %v6672
        %v6674 = vpop.f32.mrb[0].mxu0
        %6675 = vdwg.mxu0
        %v6706 = vcombine.low %v6555, %v6557
        %v6707 = vcombine.high %v6555, %v6557
        %v6708 = vcombine.high %v6638, %v6638
        %v6710 = vunpack.c.l.s4 1983009808
        %v6711 = vunpack.c.0.s8 %v6710
        %v6712 = vlaneseq
        %v6713 = vshrl.u32 %v6712, 7
        %v6714 = vsub.s32 %v6711, %v6713
        %v6715 = vrot.slane %v6706, %v6714
        %v6717 = vunpack.c.l.s4 1983009808
        %v6718 = vunpack.c.0.s8 %v6717
        %v6719 = vlaneseq
        %v6720 = vshrl.u32 %v6719, 7
        %v6721 = vsub.s32 %v6718, %v6720
        %v6722 = vrot.slane %v6707, %v6721
        %v6724 = vunpack.c.l.s4 1983009808
        %v6725 = vunpack.c.0.s8 %v6724
        %v6726 = vlaneseq
        %v6727 = vshrl.u32 %v6726, 7
        %v6728 = vsub.s32 %v6725, %v6727
        %v6729 = vrot.slane %v6638, %v6728
        %v6731 = vunpack.c.l.s4 1983009808
        %v6732 = vunpack.c.0.s8 %v6731
        %v6733 = vlaneseq
        %v6734 = vshrl.u32 %v6733, 7
        %v6735 = vsub.s32 %v6732, %v6734
        %v6736 = vrot.slane %v6708, %v6735
        %v6737 = vcombine.low %v6715, %v6729
        %v6738 = vcombine.high %v6715, %v6729
        %v6739 = vcombine.low %v6722, %v6736
        %v6740 = vcombine.high %v6722, %v6736
        %v6741 = vcombine.low %v6559, %v6561
        %v6742 = vcombine.high %v6559, %v6561
        %v6743 = vcombine.high %v6641, %v6641
        %v6745 = vunpack.c.l.s4 1983009808
        %v6746 = vunpack.c.0.s8 %v6745
        %v6747 = vlaneseq
        %v6748 = vshrl.u32 %v6747, 7
        %v6749 = vsub.s32 %v6746, %v6748
        %v6750 = vrot.slane %v6741, %v6749
        %v6752 = vunpack.c.l.s4 1983009808
        %v6753 = vunpack.c.0.s8 %v6752
        %v6754 = vlaneseq
        %v6755 = vshrl.u32 %v6754, 7
        %v6756 = vsub.s32 %v6753, %v6755
        %v6757 = vrot.slane %v6742, %v6756
        %v6759 = vunpack.c.l.s4 1983009808
        %v6760 = vunpack.c.0.s8 %v6759
        %v6761 = vlaneseq
        %v6762 = vshrl.u32 %v6761, 7
        %v6763 = vsub.s32 %v6760, %v6762
        %v6764 = vrot.slane %v6641, %v6763
        %v6766 = vunpack.c.l.s4 1983009808
        %v6767 = vunpack.c.0.s8 %v6766
        %v6768 = vlaneseq
        %v6769 = vshrl.u32 %v6768, 7
        %v6770 = vsub.s32 %v6767, %v6769
        %v6771 = vrot.slane %v6743, %v6770
        %v6772 = vcombine.low %v6750, %v6764
        %v6773 = vcombine.high %v6750, %v6764
        %v6774 = vcombine.low %v6757, %v6771
        %v6775 = vcombine.high %v6757, %v6771
        %v6776 = vcombine.low %v6565, %v6567
        %v6777 = vcombine.high %v6565, %v6567
        %v6778 = vcombine.high %v6646, %v6646
        %v6780 = vunpack.c.l.s4 1983009808
        %v6781 = vunpack.c.0.s8 %v6780
        %v6782 = vlaneseq
        %v6783 = vshrl.u32 %v6782, 7
        %v6784 = vsub.s32 %v6781, %v6783
        %v6785 = vrot.slane %v6776, %v6784
        %v6787 = vunpack.c.l.s4 1983009808
        %v6788 = vunpack.c.0.s8 %v6787
        %v6789 = vlaneseq
        %v6790 = vshrl.u32 %v6789, 7
        %v6791 = vsub.s32 %v6788, %v6790
        %v6792 = vrot.slane %v6777, %v6791
        %v6794 = vunpack.c.l.s4 1983009808
        %v6795 = vunpack.c.0.s8 %v6794
        %v6796 = vlaneseq
        %v6797 = vshrl.u32 %v6796, 7
        %v6798 = vsub.s32 %v6795, %v6797
        %v6799 = vrot.slane %v6646, %v6798
        %v6801 = vunpack.c.l.s4 1983009808
        %v6802 = vunpack.c.0.s8 %v6801
        %v6803 = vlaneseq
        %v6804 = vshrl.u32 %v6803, 7
        %v6805 = vsub.s32 %v6802, %v6804
        %v6806 = vrot.slane %v6778, %v6805
        %v6807 = vcombine.low %v6785, %v6799
        %v6808 = vcombine.high %v6785, %v6799
        %v6809 = vcombine.low %v6792, %v6806
        %v6810 = vcombine.high %v6792, %v6806
        %v6811 = vcombine.low %v6569, %v6571
        %v6812 = vcombine.high %v6569, %v6571
        %v6813 = vcombine.high %v6649, %v6649
        %v6815 = vunpack.c.l.s4 1983009808
        %v6816 = vunpack.c.0.s8 %v6815
        %v6817 = vlaneseq
        %v6818 = vshrl.u32 %v6817, 7
        %v6819 = vsub.s32 %v6816, %v6818
        %v6820 = vrot.slane %v6811, %v6819
        %v6822 = vunpack.c.l.s4 1983009808
        %v6823 = vunpack.c.0.s8 %v6822
        %v6824 = vlaneseq
        %v6825 = vshrl.u32 %v6824, 7
        %v6826 = vsub.s32 %v6823, %v6825
        %v6827 = vrot.slane %v6812, %v6826
        %v6829 = vunpack.c.l.s4 1983009808
        %v6830 = vunpack.c.0.s8 %v6829
        %v6831 = vlaneseq
        %v6832 = vshrl.u32 %v6831, 7
        %v6833 = vsub.s32 %v6830, %v6832
        %v6834 = vrot.slane %v6649, %v6833
        %v6836 = vunpack.c.l.s4 1983009808
        %v6837 = vunpack.c.0.s8 %v6836
        %v6838 = vlaneseq
        %v6839 = vshrl.u32 %v6838, 7
        %v6840 = vsub.s32 %v6837, %v6839
        %v6841 = vrot.slane %v6813, %v6840
        %v6842 = vcombine.low %v6820, %v6834
        %v6843 = vcombine.high %v6820, %v6834
        %v6844 = vcombine.low %v6827, %v6841
        %v6845 = vcombine.high %v6827, %v6841
        %v6846 = vcombine.low %v6575, %v6577
        %v6847 = vcombine.high %v6575, %v6577
        %v6848 = vcombine.high %v6654, %v6654
        %v6850 = vunpack.c.l.s4 1983009808
        %v6851 = vunpack.c.0.s8 %v6850
        %v6852 = vlaneseq
        %v6853 = vshrl.u32 %v6852, 7
        %v6854 = vsub.s32 %v6851, %v6853
        %v6855 = vrot.slane %v6846, %v6854
        %v6857 = vunpack.c.l.s4 1983009808
        %v6858 = vunpack.c.0.s8 %v6857
        %v6859 = vlaneseq
        %v6860 = vshrl.u32 %v6859, 7
        %v6861 = vsub.s32 %v6858, %v6860
        %v6862 = vrot.slane %v6847, %v6861
        %v6864 = vunpack.c.l.s4 1983009808
        %v6865 = vunpack.c.0.s8 %v6864
        %v6866 = vlaneseq
        %v6867 = vshrl.u32 %v6866, 7
        %v6868 = vsub.s32 %v6865, %v6867
        %v6869 = vrot.slane %v6654, %v6868
        %v6871 = vunpack.c.l.s4 1983009808
        %v6872 = vunpack.c.0.s8 %v6871
        %v6873 = vlaneseq
        %v6874 = vshrl.u32 %v6873, 7
        %v6875 = vsub.s32 %v6872, %v6874
        %v6876 = vrot.slane %v6848, %v6875
        %v6877 = vcombine.low %v6855, %v6869
        %v6878 = vcombine.high %v6855, %v6869
        %v6879 = vcombine.low %v6862, %v6876
        %v6880 = vcombine.high %v6862, %v6876
        %v6881 = vcombine.low %v6579, %v6581
        %v6882 = vcombine.high %v6579, %v6581
        %v6883 = vcombine.high %v6657, %v6657
        %v6885 = vunpack.c.l.s4 1983009808
        %v6886 = vunpack.c.0.s8 %v6885
        %v6887 = vlaneseq
        %v6888 = vshrl.u32 %v6887, 7
        %v6889 = vsub.s32 %v6886, %v6888
        %v6890 = vrot.slane %v6881, %v6889
        %v6892 = vunpack.c.l.s4 1983009808
        %v6893 = vunpack.c.0.s8 %v6892
        %v6894 = vlaneseq
        %v6895 = vshrl.u32 %v6894, 7
        %v6896 = vsub.s32 %v6893, %v6895
        %v6897 = vrot.slane %v6882, %v6896
        %v6899 = vunpack.c.l.s4 1983009808
        %v6900 = vunpack.c.0.s8 %v6899
        %v6901 = vlaneseq
        %v6902 = vshrl.u32 %v6901, 7
        %v6903 = vsub.s32 %v6900, %v6902
        %v6904 = vrot.slane %v6657, %v6903
        %v6906 = vunpack.c.l.s4 1983009808
        %v6907 = vunpack.c.0.s8 %v6906
        %v6908 = vlaneseq
        %v6909 = vshrl.u32 %v6908, 7
        %v6910 = vsub.s32 %v6907, %v6909
        %v6911 = vrot.slane %v6883, %v6910
        %v6912 = vcombine.low %v6890, %v6904
        %v6913 = vcombine.high %v6890, %v6904
        %v6914 = vcombine.low %v6897, %v6911
        %v6915 = vcombine.high %v6897, %v6911
        %v6916 = vcombine.low %v6585, %v6587
        %v6917 = vcombine.high %v6585, %v6587
        %v6918 = vcombine.high %v6662, %v6662
        %v6920 = vunpack.c.l.s4 1983009808
        %v6921 = vunpack.c.0.s8 %v6920
        %v6922 = vlaneseq
        %v6923 = vshrl.u32 %v6922, 7
        %v6924 = vsub.s32 %v6921, %v6923
        %v6925 = vrot.slane %v6916, %v6924
        %v6927 = vunpack.c.l.s4 1983009808
        %v6928 = vunpack.c.0.s8 %v6927
        %v6929 = vlaneseq
        %v6930 = vshrl.u32 %v6929, 7
        %v6931 = vsub.s32 %v6928, %v6930
        %v6932 = vrot.slane %v6917, %v6931
        %v6934 = vunpack.c.l.s4 1983009808
        %v6935 = vunpack.c.0.s8 %v6934
        %v6936 = vlaneseq
        %v6937 = vshrl.u32 %v6936, 7
        %v6938 = vsub.s32 %v6935, %v6937
        %v6939 = vrot.slane %v6662, %v6938
        %v6941 = vunpack.c.l.s4 1983009808
        %v6942 = vunpack.c.0.s8 %v6941
        %v6943 = vlaneseq
        %v6944 = vshrl.u32 %v6943, 7
        %v6945 = vsub.s32 %v6942, %v6944
        %v6946 = vrot.slane %v6918, %v6945
        %v6947 = vcombine.low %v6925, %v6939
        %v6948 = vcombine.high %v6925, %v6939
        %v6949 = vcombine.low %v6932, %v6946
        %v6950 = vcombine.high %v6932, %v6946
        %v6951 = vcombine.low %v6589, %v6591
        %v6952 = vcombine.high %v6589, %v6591
        %v6953 = vcombine.high %v6665, %v6665
        %v6955 = vunpack.c.l.s4 1983009808
        %v6956 = vunpack.c.0.s8 %v6955
        %v6957 = vlaneseq
        %v6958 = vshrl.u32 %v6957, 7
        %v6959 = vsub.s32 %v6956, %v6958
        %v6960 = vrot.slane %v6951, %v6959
        %v6962 = vunpack.c.l.s4 1983009808
        %v6963 = vunpack.c.0.s8 %v6962
        %v6964 = vlaneseq
        %v6965 = vshrl.u32 %v6964, 7
        %v6966 = vsub.s32 %v6963, %v6965
        %v6967 = vrot.slane %v6952, %v6966
        %v6969 = vunpack.c.l.s4 1983009808
        %v6970 = vunpack.c.0.s8 %v6969
        %v6971 = vlaneseq
        %v6972 = vshrl.u32 %v6971, 7
        %v6973 = vsub.s32 %v6970, %v6972
        %v6974 = vrot.slane %v6665, %v6973
        %v6976 = vunpack.c.l.s4 1983009808
        %v6977 = vunpack.c.0.s8 %v6976
        %v6978 = vlaneseq
        %v6979 = vshrl.u32 %v6978, 7
        %v6980 = vsub.s32 %v6977, %v6979
        %v6981 = vrot.slane %v6953, %v6980
        %v6982 = vcombine.low %v6960, %v6974
        %v6983 = vcombine.high %v6960, %v6974
        %v6984 = vcombine.low %v6967, %v6981
        %v6985 = vcombine.high %v6967, %v6981
        %v6986 = vcombine.low %v6595, %v6597
        %v6987 = vcombine.high %v6595, %v6597
        %v6988 = vcombine.high %v6670, %v6670
        %v6990 = vunpack.c.l.s4 1983009808
        %v6991 = vunpack.c.0.s8 %v6990
        %v6992 = vlaneseq
        %v6993 = vshrl.u32 %v6992, 7
        %v6994 = vsub.s32 %v6991, %v6993
        %v6995 = vrot.slane %v6986, %v6994
        %v6997 = vunpack.c.l.s4 1983009808
        %v6998 = vunpack.c.0.s8 %v6997
        %v6999 = vlaneseq
        %v7000 = vshrl.u32 %v6999, 7
        %v7001 = vsub.s32 %v6998, %v7000
        %v7002 = vrot.slane %v6987, %v7001
        %v7004 = vunpack.c.l.s4 1983009808
        %v7005 = vunpack.c.0.s8 %v7004
        %v7006 = vlaneseq
        %v7007 = vshrl.u32 %v7006, 7
        %v7008 = vsub.s32 %v7005, %v7007
        %v7009 = vrot.slane %v6670, %v7008
        %v7011 = vunpack.c.l.s4 1983009808
        %v7012 = vunpack.c.0.s8 %v7011
        %v7013 = vlaneseq
        %v7014 = vshrl.u32 %v7013, 7
        %v7015 = vsub.s32 %v7012, %v7014
        %v7016 = vrot.slane %v6988, %v7015
        %v7017 = vcombine.low %v6995, %v7009
        %v7018 = vcombine.high %v6995, %v7009
        %v7019 = vcombine.low %v7002, %v7016
        %v7020 = vcombine.high %v7002, %v7016
        %v7021 = vcombine.low %v6599, %v6601
        %v7022 = vcombine.high %v6599, %v6601
        %v7023 = vcombine.high %v6673, %v6673
        %v7025 = vunpack.c.l.s4 1983009808
        %v7026 = vunpack.c.0.s8 %v7025
        %v7027 = vlaneseq
        %v7028 = vshrl.u32 %v7027, 7
        %v7029 = vsub.s32 %v7026, %v7028
        %v7030 = vrot.slane %v7021, %v7029
        %v7032 = vunpack.c.l.s4 1983009808
        %v7033 = vunpack.c.0.s8 %v7032
        %v7034 = vlaneseq
        %v7035 = vshrl.u32 %v7034, 7
        %v7036 = vsub.s32 %v7033, %v7035
        %v7037 = vrot.slane %v7022, %v7036
        %v7039 = vunpack.c.l.s4 1983009808
        %v7040 = vunpack.c.0.s8 %v7039
        %v7041 = vlaneseq
        %v7042 = vshrl.u32 %v7041, 7
        %v7043 = vsub.s32 %v7040, %v7042
        %v7044 = vrot.slane %v6673, %v7043
        %v7046 = vunpack.c.l.s4 1983009808
        %v7047 = vunpack.c.0.s8 %v7046
        %v7048 = vlaneseq
        %v7049 = vshrl.u32 %v7048, 7
        %v7050 = vsub.s32 %v7047, %v7049
        %v7051 = vrot.slane %v7023, %v7050
        %v7052 = vcombine.low %v7030, %v7044
        %v7053 = vcombine.high %v7030, %v7044
        %v7054 = vcombine.low %v7037, %v7051
        %v7055 = vcombine.high %v7037, %v7051
        %v7088 = vadd.f32 %v5740, %v6737
        %v7089 = vadd.f32 %v5741, %v6738
        %v7090 = vadd.f32 %v5742, %v6739
        %v7091 = vadd.f32 %v5743, %v6740
        %v7092 = vadd.f32 %v5744, %v6773
        %v7093 = vadd.f32 %v5745, %v6774
        %v7094 = vadd.f32 %v5746, %v6775
        %v7095 = vadd.f32 %v5747, %v6807
        %v7096 = vadd.f32 %v5748, %v6809
        %v7097 = vadd.f32 %v5749, %v6810
        %v7098 = vadd.f32 %v5750, %v6842
        %v7099 = vadd.f32 %v5751, %v6843
        %v7100 = vadd.f32 %v5752, %v6845
        %v7101 = vadd.f32 %v5753, %v6877
        %v7102 = vadd.f32 %v5754, %v6878
        %v7103 = vadd.f32 %v5755, %v6879
        %v7104 = vadd.f32 %v5756, %v6912
        %v7105 = vadd.f32 %v5757, %v6913
        %v7106 = vadd.f32 %v5758, %v6914
        %v7107 = vadd.f32 %v5759, %v6915
        %v7108 = vadd.f32 %v5760, %v6948
        %v7109 = vadd.f32 %v5761, %v6949
        %v7110 = vadd.f32 %v5762, %v6950
        %v7111 = vadd.f32 %v5763, %v6982
        %v7112 = vadd.f32 %v5764, %v6984
        %v7113 = vadd.f32 %v5765, %v6985
        %v7114 = vadd.f32 %v5766, %v7017
        %v7115 = vadd.f32 %v5767, %v7018
        %v7116 = vadd.f32 %v5768, %v7020
        %v7117 = vadd.f32 %v5769, %v7052
        %v7118 = vadd.f32 %v5770, %v7053
        %v7119 = vadd.f32 %v5771, %v7054
        %v7120 = vrot.slane %v6737, 7
        %v7121 = vrot.slane %v7120, 2
        %v7122 = vrot.slane %v6738, 7
        %v7123 = vsel %vm3832, %v7121, %v7122
        %v7124 = vrot.slane %v7122, 2
        %v7125 = vrot.slane %v6739, 7
        %v7126 = vsel %vm3832, %v7124, %v7125
        %v7127 = vrot.slane %v7125, 2
        %v7128 = vrot.slane %v6740, 7
        %v7129 = vsel %vm3832, %v7127, %v7128
        %v7130 = vrot.slane %v7128, 2
        %v7131 = vrot.slane %v6772, 7
        %v7132 = vsel %vm3832, %v7130, %v7131
        %v7133 = vrot.slane %v6773, 7
        %v7134 = vrot.slane %v7133, 2
        %v7135 = vrot.slane %v6774, 7
        %v7136 = vsel %vm3832, %v7134, %v7135
        %v7137 = vrot.slane %v7135, 2
        %v7138 = vrot.slane %v6775, 7
        %v7139 = vsel %vm3832, %v7137, %v7138
        %v7140 = vrot.slane %v7138, 2
        %v7141 = vrot.slane %v6807, 7
        %v7142 = vsel %vm3832, %v7140, %v7141
        %v7143 = vrot.slane %v7141, 2
        %v7144 = vrot.slane %v6808, 7
        %v7145 = vsel %vm3832, %v7143, %v7144
        %v7146 = vrot.slane %v6809, 7
        %v7147 = vrot.slane %v7146, 2
        %v7148 = vrot.slane %v6810, 7
        %v7149 = vsel %vm3832, %v7147, %v7148
        %v7150 = vrot.slane %v7148, 2
        %v7151 = vrot.slane %v6842, 7
        %v7152 = vsel %vm3832, %v7150, %v7151
        %v7153 = vrot.slane %v7151, 2
        %v7154 = vrot.slane %v6843, 7
        %v7155 = vsel %vm3832, %v7153, %v7154
        %v7156 = vrot.slane %v7154, 2
        %v7157 = vrot.slane %v6844, 7
        %v7158 = vsel %vm3832, %v7156, %v7157
        %v7159 = vrot.slane %v6845, 7
        %v7160 = vrot.slane %v7159, 2
        %v7161 = vrot.slane %v6877, 7
        %v7162 = vsel %vm3832, %v7160, %v7161
        %v7163 = vrot.slane %v7161, 2
        %v7164 = vrot.slane %v6878, 7
        %v7165 = vsel %vm3832, %v7163, %v7164
        %v7166 = vrot.slane %v7164, 2
        %v7167 = vrot.slane %v6879, 7
        %v7168 = vsel %vm3832, %v7166, %v7167
        %v7169 = vrot.slane %v7167, 2
        %v7170 = vrot.slane %v6880, 7
        %v7171 = vsel %vm3832, %v7169, %v7170
        %v7172 = vrot.slane %v6912, 7
        %v7173 = vrot.slane %v7172, 2
        %v7174 = vrot.slane %v6913, 7
        %v7175 = vsel %vm3832, %v7173, %v7174
        %v7176 = vrot.slane %v7174, 2
        %v7177 = vrot.slane %v6914, 7
        %v7178 = vsel %vm3832, %v7176, %v7177
        %v7179 = vrot.slane %v7177, 2
        %v7180 = vrot.slane %v6915, 7
        %v7181 = vsel %vm3832, %v7179, %v7180
        %v7182 = vrot.slane %v7180, 2
        %v7183 = vrot.slane %v6947, 7
        %v7184 = vsel %vm3832, %v7182, %v7183
        %v7185 = vrot.slane %v6948, 7
        %v7186 = vrot.slane %v7185, 2
        %v7187 = vrot.slane %v6949, 7
        %v7188 = vsel %vm3832, %v7186, %v7187
        %v7189 = vrot.slane %v7187, 2
        %v7190 = vrot.slane %v6950, 7
        %v7191 = vsel %vm3832, %v7189, %v7190
        %v7192 = vrot.slane %v7190, 2
        %v7193 = vrot.slane %v6982, 7
        %v7194 = vsel %vm3832, %v7192, %v7193
        %v7195 = vrot.slane %v7193, 2
        %v7196 = vrot.slane %v6983, 7
        %v7197 = vsel %vm3832, %v7195, %v7196
        %v7198 = vrot.slane %v6984, 7
        %v7199 = vrot.slane %v7198, 2
        %v7200 = vrot.slane %v6985, 7
        %v7201 = vsel %vm3832, %v7199, %v7200
        %v7202 = vrot.slane %v7200, 2
        %v7203 = vrot.slane %v7017, 7
        %v7204 = vsel %vm3832, %v7202, %v7203
        %v7205 = vrot.slane %v7203, 2
        %v7206 = vrot.slane %v7018, 7
        %v7207 = vsel %vm3832, %v7205, %v7206
        %v7208 = vrot.slane %v7206, 2
        %v7209 = vrot.slane %v7019, 7
        %v7210 = vsel %vm3832, %v7208, %v7209
        %v7211 = vrot.slane %v7020, 7
        %v7212 = vrot.slane %v7211, 2
        %v7213 = vrot.slane %v7052, 7
        %v7214 = vsel %vm3832, %v7212, %v7213
        %v7215 = vrot.slane %v7213, 2
        %v7216 = vrot.slane %v7053, 7
        %v7217 = vsel %vm3832, %v7215, %v7216
        %v7218 = vrot.slane %v7216, 2
        %v7219 = vrot.slane %v7054, 7
        %v7220 = vsel %vm3832, %v7218, %v7219
        %v7221 = vrot.slane %v7219, 2
        %v7222 = vrot.slane %v7055, 7
        %v7223 = vsel %vm3832, %v7221, %v7222
        %v7224 = vrot.slane %v7123, 2
        %v7225 = vrot.slane %v7126, 2
        %v7226 = vrot.slane %v7129, 2
        %v7227 = vrot.slane %v7132, 2
        %v7228 = vrot.slane %v7136, 2
        %v7229 = vrot.slane %v7139, 2
        %v7230 = vrot.slane %v7142, 2
        %v7231 = vrot.slane %v7145, 2
        %v7232 = vrot.slane %v7149, 2
        %v7233 = vrot.slane %v7152, 2
        %v7234 = vrot.slane %v7155, 2
        %v7235 = vrot.slane %v7158, 2
        %v7236 = vrot.slane %v7162, 2
        %v7237 = vrot.slane %v7165, 2
        %v7238 = vrot.slane %v7168, 2
        %v7239 = vrot.slane %v7171, 2
        %v7240 = vrot.slane %v7175, 2
        %v7241 = vrot.slane %v7178, 2
        %v7242 = vrot.slane %v7181, 2
        %v7243 = vrot.slane %v7184, 2
        %v7244 = vrot.slane %v7188, 2
        %v7245 = vrot.slane %v7191, 2
        %v7246 = vrot.slane %v7194, 2
        %v7247 = vrot.slane %v7197, 2
        %v7248 = vrot.slane %v7201, 2
        %v7249 = vrot.slane %v7204, 2
        %v7250 = vrot.slane %v7207, 2
        %v7251 = vrot.slane %v7210, 2
        %v7252 = vrot.slane %v7214, 2
        %v7253 = vrot.slane %v7217, 2
        %v7254 = vrot.slane %v7220, 2
        %v7255 = vrot.slane %v7223, 2
        %v7288 = vadd.f32 %v7088, %v7224
        %v7289 = vadd.f32 %v7089, %v7225
        %v7290 = vadd.f32 %v7090, %v7226
        %v7291 = vadd.f32 %v7091, %v7227
        %v7292 = vadd.f32 %v7092, %v7228
        %v7293 = vadd.f32 %v7093, %v7229
        %v7294 = vadd.f32 %v7094, %v7230
        %v7295 = vadd.f32 %v7095, %v7231
        %v7296 = vadd.f32 %v7096, %v7232
        %v7297 = vadd.f32 %v7097, %v7233
        %v7298 = vadd.f32 %v7098, %v7234
        %v7299 = vadd.f32 %v7099, %v7235
        %v7300 = vadd.f32 %v7100, %v7236
        %v7301 = vadd.f32 %v7101, %v7237
        %v7302 = vadd.f32 %v7102, %v7238
        %v7303 = vadd.f32 %v7103, %v7239
        %v7304 = vadd.f32 %v7104, %v7240
        %v7305 = vadd.f32 %v7105, %v7241
        %v7306 = vadd.f32 %v7106, %v7242
        %v7307 = vadd.f32 %v7107, %v7243
        %v7308 = vadd.f32 %v7108, %v7244
        %v7309 = vadd.f32 %v7109, %v7245
        %v7310 = vadd.f32 %v7110, %v7246
        %v7311 = vadd.f32 %v7111, %v7247
        %v7312 = vadd.f32 %v7112, %v7248
        %v7313 = vadd.f32 %v7113, %v7249
        %v7314 = vadd.f32 %v7114, %v7250
        %v7315 = vadd.f32 %v7115, %v7251
        %v7316 = vadd.f32 %v7116, %v7252
        %v7317 = vadd.f32 %v7117, %v7253
        %v7318 = vadd.f32 %v7118, %v7254
        %v7319 = vadd.f32 %v7119, %v7255
        %v7320 = vrot.slane %v6738, 4
        %v7321 = vrot.slane %v6739, 4
        %v7322 = vrot.slane %v6740, 4
        %v7323 = vrot.slane %v6772, 4
        %v7324 = vrot.slane %v6774, 4
        %v7325 = vrot.slane %v6775, 4
        %v7326 = vrot.slane %v6807, 4
        %v7327 = vrot.slane %v6808, 4
        %v7328 = vrot.slane %v6810, 4
        %v7329 = vrot.slane %v6842, 4
        %v7330 = vrot.slane %v6843, 4
        %v7331 = vrot.slane %v6844, 4
        %v7332 = vrot.slane %v6877, 4
        %v7333 = vrot.slane %v6878, 4
        %v7334 = vrot.slane %v6879, 4
        %v7335 = vrot.slane %v6880, 4
        %v7336 = vrot.slane %v6913, 4
        %v7337 = vrot.slane %v6914, 4
        %v7338 = vrot.slane %v6915, 4
        %v7339 = vrot.slane %v6947, 4
        %v7340 = vrot.slane %v6949, 4
        %v7341 = vrot.slane %v6950, 4
        %v7342 = vrot.slane %v6982, 4
        %v7343 = vrot.slane %v6983, 4
        %v7344 = vrot.slane %v6985, 4
        %v7345 = vrot.slane %v7017, 4
        %v7346 = vrot.slane %v7018, 4
        %v7347 = vrot.slane %v7019, 4
        %v7348 = vrot.slane %v7052, 4
        %v7349 = vrot.slane %v7053, 4
        %v7350 = vrot.slane %v7054, 4
        %v7351 = vrot.slane %v7055, 4
        %v7384 = vadd.f32 %v7288, %v7320
        %v7385 = vadd.f32 %v7289, %v7321
        %v7386 = vadd.f32 %v7290, %v7322
        %v7387 = vadd.f32 %v7291, %v7323
        %v7388 = vadd.f32 %v7292, %v7324
        %v7389 = vadd.f32 %v7293, %v7325
        %v7390 = vadd.f32 %v7294, %v7326
        %v7391 = vadd.f32 %v7295, %v7327
        %v7392 = vadd.f32 %v7296, %v7328
        %v7393 = vadd.f32 %v7297, %v7329
        %v7394 = vadd.f32 %v7298, %v7330
        %v7395 = vadd.f32 %v7299, %v7331
        %v7396 = vadd.f32 %v7300, %v7332
        %v7397 = vadd.f32 %v7301, %v7333
        %v7398 = vadd.f32 %v7302, %v7334
        %v7399 = vadd.f32 %v7303, %v7335
        %v7400 = vadd.f32 %v7304, %v7336
        %v7401 = vadd.f32 %v7305, %v7337
        %v7402 = vadd.f32 %v7306, %v7338
        %v7403 = vadd.f32 %v7307, %v7339
        %v7404 = vadd.f32 %v7308, %v7340
        %v7405 = vadd.f32 %v7309, %v7341
        %v7406 = vadd.f32 %v7310, %v7342
        %v7407 = vadd.f32 %v7311, %v7343
        %v7408 = vadd.f32 %v7312, %v7344
        %v7409 = vadd.f32 %v7313, %v7345
        %v7410 = vadd.f32 %v7314, %v7346
        %v7411 = vadd.f32 %v7315, %v7347
        %v7412 = vadd.f32 %v7316, %v7348
        %v7413 = vadd.f32 %v7317, %v7349
        %v7414 = vadd.f32 %v7318, %v7350
        %v7415 = vadd.f32 %v7319, %v7351
        %v7416 = vlaneseq
        %v7417 = vshrl.u32 %v7416, 7
        %v7418 = vsub.s32 0, %v7417
        %v7419 = vrot.slane %v396, %v7418
        %v7421 = vcombine.high %v7419, %v7419
        %v7423 = vunpack.c.l.s4 1983009808
        %v7424 = vunpack.c.0.s8 %v7423
        %v7425 = vlaneseq
        %v7426 = vshrl.u32 %v7425, 7
        %v7427 = vsub.s32 %v7424, %v7426
        %v7428 = vrot.slane %v7419, %v7427
        %v7430 = vunpack.c.l.s4 1983009808
        %v7431 = vunpack.c.0.s8 %v7430
        %v7432 = vlaneseq
        %v7433 = vshrl.u32 %v7432, 7
        %v7434 = vsub.s32 %v7431, %v7433
        %v7435 = vrot.slane %v7421, %v7434
        %v7436 = vcombine.high %v7428, %v7428
        %v7437 = vcombine.high %v7435, %v7435
        %v7442 = vmul.f32 %v7384, %v7428
        %v7443 = vmul.f32 %v7385, %v7436
        %v7444 = vmul.f32 %v7386, %v7435
        %v7445 = vmul.f32 %v7387, %v7437
        %v7446 = vmul.f32 %v7388, %v7428
        %v7447 = vmul.f32 %v7389, %v7436
        %v7448 = vmul.f32 %v7390, %v7435
        %v7449 = vmul.f32 %v7391, %v7437
        %v7450 = vmul.f32 %v7392, %v7428
        %v7451 = vmul.f32 %v7393, %v7436
        %v7452 = vmul.f32 %v7394, %v7435
        %v7453 = vmul.f32 %v7395, %v7437
        %v7454 = vmul.f32 %v7396, %v7428
        %v7455 = vmul.f32 %v7397, %v7436
        %v7456 = vmul.f32 %v7398, %v7435
        %v7457 = vmul.f32 %v7399, %v7437
        %v7458 = vmul.f32 %v7400, %v7428
        %v7459 = vmul.f32 %v7401, %v7436
        %v7460 = vmul.f32 %v7402, %v7435
        %v7461 = vmul.f32 %v7403, %v7437
        %v7462 = vmul.f32 %v7404, %v7428
        %v7463 = vmul.f32 %v7405, %v7436
        %v7464 = vmul.f32 %v7406, %v7435
        %v7465 = vmul.f32 %v7407, %v7437
        %v7466 = vmul.f32 %v7408, %v7428
        %v7467 = vmul.f32 %v7409, %v7436
        %v7468 = vmul.f32 %v7410, %v7435
        %v7469 = vmul.f32 %v7411, %v7437
        %v7470 = vmul.f32 %v7412, %v7428
        %v7471 = vmul.f32 %v7413, %v7436
        %v7472 = vmul.f32 %v7414, %v7435
        %v7473 = vmul.f32 %v7415, %v7437
        %v7474 = vlaneseq
        %v7475 = vshrl.u32 %v7474, 7
        %v7476 = vsub.s32 0, %v7475
        %v7477 = vrot.slane %v397, %v7476
        %v7479 = vcombine.high %v7477, %v7477
        %v7481 = vunpack.c.l.s4 1983009808
        %v7482 = vunpack.c.0.s8 %v7481
        %v7483 = vlaneseq
        %v7484 = vshrl.u32 %v7483, 7
        %v7485 = vsub.s32 %v7482, %v7484
        %v7486 = vrot.slane %v7477, %v7485
        %v7488 = vunpack.c.l.s4 1983009808
        %v7489 = vunpack.c.0.s8 %v7488
        %v7490 = vlaneseq
        %v7491 = vshrl.u32 %v7490, 7
        %v7492 = vsub.s32 %v7489, %v7491
        %v7493 = vrot.slane %v7479, %v7492
        %v7494 = vcombine.high %v7486, %v7486
        %v7495 = vcombine.high %v7493, %v7493
        %v7500 = vadd.f32 %v7442, %v7486
        %v7501 = vadd.f32 %v7443, %v7494
        %v7502 = vadd.f32 %v7444, %v7493
        %v7503 = vadd.f32 %v7445, %v7495
        %v7504 = vadd.f32 %v7446, %v7486
        %v7505 = vadd.f32 %v7447, %v7494
        %v7506 = vadd.f32 %v7448, %v7493
        %v7507 = vadd.f32 %v7449, %v7495
        %v7508 = vadd.f32 %v7450, %v7486
        %v7509 = vadd.f32 %v7451, %v7494
        %v7510 = vadd.f32 %v7452, %v7493
        %v7511 = vadd.f32 %v7453, %v7495
        %v7512 = vadd.f32 %v7454, %v7486
        %v7513 = vadd.f32 %v7455, %v7494
        %v7514 = vadd.f32 %v7456, %v7493
        %v7515 = vadd.f32 %v7457, %v7495
        %v7516 = vadd.f32 %v7458, %v7486
        %v7517 = vadd.f32 %v7459, %v7494
        %v7518 = vadd.f32 %v7460, %v7493
        %v7519 = vadd.f32 %v7461, %v7495
        %v7520 = vadd.f32 %v7462, %v7486
        %v7521 = vadd.f32 %v7463, %v7494
        %v7522 = vadd.f32 %v7464, %v7493
        %v7523 = vadd.f32 %v7465, %v7495
        %v7524 = vadd.f32 %v7466, %v7486
        %v7525 = vadd.f32 %v7467, %v7494
        %v7526 = vadd.f32 %v7468, %v7493
        %v7527 = vadd.f32 %v7469, %v7495
        %v7528 = vadd.f32 %v7470, %v7486
        %v7529 = vadd.f32 %v7471, %v7494
        %v7530 = vadd.f32 %v7472, %v7493
        %v7531 = vadd.f32 %v7473, %v7495
        %v7540 = vcombine.high %v2199, %v2199
        %v7542 = vunpack.c.l.s4 1983009808
        %v7543 = vunpack.c.0.s8 %v7542
        %v7544 = vlaneseq
        %v7545 = vshrl.u32 %v7544, 7
        %v7546 = vsub.s32 %v7543, %v7545
        %v7547 = vrot.slane %v2199, %v7546
        %v7549 = vunpack.c.l.s4 1983009808
        %v7550 = vunpack.c.0.s8 %v7549
        %v7551 = vlaneseq
        %v7552 = vshrl.u32 %v7551, 7
        %v7553 = vsub.s32 %v7550, %v7552
        %v7554 = vrot.slane %v7540, %v7553
        %v7555 = vcombine.high %v7547, %v7547
        %v7556 = vcombine.high %v7554, %v7554
        %v7557 = vcombine.high %v2200, %v2200
        %v7559 = vunpack.c.l.s4 1983009808
        %v7560 = vunpack.c.0.s8 %v7559
        %v7561 = vlaneseq
        %v7562 = vshrl.u32 %v7561, 7
        %v7563 = vsub.s32 %v7560, %v7562
        %v7564 = vrot.slane %v2200, %v7563
        %v7566 = vunpack.c.l.s4 1983009808
        %v7567 = vunpack.c.0.s8 %v7566
        %v7568 = vlaneseq
        %v7569 = vshrl.u32 %v7568, 7
        %v7570 = vsub.s32 %v7567, %v7569
        %v7571 = vrot.slane %v7557, %v7570
        %v7572 = vcombine.high %v7564, %v7564
        %v7573 = vcombine.high %v7571, %v7571
        %v7574 = vcombine.high %v2201, %v2201
        %v7576 = vunpack.c.l.s4 1983009808
        %v7577 = vunpack.c.0.s8 %v7576
        %v7578 = vlaneseq
        %v7579 = vshrl.u32 %v7578, 7
        %v7580 = vsub.s32 %v7577, %v7579
        %v7581 = vrot.slane %v2201, %v7580
        %v7583 = vunpack.c.l.s4 1983009808
        %v7584 = vunpack.c.0.s8 %v7583
        %v7585 = vlaneseq
        %v7586 = vshrl.u32 %v7585, 7
        %v7587 = vsub.s32 %v7584, %v7586
        %v7588 = vrot.slane %v7574, %v7587
        %v7589 = vcombine.high %v7581, %v7581
        %v7590 = vcombine.high %v7588, %v7588
        %v7591 = vcombine.high %v2202, %v2202
        %v7593 = vunpack.c.l.s4 1983009808
        %v7594 = vunpack.c.0.s8 %v7593
        %v7595 = vlaneseq
        %v7596 = vshrl.u32 %v7595, 7
        %v7597 = vsub.s32 %v7594, %v7596
        %v7598 = vrot.slane %v2202, %v7597
        %v7600 = vunpack.c.l.s4 1983009808
        %v7601 = vunpack.c.0.s8 %v7600
        %v7602 = vlaneseq
        %v7603 = vshrl.u32 %v7602, 7
        %v7604 = vsub.s32 %v7601, %v7603
        %v7605 = vrot.slane %v7591, %v7604
        %v7606 = vcombine.high %v7598, %v7598
        %v7607 = vcombine.high %v7605, %v7605
        %v7608 = vcombine.high %v2203, %v2203
        %v7610 = vunpack.c.l.s4 1983009808
        %v7611 = vunpack.c.0.s8 %v7610
        %v7612 = vlaneseq
        %v7613 = vshrl.u32 %v7612, 7
        %v7614 = vsub.s32 %v7611, %v7613
        %v7615 = vrot.slane %v2203, %v7614
        %v7617 = vunpack.c.l.s4 1983009808
        %v7618 = vunpack.c.0.s8 %v7617
        %v7619 = vlaneseq
        %v7620 = vshrl.u32 %v7619, 7
        %v7621 = vsub.s32 %v7618, %v7620
        %v7622 = vrot.slane %v7608, %v7621
        %v7623 = vcombine.high %v7615, %v7615
        %v7624 = vcombine.high %v7622, %v7622
        %v7625 = vcombine.high %v2204, %v2204
        %v7627 = vunpack.c.l.s4 1983009808
        %v7628 = vunpack.c.0.s8 %v7627
        %v7629 = vlaneseq
        %v7630 = vshrl.u32 %v7629, 7
        %v7631 = vsub.s32 %v7628, %v7630
        %v7632 = vrot.slane %v2204, %v7631
        %v7634 = vunpack.c.l.s4 1983009808
        %v7635 = vunpack.c.0.s8 %v7634
        %v7636 = vlaneseq
        %v7637 = vshrl.u32 %v7636, 7
        %v7638 = vsub.s32 %v7635, %v7637
        %v7639 = vrot.slane %v7625, %v7638
        %v7640 = vcombine.high %v7632, %v7632
        %v7641 = vcombine.high %v7639, %v7639
        %v7642 = vcombine.high %v2205, %v2205
        %v7644 = vunpack.c.l.s4 1983009808
        %v7645 = vunpack.c.0.s8 %v7644
        %v7646 = vlaneseq
        %v7647 = vshrl.u32 %v7646, 7
        %v7648 = vsub.s32 %v7645, %v7647
        %v7649 = vrot.slane %v2205, %v7648
        %v7651 = vunpack.c.l.s4 1983009808
        %v7652 = vunpack.c.0.s8 %v7651
        %v7653 = vlaneseq
        %v7654 = vshrl.u32 %v7653, 7
        %v7655 = vsub.s32 %v7652, %v7654
        %v7656 = vrot.slane %v7642, %v7655
        %v7657 = vcombine.high %v7649, %v7649
        %v7658 = vcombine.high %v7656, %v7656
        %v7659 = vcombine.high %v2206, %v2206
        %v7661 = vunpack.c.l.s4 1983009808
        %v7662 = vunpack.c.0.s8 %v7661
        %v7663 = vlaneseq
        %v7664 = vshrl.u32 %v7663, 7
        %v7665 = vsub.s32 %v7662, %v7664
        %v7666 = vrot.slane %v2206, %v7665
        %v7668 = vunpack.c.l.s4 1983009808
        %v7669 = vunpack.c.0.s8 %v7668
        %v7670 = vlaneseq
        %v7671 = vshrl.u32 %v7670, 7
        %v7672 = vsub.s32 %v7669, %v7671
        %v7673 = vrot.slane %v7659, %v7672
        %v7674 = vcombine.high %v7666, %v7666
        %v7675 = vcombine.high %v7673, %v7673
        %v7708 = vadd.f32 %v7500, %v7547
        %v7709 = vadd.f32 %v7501, %v7555
        %v7710 = vadd.f32 %v7502, %v7554
        %v7711 = vadd.f32 %v7503, %v7556
        %v7712 = vadd.f32 %v7504, %v7564
        %v7713 = vadd.f32 %v7505, %v7572
        %v7714 = vadd.f32 %v7506, %v7571
        %v7715 = vadd.f32 %v7507, %v7573
        %v7716 = vadd.f32 %v7508, %v7581
        %v7717 = vadd.f32 %v7509, %v7589
        %v7718 = vadd.f32 %v7510, %v7588
        %v7719 = vadd.f32 %v7511, %v7590
        %v7720 = vadd.f32 %v7512, %v7598
        %v7721 = vadd.f32 %v7513, %v7606
        %v7722 = vadd.f32 %v7514, %v7605
        %v7723 = vadd.f32 %v7515, %v7607
        %v7724 = vadd.f32 %v7516, %v7615
        %v7725 = vadd.f32 %v7517, %v7623
        %v7726 = vadd.f32 %v7518, %v7622
        %v7727 = vadd.f32 %v7519, %v7624
        %v7728 = vadd.f32 %v7520, %v7632
        %v7729 = vadd.f32 %v7521, %v7640
        %v7730 = vadd.f32 %v7522, %v7639
        %v7731 = vadd.f32 %v7523, %v7641
        %v7732 = vadd.f32 %v7524, %v7649
        %v7733 = vadd.f32 %v7525, %v7657
        %v7734 = vadd.f32 %v7526, %v7656
        %v7735 = vadd.f32 %v7527, %v7658
        %v7736 = vadd.f32 %v7528, %v7666
        %v7737 = vadd.f32 %v7529, %v7674
        %v7738 = vadd.f32 %v7530, %v7673
        %v7739 = vadd.f32 %v7531, %v7675
        %v7740 = vmul.f32 %v7708, 0.5
        %v7741 = vmul.f32 %v7709, 0.5
        %v7742 = vmul.f32 %v7710, 0.5
        %v7743 = vmul.f32 %v7711, 0.5
        %v7744 = vmul.f32 %v7712, 0.5
        %v7745 = vmul.f32 %v7713, 0.5
        %v7746 = vmul.f32 %v7714, 0.5
        %v7747 = vmul.f32 %v7715, 0.5
        %v7748 = vmul.f32 %v7716, 0.5
        %v7749 = vmul.f32 %v7717, 0.5
        %v7750 = vmul.f32 %v7718, 0.5
        %v7751 = vmul.f32 %v7719, 0.5
        %v7752 = vmul.f32 %v7720, 0.5
        %v7753 = vmul.f32 %v7721, 0.5
        %v7754 = vmul.f32 %v7722, 0.5
        %v7755 = vmul.f32 %v7723, 0.5
        %v7756 = vmul.f32 %v7724, 0.5
        %v7757 = vmul.f32 %v7725, 0.5
        %v7758 = vmul.f32 %v7726, 0.5
        %v7759 = vmul.f32 %v7727, 0.5
        %v7760 = vmul.f32 %v7728, 0.5
        %v7761 = vmul.f32 %v7729, 0.5
        %v7762 = vmul.f32 %v7730, 0.5
        %v7763 = vmul.f32 %v7731, 0.5
        %v7764 = vmul.f32 %v7732, 0.5
        %v7765 = vmul.f32 %v7733, 0.5
        %v7766 = vmul.f32 %v7734, 0.5
        %v7767 = vmul.f32 %v7735, 0.5
        %v7768 = vmul.f32 %v7736, 0.5
        %v7769 = vmul.f32 %v7737, 0.5
        %v7770 = vmul.f32 %v7738, 0.5
        %v7771 = vmul.f32 %v7739, 0.5
        %v7772 = vmul.f32 %v7708, 0.70710677
        %v7773 = vmul.f32 %v7709, 0.70710677
        %v7774 = vmul.f32 %v7710, 0.70710677
        %v7775 = vmul.f32 %v7711, 0.70710677
        %v7776 = vmul.f32 %v7712, 0.70710677
        %v7777 = vmul.f32 %v7713, 0.70710677
        %v7778 = vmul.f32 %v7714, 0.70710677
        %v7779 = vmul.f32 %v7715, 0.70710677
        %v7780 = vmul.f32 %v7716, 0.70710677
        %v7781 = vmul.f32 %v7717, 0.70710677
        %v7782 = vmul.f32 %v7718, 0.70710677
        %v7783 = vmul.f32 %v7719, 0.70710677
        %v7784 = vmul.f32 %v7720, 0.70710677
        %v7785 = vmul.f32 %v7721, 0.70710677
        %v7786 = vmul.f32 %v7722, 0.70710677
        %v7787 = vmul.f32 %v7723, 0.70710677
        %v7788 = vmul.f32 %v7724, 0.70710677
        %v7789 = vmul.f32 %v7725, 0.70710677
        %v7790 = vmul.f32 %v7726, 0.70710677
        %v7791 = vmul.f32 %v7727, 0.70710677
        %v7792 = vmul.f32 %v7728, 0.70710677
        %v7793 = vmul.f32 %v7729, 0.70710677
        %v7794 = vmul.f32 %v7730, 0.70710677
        %v7795 = vmul.f32 %v7731, 0.70710677
        %v7796 = vmul.f32 %v7732, 0.70710677
        %v7797 = vmul.f32 %v7733, 0.70710677
        %v7798 = vmul.f32 %v7734, 0.70710677
        %v7799 = vmul.f32 %v7735, 0.70710677
        %v7800 = vmul.f32 %v7736, 0.70710677
        %v7801 = vmul.f32 %v7737, 0.70710677
        %v7802 = vmul.f32 %v7738, 0.70710677
        %v7803 = vmul.f32 %v7739, 0.70710677
        %v7804 = verf.f32.pop %v7772
        %v7805 = verf.f32.pop %v7773
        %v7806 = verf.f32.pop %v7774
        %v7807 = verf.f32.pop %v7775
        %v7808 = verf.f32.pop %v7776
        %v7809 = verf.f32.pop %v7777
        %v7810 = verf.f32.pop %v7778
        %v7811 = verf.f32.pop %v7779
        %v7812 = verf.f32.pop %v7780
        %v7813 = verf.f32.pop %v7781
        %v7814 = verf.f32.pop %v7782
        %v7815 = verf.f32.pop %v7783
        %v7816 = verf.f32.pop %v7784
        %v7817 = verf.f32.pop %v7785
        %v7818 = verf.f32.pop %v7786
        %v7819 = verf.f32.pop %v7787
        %v7820 = verf.f32.pop %v7788
        %v7821 = verf.f32.pop %v7789
        %v7822 = verf.f32.pop %v7790
        %v7823 = verf.f32.pop %v7791
        %v7824 = verf.f32.pop %v7792
        %v7825 = verf.f32.pop %v7793
        %v7826 = verf.f32.pop %v7794
        %v7827 = verf.f32.pop %v7795
        %v7828 = verf.f32.pop %v7796
        %v7829 = verf.f32.pop %v7797
        %v7830 = verf.f32.pop %v7798
        %v7831 = verf.f32.pop %v7799
        %v7832 = verf.f32.pop %v7800
        %v7833 = verf.f32.pop %v7801
        %v7834 = verf.f32.pop %v7802
        %v7835 = verf.f32.pop %v7803
        %v7836 = vadd.f32 %v7804, 1.0
        %v7837 = vadd.f32 %v7805, 1.0
        %v7838 = vadd.f32 %v7806, 1.0
        %v7839 = vadd.f32 %v7807, 1.0
        %v7840 = vadd.f32 %v7808, 1.0
        %v7841 = vadd.f32 %v7809, 1.0
        %v7842 = vadd.f32 %v7810, 1.0
        %v7843 = vadd.f32 %v7811, 1.0
        %v7844 = vadd.f32 %v7812, 1.0
        %v7845 = vadd.f32 %v7813, 1.0
        %v7846 = vadd.f32 %v7814, 1.0
        %v7847 = vadd.f32 %v7815, 1.0
        %v7848 = vadd.f32 %v7816, 1.0
        %v7849 = vadd.f32 %v7817, 1.0
        %v7850 = vadd.f32 %v7818, 1.0
        %v7851 = vadd.f32 %v7819, 1.0
        %v7852 = vadd.f32 %v7820, 1.0
        %v7853 = vadd.f32 %v7821, 1.0
        %v7854 = vadd.f32 %v7822, 1.0
        %v7855 = vadd.f32 %v7823, 1.0
        %v7856 = vadd.f32 %v7824, 1.0
        %v7857 = vadd.f32 %v7825, 1.0
        %v7858 = vadd.f32 %v7826, 1.0
        %v7859 = vadd.f32 %v7827, 1.0
        %v7860 = vadd.f32 %v7828, 1.0
        %v7861 = vadd.f32 %v7829, 1.0
        %v7862 = vadd.f32 %v7830, 1.0
        %v7863 = vadd.f32 %v7831, 1.0
        %v7864 = vadd.f32 %v7832, 1.0
        %v7865 = vadd.f32 %v7833, 1.0
        %v7866 = vadd.f32 %v7834, 1.0
        %v7867 = vadd.f32 %v7835, 1.0
        %v7868 = vmul.f32 %v7740, %v7836
        %v7869 = vmul.f32 %v7741, %v7837
        %v7870 = vmul.f32 %v7742, %v7838
        %v7871 = vmul.f32 %v7743, %v7839
        %v7872 = vmul.f32 %v7744, %v7840
        %v7873 = vmul.f32 %v7745, %v7841
        %v7874 = vmul.f32 %v7746, %v7842
        %v7875 = vmul.f32 %v7747, %v7843
        %v7876 = vmul.f32 %v7748, %v7844
        %v7877 = vmul.f32 %v7749, %v7845
        %v7878 = vmul.f32 %v7750, %v7846
        %v7879 = vmul.f32 %v7751, %v7847
        %v7880 = vmul.f32 %v7752, %v7848
        %v7881 = vmul.f32 %v7753, %v7849
        %v7882 = vmul.f32 %v7754, %v7850
        %v7883 = vmul.f32 %v7755, %v7851
        %v7884 = vmul.f32 %v7756, %v7852
        %v7885 = vmul.f32 %v7757, %v7853
        %v7886 = vmul.f32 %v7758, %v7854
        %v7887 = vmul.f32 %v7759, %v7855
        %v7888 = vmul.f32 %v7760, %v7856
        %v7889 = vmul.f32 %v7761, %v7857
        %v7890 = vmul.f32 %v7762, %v7858
        %v7891 = vmul.f32 %v7763, %v7859
        %v7892 = vmul.f32 %v7764, %v7860
        %v7893 = vmul.f32 %v7765, %v7861
        %v7894 = vmul.f32 %v7766, %v7862
        %v7895 = vmul.f32 %v7767, %v7863
        %v7896 = vmul.f32 %v7768, %v7864
        %v7897 = vmul.f32 %v7769, %v7865
        %v7898 = vmul.f32 %v7770, %v7866
        %v7899 = vmul.f32 %v7771, %v7867
        %v7900 = vunpack.c.l.bf16 %v2472
        %v7901 = vunpack.c.l.bf16 %v2473
        %v7902 = vunpack.c.l.bf16 %v2474
        %v7903 = vunpack.c.l.bf16 %v2475
        %v7904 = vunpack.c.l.bf16 %v2476
        %v7905 = vunpack.c.l.bf16 %v2477
        %v7906 = vunpack.c.l.bf16 %v2478
        %v7907 = vunpack.c.l.bf16 %v2479
        %v7916 = vcombine.high %v7900, %v7900
        %v7918 = vunpack.c.l.s4 1983009808
        %v7919 = vunpack.c.0.s8 %v7918
        %v7920 = vlaneseq
        %v7921 = vshrl.u32 %v7920, 7
        %v7922 = vsub.s32 %v7919, %v7921
        %v7923 = vrot.slane %v7900, %v7922
        %v7925 = vunpack.c.l.s4 1983009808
        %v7926 = vunpack.c.0.s8 %v7925
        %v7927 = vlaneseq
        %v7928 = vshrl.u32 %v7927, 7
        %v7929 = vsub.s32 %v7926, %v7928
        %v7930 = vrot.slane %v7916, %v7929
        %v7931 = vcombine.high %v7923, %v7923
        %v7932 = vcombine.high %v7930, %v7930
        %v7933 = vcombine.high %v7901, %v7901
        %v7935 = vunpack.c.l.s4 1983009808
        %v7936 = vunpack.c.0.s8 %v7935
        %v7937 = vlaneseq
        %v7938 = vshrl.u32 %v7937, 7
        %v7939 = vsub.s32 %v7936, %v7938
        %v7940 = vrot.slane %v7901, %v7939
        %v7942 = vunpack.c.l.s4 1983009808
        %v7943 = vunpack.c.0.s8 %v7942
        %v7944 = vlaneseq
        %v7945 = vshrl.u32 %v7944, 7
        %v7946 = vsub.s32 %v7943, %v7945
        %v7947 = vrot.slane %v7933, %v7946
        %v7948 = vcombine.high %v7940, %v7940
        %v7949 = vcombine.high %v7947, %v7947
        %v7950 = vcombine.high %v7902, %v7902
        %v7952 = vunpack.c.l.s4 1983009808
        %v7953 = vunpack.c.0.s8 %v7952
        %v7954 = vlaneseq
        %v7955 = vshrl.u32 %v7954, 7
        %v7956 = vsub.s32 %v7953, %v7955
        %v7957 = vrot.slane %v7902, %v7956
        %v7959 = vunpack.c.l.s4 1983009808
        %v7960 = vunpack.c.0.s8 %v7959
        %v7961 = vlaneseq
        %v7962 = vshrl.u32 %v7961, 7
        %v7963 = vsub.s32 %v7960, %v7962
        %v7964 = vrot.slane %v7950, %v7963
        %v7965 = vcombine.high %v7957, %v7957
        %v7966 = vcombine.high %v7964, %v7964
        %v7967 = vcombine.high %v7903, %v7903
        %v7969 = vunpack.c.l.s4 1983009808
        %v7970 = vunpack.c.0.s8 %v7969
        %v7971 = vlaneseq
        %v7972 = vshrl.u32 %v7971, 7
        %v7973 = vsub.s32 %v7970, %v7972
        %v7974 = vrot.slane %v7903, %v7973
        %v7976 = vunpack.c.l.s4 1983009808
        %v7977 = vunpack.c.0.s8 %v7976
        %v7978 = vlaneseq
        %v7979 = vshrl.u32 %v7978, 7
        %v7980 = vsub.s32 %v7977, %v7979
        %v7981 = vrot.slane %v7967, %v7980
        %v7982 = vcombine.high %v7974, %v7974
        %v7983 = vcombine.high %v7981, %v7981
        %v7984 = vcombine.high %v7904, %v7904
        %v7986 = vunpack.c.l.s4 1983009808
        %v7987 = vunpack.c.0.s8 %v7986
        %v7988 = vlaneseq
        %v7989 = vshrl.u32 %v7988, 7
        %v7990 = vsub.s32 %v7987, %v7989
        %v7991 = vrot.slane %v7904, %v7990
        %v7993 = vunpack.c.l.s4 1983009808
        %v7994 = vunpack.c.0.s8 %v7993
        %v7995 = vlaneseq
        %v7996 = vshrl.u32 %v7995, 7
        %v7997 = vsub.s32 %v7994, %v7996
        %v7998 = vrot.slane %v7984, %v7997
        %v7999 = vcombine.high %v7991, %v7991
        %v8000 = vcombine.high %v7998, %v7998
        %v8001 = vcombine.high %v7905, %v7905
        %v8003 = vunpack.c.l.s4 1983009808
        %v8004 = vunpack.c.0.s8 %v8003
        %v8005 = vlaneseq
        %v8006 = vshrl.u32 %v8005, 7
        %v8007 = vsub.s32 %v8004, %v8006
        %v8008 = vrot.slane %v7905, %v8007
        %v8010 = vunpack.c.l.s4 1983009808
        %v8011 = vunpack.c.0.s8 %v8010
        %v8012 = vlaneseq
        %v8013 = vshrl.u32 %v8012, 7
        %v8014 = vsub.s32 %v8011, %v8013
        %v8015 = vrot.slane %v8001, %v8014
        %v8016 = vcombine.high %v8008, %v8008
        %v8017 = vcombine.high %v8015, %v8015
        %v8018 = vcombine.high %v7906, %v7906
        %v8020 = vunpack.c.l.s4 1983009808
        %v8021 = vunpack.c.0.s8 %v8020
        %v8022 = vlaneseq
        %v8023 = vshrl.u32 %v8022, 7
        %v8024 = vsub.s32 %v8021, %v8023
        %v8025 = vrot.slane %v7906, %v8024
        %v8027 = vunpack.c.l.s4 1983009808
        %v8028 = vunpack.c.0.s8 %v8027
        %v8029 = vlaneseq
        %v8030 = vshrl.u32 %v8029, 7
        %v8031 = vsub.s32 %v8028, %v8030
        %v8032 = vrot.slane %v8018, %v8031
        %v8033 = vcombine.high %v8025, %v8025
        %v8034 = vcombine.high %v8032, %v8032
        %v8035 = vcombine.high %v7907, %v7907
        %v8037 = vunpack.c.l.s4 1983009808
        %v8038 = vunpack.c.0.s8 %v8037
        %v8039 = vlaneseq
        %v8040 = vshrl.u32 %v8039, 7
        %v8041 = vsub.s32 %v8038, %v8040
        %v8042 = vrot.slane %v7907, %v8041
        %v8044 = vunpack.c.l.s4 1983009808
        %v8045 = vunpack.c.0.s8 %v8044
        %v8046 = vlaneseq
        %v8047 = vshrl.u32 %v8046, 7
        %v8048 = vsub.s32 %v8045, %v8047
        %v8049 = vrot.slane %v8035, %v8048
        %v8050 = vcombine.high %v8042, %v8042
        %v8051 = vcombine.high %v8049, %v8049
        %v8084 = vadd.f32 %v7868, %v7923
        %v8085 = vadd.f32 %v7869, %v7931
        %v8086 = vadd.f32 %v7870, %v7930
        %v8087 = vadd.f32 %v7871, %v7932
        %v8088 = vadd.f32 %v7872, %v7940
        %v8089 = vadd.f32 %v7873, %v7948
        %v8090 = vadd.f32 %v7874, %v7947
        %v8091 = vadd.f32 %v7875, %v7949
        %v8092 = vadd.f32 %v7876, %v7957
        %v8093 = vadd.f32 %v7877, %v7965
        %v8094 = vadd.f32 %v7878, %v7964
        %v8095 = vadd.f32 %v7879, %v7966
        %v8096 = vadd.f32 %v7880, %v7974
        %v8097 = vadd.f32 %v7881, %v7982
        %v8098 = vadd.f32 %v7882, %v7981
        %v8099 = vadd.f32 %v7883, %v7983
        %v8100 = vadd.f32 %v7884, %v7991
        %v8101 = vadd.f32 %v7885, %v7999
        %v8102 = vadd.f32 %v7886, %v7998
        %v8103 = vadd.f32 %v7887, %v8000
        %v8104 = vadd.f32 %v7888, %v8008
        %v8105 = vadd.f32 %v7889, %v8016
        %v8106 = vadd.f32 %v7890, %v8015
        %v8107 = vadd.f32 %v7891, %v8017
        %v8108 = vadd.f32 %v7892, %v8025
        %v8109 = vadd.f32 %v7893, %v8033
        %v8110 = vadd.f32 %v7894, %v8032
        %v8111 = vadd.f32 %v7895, %v8034
        %v8112 = vadd.f32 %v7896, %v8042
        %v8113 = vadd.f32 %v7897, %v8050
        %v8114 = vadd.f32 %v7898, %v8049
        %v8115 = vadd.f32 %v7899, %v8051
        %v8148 = vcombine.low %v8084, %v8085
        %v8149 = vcombine.low %v8086, %v8087
        %v8151 = vunpack.c.l.s4 1983009808
        %v8152 = vunpack.c.0.s8 %v8151
        %v8153 = vlaneseq
        %v8154 = vshrl.u32 %v8153, 7
        %v8155 = vsub.s32 %v8152, %v8154
        %v8156 = vrot.slane %v8148, %v8155
        %v8158 = vunpack.c.l.s4 1983009808
        %v8159 = vunpack.c.0.s8 %v8158
        %v8160 = vlaneseq
        %v8161 = vshrl.u32 %v8160, 7
        %v8162 = vsub.s32 %v8159, %v8161
        %v8163 = vrot.slane %v8149, %v8162
        %v8164 = vcombine.low %v8156, %v8163
        %v8165 = vcombine.low %v8088, %v8089
        %v8166 = vcombine.low %v8090, %v8091
        %v8168 = vunpack.c.l.s4 1983009808
        %v8169 = vunpack.c.0.s8 %v8168
        %v8170 = vlaneseq
        %v8171 = vshrl.u32 %v8170, 7
        %v8172 = vsub.s32 %v8169, %v8171
        %v8173 = vrot.slane %v8165, %v8172
        %v8175 = vunpack.c.l.s4 1983009808
        %v8176 = vunpack.c.0.s8 %v8175
        %v8177 = vlaneseq
        %v8178 = vshrl.u32 %v8177, 7
        %v8179 = vsub.s32 %v8176, %v8178
        %v8180 = vrot.slane %v8166, %v8179
        %v8181 = vcombine.low %v8173, %v8180
        %v8182 = vcombine.low %v8092, %v8093
        %v8183 = vcombine.low %v8094, %v8095
        %v8185 = vunpack.c.l.s4 1983009808
        %v8186 = vunpack.c.0.s8 %v8185
        %v8187 = vlaneseq
        %v8188 = vshrl.u32 %v8187, 7
        %v8189 = vsub.s32 %v8186, %v8188
        %v8190 = vrot.slane %v8182, %v8189
        %v8192 = vunpack.c.l.s4 1983009808
        %v8193 = vunpack.c.0.s8 %v8192
        %v8194 = vlaneseq
        %v8195 = vshrl.u32 %v8194, 7
        %v8196 = vsub.s32 %v8193, %v8195
        %v8197 = vrot.slane %v8183, %v8196
        %v8198 = vcombine.low %v8190, %v8197
        %v8199 = vcombine.low %v8096, %v8097
        %v8200 = vcombine.low %v8098, %v8099
        %v8202 = vunpack.c.l.s4 1983009808
        %v8203 = vunpack.c.0.s8 %v8202
        %v8204 = vlaneseq
        %v8205 = vshrl.u32 %v8204, 7
        %v8206 = vsub.s32 %v8203, %v8205
        %v8207 = vrot.slane %v8199, %v8206
        %v8209 = vunpack.c.l.s4 1983009808
        %v8210 = vunpack.c.0.s8 %v8209
        %v8211 = vlaneseq
        %v8212 = vshrl.u32 %v8211, 7
        %v8213 = vsub.s32 %v8210, %v8212
        %v8214 = vrot.slane %v8200, %v8213
        %v8215 = vcombine.low %v8207, %v8214
        %v8216 = vcombine.low %v8100, %v8101
        %v8217 = vcombine.low %v8102, %v8103
        %v8219 = vunpack.c.l.s4 1983009808
        %v8220 = vunpack.c.0.s8 %v8219
        %v8221 = vlaneseq
        %v8222 = vshrl.u32 %v8221, 7
        %v8223 = vsub.s32 %v8220, %v8222
        %v8224 = vrot.slane %v8216, %v8223
        %v8226 = vunpack.c.l.s4 1983009808
        %v8227 = vunpack.c.0.s8 %v8226
        %v8228 = vlaneseq
        %v8229 = vshrl.u32 %v8228, 7
        %v8230 = vsub.s32 %v8227, %v8229
        %v8231 = vrot.slane %v8217, %v8230
        %v8232 = vcombine.low %v8224, %v8231
        %v8233 = vcombine.low %v8104, %v8105
        %v8234 = vcombine.low %v8106, %v8107
        %v8236 = vunpack.c.l.s4 1983009808
        %v8237 = vunpack.c.0.s8 %v8236
        %v8238 = vlaneseq
        %v8239 = vshrl.u32 %v8238, 7
        %v8240 = vsub.s32 %v8237, %v8239
        %v8241 = vrot.slane %v8233, %v8240
        %v8243 = vunpack.c.l.s4 1983009808
        %v8244 = vunpack.c.0.s8 %v8243
        %v8245 = vlaneseq
        %v8246 = vshrl.u32 %v8245, 7
        %v8247 = vsub.s32 %v8244, %v8246
        %v8248 = vrot.slane %v8234, %v8247
        %v8249 = vcombine.low %v8241, %v8248
        %v8250 = vcombine.low %v8108, %v8109
        %v8251 = vcombine.low %v8110, %v8111
        %v8253 = vunpack.c.l.s4 1983009808
        %v8254 = vunpack.c.0.s8 %v8253
        %v8255 = vlaneseq
        %v8256 = vshrl.u32 %v8255, 7
        %v8257 = vsub.s32 %v8254, %v8256
        %v8258 = vrot.slane %v8250, %v8257
        %v8260 = vunpack.c.l.s4 1983009808
        %v8261 = vunpack.c.0.s8 %v8260
        %v8262 = vlaneseq
        %v8263 = vshrl.u32 %v8262, 7
        %v8264 = vsub.s32 %v8261, %v8263
        %v8265 = vrot.slane %v8251, %v8264
        %v8266 = vcombine.low %v8258, %v8265
        %v8267 = vcombine.low %v8112, %v8113
        %v8268 = vcombine.low %v8114, %v8115
        %v8270 = vunpack.c.l.s4 1983009808
        %v8271 = vunpack.c.0.s8 %v8270
        %v8272 = vlaneseq
        %v8273 = vshrl.u32 %v8272, 7
        %v8274 = vsub.s32 %v8271, %v8273
        %v8275 = vrot.slane %v8267, %v8274
        %v8277 = vunpack.c.l.s4 1983009808
        %v8278 = vunpack.c.0.s8 %v8277
        %v8279 = vlaneseq
        %v8280 = vshrl.u32 %v8279, 7
        %v8281 = vsub.s32 %v8278, %v8280
        %v8282 = vrot.slane %v8268, %v8281
        %v8283 = vcombine.low %v8275, %v8282
        %8292 = vst [vmem:[%s370] sm:$0xff] %v8164
        %8293 = vst [vmem:[%s370 + $0x8] sm:$0xff] %v8181
        %8294 = vst [vmem:[%s370 + $0x10] sm:$0xff] %v8198
        %8295 = vst [vmem:[%s370 + $0x18] sm:$0xff] %v8215
        %8296 = vst [vmem:[%s370 + $0x20] sm:$0xff] %v8232
        %8297 = vst [vmem:[%s370 + $0x28] sm:$0xff] %v8249
        %8298 = vst [vmem:[%s370 + $0x30] sm:$0xff] %v8266
        %8299 = vst [vmem:[%s370 + $0x38] sm:$0xff] %v8283
        %s8300 = sand.u32 %s240, 1
        %s8301 = scalar_lea.sflag [#allocation4], %s8300
        %s8302 = sand.u32 %s240, 1
        %s8303 = smul.addr %s8302, 64
        %s8304 = scalar_lea.vmem [#allocation3], %s8303
        // Predicated region
        $region57: #{downsample_forward.1} parent=55 // pred_check
          %p8305 = pneg %p250
        $region58: #{downsample_forward.1} parent=55 // pred_check_branch
          %8307 = sbr.rel (%p8305) target = $region60
        $region59: #{downsample_forward.1} parent=55 // pred_region
          %s8309 = ssub.s32 1024, 1024
          %8310 = vsyncadd %s8301, %s8309
          %s8311 = smul.addr %s23, 8
          %s8312 = smul.addr %s8311, 128
          %s8313 = scalar_lea.hbm %s9, %s8312
          %s8314 = sshll.u32 %s8304, 4
          %s8315 = int_to_ptr.vmem [resolvable:$true] %s8314
          %8320 = dma.vmem_to_hbm [thread:$0]  %s8315, 1024, %s8313, %s8301, 128, 128, 8
        $region60: #{downsample_forward.1} parent=55 // pred_fallthru
          _
      $region56: #{downsample_forward.1} parent=5 // pred_fallthru
        _
      %p8321 = scmp.le.s32.totalorder 2, %s18
      // Predicated region
      $region61: #{downsample_forward.1} parent=5 // pred_check
        %p8322 = pneg %p8321
      $region62: #{downsample_forward.1} parent=5 // pred_check_branch
        %8324 = sbr.rel (%p8322) target = $region64
      $region63: #{downsample_forward.1} parent=5 // pred_region
        %s8325 = ssub.s32 %s18, 2
        // Predicated region
        $region65: #{downsample_forward.1} parent=63 // pred_check
          %p8326 = pneg %p256
        $region66: #{downsample_forward.1} parent=63 // pred_check_branch
          %8328 = sbr.rel (%p8326) target = $region68
        $region67: #{downsample_forward.1} parent=63 // pred_region
          %s8329 = sand.u32 %s241, 1
          %s8330 = scalar_lea.sflag [#allocation4], %s8329
          %s8331 = sand.u32 %s241, 1
          %s8332 = smul.addr %s8331, 64
          %s8333 = scalar_lea.vmem [#allocation3], %s8332
          %8334 = dma.done %s8330, 1024
        $region68: #{downsample_forward.1} parent=63 // pred_fallthru
          _
      $region64: #{downsample_forward.1} parent=5 // pred_fallthru
        _
    $region6: #{downsample_forward.1} parent=1 // loop_footer
      %s22 = sadd.s32 1, %s18
    $region7: #{downsample_forward.1} parent=1 // loop_footer_branch
      %17 = sbr.rel target = $region3
    $region8: #{downsample_forward.1} parent=1 // loop_exit
      _
    %8335 = vsyncpa [#allocation4], 1
    %s8336 = scalar_lea.sflag [#allocation4], 1
    %8337 = vsyncpa %s8336, 1

</llo_original>
